<compile_context>
chip_gen: v7x
topology: tpu7x:2x2x1
jax: 0.10.0
libtpu: 0.0.40
codegen_flags: <defaults>
</compile_context>

<pallas_src>
import functools

import jax
import jax.numpy as jnp
from jax import lax
from jax.experimental import pallas as pl
from jax.experimental.pallas import tpu as pltpu

EPS = 1e-5


def _full_spec(shape):
    """BlockSpec covering the whole array (single grid step)."""
    n = len(shape)
    return pl.BlockSpec(shape, lambda i, _n=n: (0,) * _n)


def _bn_train(y2d, gamma, beta):
    """Training-mode BatchNorm on (N, C) activations.

    Centered (two-pass) variance for robustness; normalization folded into a
    single FMA per element: y*scale + shift.
    """
    inv_n = 1.0 / y2d.shape[0]
    mean = jnp.sum(y2d, axis=0, keepdims=True) * inv_n
    d = y2d - mean
    var = jnp.sum(d * d, axis=0, keepdims=True) * inv_n        # biased, like PyTorch fwd
    scale = gamma * lax.rsqrt(var + EPS)
    shift = beta - mean * scale
    return y2d * scale + shift


def _zero_halo(pad_ref, B, H, W, C):
    """Zero only the 1-wide padding halo of a (B, H+2, W+2, C) scratch ref."""
    row = jnp.zeros((B, 1, W + 2, C), pad_ref.dtype)
    col = jnp.zeros((B, H, 1, C), pad_ref.dtype)
    pad_ref[:, 0:1, :, :] = row                  # top halo row
    pad_ref[:, H + 1:H + 2, :, :] = row          # bottom halo row
    pad_ref[:, 1:H + 1, 0:1, :] = col            # left halo column
    pad_ref[:, 1:H + 1, W + 1:W + 2, :] = col    # right halo column


def _conv3x3_taps(pad_ref, w_taps_ref, B, H, W, Cin, Cout, center_w=None):
    """3x3 'SAME' conv via tap-wise MXU accumulation (no materialized im2col).

    pad_ref:     (B, H+2, W+2, Cin) f32 VMEM scratch (halo zeroed, interior set).
    w_taps_ref:  (9, Cin, Cout) bf16, tap index = kh*3 + kw.
    center_w:    optional (Cin, Cout + Ce) bf16 value replacing tap 4's weight;
                 the trailing Ce columns are a fused side-matmul (1x1 shortcut)
                 sharing the same LHS rows (wider-N MXU occupancy).
    Returns (acc f32 (B*H*W, Cout), extra f32 (B*H*W, Ce) or None).
    """
    n = B * H * W
    acc = jnp.zeros((n, Cout), jnp.float32)
    extra = None
    for kh in range(3):
        for kw in range(3):
            t = kh * 3 + kw
            lhs = pad_ref[:, kh:kh + H, kw:kw + W, :]
            lhs = lhs.reshape(n, Cin).astype(jnp.bfloat16)      # cast at MXU boundary
            if center_w is not None and t == 4:
                y = jnp.dot(lhs, center_w, preferred_element_type=jnp.float32)
                acc = acc + y[:, :Cout]
                extra = y[:, Cout:]
            else:
                acc = acc + jnp.dot(lhs, w_taps_ref[t],
                                    preferred_element_type=jnp.float32)
    return acc, extra


# ---------------------------------------------------------------------------
# Fused BasicBlock kernel (one pallas_call for the whole residual block).
# ---------------------------------------------------------------------------
def _basic_block_kernel(*refs, B, H, W, proj):
    if proj:
        (x_ref, w1_ref, w2_ref, wc_ref, bn_ref,
         out_ref, xpad_ref, ypad_ref) = refs
    else:
        (x_ref, w1_ref, w2_ref, bn_ref,
         out_ref, xpad_ref, ypad_ref) = refs

    Cin = x_ref.shape[3]
    C = w1_ref.shape[2]
    n = B * H * W

    g1, b1 = bn_ref[0:1, :], bn_ref[1:2, :]
    g2, b2 = bn_ref[2:3, :], bn_ref[3:4, :]

    # ---- conv1 (3x3, pad=1) [+ fused 1x1 projection] + bn1 + relu ----------
    _zero_halo(xpad_ref, B, H, W, Cin)
    xpad_ref[:, 1:H + 1, 1:W + 1, :] = x_ref[...]
    center_w = wc_ref[...] if proj else None      # (Cin, 2*C) bf16: conv1-center | ws
    acc1, res_raw = _conv3x3_taps(xpad_ref, w1_ref, B, H, W, Cin, C,
                                  center_w=center_w)
    y1 = jnp.maximum(_bn_train(acc1, g1, b1), 0.0)             # f32, stays in VMEM

    # ---- conv2 (3x3, pad=1) + bn2 ------------------------------------------
    _zero_halo(ypad_ref, B, H, W, C)
    ypad_ref[:, 1:H + 1, 1:W + 1, :] = y1.reshape(B, H, W, C)
    acc2, _ = _conv3x3_taps(ypad_ref, w2_ref, B, H, W, C, C)
    y2 = _bn_train(acc2, g2, b2)

    # ---- shortcut + add + relu ---------------------------------------------
    if proj:
        gs, bs = bn_ref[4:5, :], bn_ref[5:6, :]
        res = _bn_train(res_raw, gs, bs)           # raw 1x1-conv result from center tap
    else:
        res = x_ref[...].reshape(n, C)             # identity

    out_ref[...] = jnp.maximum(y2 + res, 0.0)


def _vmem_limit_bytes():
    """Generation-aware VMEM budget (review: <=~48 MiB on v7x, more on v5e/v6e)."""
    cap = 64 * 1024 * 1024
    try:
        info = pltpu.get_tpu_info()
        cap = int(getattr(info, "vmem_capacity_bytes", cap))
    except Exception:
        pass
    return int(min((cap * 3) // 4, 100 * 1024 * 1024))


def basic_block_fused(x_nhwc, w1_taps, w2_taps, bn_params, wc=None):
    """One fused pallas_call for the whole BasicBlock; returns (B*H*W, C) f32."""
    B, H, W, Cin = x_nhwc.shape
    C = w1_taps.shape[2]
    proj = wc is not None
    kernel = functools.partial(_basic_block_kernel, B=B, H=H, W=W, proj=proj)

    inputs = [x_nhwc, w1_taps, w2_taps] + ([wc] if proj else []) + [bn_params]
    return pl.pallas_call(
        kernel,
        out_shape=jax.ShapeDtypeStruct((B * H * W, C), jnp.float32),
        grid=(1,),
        in_specs=[_full_spec(a.shape) for a in inputs],
        out_specs=_full_spec((B * H * W, C)),
        scratch_shapes=[
            pltpu.VMEM((B, H + 2, W + 2, Cin), jnp.float32),   # padded x
            pltpu.VMEM((B, H + 2, W + 2, C), jnp.float32),     # padded relu(bn1(conv1))
        ],
        compiler_params=pltpu.CompilerParams(
            dimension_semantics=("arbitrary",),
            vmem_limit_bytes=_vmem_limit_bytes(),
        ),
    )(*inputs)


# ---------------------------------------------------------------------------
# BasicBlock module
# ---------------------------------------------------------------------------
class BasicBlockPallas:
    expansion = 1

    def __init__(self, key, in_planes, planes, stride=1):
        # TODO(synk): stride > 1 conv3x3 path not implemented (demo uses stride=1).
        assert stride == 1, "only stride=1 supported in this synthetic kernel"
        self.planes = planes
        ks = jax.random.split(key, 8)
        s1 = 1.0 / (in_planes * 9) ** 0.5
        s2 = 1.0 / (planes * 9) ** 0.5
        # conv weights in PyTorch OIHW layout, deterministic init.
        self.w1 = jax.random.uniform(ks[0], (planes, in_planes, 3, 3), jnp.float32, -s1, s1)
        self.w2 = jax.random.uniform(ks[1], (planes, planes, 3, 3), jnp.float32, -s2, s2)
        self.g1 = 1.0 + 0.1 * jax.random.normal(ks[2], (planes,), jnp.float32)
        self.b1 = 0.1 * jax.random.normal(ks[3], (planes,), jnp.float32)
        self.g2 = 1.0 + 0.1 * jax.random.normal(ks[4], (planes,), jnp.float32)
        self.b2 = 0.1 * jax.random.normal(ks[5], (planes,), jnp.float32)
        self.has_proj = (stride != 1) or (in_planes != self.expansion * planes)
        if self.has_proj:
            ss = 1.0 / in_planes ** 0.5
            self.ws = jax.random.uniform(ks[6], (planes, in_planes, 1, 1), jnp.float32, -ss, ss)
            self.gs = 1.0 + 0.1 * jax.random.normal(ks[7], (planes,), jnp.float32)
            self.bs = 0.1 * jax.random.normal(jax.random.fold_in(ks[7], 1), (planes,), jnp.float32)

    @staticmethod
    def _w3x3_to_taps(w_oihw):
        # (Cout, Cin, 3, 3) -> (9, Cin, Cout) bf16, tap index = kh*3 + kw.
        cout, cin = w_oihw.shape[0], w_oihw.shape[1]
        return jnp.transpose(w_oihw, (2, 3, 1, 0)).reshape(9, cin, cout).astype(jnp.bfloat16)

    def __call__(self, x_nchw):
        x = jnp.transpose(x_nchw, (0, 2, 3, 1)).astype(jnp.float32)    # NCHW -> NHWC
        B, H, W, _ = x.shape
        w1 = self._w3x3_to_taps(self.w1)
        w2 = self._w3x3_to_taps(self.w2)
        if self.has_proj:
            ws2d = jnp.transpose(self.ws[:, :, 0, 0], (1, 0)).astype(jnp.bfloat16)  # (Cin, C)
            # Fuse the 1x1 projection with conv1's center tap (shared LHS rows,
            # wider-N matmul): wc = [w1_center | ws], shape (Cin, 2*C).
            wc = jnp.concatenate([w1[4], ws2d], axis=1)
            bn = jnp.stack([self.g1, self.b1, self.g2, self.b2, self.gs, self.bs])
            out2d = basic_block_fused(x, w1, w2, bn, wc=wc)
        else:
            bn = jnp.stack([self.g1, self.b1, self.g2, self.b2])
            out2d = basic_block_fused(x, w1, w2, bn)
        out = out2d.reshape(B, H, W, self.planes)
        return jnp.transpose(out, (0, 3, 1, 2))                        # NHWC -> NCHW


# ---------------------------------------------------------------------------
# Pure-JAX reference (mirrors the PyTorch forward) for a correctness check.
# ---------------------------------------------------------------------------
def _ref_conv(x_nhwc, w_oihw):
    w_hwio = jnp.transpose(w_oihw, (2, 3, 1, 0))
    return lax.conv_general_dilated(
        x_nhwc, w_hwio, (1, 1), "SAME",
        dimension_numbers=("NHWC", "HWIO", "NHWC"),
        precision=lax.Precision.HIGHEST)


def _ref_bn(y, gamma, beta):
    mean = y.mean(axis=(0, 1, 2), keepdims=True)
    var = ((y - mean) ** 2).mean(axis=(0, 1, 2), keepdims=True)
    return (y - mean) * lax.rsqrt(var + EPS) * gamma + beta


def _ref_forward(block, x_nchw):
    x = jnp.transpose(x_nchw, (0, 2, 3, 1))
    out = jnp.maximum(_ref_bn(_ref_conv(x, block.w1), block.g1, block.b1), 0.0)
    out = _ref_bn(_ref_conv(out, block.w2), block.g2, block.b2)
    if block.has_proj:
        sc = _ref_bn(_ref_conv(x, block.ws), block.gs, block.bs)
    else:
        sc = x
    out = jnp.maximum(out + sc, 0.0)
    return jnp.transpose(out, (0, 3, 1, 2))


if __name__ == "__main__":
    key = jax.random.PRNGKey(0)
    k_x, k_p, k_p2 = jax.random.split(key, 3)

    B, C_IN, PLANES, H, W = 2, 4, 8, 16, 16
    x = jax.random.normal(k_x, (B, C_IN, H, W), jnp.float32)           # NCHW like PyTorch

    # Projection-shortcut configuration (in_planes != planes).
    block = BasicBlockPallas(k_p, in_planes=C_IN, planes=PLANES, stride=1)
    out = jax.block_until_ready(block(x))
    ref = jax.block_until_ready(_ref_forward(block, x))
    assert out.shape == (B, PLANES, H, W), out.shape
    # Kernel matmuls run with explicit bf16 operands (f32 accumulation) while
    # the reference uses HIGHEST precision; tolerance sized for that budget
    # (real bugs such as wrong tap order / BN show up as O(1) errors).
    err = float(jnp.max(jnp.abs(out - ref)))
    assert jnp.allclose(out, ref, atol=5e-2, rtol=5e-2), err

    # Identity-shortcut configuration (in_planes == planes).
    block2 = BasicBlockPallas(k_p2, in_planes=PLANES, planes=PLANES, stride=1)
    x2 = jax.random.normal(jax.random.fold_in(k_x, 1), (B, PLANES, H, W), jnp.float32)
    out2 = jax.block_until_ready(block2(x2))
    ref2 = jax.block_until_ready(_ref_forward(block2, x2))
    err2 = float(jnp.max(jnp.abs(out2 - ref2)))
    assert jnp.allclose(out2, ref2, atol=5e-2, rtol=5e-2), err2

    # Structured test: delta-function input isolates the 3x3 tap mapping
    # (a wrong tap order / offset misplaces O(1..10) activations spatially,
    # which blows way past this tolerance regardless of MXU precision).
    x_delta = jnp.zeros((B, C_IN, H, W), jnp.float32).at[0, 1, 5, 7].set(1.0)
    out_d = jax.block_until_ready(block(x_delta))
    ref_d = jax.block_until_ready(_ref_forward(block, x_delta))
    err_d = float(jnp.max(jnp.abs(out_d - ref_d)))
    assert jnp.allclose(out_d, ref_d, atol=1e-1, rtol=1e-1), err_d

    print("KERNEL_OK")
</pallas_src>

<mosaic_0001>
module attributes {stable_mosaic.version = 11 : i64} {
  func.func @_basic_block_kernel(%arg0: i32, %arg1: memref<2x16x16x4xf32, #tpu.memory_space<vmem>>, %arg2: memref<9x4x8xbf16, #tpu.memory_space<vmem>>, %arg3: memref<9x8x8xbf16, #tpu.memory_space<vmem>>, %arg4: memref<4x16xbf16, #tpu.memory_space<vmem>>, %arg5: memref<6x8xf32, #tpu.memory_space<vmem>>, %arg6: memref<512x8xf32, #tpu.memory_space<vmem>>, %arg7: memref<2x18x18x4xf32, #tpu.memory_space<vmem>>, %arg8: memref<2x18x18x8xf32, #tpu.memory_space<vmem>>) attributes {dimension_semantics = [#tpu.dimension_semantics<arbitrary>], iteration_bounds = array<i64: 1>, scalar_prefetch = 0 : i64, scratch_operands = 2 : i64, tpu.core_type = #tpu.core_type<tc>, window_params = [{pipeline_mode = #tpu.pipeline_mode<synchronous>, transform_indices = @transform_0, window_bounds = array<i64: 2, 16, 16, 4>}, {pipeline_mode = #tpu.pipeline_mode<synchronous>, transform_indices = @transform_1, window_bounds = array<i64: 9, 4, 8>}, {pipeline_mode = #tpu.pipeline_mode<synchronous>, transform_indices = @transform_2, window_bounds = array<i64: 9, 8, 8>}, {pipeline_mode = #tpu.pipeline_mode<synchronous>, transform_indices = @transform_3, window_bounds = array<i64: 4, 16>}, {pipeline_mode = #tpu.pipeline_mode<synchronous>, transform_indices = @transform_4, window_bounds = array<i64: 6, 8>}, {pipeline_mode = #tpu.pipeline_mode<synchronous>, transform_indices = @transform_5, window_bounds = array<i64: 512, 8>}]} {
    %c0 = arith.constant 0 : index
    %c0_0 = arith.constant 0 : index
    %0 = vector.load %arg5[%c0, %c0_0] : memref<6x8xf32, #tpu.memory_space<vmem>>, vector<1x8xf32>
    %c1 = arith.constant 1 : index
    %c0_1 = arith.constant 0 : index
    %1 = vector.load %arg5[%c1, %c0_1] : memref<6x8xf32, #tpu.memory_space<vmem>>, vector<1x8xf32>
    %c2 = arith.constant 2 : index
    %c0_2 = arith.constant 0 : index
    %2 = vector.load %arg5[%c2, %c0_2] : memref<6x8xf32, #tpu.memory_space<vmem>>, vector<1x8xf32>
    %c3 = arith.constant 3 : index
    %c0_3 = arith.constant 0 : index
    %3 = vector.load %arg5[%c3, %c0_3] : memref<6x8xf32, #tpu.memory_space<vmem>>, vector<1x8xf32>
    %cst = arith.constant 0.000000e+00 : f32
    %4 = vector.broadcast %cst : f32 to vector<2x1x18x4xf32>
    %cst_4 = arith.constant 0.000000e+00 : f32
    %5 = vector.broadcast %cst_4 : f32 to vector<2x16x1x4xf32>
    %c0_5 = arith.constant 0 : index
    %c0_6 = arith.constant 0 : index
    %c0_7 = arith.constant 0 : index
    %c0_8 = arith.constant 0 : index
    %6 = vector.load %arg7[%c0_5, %c0_6, %c0_7, %c0_8] : memref<2x18x18x4xf32, #tpu.memory_space<vmem>>, vector<2x1x18x4xf32>
    tpu.vector_store %arg7[%c0_5, %c0_6, %c0_7, %c0_8], %4 {strides = array<i32>} : memref<2x18x18x4xf32, #tpu.memory_space<vmem>>, vector<2x1x18x4xf32>,
    %c0_9 = arith.constant 0 : index
    %c17 = arith.constant 17 : index
    %c0_10 = arith.constant 0 : index
    %c0_11 = arith.constant 0 : index
    %7 = vector.load %arg7[%c0_9, %c17, %c0_10, %c0_11] : memref<2x18x18x4xf32, #tpu.memory_space<vmem>>, vector<2x1x18x4xf32>
    tpu.vector_store %arg7[%c0_9, %c17, %c0_10, %c0_11], %4 {strides = array<i32>} : memref<2x18x18x4xf32, #tpu.memory_space<vmem>>, vector<2x1x18x4xf32>,
    %c0_12 = arith.constant 0 : index
    %c1_13 = arith.constant 1 : index
    %c0_14 = arith.constant 0 : index
    %c0_15 = arith.constant 0 : index
    %8 = vector.load %arg7[%c0_12, %c1_13, %c0_14, %c0_15] : memref<2x18x18x4xf32, #tpu.memory_space<vmem>>, vector<2x16x1x4xf32>
    tpu.vector_store %arg7[%c0_12, %c1_13, %c0_14, %c0_15], %5 {strides = array<i32>} : memref<2x18x18x4xf32, #tpu.memory_space<vmem>>, vector<2x16x1x4xf32>,
    %c0_16 = arith.constant 0 : index
    %c1_17 = arith.constant 1 : index
    %c17_18 = arith.constant 17 : index
    %c0_19 = arith.constant 0 : index
    %9 = vector.load %arg7[%c0_16, %c1_17, %c17_18, %c0_19] : memref<2x18x18x4xf32, #tpu.memory_space<vmem>>, vector<2x16x1x4xf32>
    tpu.vector_store %arg7[%c0_16, %c1_17, %c17_18, %c0_19], %5 {strides = array<i32>} : memref<2x18x18x4xf32, #tpu.memory_space<vmem>>, vector<2x16x1x4xf32>,
    %c0_20 = arith.constant 0 : index
    %c0_21 = arith.constant 0 : index
    %c0_22 = arith.constant 0 : index
    %c0_23 = arith.constant 0 : index
    %10 = vector.load %arg1[%c0_20, %c0_21, %c0_22, %c0_23] : memref<2x16x16x4xf32, #tpu.memory_space<vmem>>, vector<2x16x16x4xf32>
    %c0_24 = arith.constant 0 : index
    %c1_25 = arith.constant 1 : index
    %c1_26 = arith.constant 1 : index
    %c0_27 = arith.constant 0 : index
    %11 = vector.load %arg7[%c0_24, %c1_25, %c1_26, %c0_27] : memref<2x18x18x4xf32, #tpu.memory_space<vmem>>, vector<2x16x16x4xf32>
    tpu.vector_store %arg7[%c0_24, %c1_25, %c1_26, %c0_27], %10 {strides = array<i32>} : memref<2x18x18x4xf32, #tpu.memory_space<vmem>>, vector<2x16x16x4xf32>,
    %c0_28 = arith.constant 0 : index
    %c0_29 = arith.constant 0 : index
    %12 = vector.load %arg4[%c0_28, %c0_29] : memref<4x16xbf16, #tpu.memory_space<vmem>>, vector<4x16xbf16>
    %cst_30 = arith.constant 0.000000e+00 : f32
    %13 = vector.broadcast %cst_30 : f32 to vector<512x8xf32>
    %c0_31 = arith.constant 0 : index
    %c0_32 = arith.constant 0 : index
    %c0_33 = arith.constant 0 : index
    %c0_34 = arith.constant 0 : index
    %14 = vector.load %arg7[%c0_31, %c0_32, %c0_33, %c0_34] : memref<2x18x18x4xf32, #tpu.memory_space<vmem>>, vector<2x16x16x4xf32>
    %15 = vector.shape_cast %14 : vector<2x16x16x4xf32> to vector<512x4xf32>
    %16 = arith.truncf %15 : vector<512x4xf32> to vector<512x4xbf16>
    %c0_35 = arith.constant 0 : index
    %c0_36 = arith.constant 0 : index
    %c0_37 = arith.constant 0 : index
    %17 = vector.load %arg2[%c0_35, %c0_36, %c0_37] : memref<9x4x8xbf16, #tpu.memory_space<vmem>>, vector<1x4x8xbf16>
    %18 = vector.shape_cast %17 : vector<1x4x8xbf16> to vector<4x8xbf16>
    %cst_38 = arith.constant dense<0.000000e+00> : vector<512x8xf32>
    %19 = tpu.matmul %16, %18, %cst_38 {dimension_numbers = #tpu.dot_dimension_numbers<[1], [0], [0], [1], [0, 0, 1, 1], [], []>} : vector<512x4xbf16>, vector<4x8xbf16>, vector<512x8xf32> -> vector<512x8xf32>
    %20 = arith.addf %13, %19 : vector<512x8xf32>
    %c0_39 = arith.constant 0 : index
    %c0_40 = arith.constant 0 : index
    %c1_41 = arith.constant 1 : index
    %c0_42 = arith.constant 0 : index
    %21 = vector.load %arg7[%c0_39, %c0_40, %c1_41, %c0_42] : memref<2x18x18x4xf32, #tpu.memory_space<vmem>>, vector<2x16x16x4xf32>
    %22 = vector.shape_cast %21 : vector<2x16x16x4xf32> to vector<512x4xf32>
    %23 = arith.truncf %22 : vector<512x4xf32> to vector<512x4xbf16>
    %c1_43 = arith.constant 1 : index
    %c0_44 = arith.constant 0 : index
    %c0_45 = arith.constant 0 : index
    %24 = vector.load %arg2[%c1_43, %c0_44, %c0_45] : memref<9x4x8xbf16, #tpu.memory_space<vmem>>, vector<1x4x8xbf16>
    %25 = vector.shape_cast %24 : vector<1x4x8xbf16> to vector<4x8xbf16>
    %cst_46 = arith.constant dense<0.000000e+00> : vector<512x8xf32>
    %26 = tpu.matmul %23, %25, %cst_46 {dimension_numbers = #tpu.dot_dimension_numbers<[1], [0], [0], [1], [0, 0, 1, 1], [], []>} : vector<512x4xbf16>, vector<4x8xbf16>, vector<512x8xf32> -> vector<512x8xf32>
    %27 = arith.addf %20, %26 : vector<512x8xf32>
    %c0_47 = arith.constant 0 : index
    %c0_48 = arith.constant 0 : index
    %c2_49 = arith.constant 2 : index
    %c0_50 = arith.constant 0 : index
    %28 = vector.load %arg7[%c0_47, %c0_48, %c2_49, %c0_50] : memref<2x18x18x4xf32, #tpu.memory_space<vmem>>, vector<2x16x16x4xf32>
    %29 = vector.shape_cast %28 : vector<2x16x16x4xf32> to vector<512x4xf32>
    %30 = arith.truncf %29 : vector<512x4xf32> to vector<512x4xbf16>
    %c2_51 = arith.constant 2 : index
    %c0_52 = arith.constant 0 : index
    %c0_53 = arith.constant 0 : index
    %31 = vector.load %arg2[%c2_51, %c0_52, %c0_53] : memref<9x4x8xbf16, #tpu.memory_space<vmem>>, vector<1x4x8xbf16>
    %32 = vector.shape_cast %31 : vector<1x4x8xbf16> to vector<4x8xbf16>
    %cst_54 = arith.constant dense<0.000000e+00> : vector<512x8xf32>
    %33 = tpu.matmul %30, %32, %cst_54 {dimension_numbers = #tpu.dot_dimension_numbers<[1], [0], [0], [1], [0, 0, 1, 1], [], []>} : vector<512x4xbf16>, vector<4x8xbf16>, vector<512x8xf32> -> vector<512x8xf32>
    %34 = arith.addf %27, %33 : vector<512x8xf32>
    %c0_55 = arith.constant 0 : index
    %c1_56 = arith.constant 1 : index
    %c0_57 = arith.constant 0 : index
    %c0_58 = arith.constant 0 : index
    %35 = vector.load %arg7[%c0_55, %c1_56, %c0_57, %c0_58] : memref<2x18x18x4xf32, #tpu.memory_space<vmem>>, vector<2x16x16x4xf32>
    %36 = vector.shape_cast %35 : vector<2x16x16x4xf32> to vector<512x4xf32>
    %37 = arith.truncf %36 : vector<512x4xf32> to vector<512x4xbf16>
    %c3_59 = arith.constant 3 : index
    %c0_60 = arith.constant 0 : index
    %c0_61 = arith.constant 0 : index
    %38 = vector.load %arg2[%c3_59, %c0_60, %c0_61] : memref<9x4x8xbf16, #tpu.memory_space<vmem>>, vector<1x4x8xbf16>
    %39 = vector.shape_cast %38 : vector<1x4x8xbf16> to vector<4x8xbf16>
    %cst_62 = arith.constant dense<0.000000e+00> : vector<512x8xf32>
    %40 = tpu.matmul %37, %39, %cst_62 {dimension_numbers = #tpu.dot_dimension_numbers<[1], [0], [0], [1], [0, 0, 1, 1], [], []>} : vector<512x4xbf16>, vector<4x8xbf16>, vector<512x8xf32> -> vector<512x8xf32>
    %41 = arith.addf %34, %40 : vector<512x8xf32>
    %c0_63 = arith.constant 0 : index
    %c1_64 = arith.constant 1 : index
    %c1_65 = arith.constant 1 : index
    %c0_66 = arith.constant 0 : index
    %42 = vector.load %arg7[%c0_63, %c1_64, %c1_65, %c0_66] : memref<2x18x18x4xf32, #tpu.memory_space<vmem>>, vector<2x16x16x4xf32>
    %43 = vector.shape_cast %42 : vector<2x16x16x4xf32> to vector<512x4xf32>
    %44 = arith.truncf %43 : vector<512x4xf32> to vector<512x4xbf16>
    %cst_67 = arith.constant dense<0.000000e+00> : vector<512x16xf32>
    %45 = tpu.matmul %44, %12, %cst_67 {dimension_numbers = #tpu.dot_dimension_numbers<[1], [0], [0], [1], [0, 0, 1, 1], [], []>} : vector<512x4xbf16>, vector<4x16xbf16>, vector<512x16xf32> -> vector<512x16xf32>
    %46 = vector.extract_strided_slice %45 {offsets = [0, 0], sizes = [512, 8], strides = [1, 1]} : vector<512x16xf32> to vector<512x8xf32>
    %47 = arith.addf %41, %46 : vector<512x8xf32>
    %48 = vector.extract_strided_slice %45 {offsets = [0, 8], sizes = [512, 8], strides = [1, 1]} : vector<512x16xf32> to vector<512x8xf32>
    %c0_68 = arith.constant 0 : index
    %c1_69 = arith.constant 1 : index
    %c2_70 = arith.constant 2 : index
    %c0_71 = arith.constant 0 : index
    %49 = vector.load %arg7[%c0_68, %c1_69, %c2_70, %c0_71] : memref<2x18x18x4xf32, #tpu.memory_space<vmem>>, vector<2x16x16x4xf32>
    %50 = vector.shape_cast %49 : vector<2x16x16x4xf32> to vector<512x4xf32>
    %51 = arith.truncf %50 : vector<512x4xf32> to vector<512x4xbf16>
    %c5 = arith.constant 5 : index
    %c0_72 = arith.constant 0 : index
    %c0_73 = arith.constant 0 : index
    %52 = vector.load %arg2[%c5, %c0_72, %c0_73] : memref<9x4x8xbf16, #tpu.memory_space<vmem>>, vector<1x4x8xbf16>
    %53 = vector.shape_cast %52 : vector<1x4x8xbf16> to vector<4x8xbf16>
    %cst_74 = arith.constant dense<0.000000e+00> : vector<512x8xf32>
    %54 = tpu.matmul %51, %53, %cst_74 {dimension_numbers = #tpu.dot_dimension_numbers<[1], [0], [0], [1], [0, 0, 1, 1], [], []>} : vector<512x4xbf16>, vector<4x8xbf16>, vector<512x8xf32> -> vector<512x8xf32>
    %55 = arith.addf %47, %54 : vector<512x8xf32>
    %c0_75 = arith.constant 0 : index
    %c2_76 = arith.constant 2 : index
    %c0_77 = arith.constant 0 : index
    %c0_78 = arith.constant 0 : index
    %56 = vector.load %arg7[%c0_75, %c2_76, %c0_77, %c0_78] : memref<2x18x18x4xf32, #tpu.memory_space<vmem>>, vector<2x16x16x4xf32>
    %57 = vector.shape_cast %56 : vector<2x16x16x4xf32> to vector<512x4xf32>
    %58 = arith.truncf %57 : vector<512x4xf32> to vector<512x4xbf16>
    %c6 = arith.constant 6 : index
    %c0_79 = arith.constant 0 : index
    %c0_80 = arith.constant 0 : index
    %59 = vector.load %arg2[%c6, %c0_79, %c0_80] : memref<9x4x8xbf16, #tpu.memory_space<vmem>>, vector<1x4x8xbf16>
    %60 = vector.shape_cast %59 : vector<1x4x8xbf16> to vector<4x8xbf16>
    %cst_81 = arith.constant dense<0.000000e+00> : vector<512x8xf32>
    %61 = tpu.matmul %58, %60, %cst_81 {dimension_numbers = #tpu.dot_dimension_numbers<[1], [0], [0], [1], [0, 0, 1, 1], [], []>} : vector<512x4xbf16>, vector<4x8xbf16>, vector<512x8xf32> -> vector<512x8xf32>
    %62 = arith.addf %55, %61 : vector<512x8xf32>
    %c0_82 = arith.constant 0 : index
    %c2_83 = arith.constant 2 : index
    %c1_84 = arith.constant 1 : index
    %c0_85 = arith.constant 0 : index
    %63 = vector.load %arg7[%c0_82, %c2_83, %c1_84, %c0_85] : memref<2x18x18x4xf32, #tpu.memory_space<vmem>>, vector<2x16x16x4xf32>
    %64 = vector.shape_cast %63 : vector<2x16x16x4xf32> to vector<512x4xf32>
    %65 = arith.truncf %64 : vector<512x4xf32> to vector<512x4xbf16>
    %c7 = arith.constant 7 : index
    %c0_86 = arith.constant 0 : index
    %c0_87 = arith.constant 0 : index
    %66 = vector.load %arg2[%c7, %c0_86, %c0_87] : memref<9x4x8xbf16, #tpu.memory_space<vmem>>, vector<1x4x8xbf16>
    %67 = vector.shape_cast %66 : vector<1x4x8xbf16> to vector<4x8xbf16>
    %cst_88 = arith.constant dense<0.000000e+00> : vector<512x8xf32>
    %68 = tpu.matmul %65, %67, %cst_88 {dimension_numbers = #tpu.dot_dimension_numbers<[1], [0], [0], [1], [0, 0, 1, 1], [], []>} : vector<512x4xbf16>, vector<4x8xbf16>, vector<512x8xf32> -> vector<512x8xf32>
    %69 = arith.addf %62, %68 : vector<512x8xf32>
    %c0_89 = arith.constant 0 : index
    %c2_90 = arith.constant 2 : index
    %c2_91 = arith.constant 2 : index
    %c0_92 = arith.constant 0 : index
    %70 = vector.load %arg7[%c0_89, %c2_90, %c2_91, %c0_92] : memref<2x18x18x4xf32, #tpu.memory_space<vmem>>, vector<2x16x16x4xf32>
    %71 = vector.shape_cast %70 : vector<2x16x16x4xf32> to vector<512x4xf32>
    %72 = arith.truncf %71 : vector<512x4xf32> to vector<512x4xbf16>
    %c8 = arith.constant 8 : index
    %c0_93 = arith.constant 0 : index
    %c0_94 = arith.constant 0 : index
    %73 = vector.load %arg2[%c8, %c0_93, %c0_94] : memref<9x4x8xbf16, #tpu.memory_space<vmem>>, vector<1x4x8xbf16>
    %74 = vector.shape_cast %73 : vector<1x4x8xbf16> to vector<4x8xbf16>
    %cst_95 = arith.constant dense<0.000000e+00> : vector<512x8xf32>
    %75 = tpu.matmul %72, %74, %cst_95 {dimension_numbers = #tpu.dot_dimension_numbers<[1], [0], [0], [1], [0, 0, 1, 1], [], []>} : vector<512x4xbf16>, vector<4x8xbf16>, vector<512x8xf32> -> vector<512x8xf32>
    %76 = arith.addf %69, %75 : vector<512x8xf32>
    %cst_96 = arith.constant dense<0.000000e+00> : vector<8xf32>
    %77 = vector.multi_reduction <add>, %76, %cst_96 [0] : vector<512x8xf32> to vector<8xf32>
    %78 = vector.shape_cast %77 : vector<8xf32> to vector<1x8xf32>
    %cst_97 = arith.constant 0.001953125 : f32
    %79 = vector.broadcast %cst_97 : f32 to vector<1x8xf32>
    %80 = arith.mulf %78, %79 : vector<1x8xf32>
    %81 = vector.broadcast %80 : vector<1x8xf32> to vector<512x8xf32>
    %82 = arith.subf %76, %81 : vector<512x8xf32>
    %83 = arith.mulf %82, %82 : vector<512x8xf32>
    %cst_98 = arith.constant dense<0.000000e+00> : vector<8xf32>
    %84 = vector.multi_reduction <add>, %83, %cst_98 [0] : vector<512x8xf32> to vector<8xf32>
    %85 = vector.shape_cast %84 : vector<8xf32> to vector<1x8xf32>
    %cst_99 = arith.constant 0.001953125 : f32
    %86 = vector.broadcast %cst_99 : f32 to vector<1x8xf32>
    %87 = arith.mulf %85, %86 : vector<1x8xf32>
    %cst_100 = arith.constant 9.99999974E-6 : f32
    %88 = vector.broadcast %cst_100 : f32 to vector<1x8xf32>
    %89 = arith.addf %87, %88 : vector<1x8xf32>
    %90 = math.rsqrt %89 : vector<1x8xf32>
    %91 = arith.mulf %0, %90 : vector<1x8xf32>
    %92 = arith.mulf %80, %91 : vector<1x8xf32>
    %93 = arith.subf %1, %92 : vector<1x8xf32>
    %94 = vector.broadcast %91 : vector<1x8xf32> to vector<512x8xf32>
    %95 = arith.mulf %76, %94 : vector<512x8xf32>
    %96 = vector.broadcast %93 : vector<1x8xf32> to vector<512x8xf32>
    %97 = arith.addf %95, %96 : vector<512x8xf32>
    %cst_101 = arith.constant 0.000000e+00 : f32
    %98 = vector.broadcast %cst_101 : f32 to vector<512x8xf32>
    %99 = arith.maximumf %97, %98 : vector<512x8xf32>
    %cst_102 = arith.constant 0.000000e+00 : f32
    %100 = vector.broadcast %cst_102 : f32 to vector<2x1x18x8xf32>
    %cst_103 = arith.constant 0.000000e+00 : f32
    %101 = vector.broadcast %cst_103 : f32 to vector<2x16x1x8xf32>
    %c0_104 = arith.constant 0 : index
    %c0_105 = arith.constant 0 : index
    %c0_106 = arith.constant 0 : index
    %c0_107 = arith.constant 0 : index
    %102 = vector.load %arg8[%c0_104, %c0_105, %c0_106, %c0_107] : memref<2x18x18x8xf32, #tpu.memory_space<vmem>>, vector<2x1x18x8xf32>
    tpu.vector_store %arg8[%c0_104, %c0_105, %c0_106, %c0_107], %100 {strides = array<i32>} : memref<2x18x18x8xf32, #tpu.memory_space<vmem>>, vector<2x1x18x8xf32>,
    %c0_108 = arith.constant 0 : index
    %c17_109 = arith.constant 17 : index
    %c0_110 = arith.constant 0 : index
    %c0_111 = arith.constant 0 : index
    %103 = vector.load %arg8[%c0_108, %c17_109, %c0_110, %c0_111] : memref<2x18x18x8xf32, #tpu.memory_space<vmem>>, vector<2x1x18x8xf32>
    tpu.vector_store %arg8[%c0_108, %c17_109, %c0_110, %c0_111], %100 {strides = array<i32>} : memref<2x18x18x8xf32, #tpu.memory_space<vmem>>, vector<2x1x18x8xf32>,
    %c0_112 = arith.constant 0 : index
    %c1_113 = arith.constant 1 : index
    %c0_114 = arith.constant 0 : index
    %c0_115 = arith.constant 0 : index
    %104 = vector.load %arg8[%c0_112, %c1_113, %c0_114, %c0_115] : memref<2x18x18x8xf32, #tpu.memory_space<vmem>>, vector<2x16x1x8xf32>
    tpu.vector_store %arg8[%c0_112, %c1_113, %c0_114, %c0_115], %101 {strides = array<i32>} : memref<2x18x18x8xf32, #tpu.memory_space<vmem>>, vector<2x16x1x8xf32>,
    %c0_116 = arith.constant 0 : index
    %c1_117 = arith.constant 1 : index
    %c17_118 = arith.constant 17 : index
    %c0_119 = arith.constant 0 : index
    %105 = vector.load %arg8[%c0_116, %c1_117, %c17_118, %c0_119] : memref<2x18x18x8xf32, #tpu.memory_space<vmem>>, vector<2x16x1x8xf32>
    tpu.vector_store %arg8[%c0_116, %c1_117, %c17_118, %c0_119], %101 {strides = array<i32>} : memref<2x18x18x8xf32, #tpu.memory_space<vmem>>, vector<2x16x1x8xf32>,
    %106 = vector.shape_cast %99 : vector<512x8xf32> to vector<2x16x16x8xf32>
    %c0_120 = arith.constant 0 : index
    %c1_121 = arith.constant 1 : index
    %c1_122 = arith.constant 1 : index
    %c0_123 = arith.constant 0 : index
    %107 = vector.load %arg8[%c0_120, %c1_121, %c1_122, %c0_123] : memref<2x18x18x8xf32, #tpu.memory_space<vmem>>, vector<2x16x16x8xf32>
    tpu.vector_store %arg8[%c0_120, %c1_121, %c1_122, %c0_123], %106 {strides = array<i32>} : memref<2x18x18x8xf32, #tpu.memory_space<vmem>>, vector<2x16x16x8xf32>,
    %cst_124 = arith.constant 0.000000e+00 : f32
    %108 = vector.broadcast %cst_124 : f32 to vector<512x8xf32>
    %c0_125 = arith.constant 0 : index
    %c0_126 = arith.constant 0 : index
    %c0_127 = arith.constant 0 : index
    %c0_128 = arith.constant 0 : index
    %109 = vector.load %arg8[%c0_125, %c0_126, %c0_127, %c0_128] : memref<2x18x18x8xf32, #tpu.memory_space<vmem>>, vector<2x16x16x8xf32>
    %110 = vector.shape_cast %109 : vector<2x16x16x8xf32> to vector<512x8xf32>
    %111 = arith.truncf %110 : vector<512x8xf32> to vector<512x8xbf16>
    %c0_129 = arith.constant 0 : index
    %c0_130 = arith.constant 0 : index
    %c0_131 = arith.constant 0 : index
    %112 = vector.load %arg3[%c0_129, %c0_130, %c0_131] : memref<9x8x8xbf16, #tpu.memory_space<vmem>>, vector<1x8x8xbf16>
    %113 = vector.shape_cast %112 : vector<1x8x8xbf16> to vector<8x8xbf16>
    %cst_132 = arith.constant dense<0.000000e+00> : vector<512x8xf32>
    %114 = tpu.matmul %111, %113, %cst_132 {dimension_numbers = #tpu.dot_dimension_numbers<[1], [0], [0], [1], [0, 0, 1, 1], [], []>} : vector<512x8xbf16>, vector<8x8xbf16>, vector<512x8xf32> -> vector<512x8xf32>
    %115 = arith.addf %108, %114 : vector<512x8xf32>
    %c0_133 = arith.constant 0 : index
    %c0_134 = arith.constant 0 : index
    %c1_135 = arith.constant 1 : index
    %c0_136 = arith.constant 0 : index
    %116 = vector.load %arg8[%c0_133, %c0_134, %c1_135, %c0_136] : memref<2x18x18x8xf32, #tpu.memory_space<vmem>>, vector<2x16x16x8xf32>
    %117 = vector.shape_cast %116 : vector<2x16x16x8xf32> to vector<512x8xf32>
    %118 = arith.truncf %117 : vector<512x8xf32> to vector<512x8xbf16>
    %c1_137 = arith.constant 1 : index
    %c0_138 = arith.constant 0 : index
    %c0_139 = arith.constant 0 : index
    %119 = vector.load %arg3[%c1_137, %c0_138, %c0_139] : memref<9x8x8xbf16, #tpu.memory_space<vmem>>, vector<1x8x8xbf16>
    %120 = vector.shape_cast %119 : vector<1x8x8xbf16> to vector<8x8xbf16>
    %cst_140 = arith.constant dense<0.000000e+00> : vector<512x8xf32>
    %121 = tpu.matmul %118, %120, %cst_140 {dimension_numbers = #tpu.dot_dimension_numbers<[1], [0], [0], [1], [0, 0, 1, 1], [], []>} : vector<512x8xbf16>, vector<8x8xbf16>, vector<512x8xf32> -> vector<512x8xf32>
    %122 = arith.addf %115, %121 : vector<512x8xf32>
    %c0_141 = arith.constant 0 : index
    %c0_142 = arith.constant 0 : index
    %c2_143 = arith.constant 2 : index
    %c0_144 = arith.constant 0 : index
    %123 = vector.load %arg8[%c0_141, %c0_142, %c2_143, %c0_144] : memref<2x18x18x8xf32, #tpu.memory_space<vmem>>, vector<2x16x16x8xf32>
    %124 = vector.shape_cast %123 : vector<2x16x16x8xf32> to vector<512x8xf32>
    %125 = arith.truncf %124 : vector<512x8xf32> to vector<512x8xbf16>
    %c2_145 = arith.constant 2 : index
    %c0_146 = arith.constant 0 : index
    %c0_147 = arith.constant 0 : index
    %126 = vector.load %arg3[%c2_145, %c0_146, %c0_147] : memref<9x8x8xbf16, #tpu.memory_space<vmem>>, vector<1x8x8xbf16>
    %127 = vector.shape_cast %126 : vector<1x8x8xbf16> to vector<8x8xbf16>
    %cst_148 = arith.constant dense<0.000000e+00> : vector<512x8xf32>
    %128 = tpu.matmul %125, %127, %cst_148 {dimension_numbers = #tpu.dot_dimension_numbers<[1], [0], [0], [1], [0, 0, 1, 1], [], []>} : vector<512x8xbf16>, vector<8x8xbf16>, vector<512x8xf32> -> vector<512x8xf32>
    %129 = arith.addf %122, %128 : vector<512x8xf32>
    %c0_149 = arith.constant 0 : index
    %c1_150 = arith.constant 1 : index
    %c0_151 = arith.constant 0 : index
    %c0_152 = arith.constant 0 : index
    %130 = vector.load %arg8[%c0_149, %c1_150, %c0_151, %c0_152] : memref<2x18x18x8xf32, #tpu.memory_space<vmem>>, vector<2x16x16x8xf32>
    %131 = vector.shape_cast %130 : vector<2x16x16x8xf32> to vector<512x8xf32>
    %132 = arith.truncf %131 : vector<512x8xf32> to vector<512x8xbf16>
    %c3_153 = arith.constant 3 : index
    %c0_154 = arith.constant 0 : index
    %c0_155 = arith.constant 0 : index
    %133 = vector.load %arg3[%c3_153, %c0_154, %c0_155] : memref<9x8x8xbf16, #tpu.memory_space<vmem>>, vector<1x8x8xbf16>
    %134 = vector.shape_cast %133 : vector<1x8x8xbf16> to vector<8x8xbf16>
    %cst_156 = arith.constant dense<0.000000e+00> : vector<512x8xf32>
    %135 = tpu.matmul %132, %134, %cst_156 {dimension_numbers = #tpu.dot_dimension_numbers<[1], [0], [0], [1], [0, 0, 1, 1], [], []>} : vector<512x8xbf16>, vector<8x8xbf16>, vector<512x8xf32> -> vector<512x8xf32>
    %136 = arith.addf %129, %135 : vector<512x8xf32>
    %c0_157 = arith.constant 0 : index
    %c1_158 = arith.constant 1 : index
    %c1_159 = arith.constant 1 : index
    %c0_160 = arith.constant 0 : index
    %137 = vector.load %arg8[%c0_157, %c1_158, %c1_159, %c0_160] : memref<2x18x18x8xf32, #tpu.memory_space<vmem>>, vector<2x16x16x8xf32>
    %138 = vector.shape_cast %137 : vector<2x16x16x8xf32> to vector<512x8xf32>
    %139 = arith.truncf %138 : vector<512x8xf32> to vector<512x8xbf16>
    %c4 = arith.constant 4 : index
    %c0_161 = arith.constant 0 : index
    %c0_162 = arith.constant 0 : index
    %140 = vector.load %arg3[%c4, %c0_161, %c0_162] : memref<9x8x8xbf16, #tpu.memory_space<vmem>>, vector<1x8x8xbf16>
    %141 = vector.shape_cast %140 : vector<1x8x8xbf16> to vector<8x8xbf16>
    %cst_163 = arith.constant dense<0.000000e+00> : vector<512x8xf32>
    %142 = tpu.matmul %139, %141, %cst_163 {dimension_numbers = #tpu.dot_dimension_numbers<[1], [0], [0], [1], [0, 0, 1, 1], [], []>} : vector<512x8xbf16>, vector<8x8xbf16>, vector<512x8xf32> -> vector<512x8xf32>
    %143 = arith.addf %136, %142 : vector<512x8xf32>
    %c0_164 = arith.constant 0 : index
    %c1_165 = arith.constant 1 : index
    %c2_166 = arith.constant 2 : index
    %c0_167 = arith.constant 0 : index
    %144 = vector.load %arg8[%c0_164, %c1_165, %c2_166, %c0_167] : memref<2x18x18x8xf32, #tpu.memory_space<vmem>>, vector<2x16x16x8xf32>
    %145 = vector.shape_cast %144 : vector<2x16x16x8xf32> to vector<512x8xf32>
    %146 = arith.truncf %145 : vector<512x8xf32> to vector<512x8xbf16>
    %c5_168 = arith.constant 5 : index
    %c0_169 = arith.constant 0 : index
    %c0_170 = arith.constant 0 : index
    %147 = vector.load %arg3[%c5_168, %c0_169, %c0_170] : memref<9x8x8xbf16, #tpu.memory_space<vmem>>, vector<1x8x8xbf16>
    %148 = vector.shape_cast %147 : vector<1x8x8xbf16> to vector<8x8xbf16>
    %cst_171 = arith.constant dense<0.000000e+00> : vector<512x8xf32>
    %149 = tpu.matmul %146, %148, %cst_171 {dimension_numbers = #tpu.dot_dimension_numbers<[1], [0], [0], [1], [0, 0, 1, 1], [], []>} : vector<512x8xbf16>, vector<8x8xbf16>, vector<512x8xf32> -> vector<512x8xf32>
    %150 = arith.addf %143, %149 : vector<512x8xf32>
    %c0_172 = arith.constant 0 : index
    %c2_173 = arith.constant 2 : index
    %c0_174 = arith.constant 0 : index
    %c0_175 = arith.constant 0 : index
    %151 = vector.load %arg8[%c0_172, %c2_173, %c0_174, %c0_175] : memref<2x18x18x8xf32, #tpu.memory_space<vmem>>, vector<2x16x16x8xf32>
    %152 = vector.shape_cast %151 : vector<2x16x16x8xf32> to vector<512x8xf32>
    %153 = arith.truncf %152 : vector<512x8xf32> to vector<512x8xbf16>
    %c6_176 = arith.constant 6 : index
    %c0_177 = arith.constant 0 : index
    %c0_178 = arith.constant 0 : index
    %154 = vector.load %arg3[%c6_176, %c0_177, %c0_178] : memref<9x8x8xbf16, #tpu.memory_space<vmem>>, vector<1x8x8xbf16>
    %155 = vector.shape_cast %154 : vector<1x8x8xbf16> to vector<8x8xbf16>
    %cst_179 = arith.constant dense<0.000000e+00> : vector<512x8xf32>
    %156 = tpu.matmul %153, %155, %cst_179 {dimension_numbers = #tpu.dot_dimension_numbers<[1], [0], [0], [1], [0, 0, 1, 1], [], []>} : vector<512x8xbf16>, vector<8x8xbf16>, vector<512x8xf32> -> vector<512x8xf32>
    %157 = arith.addf %150, %156 : vector<512x8xf32>
    %c0_180 = arith.constant 0 : index
    %c2_181 = arith.constant 2 : index
    %c1_182 = arith.constant 1 : index
    %c0_183 = arith.constant 0 : index
    %158 = vector.load %arg8[%c0_180, %c2_181, %c1_182, %c0_183] : memref<2x18x18x8xf32, #tpu.memory_space<vmem>>, vector<2x16x16x8xf32>
    %159 = vector.shape_cast %158 : vector<2x16x16x8xf32> to vector<512x8xf32>
    %160 = arith.truncf %159 : vector<512x8xf32> to vector<512x8xbf16>
    %c7_184 = arith.constant 7 : index
    %c0_185 = arith.constant 0 : index
    %c0_186 = arith.constant 0 : index
    %161 = vector.load %arg3[%c7_184, %c0_185, %c0_186] : memref<9x8x8xbf16, #tpu.memory_space<vmem>>, vector<1x8x8xbf16>
    %162 = vector.shape_cast %161 : vector<1x8x8xbf16> to vector<8x8xbf16>
    %cst_187 = arith.constant dense<0.000000e+00> : vector<512x8xf32>
    %163 = tpu.matmul %160, %162, %cst_187 {dimension_numbers = #tpu.dot_dimension_numbers<[1], [0], [0], [1], [0, 0, 1, 1], [], []>} : vector<512x8xbf16>, vector<8x8xbf16>, vector<512x8xf32> -> vector<512x8xf32>
    %164 = arith.addf %157, %163 : vector<512x8xf32>
    %c0_188 = arith.constant 0 : index
    %c2_189 = arith.constant 2 : index
    %c2_190 = arith.constant 2 : index
    %c0_191 = arith.constant 0 : index
    %165 = vector.load %arg8[%c0_188, %c2_189, %c2_190, %c0_191] : memref<2x18x18x8xf32, #tpu.memory_space<vmem>>, vector<2x16x16x8xf32>
    %166 = vector.shape_cast %165 : vector<2x16x16x8xf32> to vector<512x8xf32>
    %167 = arith.truncf %166 : vector<512x8xf32> to vector<512x8xbf16>
    %c8_192 = arith.constant 8 : index
    %c0_193 = arith.constant 0 : index
    %c0_194 = arith.constant 0 : index
    %168 = vector.load %arg3[%c8_192, %c0_193, %c0_194] : memref<9x8x8xbf16, #tpu.memory_space<vmem>>, vector<1x8x8xbf16>
    %169 = vector.shape_cast %168 : vector<1x8x8xbf16> to vector<8x8xbf16>
    %cst_195 = arith.constant dense<0.000000e+00> : vector<512x8xf32>
    %170 = tpu.matmul %167, %169, %cst_195 {dimension_numbers = #tpu.dot_dimension_numbers<[1], [0], [0], [1], [0, 0, 1, 1], [], []>} : vector<512x8xbf16>, vector<8x8xbf16>, vector<512x8xf32> -> vector<512x8xf32>
    %171 = arith.addf %164, %170 : vector<512x8xf32>
    %cst_196 = arith.constant dense<0.000000e+00> : vector<8xf32>
    %172 = vector.multi_reduction <add>, %171, %cst_196 [0] : vector<512x8xf32> to vector<8xf32>
    %173 = vector.shape_cast %172 : vector<8xf32> to vector<1x8xf32>
    %cst_197 = arith.constant 0.001953125 : f32
    %174 = vector.broadcast %cst_197 : f32 to vector<1x8xf32>
    %175 = arith.mulf %173, %174 : vector<1x8xf32>
    %176 = vector.broadcast %175 : vector<1x8xf32> to vector<512x8xf32>
    %177 = arith.subf %171, %176 : vector<512x8xf32>
    %178 = arith.mulf %177, %177 : vector<512x8xf32>
    %cst_198 = arith.constant dense<0.000000e+00> : vector<8xf32>
    %179 = vector.multi_reduction <add>, %178, %cst_198 [0] : vector<512x8xf32> to vector<8xf32>
    %180 = vector.shape_cast %179 : vector<8xf32> to vector<1x8xf32>
    %cst_199 = arith.constant 0.001953125 : f32
    %181 = vector.broadcast %cst_199 : f32 to vector<1x8xf32>
    %182 = arith.mulf %180, %181 : vector<1x8xf32>
    %cst_200 = arith.constant 9.99999974E-6 : f32
    %183 = vector.broadcast %cst_200 : f32 to vector<1x8xf32>
    %184 = arith.addf %182, %183 : vector<1x8xf32>
    %185 = math.rsqrt %184 : vector<1x8xf32>
    %186 = arith.mulf %2, %185 : vector<1x8xf32>
    %187 = arith.mulf %175, %186 : vector<1x8xf32>
    %188 = arith.subf %3, %187 : vector<1x8xf32>
    %189 = vector.broadcast %186 : vector<1x8xf32> to vector<512x8xf32>
    %190 = arith.mulf %171, %189 : vector<512x8xf32>
    %191 = vector.broadcast %188 : vector<1x8xf32> to vector<512x8xf32>
    %192 = arith.addf %190, %191 : vector<512x8xf32>
    %c4_201 = arith.constant 4 : index
    %c0_202 = arith.constant 0 : index
    %193 = vector.load %arg5[%c4_201, %c0_202] : memref<6x8xf32, #tpu.memory_space<vmem>>, vector<1x8xf32>
    %c5_203 = arith.constant 5 : index
    %c0_204 = arith.constant 0 : index
    %194 = vector.load %arg5[%c5_203, %c0_204] : memref<6x8xf32, #tpu.memory_space<vmem>>, vector<1x8xf32>
    %cst_205 = arith.constant dense<0.000000e+00> : vector<8xf32>
    %195 = vector.multi_reduction <add>, %48, %cst_205 [0] : vector<512x8xf32> to vector<8xf32>
    %196 = vector.shape_cast %195 : vector<8xf32> to vector<1x8xf32>
    %cst_206 = arith.constant 0.001953125 : f32
    %197 = vector.broadcast %cst_206 : f32 to vector<1x8xf32>
    %198 = arith.mulf %196, %197 : vector<1x8xf32>
    %199 = vector.broadcast %198 : vector<1x8xf32> to vector<512x8xf32>
    %200 = arith.subf %48, %199 : vector<512x8xf32>
    %201 = arith.mulf %200, %200 : vector<512x8xf32>
    %cst_207 = arith.constant dense<0.000000e+00> : vector<8xf32>
    %202 = vector.multi_reduction <add>, %201, %cst_207 [0] : vector<512x8xf32> to vector<8xf32>
    %203 = vector.shape_cast %202 : vector<8xf32> to vector<1x8xf32>
    %cst_208 = arith.constant 0.001953125 : f32
    %204 = vector.broadcast %cst_208 : f32 to vector<1x8xf32>
    %205 = arith.mulf %203, %204 : vector<1x8xf32>
    %cst_209 = arith.constant 9.99999974E-6 : f32
    %206 = vector.broadcast %cst_209 : f32 to vector<1x8xf32>
    %207 = arith.addf %205, %206 : vector<1x8xf32>
    %208 = math.rsqrt %207 : vector<1x8xf32>
    %209 = arith.mulf %193, %208 : vector<1x8xf32>
    %210 = arith.mulf %198, %209 : vector<1x8xf32>
    %211 = arith.subf %194, %210 : vector<1x8xf32>
    %212 = vector.broadcast %209 : vector<1x8xf32> to vector<512x8xf32>
    %213 = arith.mulf %48, %212 : vector<512x8xf32>
    %214 = vector.broadcast %211 : vector<1x8xf32> to vector<512x8xf32>
    %215 = arith.addf %213, %214 : vector<512x8xf32>
    %216 = arith.addf %192, %215 : vector<512x8xf32>
    %cst_210 = arith.constant 0.000000e+00 : f32
    %217 = vector.broadcast %cst_210 : f32 to vector<512x8xf32>
    %218 = arith.maximumf %216, %217 : vector<512x8xf32>
    %c0_211 = arith.constant 0 : index
    %c0_212 = arith.constant 0 : index
    %219 = vector.load %arg6[%c0_211, %c0_212] : memref<512x8xf32, #tpu.memory_space<vmem>>, vector<512x8xf32>
    tpu.vector_store %arg6[%c0_211, %c0_212], %218 {strides = array<i32>} : memref<512x8xf32, #tpu.memory_space<vmem>>, vector<512x8xf32>,
    return
  }
  func.func @transform_0(%arg0: i32) -> (i32, i32, i32, i32) {
    %c0_i32 = arith.constant 0 : i32
    %c0_i32_0 = arith.constant 0 : i32
    %c0_i32_1 = arith.constant 0 : i32
    %c0_i32_2 = arith.constant 0 : i32
    %c0_i32_3 = arith.constant 0 : i32
    return %c0_i32, %c0_i32_0, %c0_i32_1, %c0_i32_2 : i32, i32, i32, i32
  }
  func.func @transform_1(%arg0: i32) -> (i32, i32, i32) {
    %c0_i32 = arith.constant 0 : i32
    %c0_i32_0 = arith.constant 0 : i32
    %c0_i32_1 = arith.constant 0 : i32
    %c0_i32_2 = arith.constant 0 : i32
    return %c0_i32, %c0_i32_0, %c0_i32_1 : i32, i32, i32
  }
  func.func @transform_2(%arg0: i32) -> (i32, i32, i32) {
    %c0_i32 = arith.constant 0 : i32
    %c0_i32_0 = arith.constant 0 : i32
    %c0_i32_1 = arith.constant 0 : i32
    %c0_i32_2 = arith.constant 0 : i32
    return %c0_i32, %c0_i32_0, %c0_i32_1 : i32, i32, i32
  }
  func.func @transform_3(%arg0: i32) -> (i32, i32) {
    %c0_i32 = arith.constant 0 : i32
    %c0_i32_0 = arith.constant 0 : i32
    %c0_i32_1 = arith.constant 0 : i32
    return %c0_i32, %c0_i32_0 : i32, i32
  }
  func.func @transform_4(%arg0: i32) -> (i32, i32) {
    %c0_i32 = arith.constant 0 : i32
    %c0_i32_0 = arith.constant 0 : i32
    %c0_i32_1 = arith.constant 0 : i32
    return %c0_i32, %c0_i32_0 : i32, i32
  }
  func.func @transform_5(%arg0: i32) -> (i32, i32) {
    %c0_i32 = arith.constant 0 : i32
    %c0_i32_0 = arith.constant 0 : i32
    %c0_i32_1 = arith.constant 0 : i32
    return %c0_i32, %c0_i32_0 : i32, i32
  }
}

</mosaic_0001>

<llo_original>
// kernel: tpu_custom_call.1
$region0: #{tpu_custom_call.1}
  #allocation0 [shape = 'u32[]', space=smem, size = 0x4, offset = 0x4, fixed_abs, tag = 'smem constant byte address 0x4 - core index']
  #allocation1 [shape = 'u32[144,128]{1,0:T(1,128)}', space=vmem, size = 0x12000, scoped, tag = 'internal scratch']
  #allocation2 [shape = 'f32[2,18,18,4]{3,2,1,0:T(8,128)}', space=vmem, size = 0x6c000, scoped, tag = 'scratch operand']
  #allocation3 [shape = 'f32[2,18,18,8]{3,2,1,0:T(8,128)}', space=vmem, size = 0x6c000, scoped, tag = 'scratch operand']
  %s0 = inlined_call_operand.vmem [shape: f32[2,16,16,4], index: 0, kind: input, shape index: {}]
  %s1 = inlined_call_operand.vmem [shape: bf16[9,4,8], index: 1, kind: input, shape index: {}]
  %s2 = inlined_call_operand.vmem [shape: bf16[9,8,8], index: 2, kind: input, shape index: {}]
  %s3 = inlined_call_operand.vmem [shape: bf16[4,16], index: 3, kind: input, shape index: {}]
  %s4 = inlined_call_operand.vmem [shape: f32[6,8], index: 4, kind: input, shape index: {}]
  %s5 = inlined_call_operand.vmem [shape: f32[512,8], index: 5, kind: output, shape index: {}]
  %s6 = sld [smem:[#allocation0]]
  $region30: #{tpu_custom_call.1} parent=0
    _
  %s8 = ssub.s32 1, %s6
  %s9 = scalar_select 0, %s8, %s6
  // Predicated region
  $region2: #{tpu_custom_call.1} parent=0 // pred_check
    _
  $region3: #{tpu_custom_call.1} parent=0 // pred_check_branch
    %11 = sbr.rel (0) target = $region5
  $region4: #{tpu_custom_call.1} parent=0 // pred_region
    _
  $region5: #{tpu_custom_call.1} parent=0 // pred_fallthru
    _
  // Predicated region
  $region6: #{tpu_custom_call.1} parent=0 // pred_check
    _
  $region7: #{tpu_custom_call.1} parent=0 // pred_check_branch
    %13 = sbr.rel (0) target = $region9
  $region8: #{tpu_custom_call.1} parent=0 // pred_region
    _
  $region9: #{tpu_custom_call.1} parent=0 // pred_fallthru
    _
  // Predicated region
  $region10: #{tpu_custom_call.1} parent=0 // pred_check
    _
  $region11: #{tpu_custom_call.1} parent=0 // pred_check_branch
    %15 = sbr.rel (0) target = $region13
  $region12: #{tpu_custom_call.1} parent=0 // pred_region
    _
  $region13: #{tpu_custom_call.1} parent=0 // pred_fallthru
    _
  // Predicated region
  $region14: #{tpu_custom_call.1} parent=0 // pred_check
    _
  $region15: #{tpu_custom_call.1} parent=0 // pred_check_branch
    %17 = sbr.rel (0) target = $region17
  $region16: #{tpu_custom_call.1} parent=0 // pred_region
    _
  $region17: #{tpu_custom_call.1} parent=0 // pred_fallthru
    _
  // Predicated region
  $region18: #{tpu_custom_call.1} parent=0 // pred_check
    _
  $region19: #{tpu_custom_call.1} parent=0 // pred_check_branch
    %19 = sbr.rel (0) target = $region21
  $region20: #{tpu_custom_call.1} parent=0 // pred_region
    _
  $region21: #{tpu_custom_call.1} parent=0 // pred_fallthru
    _
  %v21 = vld [vmem:[%s4] sm:$0x1]
  %v22 = vld [vmem:[%s4 + $0x1] sm:$0x1]
  %v23 = vld [vmem:[%s4 + $0x2] sm:$0x1]
  %v24 = vld [vmem:[%s4 + $0x3] sm:$0x1]
  %vm25 = vcmask 31744
  %26 = vst.msk [vmem:[#allocation2] sm:$0xff] %vm25, 0.0
  %27 = vst.msk [vmem:[#allocation2 + $0x8] sm:$0xff] %vm25, 0.0
  %vm28 = vcmask 25600
  %29 = vst.msk [vmem:[#allocation2 + $0x10] sm:$0x3] %vm28, 0.0
  %30 = vst.msk [vmem:[#allocation2 + $0x1b0] sm:$0xff] %vm25, 0.0
  %31 = vst.msk [vmem:[#allocation2 + $0x1b8] sm:$0xff] %vm25, 0.0
  %32 = vst.msk [vmem:[#allocation2 + $0x1c0] sm:$0x3] %vm28, 0.0
  %s33 = scalar_lea.vmem [#allocation2], 408
  %34 = vst.msk [vmem:[%s33] sm:$0xff] %vm25, 0.0
  %35 = vst.msk [vmem:[%s33 + $0x8] sm:$0xff] %vm25, 0.0
  %36 = vst.msk [vmem:[%s33 + $0x10] sm:$0x3] %vm28, 0.0
  %37 = vst.msk [vmem:[%s33 + $0x1b0] sm:$0xff] %vm25, 0.0
  %38 = vst.msk [vmem:[%s33 + $0x1b8] sm:$0xff] %vm25, 0.0
  %39 = vst.msk [vmem:[%s33 + $0x1c0] sm:$0x3] %vm28, 0.0
  %s40 = scalar_lea.vmem [#allocation2], 24
  %vm41 = vcmask 24576
  %42 = vst.msk [vmem:[%s40] sm:$0x1] %vm41, 0.0
  %43 = vst.msk [vmem:[%s40 + $0x18] sm:$0x1] %vm41, 0.0
  %44 = vst.msk [vmem:[%s40 + $0x30] sm:$0x1] %vm41, 0.0
  %45 = vst.msk [vmem:[%s40 + $0x48] sm:$0x1] %vm41, 0.0
  %46 = vst.msk [vmem:[%s40 + $0x60] sm:$0x1] %vm41, 0.0
  %47 = vst.msk [vmem:[%s40 + $0x78] sm:$0x1] %vm41, 0.0
  %48 = vst.msk [vmem:[%s40 + $0x90] sm:$0x1] %vm41, 0.0
  %49 = vst.msk [vmem:[%s40 + $0xa8] sm:$0x1] %vm41, 0.0
  %50 = vst.msk [vmem:[%s40 + $0xc0] sm:$0x1] %vm41, 0.0
  %51 = vst.msk [vmem:[%s40 + $0xd8] sm:$0x1] %vm41, 0.0
  %52 = vst.msk [vmem:[%s40 + $0xf0] sm:$0x1] %vm41, 0.0
  %53 = vst.msk [vmem:[%s40 + $0x108] sm:$0x1] %vm41, 0.0
  %54 = vst.msk [vmem:[%s40 + $0x120] sm:$0x1] %vm41, 0.0
  %55 = vst.msk [vmem:[%s40 + $0x138] sm:$0x1] %vm41, 0.0
  %56 = vst.msk [vmem:[%s40 + $0x150] sm:$0x1] %vm41, 0.0
  %57 = vst.msk [vmem:[%s40 + $0x168] sm:$0x1] %vm41, 0.0
  %58 = vst.msk [vmem:[%s40 + $0x1b0] sm:$0x1] %vm41, 0.0
  %59 = vst.msk [vmem:[%s40 + $0x1c8] sm:$0x1] %vm41, 0.0
  %60 = vst.msk [vmem:[%s40 + $0x1e0] sm:$0x1] %vm41, 0.0
  %61 = vst.msk [vmem:[%s40 + $0x1f8] sm:$0x1] %vm41, 0.0
  %62 = vst.msk [vmem:[%s40 + $0x210] sm:$0x1] %vm41, 0.0
  %63 = vst.msk [vmem:[%s40 + $0x228] sm:$0x1] %vm41, 0.0
  %64 = vst.msk [vmem:[%s40 + $0x240] sm:$0x1] %vm41, 0.0
  %65 = vst.msk [vmem:[%s40 + $0x258] sm:$0x1] %vm41, 0.0
  %66 = vst.msk [vmem:[%s40 + $0x270] sm:$0x1] %vm41, 0.0
  %67 = vst.msk [vmem:[%s40 + $0x288] sm:$0x1] %vm41, 0.0
  %68 = vst.msk [vmem:[%s40 + $0x2a0] sm:$0x1] %vm41, 0.0
  %69 = vst.msk [vmem:[%s40 + $0x2b8] sm:$0x1] %vm41, 0.0
  %70 = vst.msk [vmem:[%s40 + $0x2d0] sm:$0x1] %vm41, 0.0
  %71 = vst.msk [vmem:[%s40 + $0x2e8] sm:$0x1] %vm41, 0.0
  %72 = vst.msk [vmem:[%s40 + $0x300] sm:$0x1] %vm41, 0.0
  %73 = vst.msk [vmem:[%s40 + $0x318] sm:$0x1] %vm41, 0.0
  %74 = vst.msk [vmem:[%s40 + $0x11] sm:$0x1] %vm41, 0.0
  %75 = vst.msk [vmem:[%s40 + $0x29] sm:$0x1] %vm41, 0.0
  %76 = vst.msk [vmem:[%s40 + $0x41] sm:$0x1] %vm41, 0.0
  %77 = vst.msk [vmem:[%s40 + $0x59] sm:$0x1] %vm41, 0.0
  %78 = vst.msk [vmem:[%s40 + $0x71] sm:$0x1] %vm41, 0.0
  %79 = vst.msk [vmem:[%s40 + $0x89] sm:$0x1] %vm41, 0.0
  %80 = vst.msk [vmem:[%s40 + $0xa1] sm:$0x1] %vm41, 0.0
  %81 = vst.msk [vmem:[%s40 + $0xb9] sm:$0x1] %vm41, 0.0
  %82 = vst.msk [vmem:[%s40 + $0xd1] sm:$0x1] %vm41, 0.0
  %83 = vst.msk [vmem:[%s40 + $0xe9] sm:$0x1] %vm41, 0.0
  %84 = vst.msk [vmem:[%s40 + $0x101] sm:$0x1] %vm41, 0.0
  %85 = vst.msk [vmem:[%s40 + $0x119] sm:$0x1] %vm41, 0.0
  %86 = vst.msk [vmem:[%s40 + $0x131] sm:$0x1] %vm41, 0.0
  %87 = vst.msk [vmem:[%s40 + $0x149] sm:$0x1] %vm41, 0.0
  %88 = vst.msk [vmem:[%s40 + $0x161] sm:$0x1] %vm41, 0.0
  %89 = vst.msk [vmem:[%s40 + $0x179] sm:$0x1] %vm41, 0.0
  %90 = vst.msk [vmem:[%s40 + $0x1c1] sm:$0x1] %vm41, 0.0
  %91 = vst.msk [vmem:[%s40 + $0x1d9] sm:$0x1] %vm41, 0.0
  %92 = vst.msk [vmem:[%s40 + $0x1f1] sm:$0x1] %vm41, 0.0
  %93 = vst.msk [vmem:[%s40 + $0x209] sm:$0x1] %vm41, 0.0
  %94 = vst.msk [vmem:[%s40 + $0x221] sm:$0x1] %vm41, 0.0
  %95 = vst.msk [vmem:[%s40 + $0x239] sm:$0x1] %vm41, 0.0
  %96 = vst.msk [vmem:[%s40 + $0x251] sm:$0x1] %vm41, 0.0
  %97 = vst.msk [vmem:[%s40 + $0x269] sm:$0x1] %vm41, 0.0
  %98 = vst.msk [vmem:[%s40 + $0x281] sm:$0x1] %vm41, 0.0
  %99 = vst.msk [vmem:[%s40 + $0x299] sm:$0x1] %vm41, 0.0
  %100 = vst.msk [vmem:[%s40 + $0x2b1] sm:$0x1] %vm41, 0.0
  %101 = vst.msk [vmem:[%s40 + $0x2c9] sm:$0x1] %vm41, 0.0
  %102 = vst.msk [vmem:[%s40 + $0x2e1] sm:$0x1] %vm41, 0.0
  %103 = vst.msk [vmem:[%s40 + $0x2f9] sm:$0x1] %vm41, 0.0
  %104 = vst.msk [vmem:[%s40 + $0x311] sm:$0x1] %vm41, 0.0
  %105 = vst.msk [vmem:[%s40 + $0x329] sm:$0x1] %vm41, 0.0
  %v106 = vld [vmem:[%s0] sm:$0xff]
  %v107 = vld [vmem:[%s0 + $0x8] sm:$0xff]
  %v108 = vld [vmem:[%s0 + $0x10] sm:$0xff]
  %v109 = vld [vmem:[%s0 + $0x18] sm:$0xff]
  %v110 = vld [vmem:[%s0 + $0x20] sm:$0xff]
  %v111 = vld [vmem:[%s0 + $0x28] sm:$0xff]
  %v112 = vld [vmem:[%s0 + $0x30] sm:$0xff]
  %v113 = vld [vmem:[%s0 + $0x38] sm:$0xff]
  %v114 = vld [vmem:[%s0 + $0x40] sm:$0xff]
  %v115 = vld [vmem:[%s0 + $0x48] sm:$0xff]
  %v116 = vld [vmem:[%s0 + $0x50] sm:$0xff]
  %v117 = vld [vmem:[%s0 + $0x58] sm:$0xff]
  %v118 = vld [vmem:[%s0 + $0x60] sm:$0xff]
  %v119 = vld [vmem:[%s0 + $0x68] sm:$0xff]
  %v120 = vld [vmem:[%s0 + $0x70] sm:$0xff]
  %v121 = vld [vmem:[%s0 + $0x78] sm:$0xff]
  %v122 = vld [vmem:[%s0 + $0x80] sm:$0xff]
  %v123 = vld [vmem:[%s0 + $0x88] sm:$0xff]
  %v124 = vld [vmem:[%s0 + $0x90] sm:$0xff]
  %v125 = vld [vmem:[%s0 + $0x98] sm:$0xff]
  %v126 = vld [vmem:[%s0 + $0xa0] sm:$0xff]
  %v127 = vld [vmem:[%s0 + $0xa8] sm:$0xff]
  %v128 = vld [vmem:[%s0 + $0xb0] sm:$0xff]
  %v129 = vld [vmem:[%s0 + $0xb8] sm:$0xff]
  %v130 = vld [vmem:[%s0 + $0xc0] sm:$0xff]
  %v131 = vld [vmem:[%s0 + $0xc8] sm:$0xff]
  %v132 = vld [vmem:[%s0 + $0xd0] sm:$0xff]
  %v133 = vld [vmem:[%s0 + $0xd8] sm:$0xff]
  %v134 = vld [vmem:[%s0 + $0xe0] sm:$0xff]
  %v135 = vld [vmem:[%s0 + $0xe8] sm:$0xff]
  %v136 = vld [vmem:[%s0 + $0xf0] sm:$0xff]
  %v137 = vld [vmem:[%s0 + $0xf8] sm:$0xff]
  %v138 = vld [vmem:[%s0 + $0x100] sm:$0xff]
  %v139 = vld [vmem:[%s0 + $0x108] sm:$0xff]
  %v140 = vld [vmem:[%s0 + $0x110] sm:$0xff]
  %v141 = vld [vmem:[%s0 + $0x118] sm:$0xff]
  %v142 = vld [vmem:[%s0 + $0x120] sm:$0xff]
  %v143 = vld [vmem:[%s0 + $0x128] sm:$0xff]
  %v144 = vld [vmem:[%s0 + $0x130] sm:$0xff]
  %v145 = vld [vmem:[%s0 + $0x138] sm:$0xff]
  %v146 = vld [vmem:[%s0 + $0x140] sm:$0xff]
  %v147 = vld [vmem:[%s0 + $0x148] sm:$0xff]
  %v148 = vld [vmem:[%s0 + $0x150] sm:$0xff]
  %v149 = vld [vmem:[%s0 + $0x158] sm:$0xff]
  %v150 = vld [vmem:[%s0 + $0x160] sm:$0xff]
  %v151 = vld [vmem:[%s0 + $0x168] sm:$0xff]
  %v152 = vld [vmem:[%s0 + $0x170] sm:$0xff]
  %v153 = vld [vmem:[%s0 + $0x178] sm:$0xff]
  %v154 = vld [vmem:[%s0 + $0x180] sm:$0xff]
  %v155 = vld [vmem:[%s0 + $0x188] sm:$0xff]
  %v156 = vld [vmem:[%s0 + $0x190] sm:$0xff]
  %v157 = vld [vmem:[%s0 + $0x198] sm:$0xff]
  %v158 = vld [vmem:[%s0 + $0x1a0] sm:$0xff]
  %v159 = vld [vmem:[%s0 + $0x1a8] sm:$0xff]
  %v160 = vld [vmem:[%s0 + $0x1b0] sm:$0xff]
  %v161 = vld [vmem:[%s0 + $0x1b8] sm:$0xff]
  %v162 = vld [vmem:[%s0 + $0x1c0] sm:$0xff]
  %v163 = vld [vmem:[%s0 + $0x1c8] sm:$0xff]
  %v164 = vld [vmem:[%s0 + $0x1d0] sm:$0xff]
  %v165 = vld [vmem:[%s0 + $0x1d8] sm:$0xff]
  %v166 = vld [vmem:[%s0 + $0x1e0] sm:$0xff]
  %v167 = vld [vmem:[%s0 + $0x1e8] sm:$0xff]
  %v168 = vld [vmem:[%s0 + $0x1f0] sm:$0xff]
  %v169 = vld [vmem:[%s0 + $0x1f8] sm:$0xff]
  %170 = vst.msk [vmem:[%s40 + $0x1] sm:$0xff] %vm25, %v106
  %171 = vst.msk [vmem:[%s40 + $0x9] sm:$0xff] %vm25, %v107
  %172 = vst.msk [vmem:[%s40 + $0x19] sm:$0xff] %vm25, %v108
  %173 = vst.msk [vmem:[%s40 + $0x21] sm:$0xff] %vm25, %v109
  %174 = vst.msk [vmem:[%s40 + $0x31] sm:$0xff] %vm25, %v110
  %175 = vst.msk [vmem:[%s40 + $0x39] sm:$0xff] %vm25, %v111
  %176 = vst.msk [vmem:[%s40 + $0x49] sm:$0xff] %vm25, %v112
  %177 = vst.msk [vmem:[%s40 + $0x51] sm:$0xff] %vm25, %v113
  %178 = vst.msk [vmem:[%s40 + $0x61] sm:$0xff] %vm25, %v114
  %179 = vst.msk [vmem:[%s40 + $0x69] sm:$0xff] %vm25, %v115
  %180 = vst.msk [vmem:[%s40 + $0x79] sm:$0xff] %vm25, %v116
  %181 = vst.msk [vmem:[%s40 + $0x81] sm:$0xff] %vm25, %v117
  %182 = vst.msk [vmem:[%s40 + $0x91] sm:$0xff] %vm25, %v118
  %183 = vst.msk [vmem:[%s40 + $0x99] sm:$0xff] %vm25, %v119
  %184 = vst.msk [vmem:[%s40 + $0xa9] sm:$0xff] %vm25, %v120
  %185 = vst.msk [vmem:[%s40 + $0xb1] sm:$0xff] %vm25, %v121
  %186 = vst.msk [vmem:[%s40 + $0xc1] sm:$0xff] %vm25, %v122
  %187 = vst.msk [vmem:[%s40 + $0xc9] sm:$0xff] %vm25, %v123
  %188 = vst.msk [vmem:[%s40 + $0xd9] sm:$0xff] %vm25, %v124
  %189 = vst.msk [vmem:[%s40 + $0xe1] sm:$0xff] %vm25, %v125
  %190 = vst.msk [vmem:[%s40 + $0xf1] sm:$0xff] %vm25, %v126
  %191 = vst.msk [vmem:[%s40 + $0xf9] sm:$0xff] %vm25, %v127
  %192 = vst.msk [vmem:[%s40 + $0x109] sm:$0xff] %vm25, %v128
  %193 = vst.msk [vmem:[%s40 + $0x111] sm:$0xff] %vm25, %v129
  %194 = vst.msk [vmem:[%s40 + $0x121] sm:$0xff] %vm25, %v130
  %195 = vst.msk [vmem:[%s40 + $0x129] sm:$0xff] %vm25, %v131
  %196 = vst.msk [vmem:[%s40 + $0x139] sm:$0xff] %vm25, %v132
  %197 = vst.msk [vmem:[%s40 + $0x141] sm:$0xff] %vm25, %v133
  %198 = vst.msk [vmem:[%s40 + $0x151] sm:$0xff] %vm25, %v134
  %199 = vst.msk [vmem:[%s40 + $0x159] sm:$0xff] %vm25, %v135
  %200 = vst.msk [vmem:[%s40 + $0x169] sm:$0xff] %vm25, %v136
  %201 = vst.msk [vmem:[%s40 + $0x171] sm:$0xff] %vm25, %v137
  %202 = vst.msk [vmem:[%s40 + $0x1b1] sm:$0xff] %vm25, %v138
  %203 = vst.msk [vmem:[%s40 + $0x1b9] sm:$0xff] %vm25, %v139
  %204 = vst.msk [vmem:[%s40 + $0x1c9] sm:$0xff] %vm25, %v140
  %205 = vst.msk [vmem:[%s40 + $0x1d1] sm:$0xff] %vm25, %v141
  %206 = vst.msk [vmem:[%s40 + $0x1e1] sm:$0xff] %vm25, %v142
  %207 = vst.msk [vmem:[%s40 + $0x1e9] sm:$0xff] %vm25, %v143
  %208 = vst.msk [vmem:[%s40 + $0x1f9] sm:$0xff] %vm25, %v144
  %209 = vst.msk [vmem:[%s40 + $0x201] sm:$0xff] %vm25, %v145
  %210 = vst.msk [vmem:[%s40 + $0x211] sm:$0xff] %vm25, %v146
  %211 = vst.msk [vmem:[%s40 + $0x219] sm:$0xff] %vm25, %v147
  %212 = vst.msk [vmem:[%s40 + $0x229] sm:$0xff] %vm25, %v148
  %213 = vst.msk [vmem:[%s40 + $0x231] sm:$0xff] %vm25, %v149
  %214 = vst.msk [vmem:[%s40 + $0x241] sm:$0xff] %vm25, %v150
  %215 = vst.msk [vmem:[%s40 + $0x249] sm:$0xff] %vm25, %v151
  %216 = vst.msk [vmem:[%s40 + $0x259] sm:$0xff] %vm25, %v152
  %217 = vst.msk [vmem:[%s40 + $0x261] sm:$0xff] %vm25, %v153
  %218 = vst.msk [vmem:[%s40 + $0x271] sm:$0xff] %vm25, %v154
  %219 = vst.msk [vmem:[%s40 + $0x279] sm:$0xff] %vm25, %v155
  %220 = vst.msk [vmem:[%s40 + $0x289] sm:$0xff] %vm25, %v156
  %221 = vst.msk [vmem:[%s40 + $0x291] sm:$0xff] %vm25, %v157
  %222 = vst.msk [vmem:[%s40 + $0x2a1] sm:$0xff] %vm25, %v158
  %223 = vst.msk [vmem:[%s40 + $0x2a9] sm:$0xff] %vm25, %v159
  %224 = vst.msk [vmem:[%s40 + $0x2b9] sm:$0xff] %vm25, %v160
  %225 = vst.msk [vmem:[%s40 + $0x2c1] sm:$0xff] %vm25, %v161
  %226 = vst.msk [vmem:[%s40 + $0x2d1] sm:$0xff] %vm25, %v162
  %227 = vst.msk [vmem:[%s40 + $0x2d9] sm:$0xff] %vm25, %v163
  %228 = vst.msk [vmem:[%s40 + $0x2e9] sm:$0xff] %vm25, %v164
  %229 = vst.msk [vmem:[%s40 + $0x2f1] sm:$0xff] %vm25, %v165
  %230 = vst.msk [vmem:[%s40 + $0x301] sm:$0xff] %vm25, %v166
  %231 = vst.msk [vmem:[%s40 + $0x309] sm:$0xff] %vm25, %v167
  %232 = vst.msk [vmem:[%s40 + $0x319] sm:$0xff] %vm25, %v168
  %233 = vst.msk [vmem:[%s40 + $0x321] sm:$0xff] %vm25, %v169
  %v234 = vld [vmem:[%s3] sm:$0x3]
  %v235 = vld [vmem:[#allocation2] sm:$0xff]
  %v236 = vld [vmem:[#allocation2 + $0x8] sm:$0xff]
  %v237 = vld [vmem:[#allocation2 + $0x18] sm:$0xff]
  %v238 = vld [vmem:[#allocation2 + $0x20] sm:$0xff]
  %v239 = vld [vmem:[#allocation2 + $0x30] sm:$0xff]
  %v240 = vld [vmem:[#allocation2 + $0x38] sm:$0xff]
  %v241 = vld [vmem:[#allocation2 + $0x48] sm:$0xff]
  %v242 = vld [vmem:[#allocation2 + $0x50] sm:$0xff]
  %v243 = vld [vmem:[#allocation2 + $0x60] sm:$0xff]
  %v244 = vld [vmem:[#allocation2 + $0x68] sm:$0xff]
  %v245 = vld [vmem:[#allocation2 + $0x78] sm:$0xff]
  %v246 = vld [vmem:[#allocation2 + $0x80] sm:$0xff]
  %v247 = vld [vmem:[#allocation2 + $0x90] sm:$0xff]
  %v248 = vld [vmem:[#allocation2 + $0x98] sm:$0xff]
  %v249 = vld [vmem:[#allocation2 + $0xa8] sm:$0xff]
  %v250 = vld [vmem:[#allocation2 + $0xb0] sm:$0xff]
  %v251 = vld [vmem:[#allocation2 + $0xc0] sm:$0xff]
  %v252 = vld [vmem:[#allocation2 + $0xc8] sm:$0xff]
  %v253 = vld [vmem:[#allocation2 + $0xd8] sm:$0xff]
  %v254 = vld [vmem:[#allocation2 + $0xe0] sm:$0xff]
  %v255 = vld [vmem:[#allocation2 + $0xf0] sm:$0xff]
  %v256 = vld [vmem:[#allocation2 + $0xf8] sm:$0xff]
  %v257 = vld [vmem:[#allocation2 + $0x108] sm:$0xff]
  %v258 = vld [vmem:[#allocation2 + $0x110] sm:$0xff]
  %v259 = vld [vmem:[#allocation2 + $0x120] sm:$0xff]
  %v260 = vld [vmem:[#allocation2 + $0x128] sm:$0xff]
  %v261 = vld [vmem:[#allocation2 + $0x138] sm:$0xff]
  %v262 = vld [vmem:[#allocation2 + $0x140] sm:$0xff]
  %v263 = vld [vmem:[#allocation2 + $0x150] sm:$0xff]
  %v264 = vld [vmem:[#allocation2 + $0x158] sm:$0xff]
  %v265 = vld [vmem:[#allocation2 + $0x168] sm:$0xff]
  %v266 = vld [vmem:[#allocation2 + $0x170] sm:$0xff]
  %v267 = vld [vmem:[#allocation2 + $0x1b0] sm:$0xff]
  %v268 = vld [vmem:[#allocation2 + $0x1b8] sm:$0xff]
  %v269 = vld [vmem:[#allocation2 + $0x1c8] sm:$0xff]
  %v270 = vld [vmem:[#allocation2 + $0x1d0] sm:$0xff]
  %v271 = vld [vmem:[#allocation2 + $0x1e0] sm:$0xff]
  %v272 = vld [vmem:[#allocation2 + $0x1e8] sm:$0xff]
  %v273 = vld [vmem:[#allocation2 + $0x1f8] sm:$0xff]
  %v274 = vld [vmem:[#allocation2 + $0x200] sm:$0xff]
  %v275 = vld [vmem:[#allocation2 + $0x210] sm:$0xff]
  %v276 = vld [vmem:[#allocation2 + $0x218] sm:$0xff]
  %v277 = vld [vmem:[#allocation2 + $0x228] sm:$0xff]
  %v278 = vld [vmem:[#allocation2 + $0x230] sm:$0xff]
  %v279 = vld [vmem:[#allocation2 + $0x240] sm:$0xff]
  %v280 = vld [vmem:[#allocation2 + $0x248] sm:$0xff]
  %v281 = vld [vmem:[#allocation2 + $0x258] sm:$0xff]
  %v282 = vld [vmem:[#allocation2 + $0x260] sm:$0xff]
  %v283 = vld [vmem:[#allocation2 + $0x270] sm:$0xff]
  %v284 = vld [vmem:[#allocation2 + $0x278] sm:$0xff]
  %v285 = vld [vmem:[#allocation2 + $0x288] sm:$0xff]
  %v286 = vld [vmem:[#allocation2 + $0x290] sm:$0xff]
  %v287 = vld [vmem:[#allocation2 + $0x2a0] sm:$0xff]
  %v288 = vld [vmem:[#allocation2 + $0x2a8] sm:$0xff]
  %v289 = vld [vmem:[#allocation2 + $0x2b8] sm:$0xff]
  %v290 = vld [vmem:[#allocation2 + $0x2c0] sm:$0xff]
  %v291 = vld [vmem:[#allocation2 + $0x2d0] sm:$0xff]
  %v292 = vld [vmem:[#allocation2 + $0x2d8] sm:$0xff]
  %v293 = vld [vmem:[#allocation2 + $0x2e8] sm:$0xff]
  %v294 = vld [vmem:[#allocation2 + $0x2f0] sm:$0xff]
  %v295 = vld [vmem:[#allocation2 + $0x300] sm:$0xff]
  %v296 = vld [vmem:[#allocation2 + $0x308] sm:$0xff]
  %v297 = vld [vmem:[#allocation2 + $0x318] sm:$0xff]
  %v298 = vld [vmem:[#allocation2 + $0x320] sm:$0xff]
  %v299 = vpack.c.bf16 %v236, %v235
  %v300 = vpack.c.bf16 %v238, %v237
  %v301 = vpack.c.bf16 %v240, %v239
  %v302 = vpack.c.bf16 %v242, %v241
  %v303 = vpack.c.bf16 %v244, %v243
  %v304 = vpack.c.bf16 %v246, %v245
  %v305 = vpack.c.bf16 %v248, %v247
  %v306 = vpack.c.bf16 %v250, %v249
  %v307 = vpack.c.bf16 %v252, %v251
  %v308 = vpack.c.bf16 %v254, %v253
  %v309 = vpack.c.bf16 %v256, %v255
  %v310 = vpack.c.bf16 %v258, %v257
  %v311 = vpack.c.bf16 %v260, %v259
  %v312 = vpack.c.bf16 %v262, %v261
  %v313 = vpack.c.bf16 %v264, %v263
  %v314 = vpack.c.bf16 %v266, %v265
  %v315 = vpack.c.bf16 %v268, %v267
  %v316 = vpack.c.bf16 %v270, %v269
  %v317 = vpack.c.bf16 %v272, %v271
  %v318 = vpack.c.bf16 %v274, %v273
  %v319 = vpack.c.bf16 %v276, %v275
  %v320 = vpack.c.bf16 %v278, %v277
  %v321 = vpack.c.bf16 %v280, %v279
  %v322 = vpack.c.bf16 %v282, %v281
  %v323 = vpack.c.bf16 %v284, %v283
  %v324 = vpack.c.bf16 %v286, %v285
  %v325 = vpack.c.bf16 %v288, %v287
  %v326 = vpack.c.bf16 %v290, %v289
  %v327 = vpack.c.bf16 %v292, %v291
  %v328 = vpack.c.bf16 %v294, %v293
  %v329 = vpack.c.bf16 %v296, %v295
  %v330 = vpack.c.bf16 %v298, %v297
  %v331 = vld [vmem:[%s1] sm:$0x3]
  %v332 = vld [vmem:[#allocation2 + $0x1] sm:$0xff]
  %v333 = vld [vmem:[#allocation2 + $0x9] sm:$0xff]
  %v334 = vld [vmem:[#allocation2 + $0x19] sm:$0xff]
  %v335 = vld [vmem:[#allocation2 + $0x21] sm:$0xff]
  %v336 = vld [vmem:[#allocation2 + $0x31] sm:$0xff]
  %v337 = vld [vmem:[#allocation2 + $0x39] sm:$0xff]
  %v338 = vld [vmem:[#allocation2 + $0x49] sm:$0xff]
  %v339 = vld [vmem:[#allocation2 + $0x51] sm:$0xff]
  %v340 = vld [vmem:[#allocation2 + $0x61] sm:$0xff]
  %v341 = vld [vmem:[#allocation2 + $0x69] sm:$0xff]
  %v342 = vld [vmem:[#allocation2 + $0x79] sm:$0xff]
  %v343 = vld [vmem:[#allocation2 + $0x81] sm:$0xff]
  %v344 = vld [vmem:[#allocation2 + $0x91] sm:$0xff]
  %v345 = vld [vmem:[#allocation2 + $0x99] sm:$0xff]
  %v346 = vld [vmem:[#allocation2 + $0xa9] sm:$0xff]
  %v347 = vld [vmem:[#allocation2 + $0xb1] sm:$0xff]
  %v348 = vld [vmem:[#allocation2 + $0xc1] sm:$0xff]
  %v349 = vld [vmem:[#allocation2 + $0xc9] sm:$0xff]
  %v350 = vld [vmem:[#allocation2 + $0xd9] sm:$0xff]
  %v351 = vld [vmem:[#allocation2 + $0xe1] sm:$0xff]
  %v352 = vld [vmem:[#allocation2 + $0xf1] sm:$0xff]
  %v353 = vld [vmem:[#allocation2 + $0xf9] sm:$0xff]
  %v354 = vld [vmem:[#allocation2 + $0x109] sm:$0xff]
  %v355 = vld [vmem:[#allocation2 + $0x111] sm:$0xff]
  %v356 = vld [vmem:[#allocation2 + $0x121] sm:$0xff]
  %v357 = vld [vmem:[#allocation2 + $0x129] sm:$0xff]
  %v358 = vld [vmem:[#allocation2 + $0x139] sm:$0xff]
  %v359 = vld [vmem:[#allocation2 + $0x141] sm:$0xff]
  %v360 = vld [vmem:[#allocation2 + $0x151] sm:$0xff]
  %v361 = vld [vmem:[#allocation2 + $0x159] sm:$0xff]
  %v362 = vld [vmem:[#allocation2 + $0x169] sm:$0xff]
  %v363 = vld [vmem:[#allocation2 + $0x171] sm:$0xff]
  %v364 = vld [vmem:[#allocation2 + $0x1b1] sm:$0xff]
  %v365 = vld [vmem:[#allocation2 + $0x1b9] sm:$0xff]
  %v366 = vld [vmem:[#allocation2 + $0x1c9] sm:$0xff]
  %v367 = vld [vmem:[#allocation2 + $0x1d1] sm:$0xff]
  %v368 = vld [vmem:[#allocation2 + $0x1e1] sm:$0xff]
  %v369 = vld [vmem:[#allocation2 + $0x1e9] sm:$0xff]
  %v370 = vld [vmem:[#allocation2 + $0x1f9] sm:$0xff]
  %v371 = vld [vmem:[#allocation2 + $0x201] sm:$0xff]
  %v372 = vld [vmem:[#allocation2 + $0x211] sm:$0xff]
  %v373 = vld [vmem:[#allocation2 + $0x219] sm:$0xff]
  %v374 = vld [vmem:[#allocation2 + $0x229] sm:$0xff]
  %v375 = vld [vmem:[#allocation2 + $0x231] sm:$0xff]
  %v376 = vld [vmem:[#allocation2 + $0x241] sm:$0xff]
  %v377 = vld [vmem:[#allocation2 + $0x249] sm:$0xff]
  %v378 = vld [vmem:[#allocation2 + $0x259] sm:$0xff]
  %v379 = vld [vmem:[#allocation2 + $0x261] sm:$0xff]
  %v380 = vld [vmem:[#allocation2 + $0x271] sm:$0xff]
  %v381 = vld [vmem:[#allocation2 + $0x279] sm:$0xff]
  %v382 = vld [vmem:[#allocation2 + $0x289] sm:$0xff]
  %v383 = vld [vmem:[#allocation2 + $0x291] sm:$0xff]
  %v384 = vld [vmem:[#allocation2 + $0x2a1] sm:$0xff]
  %v385 = vld [vmem:[#allocation2 + $0x2a9] sm:$0xff]
  %v386 = vld [vmem:[#allocation2 + $0x2b9] sm:$0xff]
  %v387 = vld [vmem:[#allocation2 + $0x2c1] sm:$0xff]
  %v388 = vld [vmem:[#allocation2 + $0x2d1] sm:$0xff]
  %v389 = vld [vmem:[#allocation2 + $0x2d9] sm:$0xff]
  %v390 = vld [vmem:[#allocation2 + $0x2e9] sm:$0xff]
  %v391 = vld [vmem:[#allocation2 + $0x2f1] sm:$0xff]
  %v392 = vld [vmem:[#allocation2 + $0x301] sm:$0xff]
  %v393 = vld [vmem:[#allocation2 + $0x309] sm:$0xff]
  %v394 = vld [vmem:[#allocation2 + $0x319] sm:$0xff]
  %v395 = vld [vmem:[#allocation2 + $0x321] sm:$0xff]
  %v396 = vpack.c.bf16 %v333, %v332
  %v397 = vpack.c.bf16 %v335, %v334
  %v398 = vpack.c.bf16 %v337, %v336
  %v399 = vpack.c.bf16 %v339, %v338
  %v400 = vpack.c.bf16 %v341, %v340
  %v401 = vpack.c.bf16 %v343, %v342
  %v402 = vpack.c.bf16 %v345, %v344
  %v403 = vpack.c.bf16 %v347, %v346
  %v404 = vpack.c.bf16 %v349, %v348
  %v405 = vpack.c.bf16 %v351, %v350
  %v406 = vpack.c.bf16 %v353, %v352
  %v407 = vpack.c.bf16 %v355, %v354
  %v408 = vpack.c.bf16 %v357, %v356
  %v409 = vpack.c.bf16 %v359, %v358
  %v410 = vpack.c.bf16 %v361, %v360
  %v411 = vpack.c.bf16 %v363, %v362
  %v412 = vpack.c.bf16 %v365, %v364
  %v413 = vpack.c.bf16 %v367, %v366
  %v414 = vpack.c.bf16 %v369, %v368
  %v415 = vpack.c.bf16 %v371, %v370
  %v416 = vpack.c.bf16 %v373, %v372
  %v417 = vpack.c.bf16 %v375, %v374
  %v418 = vpack.c.bf16 %v377, %v376
  %v419 = vpack.c.bf16 %v379, %v378
  %v420 = vpack.c.bf16 %v381, %v380
  %v421 = vpack.c.bf16 %v383, %v382
  %v422 = vpack.c.bf16 %v385, %v384
  %v423 = vpack.c.bf16 %v387, %v386
  %v424 = vpack.c.bf16 %v389, %v388
  %v425 = vpack.c.bf16 %v391, %v390
  %v426 = vpack.c.bf16 %v393, %v392
  %v427 = vpack.c.bf16 %v395, %v394
  %s428 = scalar_lea.vmem %s1, 2
  %v429 = vld [vmem:[%s428] sm:$0x3]
  %v431 = vsel %vm25, %v396, 0
  %v434 = vsel %vm25, %v397, 0
  %v437 = vsel %vm25, %v398, 0
  %v440 = vsel %vm25, %v399, 0
  %v443 = vsel %vm25, %v400, 0
  %v446 = vsel %vm25, %v401, 0
  %v449 = vsel %vm25, %v402, 0
  %v452 = vsel %vm25, %v403, 0
  %v455 = vsel %vm25, %v404, 0
  %v458 = vsel %vm25, %v405, 0
  %v461 = vsel %vm25, %v406, 0
  %v464 = vsel %vm25, %v407, 0
  %v467 = vsel %vm25, %v408, 0
  %v470 = vsel %vm25, %v409, 0
  %v473 = vsel %vm25, %v410, 0
  %v476 = vsel %vm25, %v411, 0
  %v479 = vsel %vm25, %v412, 0
  %v482 = vsel %vm25, %v413, 0
  %v485 = vsel %vm25, %v414, 0
  %v488 = vsel %vm25, %v415, 0
  %v491 = vsel %vm25, %v416, 0
  %v494 = vsel %vm25, %v417, 0
  %v497 = vsel %vm25, %v418, 0
  %v500 = vsel %vm25, %v419, 0
  %v503 = vsel %vm25, %v420, 0
  %v506 = vsel %vm25, %v421, 0
  %v509 = vsel %vm25, %v422, 0
  %v512 = vsel %vm25, %v423, 0
  %v515 = vsel %vm25, %v424, 0
  %v518 = vsel %vm25, %v425, 0
  %v521 = vsel %vm25, %v426, 0
  %v524 = vsel %vm25, %v427, 0
  %vm526 = vcmask 1041408
  %v528 = vsel %vm526, %v429, 0
  %530 = vmatprep.subr.bf16.mxu0 0
  %531 = vmatpush1.bf16.msra.mxu0 %v528
  %532 = vmatprep.subr.bf16.mxu0 0
  %533 = vmatpush1.bf16.msra.mxu0 0
  %534 = vmatprep.subr.bf16.mxu0 0
  %535 = vmatpush1.bf16.msra.mxu0 0
  %536 = vmatprep.subr.bf16.mxu0 0
  %537 = vmatpush1.bf16.msra.mxu0 0
  %538 = vmatprep.subr.bf16.mxu0 0
  %539 = vmatpush1.bf16.msra.mxu0 0
  %540 = vmatprep.subr.bf16.mxu0 0
  %541 = vmatpush1.bf16.msra.mxu0 0
  %542 = vmatprep.subr.bf16.mxu0 0
  %543 = vmatpush1.bf16.msra.mxu0 0
  %544 = vmatprep.subr.bf16.mxu0 0
  %545 = vmatpush1.bf16.msra.mxu0 0
  %546 = vmatprep.subr.bf16.mxu0 0
  %547 = vmatpush1.bf16.msra.mxu0 0
  %548 = vmatprep.subr.bf16.mxu0 0
  %549 = vmatpush1.bf16.msra.mxu0 0
  %550 = vmatprep.subr.bf16.mxu0 0
  %551 = vmatpush1.bf16.msra.mxu0 0
  %552 = vmatprep.subr.bf16.mxu0 0
  %553 = vmatpush1.bf16.msra.mxu0 0
  %554 = vmatprep.subr.bf16.mxu0 0
  %555 = vmatpush1.bf16.msra.mxu0 0
  %556 = vmatprep.subr.bf16.mxu0 0
  %557 = vmatpush1.bf16.msra.mxu0 0
  %558 = vmatprep.subr.bf16.mxu0 0
  %559 = vmatpush1.bf16.msra.mxu0 0
  %560 = vmatprep.subr.bf16.mxu0 0
  %561 = vmatpush1.bf16.msra.mxu0 0
  %562 = vmatprep.mubr.bf16.mxu0 0
  %563 = vmatmul.mubr.bf16.gmra.mrb[0].mxu0 %v431
  %v564 = vpop.f32.mrb[0].mxu0
  %v565 = vadd.f32 0.0, %v564
  %v566 = vpop.f32.mrb[0].mxu0
  %v567 = vpop.f32.mrb[0].mxu0
  %v568 = vadd.f32 0.0, %v567
  %v569 = vpop.f32.mrb[0].mxu0
  %570 = vmatprep.mubr.bf16.mxu0 0
  %571 = vmatmul.mubr.bf16.gmra.mrb[0].mxu0 %v434
  %v572 = vpop.f32.mrb[0].mxu0
  %v573 = vadd.f32 0.0, %v572
  %v574 = vpop.f32.mrb[0].mxu0
  %v575 = vpop.f32.mrb[0].mxu0
  %v576 = vadd.f32 0.0, %v575
  %v577 = vpop.f32.mrb[0].mxu0
  %578 = vmatprep.mubr.bf16.mxu0 0
  %579 = vmatmul.mubr.bf16.gmra.mrb[0].mxu0 %v437
  %v580 = vpop.f32.mrb[0].mxu0
  %v581 = vadd.f32 0.0, %v580
  %v582 = vpop.f32.mrb[0].mxu0
  %v583 = vpop.f32.mrb[0].mxu0
  %v584 = vadd.f32 0.0, %v583
  %v585 = vpop.f32.mrb[0].mxu0
  %586 = vmatprep.mubr.bf16.mxu0 0
  %587 = vmatmul.mubr.bf16.gmra.mrb[0].mxu0 %v440
  %v588 = vpop.f32.mrb[0].mxu0
  %v589 = vadd.f32 0.0, %v588
  %v590 = vpop.f32.mrb[0].mxu0
  %v591 = vpop.f32.mrb[0].mxu0
  %v592 = vadd.f32 0.0, %v591
  %v593 = vpop.f32.mrb[0].mxu0
  %594 = vmatprep.mubr.bf16.mxu0 0
  %595 = vmatmul.mubr.bf16.gmra.mrb[0].mxu0 %v443
  %v596 = vpop.f32.mrb[0].mxu0
  %v597 = vadd.f32 0.0, %v596
  %v598 = vpop.f32.mrb[0].mxu0
  %v599 = vpop.f32.mrb[0].mxu0
  %v600 = vadd.f32 0.0, %v599
  %v601 = vpop.f32.mrb[0].mxu0
  %602 = vmatprep.mubr.bf16.mxu0 0
  %603 = vmatmul.mubr.bf16.gmra.mrb[0].mxu0 %v446
  %v604 = vpop.f32.mrb[0].mxu0
  %v605 = vadd.f32 0.0, %v604
  %v606 = vpop.f32.mrb[0].mxu0
  %v607 = vpop.f32.mrb[0].mxu0
  %v608 = vadd.f32 0.0, %v607
  %v609 = vpop.f32.mrb[0].mxu0
  %610 = vmatprep.mubr.bf16.mxu0 0
  %611 = vmatmul.mubr.bf16.gmra.mrb[0].mxu0 %v449
  %v612 = vpop.f32.mrb[0].mxu0
  %v613 = vadd.f32 0.0, %v612
  %v614 = vpop.f32.mrb[0].mxu0
  %v615 = vpop.f32.mrb[0].mxu0
  %v616 = vadd.f32 0.0, %v615
  %v617 = vpop.f32.mrb[0].mxu0
  %618 = vmatprep.mubr.bf16.mxu0 0
  %619 = vmatmul.mubr.bf16.gmra.mrb[0].mxu0 %v452
  %v620 = vpop.f32.mrb[0].mxu0
  %v621 = vadd.f32 0.0, %v620
  %v622 = vpop.f32.mrb[0].mxu0
  %v623 = vpop.f32.mrb[0].mxu0
  %v624 = vadd.f32 0.0, %v623
  %v625 = vpop.f32.mrb[0].mxu0
  %626 = vmatprep.mubr.bf16.mxu0 0
  %627 = vmatmul.mubr.bf16.gmra.mrb[0].mxu0 %v455
  %v628 = vpop.f32.mrb[0].mxu0
  %v629 = vadd.f32 0.0, %v628
  %v630 = vpop.f32.mrb[0].mxu0
  %v631 = vpop.f32.mrb[0].mxu0
  %v632 = vadd.f32 0.0, %v631
  %v633 = vpop.f32.mrb[0].mxu0
  %634 = vmatprep.mubr.bf16.mxu0 0
  %635 = vmatmul.mubr.bf16.gmra.mrb[0].mxu0 %v458
  %v636 = vpop.f32.mrb[0].mxu0
  %v637 = vadd.f32 0.0, %v636
  %v638 = vpop.f32.mrb[0].mxu0
  %v639 = vpop.f32.mrb[0].mxu0
  %v640 = vadd.f32 0.0, %v639
  %v641 = vpop.f32.mrb[0].mxu0
  %642 = vmatprep.mubr.bf16.mxu0 0
  %643 = vmatmul.mubr.bf16.gmra.mrb[0].mxu0 %v461
  %v644 = vpop.f32.mrb[0].mxu0
  %v645 = vadd.f32 0.0, %v644
  %v646 = vpop.f32.mrb[0].mxu0
  %v647 = vpop.f32.mrb[0].mxu0
  %v648 = vadd.f32 0.0, %v647
  %v649 = vpop.f32.mrb[0].mxu0
  %650 = vmatprep.mubr.bf16.mxu0 0
  %651 = vmatmul.mubr.bf16.gmra.mrb[0].mxu0 %v464
  %v652 = vpop.f32.mrb[0].mxu0
  %v653 = vadd.f32 0.0, %v652
  %v654 = vpop.f32.mrb[0].mxu0
  %v655 = vpop.f32.mrb[0].mxu0
  %v656 = vadd.f32 0.0, %v655
  %v657 = vpop.f32.mrb[0].mxu0
  %658 = vmatprep.mubr.bf16.mxu0 0
  %659 = vmatmul.mubr.bf16.gmra.mrb[0].mxu0 %v467
  %v660 = vpop.f32.mrb[0].mxu0
  %v661 = vadd.f32 0.0, %v660
  %v662 = vpop.f32.mrb[0].mxu0
  %v663 = vpop.f32.mrb[0].mxu0
  %v664 = vadd.f32 0.0, %v663
  %v665 = vpop.f32.mrb[0].mxu0
  %666 = vmatprep.mubr.bf16.mxu0 0
  %667 = vmatmul.mubr.bf16.gmra.mrb[0].mxu0 %v470
  %v668 = vpop.f32.mrb[0].mxu0
  %v669 = vadd.f32 0.0, %v668
  %v670 = vpop.f32.mrb[0].mxu0
  %v671 = vpop.f32.mrb[0].mxu0
  %v672 = vadd.f32 0.0, %v671
  %v673 = vpop.f32.mrb[0].mxu0
  %674 = vmatprep.mubr.bf16.mxu0 0
  %675 = vmatmul.mubr.bf16.gmra.mrb[0].mxu0 %v473
  %v676 = vpop.f32.mrb[0].mxu0
  %v677 = vadd.f32 0.0, %v676
  %v678 = vpop.f32.mrb[0].mxu0
  %v679 = vpop.f32.mrb[0].mxu0
  %v680 = vadd.f32 0.0, %v679
  %v681 = vpop.f32.mrb[0].mxu0
  %682 = vmatprep.mubr.bf16.mxu0 0
  %683 = vmatmul.mubr.bf16.gmra.mrb[0].mxu0 %v476
  %v684 = vpop.f32.mrb[0].mxu0
  %v685 = vadd.f32 0.0, %v684
  %v686 = vpop.f32.mrb[0].mxu0
  %v687 = vpop.f32.mrb[0].mxu0
  %v688 = vadd.f32 0.0, %v687
  %v689 = vpop.f32.mrb[0].mxu0
  %690 = vmatprep.mubr.bf16.mxu0 0
  %691 = vmatmul.mubr.bf16.gmra.mrb[0].mxu0 %v479
  %v692 = vpop.f32.mrb[0].mxu0
  %v693 = vadd.f32 0.0, %v692
  %v694 = vpop.f32.mrb[0].mxu0
  %v695 = vpop.f32.mrb[0].mxu0
  %v696 = vadd.f32 0.0, %v695
  %v697 = vpop.f32.mrb[0].mxu0
  %698 = vmatprep.mubr.bf16.mxu0 0
  %699 = vmatmul.mubr.bf16.gmra.mrb[0].mxu0 %v482
  %v700 = vpop.f32.mrb[0].mxu0
  %v701 = vadd.f32 0.0, %v700
  %v702 = vpop.f32.mrb[0].mxu0
  %v703 = vpop.f32.mrb[0].mxu0
  %v704 = vadd.f32 0.0, %v703
  %v705 = vpop.f32.mrb[0].mxu0
  %706 = vmatprep.mubr.bf16.mxu0 0
  %707 = vmatmul.mubr.bf16.gmra.mrb[0].mxu0 %v485
  %v708 = vpop.f32.mrb[0].mxu0
  %v709 = vadd.f32 0.0, %v708
  %v710 = vpop.f32.mrb[0].mxu0
  %v711 = vpop.f32.mrb[0].mxu0
  %v712 = vadd.f32 0.0, %v711
  %v713 = vpop.f32.mrb[0].mxu0
  %714 = vmatprep.mubr.bf16.mxu0 0
  %715 = vmatmul.mubr.bf16.gmra.mrb[0].mxu0 %v488
  %v716 = vpop.f32.mrb[0].mxu0
  %v717 = vadd.f32 0.0, %v716
  %v718 = vpop.f32.mrb[0].mxu0
  %v719 = vpop.f32.mrb[0].mxu0
  %v720 = vadd.f32 0.0, %v719
  %v721 = vpop.f32.mrb[0].mxu0
  %722 = vmatprep.mubr.bf16.mxu0 0
  %723 = vmatmul.mubr.bf16.gmra.mrb[0].mxu0 %v491
  %v724 = vpop.f32.mrb[0].mxu0
  %v725 = vadd.f32 0.0, %v724
  %v726 = vpop.f32.mrb[0].mxu0
  %v727 = vpop.f32.mrb[0].mxu0
  %v728 = vadd.f32 0.0, %v727
  %v729 = vpop.f32.mrb[0].mxu0
  %730 = vmatprep.mubr.bf16.mxu0 0
  %731 = vmatmul.mubr.bf16.gmra.mrb[0].mxu0 %v494
  %v732 = vpop.f32.mrb[0].mxu0
  %v733 = vadd.f32 0.0, %v732
  %v734 = vpop.f32.mrb[0].mxu0
  %v735 = vpop.f32.mrb[0].mxu0
  %v736 = vadd.f32 0.0, %v735
  %v737 = vpop.f32.mrb[0].mxu0
  %738 = vmatprep.mubr.bf16.mxu0 0
  %739 = vmatmul.mubr.bf16.gmra.mrb[0].mxu0 %v497
  %v740 = vpop.f32.mrb[0].mxu0
  %v741 = vadd.f32 0.0, %v740
  %v742 = vpop.f32.mrb[0].mxu0
  %v743 = vpop.f32.mrb[0].mxu0
  %v744 = vadd.f32 0.0, %v743
  %v745 = vpop.f32.mrb[0].mxu0
  %746 = vmatprep.mubr.bf16.mxu0 0
  %747 = vmatmul.mubr.bf16.gmra.mrb[0].mxu0 %v500
  %v748 = vpop.f32.mrb[0].mxu0
  %v749 = vadd.f32 0.0, %v748
  %v750 = vpop.f32.mrb[0].mxu0
  %v751 = vpop.f32.mrb[0].mxu0
  %v752 = vadd.f32 0.0, %v751
  %v753 = vpop.f32.mrb[0].mxu0
  %754 = vmatprep.mubr.bf16.mxu0 0
  %755 = vmatmul.mubr.bf16.gmra.mrb[0].mxu0 %v503
  %v756 = vpop.f32.mrb[0].mxu0
  %v757 = vadd.f32 0.0, %v756
  %v758 = vpop.f32.mrb[0].mxu0
  %v759 = vpop.f32.mrb[0].mxu0
  %v760 = vadd.f32 0.0, %v759
  %v761 = vpop.f32.mrb[0].mxu0
  %762 = vmatprep.mubr.bf16.mxu0 0
  %763 = vmatmul.mubr.bf16.gmra.mrb[0].mxu0 %v506
  %v764 = vpop.f32.mrb[0].mxu0
  %v765 = vadd.f32 0.0, %v764
  %v766 = vpop.f32.mrb[0].mxu0
  %v767 = vpop.f32.mrb[0].mxu0
  %v768 = vadd.f32 0.0, %v767
  %v769 = vpop.f32.mrb[0].mxu0
  %770 = vmatprep.mubr.bf16.mxu0 0
  %771 = vmatmul.mubr.bf16.gmra.mrb[0].mxu0 %v509
  %v772 = vpop.f32.mrb[0].mxu0
  %v773 = vadd.f32 0.0, %v772
  %v774 = vpop.f32.mrb[0].mxu0
  %v775 = vpop.f32.mrb[0].mxu0
  %v776 = vadd.f32 0.0, %v775
  %v777 = vpop.f32.mrb[0].mxu0
  %778 = vmatprep.mubr.bf16.mxu0 0
  %779 = vmatmul.mubr.bf16.gmra.mrb[0].mxu0 %v512
  %v780 = vpop.f32.mrb[0].mxu0
  %v781 = vadd.f32 0.0, %v780
  %v782 = vpop.f32.mrb[0].mxu0
  %v783 = vpop.f32.mrb[0].mxu0
  %v784 = vadd.f32 0.0, %v783
  %v785 = vpop.f32.mrb[0].mxu0
  %786 = vmatprep.mubr.bf16.mxu0 0
  %787 = vmatmul.mubr.bf16.gmra.mrb[0].mxu0 %v515
  %v788 = vpop.f32.mrb[0].mxu0
  %v789 = vadd.f32 0.0, %v788
  %v790 = vpop.f32.mrb[0].mxu0
  %v791 = vpop.f32.mrb[0].mxu0
  %v792 = vadd.f32 0.0, %v791
  %v793 = vpop.f32.mrb[0].mxu0
  %794 = vmatprep.mubr.bf16.mxu0 0
  %795 = vmatmul.mubr.bf16.gmra.mrb[0].mxu0 %v518
  %v796 = vpop.f32.mrb[0].mxu0
  %v797 = vadd.f32 0.0, %v796
  %v798 = vpop.f32.mrb[0].mxu0
  %v799 = vpop.f32.mrb[0].mxu0
  %v800 = vadd.f32 0.0, %v799
  %v801 = vpop.f32.mrb[0].mxu0
  %802 = vmatprep.mubr.bf16.mxu0 0
  %803 = vmatmul.mubr.bf16.gmra.mrb[0].mxu0 %v521
  %v804 = vpop.f32.mrb[0].mxu0
  %v805 = vadd.f32 0.0, %v804
  %v806 = vpop.f32.mrb[0].mxu0
  %v807 = vpop.f32.mrb[0].mxu0
  %v808 = vadd.f32 0.0, %v807
  %v809 = vpop.f32.mrb[0].mxu0
  %810 = vmatprep.mubr.bf16.mxu0 0
  %811 = vmatmul.mubr.bf16.gmra.mrb[0].mxu0 %v524
  %v812 = vpop.f32.mrb[0].mxu0
  %v813 = vadd.f32 0.0, %v812
  %v814 = vpop.f32.mrb[0].mxu0
  %v815 = vpop.f32.mrb[0].mxu0
  %v816 = vadd.f32 0.0, %v815
  %v817 = vpop.f32.mrb[0].mxu0
  %818 = vdwg.mxu0
  %v820 = vsel %vm25, %v299, 0
  %v823 = vsel %vm25, %v300, 0
  %v826 = vsel %vm25, %v301, 0
  %v829 = vsel %vm25, %v302, 0
  %v832 = vsel %vm25, %v303, 0
  %v835 = vsel %vm25, %v304, 0
  %v838 = vsel %vm25, %v305, 0
  %v841 = vsel %vm25, %v306, 0
  %v844 = vsel %vm25, %v307, 0
  %v847 = vsel %vm25, %v308, 0
  %v850 = vsel %vm25, %v309, 0
  %v853 = vsel %vm25, %v310, 0
  %v856 = vsel %vm25, %v311, 0
  %v859 = vsel %vm25, %v312, 0
  %v862 = vsel %vm25, %v313, 0
  %v865 = vsel %vm25, %v314, 0
  %v868 = vsel %vm25, %v315, 0
  %v871 = vsel %vm25, %v316, 0
  %v874 = vsel %vm25, %v317, 0
  %v877 = vsel %vm25, %v318, 0
  %v880 = vsel %vm25, %v319, 0
  %v883 = vsel %vm25, %v320, 0
  %v886 = vsel %vm25, %v321, 0
  %v889 = vsel %vm25, %v322, 0
  %v892 = vsel %vm25, %v323, 0
  %v895 = vsel %vm25, %v324, 0
  %v898 = vsel %vm25, %v325, 0
  %v901 = vsel %vm25, %v326, 0
  %v904 = vsel %vm25, %v327, 0
  %v907 = vsel %vm25, %v328, 0
  %v910 = vsel %vm25, %v329, 0
  %v913 = vsel %vm25, %v330, 0
  %v916 = vsel %vm526, %v331, 0
  %918 = vmatprep.subr.bf16.mxu0 0
  %919 = vmatpush1.bf16.msra.mxu0 %v916
  %920 = vmatprep.subr.bf16.mxu0 0
  %921 = vmatpush1.bf16.msra.mxu0 0
  %922 = vmatprep.subr.bf16.mxu0 0
  %923 = vmatpush1.bf16.msra.mxu0 0
  %924 = vmatprep.subr.bf16.mxu0 0
  %925 = vmatpush1.bf16.msra.mxu0 0
  %926 = vmatprep.subr.bf16.mxu0 0
  %927 = vmatpush1.bf16.msra.mxu0 0
  %928 = vmatprep.subr.bf16.mxu0 0
  %929 = vmatpush1.bf16.msra.mxu0 0
  %930 = vmatprep.subr.bf16.mxu0 0
  %931 = vmatpush1.bf16.msra.mxu0 0
  %932 = vmatprep.subr.bf16.mxu0 0
  %933 = vmatpush1.bf16.msra.mxu0 0
  %934 = vmatprep.subr.bf16.mxu0 0
  %935 = vmatpush1.bf16.msra.mxu0 0
  %936 = vmatprep.subr.bf16.mxu0 0
  %937 = vmatpush1.bf16.msra.mxu0 0
  %938 = vmatprep.subr.bf16.mxu0 0
  %939 = vmatpush1.bf16.msra.mxu0 0
  %940 = vmatprep.subr.bf16.mxu0 0
  %941 = vmatpush1.bf16.msra.mxu0 0
  %942 = vmatprep.subr.bf16.mxu0 0
  %943 = vmatpush1.bf16.msra.mxu0 0
  %944 = vmatprep.subr.bf16.mxu0 0
  %945 = vmatpush1.bf16.msra.mxu0 0
  %946 = vmatprep.subr.bf16.mxu0 0
  %947 = vmatpush1.bf16.msra.mxu0 0
  %948 = vmatprep.subr.bf16.mxu0 0
  %949 = vmatpush1.bf16.msra.mxu0 0
  %950 = vmatprep.mubr.bf16.mxu0 0
  %951 = vmatmul.mubr.bf16.gmra.mrb[0].mxu0 %v820
  %v952 = vpop.f32.mrb[0].mxu0
  %v953 = vadd.f32 %v565, %v952
  %v954 = vpop.f32.mrb[0].mxu0
  %v955 = vpop.f32.mrb[0].mxu0
  %v956 = vadd.f32 %v568, %v955
  %v957 = vpop.f32.mrb[0].mxu0
  %958 = vmatprep.mubr.bf16.mxu0 0
  %959 = vmatmul.mubr.bf16.gmra.mrb[0].mxu0 %v823
  %v960 = vpop.f32.mrb[0].mxu0
  %v961 = vadd.f32 %v573, %v960
  %v962 = vpop.f32.mrb[0].mxu0
  %v963 = vpop.f32.mrb[0].mxu0
  %v964 = vadd.f32 %v576, %v963
  %v965 = vpop.f32.mrb[0].mxu0
  %966 = vmatprep.mubr.bf16.mxu0 0
  %967 = vmatmul.mubr.bf16.gmra.mrb[0].mxu0 %v826
  %v968 = vpop.f32.mrb[0].mxu0
  %v969 = vadd.f32 %v581, %v968
  %v970 = vpop.f32.mrb[0].mxu0
  %v971 = vpop.f32.mrb[0].mxu0
  %v972 = vadd.f32 %v584, %v971
  %v973 = vpop.f32.mrb[0].mxu0
  %974 = vmatprep.mubr.bf16.mxu0 0
  %975 = vmatmul.mubr.bf16.gmra.mrb[0].mxu0 %v829
  %v976 = vpop.f32.mrb[0].mxu0
  %v977 = vadd.f32 %v589, %v976
  %v978 = vpop.f32.mrb[0].mxu0
  %v979 = vpop.f32.mrb[0].mxu0
  %v980 = vadd.f32 %v592, %v979
  %v981 = vpop.f32.mrb[0].mxu0
  %982 = vmatprep.mubr.bf16.mxu0 0
  %983 = vmatmul.mubr.bf16.gmra.mrb[0].mxu0 %v832
  %v984 = vpop.f32.mrb[0].mxu0
  %v985 = vadd.f32 %v597, %v984
  %v986 = vpop.f32.mrb[0].mxu0
  %v987 = vpop.f32.mrb[0].mxu0
  %v988 = vadd.f32 %v600, %v987
  %v989 = vpop.f32.mrb[0].mxu0
  %990 = vmatprep.mubr.bf16.mxu0 0
  %991 = vmatmul.mubr.bf16.gmra.mrb[0].mxu0 %v835
  %v992 = vpop.f32.mrb[0].mxu0
  %v993 = vadd.f32 %v605, %v992
  %v994 = vpop.f32.mrb[0].mxu0
  %v995 = vpop.f32.mrb[0].mxu0
  %v996 = vadd.f32 %v608, %v995
  %v997 = vpop.f32.mrb[0].mxu0
  %998 = vmatprep.mubr.bf16.mxu0 0
  %999 = vmatmul.mubr.bf16.gmra.mrb[0].mxu0 %v838
  %v1000 = vpop.f32.mrb[0].mxu0
  %v1001 = vadd.f32 %v613, %v1000
  %v1002 = vpop.f32.mrb[0].mxu0
  %v1003 = vpop.f32.mrb[0].mxu0
  %v1004 = vadd.f32 %v616, %v1003
  %v1005 = vpop.f32.mrb[0].mxu0
  %1006 = vmatprep.mubr.bf16.mxu0 0
  %1007 = vmatmul.mubr.bf16.gmra.mrb[0].mxu0 %v841
  %v1008 = vpop.f32.mrb[0].mxu0
  %v1009 = vadd.f32 %v621, %v1008
  %v1010 = vpop.f32.mrb[0].mxu0
  %v1011 = vpop.f32.mrb[0].mxu0
  %v1012 = vadd.f32 %v624, %v1011
  %v1013 = vpop.f32.mrb[0].mxu0
  %1014 = vmatprep.mubr.bf16.mxu0 0
  %1015 = vmatmul.mubr.bf16.gmra.mrb[0].mxu0 %v844
  %v1016 = vpop.f32.mrb[0].mxu0
  %v1017 = vadd.f32 %v629, %v1016
  %v1018 = vpop.f32.mrb[0].mxu0
  %v1019 = vpop.f32.mrb[0].mxu0
  %v1020 = vadd.f32 %v632, %v1019
  %v1021 = vpop.f32.mrb[0].mxu0
  %1022 = vmatprep.mubr.bf16.mxu0 0
  %1023 = vmatmul.mubr.bf16.gmra.mrb[0].mxu0 %v847
  %v1024 = vpop.f32.mrb[0].mxu0
  %v1025 = vadd.f32 %v637, %v1024
  %v1026 = vpop.f32.mrb[0].mxu0
  %v1027 = vpop.f32.mrb[0].mxu0
  %v1028 = vadd.f32 %v640, %v1027
  %v1029 = vpop.f32.mrb[0].mxu0
  %1030 = vmatprep.mubr.bf16.mxu0 0
  %1031 = vmatmul.mubr.bf16.gmra.mrb[0].mxu0 %v850
  %v1032 = vpop.f32.mrb[0].mxu0
  %v1033 = vadd.f32 %v645, %v1032
  %v1034 = vpop.f32.mrb[0].mxu0
  %v1035 = vpop.f32.mrb[0].mxu0
  %v1036 = vadd.f32 %v648, %v1035
  %v1037 = vpop.f32.mrb[0].mxu0
  %1038 = vmatprep.mubr.bf16.mxu0 0
  %1039 = vmatmul.mubr.bf16.gmra.mrb[0].mxu0 %v853
  %v1040 = vpop.f32.mrb[0].mxu0
  %v1041 = vadd.f32 %v653, %v1040
  %v1042 = vpop.f32.mrb[0].mxu0
  %v1043 = vpop.f32.mrb[0].mxu0
  %v1044 = vadd.f32 %v656, %v1043
  %v1045 = vpop.f32.mrb[0].mxu0
  %1046 = vmatprep.mubr.bf16.mxu0 0
  %1047 = vmatmul.mubr.bf16.gmra.mrb[0].mxu0 %v856
  %v1048 = vpop.f32.mrb[0].mxu0
  %v1049 = vadd.f32 %v661, %v1048
  %v1050 = vpop.f32.mrb[0].mxu0
  %v1051 = vpop.f32.mrb[0].mxu0
  %v1052 = vadd.f32 %v664, %v1051
  %v1053 = vpop.f32.mrb[0].mxu0
  %1054 = vmatprep.mubr.bf16.mxu0 0
  %1055 = vmatmul.mubr.bf16.gmra.mrb[0].mxu0 %v859
  %v1056 = vpop.f32.mrb[0].mxu0
  %v1057 = vadd.f32 %v669, %v1056
  %v1058 = vpop.f32.mrb[0].mxu0
  %v1059 = vpop.f32.mrb[0].mxu0
  %v1060 = vadd.f32 %v672, %v1059
  %v1061 = vpop.f32.mrb[0].mxu0
  %1062 = vmatprep.mubr.bf16.mxu0 0
  %1063 = vmatmul.mubr.bf16.gmra.mrb[0].mxu0 %v862
  %v1064 = vpop.f32.mrb[0].mxu0
  %v1065 = vadd.f32 %v677, %v1064
  %v1066 = vpop.f32.mrb[0].mxu0
  %v1067 = vpop.f32.mrb[0].mxu0
  %v1068 = vadd.f32 %v680, %v1067
  %v1069 = vpop.f32.mrb[0].mxu0
  %1070 = vmatprep.mubr.bf16.mxu0 0
  %1071 = vmatmul.mubr.bf16.gmra.mrb[0].mxu0 %v865
  %v1072 = vpop.f32.mrb[0].mxu0
  %v1073 = vadd.f32 %v685, %v1072
  %v1074 = vpop.f32.mrb[0].mxu0
  %v1075 = vpop.f32.mrb[0].mxu0
  %v1076 = vadd.f32 %v688, %v1075
  %v1077 = vpop.f32.mrb[0].mxu0
  %1078 = vmatprep.mubr.bf16.mxu0 0
  %1079 = vmatmul.mubr.bf16.gmra.mrb[0].mxu0 %v868
  %v1080 = vpop.f32.mrb[0].mxu0
  %v1081 = vadd.f32 %v693, %v1080
  %v1082 = vpop.f32.mrb[0].mxu0
  %v1083 = vpop.f32.mrb[0].mxu0
  %v1084 = vadd.f32 %v696, %v1083
  %v1085 = vpop.f32.mrb[0].mxu0
  %1086 = vmatprep.mubr.bf16.mxu0 0
  %1087 = vmatmul.mubr.bf16.gmra.mrb[0].mxu0 %v871
  %v1088 = vpop.f32.mrb[0].mxu0
  %v1089 = vadd.f32 %v701, %v1088
  %v1090 = vpop.f32.mrb[0].mxu0
  %v1091 = vpop.f32.mrb[0].mxu0
  %v1092 = vadd.f32 %v704, %v1091
  %v1093 = vpop.f32.mrb[0].mxu0
  %1094 = vmatprep.mubr.bf16.mxu0 0
  %1095 = vmatmul.mubr.bf16.gmra.mrb[0].mxu0 %v874
  %v1096 = vpop.f32.mrb[0].mxu0
  %v1097 = vadd.f32 %v709, %v1096
  %v1098 = vpop.f32.mrb[0].mxu0
  %v1099 = vpop.f32.mrb[0].mxu0
  %v1100 = vadd.f32 %v712, %v1099
  %v1101 = vpop.f32.mrb[0].mxu0
  %1102 = vmatprep.mubr.bf16.mxu0 0
  %1103 = vmatmul.mubr.bf16.gmra.mrb[0].mxu0 %v877
  %v1104 = vpop.f32.mrb[0].mxu0
  %v1105 = vadd.f32 %v717, %v1104
  %v1106 = vpop.f32.mrb[0].mxu0
  %v1107 = vpop.f32.mrb[0].mxu0
  %v1108 = vadd.f32 %v720, %v1107
  %v1109 = vpop.f32.mrb[0].mxu0
  %1110 = vmatprep.mubr.bf16.mxu0 0
  %1111 = vmatmul.mubr.bf16.gmra.mrb[0].mxu0 %v880
  %v1112 = vpop.f32.mrb[0].mxu0
  %v1113 = vadd.f32 %v725, %v1112
  %v1114 = vpop.f32.mrb[0].mxu0
  %v1115 = vpop.f32.mrb[0].mxu0
  %v1116 = vadd.f32 %v728, %v1115
  %v1117 = vpop.f32.mrb[0].mxu0
  %1118 = vmatprep.mubr.bf16.mxu0 0
  %1119 = vmatmul.mubr.bf16.gmra.mrb[0].mxu0 %v883
  %v1120 = vpop.f32.mrb[0].mxu0
  %v1121 = vadd.f32 %v733, %v1120
  %v1122 = vpop.f32.mrb[0].mxu0
  %v1123 = vpop.f32.mrb[0].mxu0
  %v1124 = vadd.f32 %v736, %v1123
  %v1125 = vpop.f32.mrb[0].mxu0
  %1126 = vmatprep.mubr.bf16.mxu0 0
  %1127 = vmatmul.mubr.bf16.gmra.mrb[0].mxu0 %v886
  %v1128 = vpop.f32.mrb[0].mxu0
  %v1129 = vadd.f32 %v741, %v1128
  %v1130 = vpop.f32.mrb[0].mxu0
  %v1131 = vpop.f32.mrb[0].mxu0
  %v1132 = vadd.f32 %v744, %v1131
  %v1133 = vpop.f32.mrb[0].mxu0
  %1134 = vmatprep.mubr.bf16.mxu0 0
  %1135 = vmatmul.mubr.bf16.gmra.mrb[0].mxu0 %v889
  %v1136 = vpop.f32.mrb[0].mxu0
  %v1137 = vadd.f32 %v749, %v1136
  %v1138 = vpop.f32.mrb[0].mxu0
  %v1139 = vpop.f32.mrb[0].mxu0
  %v1140 = vadd.f32 %v752, %v1139
  %v1141 = vpop.f32.mrb[0].mxu0
  %1142 = vmatprep.mubr.bf16.mxu0 0
  %1143 = vmatmul.mubr.bf16.gmra.mrb[0].mxu0 %v892
  %v1144 = vpop.f32.mrb[0].mxu0
  %v1145 = vadd.f32 %v757, %v1144
  %v1146 = vpop.f32.mrb[0].mxu0
  %v1147 = vpop.f32.mrb[0].mxu0
  %v1148 = vadd.f32 %v760, %v1147
  %v1149 = vpop.f32.mrb[0].mxu0
  %1150 = vmatprep.mubr.bf16.mxu0 0
  %1151 = vmatmul.mubr.bf16.gmra.mrb[0].mxu0 %v895
  %v1152 = vpop.f32.mrb[0].mxu0
  %v1153 = vadd.f32 %v765, %v1152
  %v1154 = vpop.f32.mrb[0].mxu0
  %v1155 = vpop.f32.mrb[0].mxu0
  %v1156 = vadd.f32 %v768, %v1155
  %v1157 = vpop.f32.mrb[0].mxu0
  %1158 = vmatprep.mubr.bf16.mxu0 0
  %1159 = vmatmul.mubr.bf16.gmra.mrb[0].mxu0 %v898
  %v1160 = vpop.f32.mrb[0].mxu0
  %v1161 = vadd.f32 %v773, %v1160
  %v1162 = vpop.f32.mrb[0].mxu0
  %v1163 = vpop.f32.mrb[0].mxu0
  %v1164 = vadd.f32 %v776, %v1163
  %v1165 = vpop.f32.mrb[0].mxu0
  %1166 = vmatprep.mubr.bf16.mxu0 0
  %1167 = vmatmul.mubr.bf16.gmra.mrb[0].mxu0 %v901
  %v1168 = vpop.f32.mrb[0].mxu0
  %v1169 = vadd.f32 %v781, %v1168
  %v1170 = vpop.f32.mrb[0].mxu0
  %v1171 = vpop.f32.mrb[0].mxu0
  %v1172 = vadd.f32 %v784, %v1171
  %v1173 = vpop.f32.mrb[0].mxu0
  %1174 = vmatprep.mubr.bf16.mxu0 0
  %1175 = vmatmul.mubr.bf16.gmra.mrb[0].mxu0 %v904
  %v1176 = vpop.f32.mrb[0].mxu0
  %v1177 = vadd.f32 %v789, %v1176
  %v1178 = vpop.f32.mrb[0].mxu0
  %v1179 = vpop.f32.mrb[0].mxu0
  %v1180 = vadd.f32 %v792, %v1179
  %v1181 = vpop.f32.mrb[0].mxu0
  %1182 = vmatprep.mubr.bf16.mxu0 0
  %1183 = vmatmul.mubr.bf16.gmra.mrb[0].mxu0 %v907
  %v1184 = vpop.f32.mrb[0].mxu0
  %v1185 = vadd.f32 %v797, %v1184
  %v1186 = vpop.f32.mrb[0].mxu0
  %v1187 = vpop.f32.mrb[0].mxu0
  %v1188 = vadd.f32 %v800, %v1187
  %v1189 = vpop.f32.mrb[0].mxu0
  %1190 = vmatprep.mubr.bf16.mxu0 0
  %1191 = vmatmul.mubr.bf16.gmra.mrb[0].mxu0 %v910
  %v1192 = vpop.f32.mrb[0].mxu0
  %v1193 = vadd.f32 %v805, %v1192
  %v1194 = vpop.f32.mrb[0].mxu0
  %v1195 = vpop.f32.mrb[0].mxu0
  %v1196 = vadd.f32 %v808, %v1195
  %v1197 = vpop.f32.mrb[0].mxu0
  %1198 = vmatprep.mubr.bf16.mxu0 0
  %1199 = vmatmul.mubr.bf16.gmra.mrb[0].mxu0 %v913
  %v1200 = vpop.f32.mrb[0].mxu0
  %v1201 = vadd.f32 %v813, %v1200
  %v1202 = vpop.f32.mrb[0].mxu0
  %v1203 = vpop.f32.mrb[0].mxu0
  %v1204 = vadd.f32 %v816, %v1203
  %v1205 = vpop.f32.mrb[0].mxu0
  %1206 = vdwg.mxu0
  %v1207 = vld [vmem:[#allocation2 + $0x2] sm:$0xff]
  %v1208 = vld [vmem:[#allocation2 + $0xa] sm:$0xff]
  %v1209 = vld [vmem:[#allocation2 + $0x1a] sm:$0xff]
  %v1210 = vld [vmem:[#allocation2 + $0x22] sm:$0xff]
  %v1211 = vld [vmem:[#allocation2 + $0x32] sm:$0xff]
  %v1212 = vld [vmem:[#allocation2 + $0x3a] sm:$0xff]
  %v1213 = vld [vmem:[#allocation2 + $0x4a] sm:$0xff]
  %v1214 = vld [vmem:[#allocation2 + $0x52] sm:$0xff]
  %v1215 = vld [vmem:[#allocation2 + $0x62] sm:$0xff]
  %v1216 = vld [vmem:[#allocation2 + $0x6a] sm:$0xff]
  %v1217 = vld [vmem:[#allocation2 + $0x7a] sm:$0xff]
  %v1218 = vld [vmem:[#allocation2 + $0x82] sm:$0xff]
  %v1219 = vld [vmem:[#allocation2 + $0x92] sm:$0xff]
  %v1220 = vld [vmem:[#allocation2 + $0x9a] sm:$0xff]
  %v1221 = vld [vmem:[#allocation2 + $0xaa] sm:$0xff]
  %v1222 = vld [vmem:[#allocation2 + $0xb2] sm:$0xff]
  %v1223 = vld [vmem:[#allocation2 + $0xc2] sm:$0xff]
  %v1224 = vld [vmem:[#allocation2 + $0xca] sm:$0xff]
  %v1225 = vld [vmem:[#allocation2 + $0xda] sm:$0xff]
  %v1226 = vld [vmem:[#allocation2 + $0xe2] sm:$0xff]
  %v1227 = vld [vmem:[#allocation2 + $0xf2] sm:$0xff]
  %v1228 = vld [vmem:[#allocation2 + $0xfa] sm:$0xff]
  %v1229 = vld [vmem:[#allocation2 + $0x10a] sm:$0xff]
  %v1230 = vld [vmem:[#allocation2 + $0x112] sm:$0xff]
  %v1231 = vld [vmem:[#allocation2 + $0x122] sm:$0xff]
  %v1232 = vld [vmem:[#allocation2 + $0x12a] sm:$0xff]
  %v1233 = vld [vmem:[#allocation2 + $0x13a] sm:$0xff]
  %v1234 = vld [vmem:[#allocation2 + $0x142] sm:$0xff]
  %v1235 = vld [vmem:[#allocation2 + $0x152] sm:$0xff]
  %v1236 = vld [vmem:[#allocation2 + $0x15a] sm:$0xff]
  %v1237 = vld [vmem:[#allocation2 + $0x16a] sm:$0xff]
  %v1238 = vld [vmem:[#allocation2 + $0x172] sm:$0xff]
  %v1239 = vld [vmem:[#allocation2 + $0x1b2] sm:$0xff]
  %v1240 = vld [vmem:[#allocation2 + $0x1ba] sm:$0xff]
  %v1241 = vld [vmem:[#allocation2 + $0x1ca] sm:$0xff]
  %v1242 = vld [vmem:[#allocation2 + $0x1d2] sm:$0xff]
  %v1243 = vld [vmem:[#allocation2 + $0x1e2] sm:$0xff]
  %v1244 = vld [vmem:[#allocation2 + $0x1ea] sm:$0xff]
  %v1245 = vld [vmem:[#allocation2 + $0x1fa] sm:$0xff]
  %v1246 = vld [vmem:[#allocation2 + $0x202] sm:$0xff]
  %v1247 = vld [vmem:[#allocation2 + $0x212] sm:$0xff]
  %v1248 = vld [vmem:[#allocation2 + $0x21a] sm:$0xff]
  %v1249 = vld [vmem:[#allocation2 + $0x22a] sm:$0xff]
  %v1250 = vld [vmem:[#allocation2 + $0x232] sm:$0xff]
  %v1251 = vld [vmem:[#allocation2 + $0x242] sm:$0xff]
  %v1252 = vld [vmem:[#allocation2 + $0x24a] sm:$0xff]
  %v1253 = vld [vmem:[#allocation2 + $0x25a] sm:$0xff]
  %v1254 = vld [vmem:[#allocation2 + $0x262] sm:$0xff]
  %v1255 = vld [vmem:[#allocation2 + $0x272] sm:$0xff]
  %v1256 = vld [vmem:[#allocation2 + $0x27a] sm:$0xff]
  %v1257 = vld [vmem:[#allocation2 + $0x28a] sm:$0xff]
  %v1258 = vld [vmem:[#allocation2 + $0x292] sm:$0xff]
  %v1259 = vld [vmem:[#allocation2 + $0x2a2] sm:$0xff]
  %v1260 = vld [vmem:[#allocation2 + $0x2aa] sm:$0xff]
  %v1261 = vld [vmem:[#allocation2 + $0x2ba] sm:$0xff]
  %v1262 = vld [vmem:[#allocation2 + $0x2c2] sm:$0xff]
  %v1263 = vld [vmem:[#allocation2 + $0x2d2] sm:$0xff]
  %v1264 = vld [vmem:[#allocation2 + $0x2da] sm:$0xff]
  %v1265 = vld [vmem:[#allocation2 + $0x2ea] sm:$0xff]
  %v1266 = vld [vmem:[#allocation2 + $0x2f2] sm:$0xff]
  %v1267 = vld [vmem:[#allocation2 + $0x302] sm:$0xff]
  %v1268 = vld [vmem:[#allocation2 + $0x30a] sm:$0xff]
  %v1269 = vld [vmem:[#allocation2 + $0x31a] sm:$0xff]
  %v1270 = vld [vmem:[#allocation2 + $0x322] sm:$0xff]
  %v1271 = vpack.c.bf16 %v1208, %v1207
  %v1272 = vpack.c.bf16 %v1210, %v1209
  %v1273 = vpack.c.bf16 %v1212, %v1211
  %v1274 = vpack.c.bf16 %v1214, %v1213
  %v1275 = vpack.c.bf16 %v1216, %v1215
  %v1276 = vpack.c.bf16 %v1218, %v1217
  %v1277 = vpack.c.bf16 %v1220, %v1219
  %v1278 = vpack.c.bf16 %v1222, %v1221
  %v1279 = vpack.c.bf16 %v1224, %v1223
  %v1280 = vpack.c.bf16 %v1226, %v1225
  %v1281 = vpack.c.bf16 %v1228, %v1227
  %v1282 = vpack.c.bf16 %v1230, %v1229
  %v1283 = vpack.c.bf16 %v1232, %v1231
  %v1284 = vpack.c.bf16 %v1234, %v1233
  %v1285 = vpack.c.bf16 %v1236, %v1235
  %v1286 = vpack.c.bf16 %v1238, %v1237
  %v1287 = vpack.c.bf16 %v1240, %v1239
  %v1288 = vpack.c.bf16 %v1242, %v1241
  %v1289 = vpack.c.bf16 %v1244, %v1243
  %v1290 = vpack.c.bf16 %v1246, %v1245
  %v1291 = vpack.c.bf16 %v1248, %v1247
  %v1292 = vpack.c.bf16 %v1250, %v1249
  %v1293 = vpack.c.bf16 %v1252, %v1251
  %v1294 = vpack.c.bf16 %v1254, %v1253
  %v1295 = vpack.c.bf16 %v1256, %v1255
  %v1296 = vpack.c.bf16 %v1258, %v1257
  %v1297 = vpack.c.bf16 %v1260, %v1259
  %v1298 = vpack.c.bf16 %v1262, %v1261
  %v1299 = vpack.c.bf16 %v1264, %v1263
  %v1300 = vpack.c.bf16 %v1266, %v1265
  %v1301 = vpack.c.bf16 %v1268, %v1267
  %v1302 = vpack.c.bf16 %v1270, %v1269
  %s1303 = scalar_lea.vmem %s1, 4
  %v1304 = vld [vmem:[%s1303] sm:$0x3]
  %v1306 = vsel %vm25, %v1271, 0
  %v1309 = vsel %vm25, %v1272, 0
  %v1312 = vsel %vm25, %v1273, 0
  %v1315 = vsel %vm25, %v1274, 0
  %v1318 = vsel %vm25, %v1275, 0
  %v1321 = vsel %vm25, %v1276, 0
  %v1324 = vsel %vm25, %v1277, 0
  %v1327 = vsel %vm25, %v1278, 0
  %v1330 = vsel %vm25, %v1279, 0
  %v1333 = vsel %vm25, %v1280, 0
  %v1336 = vsel %vm25, %v1281, 0
  %v1339 = vsel %vm25, %v1282, 0
  %v1342 = vsel %vm25, %v1283, 0
  %v1345 = vsel %vm25, %v1284, 0
  %v1348 = vsel %vm25, %v1285, 0
  %v1351 = vsel %vm25, %v1286, 0
  %v1354 = vsel %vm25, %v1287, 0
  %v1357 = vsel %vm25, %v1288, 0
  %v1360 = vsel %vm25, %v1289, 0
  %v1363 = vsel %vm25, %v1290, 0
  %v1366 = vsel %vm25, %v1291, 0
  %v1369 = vsel %vm25, %v1292, 0
  %v1372 = vsel %vm25, %v1293, 0
  %v1375 = vsel %vm25, %v1294, 0
  %v1378 = vsel %vm25, %v1295, 0
  %v1381 = vsel %vm25, %v1296, 0
  %v1384 = vsel %vm25, %v1297, 0
  %v1387 = vsel %vm25, %v1298, 0
  %v1390 = vsel %vm25, %v1299, 0
  %v1393 = vsel %vm25, %v1300, 0
  %v1396 = vsel %vm25, %v1301, 0
  %v1399 = vsel %vm25, %v1302, 0
  %v1402 = vsel %vm526, %v1304, 0
  %1404 = vmatprep.subr.bf16.mxu0 0
  %1405 = vmatpush1.bf16.msra.mxu0 %v1402
  %1406 = vmatprep.subr.bf16.mxu0 0
  %1407 = vmatpush1.bf16.msra.mxu0 0
  %1408 = vmatprep.subr.bf16.mxu0 0
  %1409 = vmatpush1.bf16.msra.mxu0 0
  %1410 = vmatprep.subr.bf16.mxu0 0
  %1411 = vmatpush1.bf16.msra.mxu0 0
  %1412 = vmatprep.subr.bf16.mxu0 0
  %1413 = vmatpush1.bf16.msra.mxu0 0
  %1414 = vmatprep.subr.bf16.mxu0 0
  %1415 = vmatpush1.bf16.msra.mxu0 0
  %1416 = vmatprep.subr.bf16.mxu0 0
  %1417 = vmatpush1.bf16.msra.mxu0 0
  %1418 = vmatprep.subr.bf16.mxu0 0
  %1419 = vmatpush1.bf16.msra.mxu0 0
  %1420 = vmatprep.subr.bf16.mxu0 0
  %1421 = vmatpush1.bf16.msra.mxu0 0
  %1422 = vmatprep.subr.bf16.mxu0 0
  %1423 = vmatpush1.bf16.msra.mxu0 0
  %1424 = vmatprep.subr.bf16.mxu0 0
  %1425 = vmatpush1.bf16.msra.mxu0 0
  %1426 = vmatprep.subr.bf16.mxu0 0
  %1427 = vmatpush1.bf16.msra.mxu0 0
  %1428 = vmatprep.subr.bf16.mxu0 0
  %1429 = vmatpush1.bf16.msra.mxu0 0
  %1430 = vmatprep.subr.bf16.mxu0 0
  %1431 = vmatpush1.bf16.msra.mxu0 0
  %1432 = vmatprep.subr.bf16.mxu0 0
  %1433 = vmatpush1.bf16.msra.mxu0 0
  %1434 = vmatprep.subr.bf16.mxu0 0
  %1435 = vmatpush1.bf16.msra.mxu0 0
  %1436 = vmatprep.mubr.bf16.mxu0 0
  %1437 = vmatmul.mubr.bf16.gmra.mrb[0].mxu0 %v1306
  %v1438 = vpop.f32.mrb[0].mxu0
  %v1439 = vadd.f32 0.0, %v1438
  %v1440 = vpop.f32.mrb[0].mxu0
  %v1441 = vpop.f32.mrb[0].mxu0
  %v1442 = vadd.f32 0.0, %v1441
  %v1443 = vpop.f32.mrb[0].mxu0
  %1444 = vmatprep.mubr.bf16.mxu0 0
  %1445 = vmatmul.mubr.bf16.gmra.mrb[0].mxu0 %v1309
  %v1446 = vpop.f32.mrb[0].mxu0
  %v1447 = vadd.f32 0.0, %v1446
  %v1448 = vpop.f32.mrb[0].mxu0
  %v1449 = vpop.f32.mrb[0].mxu0
  %v1450 = vadd.f32 0.0, %v1449
  %v1451 = vpop.f32.mrb[0].mxu0
  %1452 = vmatprep.mubr.bf16.mxu0 0
  %1453 = vmatmul.mubr.bf16.gmra.mrb[0].mxu0 %v1312
  %v1454 = vpop.f32.mrb[0].mxu0
  %v1455 = vadd.f32 0.0, %v1454
  %v1456 = vpop.f32.mrb[0].mxu0
  %v1457 = vpop.f32.mrb[0].mxu0
  %v1458 = vadd.f32 0.0, %v1457
  %v1459 = vpop.f32.mrb[0].mxu0
  %1460 = vmatprep.mubr.bf16.mxu0 0
  %1461 = vmatmul.mubr.bf16.gmra.mrb[0].mxu0 %v1315
  %v1462 = vpop.f32.mrb[0].mxu0
  %v1463 = vadd.f32 0.0, %v1462
  %v1464 = vpop.f32.mrb[0].mxu0
  %v1465 = vpop.f32.mrb[0].mxu0
  %v1466 = vadd.f32 0.0, %v1465
  %v1467 = vpop.f32.mrb[0].mxu0
  %1468 = vmatprep.mubr.bf16.mxu0 0
  %1469 = vmatmul.mubr.bf16.gmra.mrb[0].mxu0 %v1318
  %v1470 = vpop.f32.mrb[0].mxu0
  %v1471 = vadd.f32 0.0, %v1470
  %v1472 = vpop.f32.mrb[0].mxu0
  %v1473 = vpop.f32.mrb[0].mxu0
  %v1474 = vadd.f32 0.0, %v1473
  %v1475 = vpop.f32.mrb[0].mxu0
  %1476 = vmatprep.mubr.bf16.mxu0 0
  %1477 = vmatmul.mubr.bf16.gmra.mrb[0].mxu0 %v1321
  %v1478 = vpop.f32.mrb[0].mxu0
  %v1479 = vadd.f32 0.0, %v1478
  %v1480 = vpop.f32.mrb[0].mxu0
  %v1481 = vpop.f32.mrb[0].mxu0
  %v1482 = vadd.f32 0.0, %v1481
  %v1483 = vpop.f32.mrb[0].mxu0
  %1484 = vmatprep.mubr.bf16.mxu0 0
  %1485 = vmatmul.mubr.bf16.gmra.mrb[0].mxu0 %v1324
  %v1486 = vpop.f32.mrb[0].mxu0
  %v1487 = vadd.f32 0.0, %v1486
  %v1488 = vpop.f32.mrb[0].mxu0
  %v1489 = vpop.f32.mrb[0].mxu0
  %v1490 = vadd.f32 0.0, %v1489
  %v1491 = vpop.f32.mrb[0].mxu0
  %1492 = vmatprep.mubr.bf16.mxu0 0
  %1493 = vmatmul.mubr.bf16.gmra.mrb[0].mxu0 %v1327
  %v1494 = vpop.f32.mrb[0].mxu0
  %v1495 = vadd.f32 0.0, %v1494
  %v1496 = vpop.f32.mrb[0].mxu0
  %v1497 = vpop.f32.mrb[0].mxu0
  %v1498 = vadd.f32 0.0, %v1497
  %v1499 = vpop.f32.mrb[0].mxu0
  %1500 = vmatprep.mubr.bf16.mxu0 0
  %1501 = vmatmul.mubr.bf16.gmra.mrb[0].mxu0 %v1330
  %v1502 = vpop.f32.mrb[0].mxu0
  %v1503 = vadd.f32 0.0, %v1502
  %v1504 = vpop.f32.mrb[0].mxu0
  %v1505 = vpop.f32.mrb[0].mxu0
  %v1506 = vadd.f32 0.0, %v1505
  %v1507 = vpop.f32.mrb[0].mxu0
  %1508 = vmatprep.mubr.bf16.mxu0 0
  %1509 = vmatmul.mubr.bf16.gmra.mrb[0].mxu0 %v1333
  %v1510 = vpop.f32.mrb[0].mxu0
  %v1511 = vadd.f32 0.0, %v1510
  %v1512 = vpop.f32.mrb[0].mxu0
  %v1513 = vpop.f32.mrb[0].mxu0
  %v1514 = vadd.f32 0.0, %v1513
  %v1515 = vpop.f32.mrb[0].mxu0
  %1516 = vmatprep.mubr.bf16.mxu0 0
  %1517 = vmatmul.mubr.bf16.gmra.mrb[0].mxu0 %v1336
  %v1518 = vpop.f32.mrb[0].mxu0
  %v1519 = vadd.f32 0.0, %v1518
  %v1520 = vpop.f32.mrb[0].mxu0
  %v1521 = vpop.f32.mrb[0].mxu0
  %v1522 = vadd.f32 0.0, %v1521
  %v1523 = vpop.f32.mrb[0].mxu0
  %1524 = vmatprep.mubr.bf16.mxu0 0
  %1525 = vmatmul.mubr.bf16.gmra.mrb[0].mxu0 %v1339
  %v1526 = vpop.f32.mrb[0].mxu0
  %v1527 = vadd.f32 0.0, %v1526
  %v1528 = vpop.f32.mrb[0].mxu0
  %v1529 = vpop.f32.mrb[0].mxu0
  %v1530 = vadd.f32 0.0, %v1529
  %v1531 = vpop.f32.mrb[0].mxu0
  %1532 = vmatprep.mubr.bf16.mxu0 0
  %1533 = vmatmul.mubr.bf16.gmra.mrb[0].mxu0 %v1342
  %v1534 = vpop.f32.mrb[0].mxu0
  %v1535 = vadd.f32 0.0, %v1534
  %v1536 = vpop.f32.mrb[0].mxu0
  %v1537 = vpop.f32.mrb[0].mxu0
  %v1538 = vadd.f32 0.0, %v1537
  %v1539 = vpop.f32.mrb[0].mxu0
  %1540 = vmatprep.mubr.bf16.mxu0 0
  %1541 = vmatmul.mubr.bf16.gmra.mrb[0].mxu0 %v1345
  %v1542 = vpop.f32.mrb[0].mxu0
  %v1543 = vadd.f32 0.0, %v1542
  %v1544 = vpop.f32.mrb[0].mxu0
  %v1545 = vpop.f32.mrb[0].mxu0
  %v1546 = vadd.f32 0.0, %v1545
  %v1547 = vpop.f32.mrb[0].mxu0
  %1548 = vmatprep.mubr.bf16.mxu0 0
  %1549 = vmatmul.mubr.bf16.gmra.mrb[0].mxu0 %v1348
  %v1550 = vpop.f32.mrb[0].mxu0
  %v1551 = vadd.f32 0.0, %v1550
  %v1552 = vpop.f32.mrb[0].mxu0
  %v1553 = vpop.f32.mrb[0].mxu0
  %v1554 = vadd.f32 0.0, %v1553
  %v1555 = vpop.f32.mrb[0].mxu0
  %1556 = vmatprep.mubr.bf16.mxu0 0
  %1557 = vmatmul.mubr.bf16.gmra.mrb[0].mxu0 %v1351
  %v1558 = vpop.f32.mrb[0].mxu0
  %v1559 = vadd.f32 0.0, %v1558
  %v1560 = vpop.f32.mrb[0].mxu0
  %v1561 = vpop.f32.mrb[0].mxu0
  %v1562 = vadd.f32 0.0, %v1561
  %v1563 = vpop.f32.mrb[0].mxu0
  %1564 = vmatprep.mubr.bf16.mxu0 0
  %1565 = vmatmul.mubr.bf16.gmra.mrb[0].mxu0 %v1354
  %v1566 = vpop.f32.mrb[0].mxu0
  %v1567 = vadd.f32 0.0, %v1566
  %v1568 = vpop.f32.mrb[0].mxu0
  %v1569 = vpop.f32.mrb[0].mxu0
  %v1570 = vadd.f32 0.0, %v1569
  %v1571 = vpop.f32.mrb[0].mxu0
  %1572 = vmatprep.mubr.bf16.mxu0 0
  %1573 = vmatmul.mubr.bf16.gmra.mrb[0].mxu0 %v1357
  %v1574 = vpop.f32.mrb[0].mxu0
  %v1575 = vadd.f32 0.0, %v1574
  %v1576 = vpop.f32.mrb[0].mxu0
  %v1577 = vpop.f32.mrb[0].mxu0
  %v1578 = vadd.f32 0.0, %v1577
  %v1579 = vpop.f32.mrb[0].mxu0
  %1580 = vmatprep.mubr.bf16.mxu0 0
  %1581 = vmatmul.mubr.bf16.gmra.mrb[0].mxu0 %v1360
  %v1582 = vpop.f32.mrb[0].mxu0
  %v1583 = vadd.f32 0.0, %v1582
  %v1584 = vpop.f32.mrb[0].mxu0
  %v1585 = vpop.f32.mrb[0].mxu0
  %v1586 = vadd.f32 0.0, %v1585
  %v1587 = vpop.f32.mrb[0].mxu0
  %1588 = vmatprep.mubr.bf16.mxu0 0
  %1589 = vmatmul.mubr.bf16.gmra.mrb[0].mxu0 %v1363
  %v1590 = vpop.f32.mrb[0].mxu0
  %v1591 = vadd.f32 0.0, %v1590
  %v1592 = vpop.f32.mrb[0].mxu0
  %v1593 = vpop.f32.mrb[0].mxu0
  %v1594 = vadd.f32 0.0, %v1593
  %v1595 = vpop.f32.mrb[0].mxu0
  %1596 = vmatprep.mubr.bf16.mxu0 0
  %1597 = vmatmul.mubr.bf16.gmra.mrb[0].mxu0 %v1366
  %v1598 = vpop.f32.mrb[0].mxu0
  %v1599 = vadd.f32 0.0, %v1598
  %v1600 = vpop.f32.mrb[0].mxu0
  %v1601 = vpop.f32.mrb[0].mxu0
  %v1602 = vadd.f32 0.0, %v1601
  %v1603 = vpop.f32.mrb[0].mxu0
  %1604 = vmatprep.mubr.bf16.mxu0 0
  %1605 = vmatmul.mubr.bf16.gmra.mrb[0].mxu0 %v1369
  %v1606 = vpop.f32.mrb[0].mxu0
  %v1607 = vadd.f32 0.0, %v1606
  %v1608 = vpop.f32.mrb[0].mxu0
  %v1609 = vpop.f32.mrb[0].mxu0
  %v1610 = vadd.f32 0.0, %v1609
  %v1611 = vpop.f32.mrb[0].mxu0
  %1612 = vmatprep.mubr.bf16.mxu0 0
  %1613 = vmatmul.mubr.bf16.gmra.mrb[0].mxu0 %v1372
  %v1614 = vpop.f32.mrb[0].mxu0
  %v1615 = vadd.f32 0.0, %v1614
  %v1616 = vpop.f32.mrb[0].mxu0
  %v1617 = vpop.f32.mrb[0].mxu0
  %v1618 = vadd.f32 0.0, %v1617
  %v1619 = vpop.f32.mrb[0].mxu0
  %1620 = vmatprep.mubr.bf16.mxu0 0
  %1621 = vmatmul.mubr.bf16.gmra.mrb[0].mxu0 %v1375
  %v1622 = vpop.f32.mrb[0].mxu0
  %v1623 = vadd.f32 0.0, %v1622
  %v1624 = vpop.f32.mrb[0].mxu0
  %v1625 = vpop.f32.mrb[0].mxu0
  %v1626 = vadd.f32 0.0, %v1625
  %v1627 = vpop.f32.mrb[0].mxu0
  %1628 = vmatprep.mubr.bf16.mxu0 0
  %1629 = vmatmul.mubr.bf16.gmra.mrb[0].mxu0 %v1378
  %v1630 = vpop.f32.mrb[0].mxu0
  %v1631 = vadd.f32 0.0, %v1630
  %v1632 = vpop.f32.mrb[0].mxu0
  %v1633 = vpop.f32.mrb[0].mxu0
  %v1634 = vadd.f32 0.0, %v1633
  %v1635 = vpop.f32.mrb[0].mxu0
  %1636 = vmatprep.mubr.bf16.mxu0 0
  %1637 = vmatmul.mubr.bf16.gmra.mrb[0].mxu0 %v1381
  %v1638 = vpop.f32.mrb[0].mxu0
  %v1639 = vadd.f32 0.0, %v1638
  %v1640 = vpop.f32.mrb[0].mxu0
  %v1641 = vpop.f32.mrb[0].mxu0
  %v1642 = vadd.f32 0.0, %v1641
  %v1643 = vpop.f32.mrb[0].mxu0
  %1644 = vmatprep.mubr.bf16.mxu0 0
  %1645 = vmatmul.mubr.bf16.gmra.mrb[0].mxu0 %v1384
  %v1646 = vpop.f32.mrb[0].mxu0
  %v1647 = vadd.f32 0.0, %v1646
  %v1648 = vpop.f32.mrb[0].mxu0
  %v1649 = vpop.f32.mrb[0].mxu0
  %v1650 = vadd.f32 0.0, %v1649
  %v1651 = vpop.f32.mrb[0].mxu0
  %1652 = vmatprep.mubr.bf16.mxu0 0
  %1653 = vmatmul.mubr.bf16.gmra.mrb[0].mxu0 %v1387
  %v1654 = vpop.f32.mrb[0].mxu0
  %v1655 = vadd.f32 0.0, %v1654
  %v1656 = vpop.f32.mrb[0].mxu0
  %v1657 = vpop.f32.mrb[0].mxu0
  %v1658 = vadd.f32 0.0, %v1657
  %v1659 = vpop.f32.mrb[0].mxu0
  %1660 = vmatprep.mubr.bf16.mxu0 0
  %1661 = vmatmul.mubr.bf16.gmra.mrb[0].mxu0 %v1390
  %v1662 = vpop.f32.mrb[0].mxu0
  %v1663 = vadd.f32 0.0, %v1662
  %v1664 = vpop.f32.mrb[0].mxu0
  %v1665 = vpop.f32.mrb[0].mxu0
  %v1666 = vadd.f32 0.0, %v1665
  %v1667 = vpop.f32.mrb[0].mxu0
  %1668 = vmatprep.mubr.bf16.mxu0 0
  %1669 = vmatmul.mubr.bf16.gmra.mrb[0].mxu0 %v1393
  %v1670 = vpop.f32.mrb[0].mxu0
  %v1671 = vadd.f32 0.0, %v1670
  %v1672 = vpop.f32.mrb[0].mxu0
  %v1673 = vpop.f32.mrb[0].mxu0
  %v1674 = vadd.f32 0.0, %v1673
  %v1675 = vpop.f32.mrb[0].mxu0
  %1676 = vmatprep.mubr.bf16.mxu0 0
  %1677 = vmatmul.mubr.bf16.gmra.mrb[0].mxu0 %v1396
  %v1678 = vpop.f32.mrb[0].mxu0
  %v1679 = vadd.f32 0.0, %v1678
  %v1680 = vpop.f32.mrb[0].mxu0
  %v1681 = vpop.f32.mrb[0].mxu0
  %v1682 = vadd.f32 0.0, %v1681
  %v1683 = vpop.f32.mrb[0].mxu0
  %1684 = vmatprep.mubr.bf16.mxu0 0
  %1685 = vmatmul.mubr.bf16.gmra.mrb[0].mxu0 %v1399
  %v1686 = vpop.f32.mrb[0].mxu0
  %v1687 = vadd.f32 0.0, %v1686
  %v1688 = vpop.f32.mrb[0].mxu0
  %v1689 = vpop.f32.mrb[0].mxu0
  %v1690 = vadd.f32 0.0, %v1689
  %v1691 = vpop.f32.mrb[0].mxu0
  %1692 = vdwg.mxu0
  %v1693 = vadd.f32 %v953, %v1439
  %v1694 = vadd.f32 %v956, %v1442
  %v1695 = vadd.f32 %v961, %v1447
  %v1696 = vadd.f32 %v964, %v1450
  %v1697 = vadd.f32 %v969, %v1455
  %v1698 = vadd.f32 %v972, %v1458
  %v1699 = vadd.f32 %v977, %v1463
  %v1700 = vadd.f32 %v980, %v1466
  %v1701 = vadd.f32 %v985, %v1471
  %v1702 = vadd.f32 %v988, %v1474
  %v1703 = vadd.f32 %v993, %v1479
  %v1704 = vadd.f32 %v996, %v1482
  %v1705 = vadd.f32 %v1001, %v1487
  %v1706 = vadd.f32 %v1004, %v1490
  %v1707 = vadd.f32 %v1009, %v1495
  %v1708 = vadd.f32 %v1012, %v1498
  %v1709 = vadd.f32 %v1017, %v1503
  %v1710 = vadd.f32 %v1020, %v1506
  %v1711 = vadd.f32 %v1025, %v1511
  %v1712 = vadd.f32 %v1028, %v1514
  %v1713 = vadd.f32 %v1033, %v1519
  %v1714 = vadd.f32 %v1036, %v1522
  %v1715 = vadd.f32 %v1041, %v1527
  %v1716 = vadd.f32 %v1044, %v1530
  %v1717 = vadd.f32 %v1049, %v1535
  %v1718 = vadd.f32 %v1052, %v1538
  %v1719 = vadd.f32 %v1057, %v1543
  %v1720 = vadd.f32 %v1060, %v1546
  %v1721 = vadd.f32 %v1065, %v1551
  %v1722 = vadd.f32 %v1068, %v1554
  %v1723 = vadd.f32 %v1073, %v1559
  %v1724 = vadd.f32 %v1076, %v1562
  %v1725 = vadd.f32 %v1081, %v1567
  %v1726 = vadd.f32 %v1084, %v1570
  %v1727 = vadd.f32 %v1089, %v1575
  %v1728 = vadd.f32 %v1092, %v1578
  %v1729 = vadd.f32 %v1097, %v1583
  %v1730 = vadd.f32 %v1100, %v1586
  %v1731 = vadd.f32 %v1105, %v1591
  %v1732 = vadd.f32 %v1108, %v1594
  %v1733 = vadd.f32 %v1113, %v1599
  %v1734 = vadd.f32 %v1116, %v1602
  %v1735 = vadd.f32 %v1121, %v1607
  %v1736 = vadd.f32 %v1124, %v1610
  %v1737 = vadd.f32 %v1129, %v1615
  %v1738 = vadd.f32 %v1132, %v1618
  %v1739 = vadd.f32 %v1137, %v1623
  %v1740 = vadd.f32 %v1140, %v1626
  %v1741 = vadd.f32 %v1145, %v1631
  %v1742 = vadd.f32 %v1148, %v1634
  %v1743 = vadd.f32 %v1153, %v1639
  %v1744 = vadd.f32 %v1156, %v1642
  %v1745 = vadd.f32 %v1161, %v1647
  %v1746 = vadd.f32 %v1164, %v1650
  %v1747 = vadd.f32 %v1169, %v1655
  %v1748 = vadd.f32 %v1172, %v1658
  %v1749 = vadd.f32 %v1177, %v1663
  %v1750 = vadd.f32 %v1180, %v1666
  %v1751 = vadd.f32 %v1185, %v1671
  %v1752 = vadd.f32 %v1188, %v1674
  %v1753 = vadd.f32 %v1193, %v1679
  %v1754 = vadd.f32 %v1196, %v1682
  %v1755 = vadd.f32 %v1201, %v1687
  %v1756 = vadd.f32 %v1204, %v1690
  %v1757 = vld [vmem:[%s40] sm:$0xff]
  %v1758 = vld [vmem:[%s40 + $0x8] sm:$0xff]
  %v1759 = vld [vmem:[%s40 + $0x18] sm:$0xff]
  %v1760 = vld [vmem:[%s40 + $0x20] sm:$0xff]
  %v1761 = vld [vmem:[%s40 + $0x30] sm:$0xff]
  %v1762 = vld [vmem:[%s40 + $0x38] sm:$0xff]
  %v1763 = vld [vmem:[%s40 + $0x48] sm:$0xff]
  %v1764 = vld [vmem:[%s40 + $0x50] sm:$0xff]
  %v1765 = vld [vmem:[%s40 + $0x60] sm:$0xff]
  %v1766 = vld [vmem:[%s40 + $0x68] sm:$0xff]
  %v1767 = vld [vmem:[%s40 + $0x78] sm:$0xff]
  %v1768 = vld [vmem:[%s40 + $0x80] sm:$0xff]
  %v1769 = vld [vmem:[%s40 + $0x90] sm:$0xff]
  %v1770 = vld [vmem:[%s40 + $0x98] sm:$0xff]
  %v1771 = vld [vmem:[%s40 + $0xa8] sm:$0xff]
  %v1772 = vld [vmem:[%s40 + $0xb0] sm:$0xff]
  %v1773 = vld [vmem:[%s40 + $0xc0] sm:$0xff]
  %v1774 = vld [vmem:[%s40 + $0xc8] sm:$0xff]
  %v1775 = vld [vmem:[%s40 + $0xd8] sm:$0xff]
  %v1776 = vld [vmem:[%s40 + $0xe0] sm:$0xff]
  %v1777 = vld [vmem:[%s40 + $0xf0] sm:$0xff]
  %v1778 = vld [vmem:[%s40 + $0xf8] sm:$0xff]
  %v1779 = vld [vmem:[%s40 + $0x108] sm:$0xff]
  %v1780 = vld [vmem:[%s40 + $0x110] sm:$0xff]
  %v1781 = vld [vmem:[%s40 + $0x120] sm:$0xff]
  %v1782 = vld [vmem:[%s40 + $0x128] sm:$0xff]
  %v1783 = vld [vmem:[%s40 + $0x138] sm:$0xff]
  %v1784 = vld [vmem:[%s40 + $0x140] sm:$0xff]
  %v1785 = vld [vmem:[%s40 + $0x150] sm:$0xff]
  %v1786 = vld [vmem:[%s40 + $0x158] sm:$0xff]
  %v1787 = vld [vmem:[%s40 + $0x168] sm:$0xff]
  %v1788 = vld [vmem:[%s40 + $0x170] sm:$0xff]
  %v1789 = vld [vmem:[%s40 + $0x1b0] sm:$0xff]
  %v1790 = vld [vmem:[%s40 + $0x1b8] sm:$0xff]
  %v1791 = vld [vmem:[%s40 + $0x1c8] sm:$0xff]
  %v1792 = vld [vmem:[%s40 + $0x1d0] sm:$0xff]
  %v1793 = vld [vmem:[%s40 + $0x1e0] sm:$0xff]
  %v1794 = vld [vmem:[%s40 + $0x1e8] sm:$0xff]
  %v1795 = vld [vmem:[%s40 + $0x1f8] sm:$0xff]
  %v1796 = vld [vmem:[%s40 + $0x200] sm:$0xff]
  %v1797 = vld [vmem:[%s40 + $0x210] sm:$0xff]
  %v1798 = vld [vmem:[%s40 + $0x218] sm:$0xff]
  %v1799 = vld [vmem:[%s40 + $0x228] sm:$0xff]
  %v1800 = vld [vmem:[%s40 + $0x230] sm:$0xff]
  %v1801 = vld [vmem:[%s40 + $0x240] sm:$0xff]
  %v1802 = vld [vmem:[%s40 + $0x248] sm:$0xff]
  %v1803 = vld [vmem:[%s40 + $0x258] sm:$0xff]
  %v1804 = vld [vmem:[%s40 + $0x260] sm:$0xff]
  %v1805 = vld [vmem:[%s40 + $0x270] sm:$0xff]
  %v1806 = vld [vmem:[%s40 + $0x278] sm:$0xff]
  %v1807 = vld [vmem:[%s40 + $0x288] sm:$0xff]
  %v1808 = vld [vmem:[%s40 + $0x290] sm:$0xff]
  %v1809 = vld [vmem:[%s40 + $0x2a0] sm:$0xff]
  %v1810 = vld [vmem:[%s40 + $0x2a8] sm:$0xff]
  %v1811 = vld [vmem:[%s40 + $0x2b8] sm:$0xff]
  %v1812 = vld [vmem:[%s40 + $0x2c0] sm:$0xff]
  %v1813 = vld [vmem:[%s40 + $0x2d0] sm:$0xff]
  %v1814 = vld [vmem:[%s40 + $0x2d8] sm:$0xff]
  %v1815 = vld [vmem:[%s40 + $0x2e8] sm:$0xff]
  %v1816 = vld [vmem:[%s40 + $0x2f0] sm:$0xff]
  %v1817 = vld [vmem:[%s40 + $0x300] sm:$0xff]
  %v1818 = vld [vmem:[%s40 + $0x308] sm:$0xff]
  %v1819 = vld [vmem:[%s40 + $0x318] sm:$0xff]
  %v1820 = vld [vmem:[%s40 + $0x320] sm:$0xff]
  %v1821 = vpack.c.bf16 %v1758, %v1757
  %v1822 = vpack.c.bf16 %v1760, %v1759
  %v1823 = vpack.c.bf16 %v1762, %v1761
  %v1824 = vpack.c.bf16 %v1764, %v1763
  %v1825 = vpack.c.bf16 %v1766, %v1765
  %v1826 = vpack.c.bf16 %v1768, %v1767
  %v1827 = vpack.c.bf16 %v1770, %v1769
  %v1828 = vpack.c.bf16 %v1772, %v1771
  %v1829 = vpack.c.bf16 %v1774, %v1773
  %v1830 = vpack.c.bf16 %v1776, %v1775
  %v1831 = vpack.c.bf16 %v1778, %v1777
  %v1832 = vpack.c.bf16 %v1780, %v1779
  %v1833 = vpack.c.bf16 %v1782, %v1781
  %v1834 = vpack.c.bf16 %v1784, %v1783
  %v1835 = vpack.c.bf16 %v1786, %v1785
  %v1836 = vpack.c.bf16 %v1788, %v1787
  %v1837 = vpack.c.bf16 %v1790, %v1789
  %v1838 = vpack.c.bf16 %v1792, %v1791
  %v1839 = vpack.c.bf16 %v1794, %v1793
  %v1840 = vpack.c.bf16 %v1796, %v1795
  %v1841 = vpack.c.bf16 %v1798, %v1797
  %v1842 = vpack.c.bf16 %v1800, %v1799
  %v1843 = vpack.c.bf16 %v1802, %v1801
  %v1844 = vpack.c.bf16 %v1804, %v1803
  %v1845 = vpack.c.bf16 %v1806, %v1805
  %v1846 = vpack.c.bf16 %v1808, %v1807
  %v1847 = vpack.c.bf16 %v1810, %v1809
  %v1848 = vpack.c.bf16 %v1812, %v1811
  %v1849 = vpack.c.bf16 %v1814, %v1813
  %v1850 = vpack.c.bf16 %v1816, %v1815
  %v1851 = vpack.c.bf16 %v1818, %v1817
  %v1852 = vpack.c.bf16 %v1820, %v1819
  %s1853 = scalar_lea.vmem %s1, 6
  %v1854 = vld [vmem:[%s1853] sm:$0x3]
  %v1856 = vsel %vm25, %v1821, 0
  %v1859 = vsel %vm25, %v1822, 0
  %v1862 = vsel %vm25, %v1823, 0
  %v1865 = vsel %vm25, %v1824, 0
  %v1868 = vsel %vm25, %v1825, 0
  %v1871 = vsel %vm25, %v1826, 0
  %v1874 = vsel %vm25, %v1827, 0
  %v1877 = vsel %vm25, %v1828, 0
  %v1880 = vsel %vm25, %v1829, 0
  %v1883 = vsel %vm25, %v1830, 0
  %v1886 = vsel %vm25, %v1831, 0
  %v1889 = vsel %vm25, %v1832, 0
  %v1892 = vsel %vm25, %v1833, 0
  %v1895 = vsel %vm25, %v1834, 0
  %v1898 = vsel %vm25, %v1835, 0
  %v1901 = vsel %vm25, %v1836, 0
  %v1904 = vsel %vm25, %v1837, 0
  %v1907 = vsel %vm25, %v1838, 0
  %v1910 = vsel %vm25, %v1839, 0
  %v1913 = vsel %vm25, %v1840, 0
  %v1916 = vsel %vm25, %v1841, 0
  %v1919 = vsel %vm25, %v1842, 0
  %v1922 = vsel %vm25, %v1843, 0
  %v1925 = vsel %vm25, %v1844, 0
  %v1928 = vsel %vm25, %v1845, 0
  %v1931 = vsel %vm25, %v1846, 0
  %v1934 = vsel %vm25, %v1847, 0
  %v1937 = vsel %vm25, %v1848, 0
  %v1940 = vsel %vm25, %v1849, 0
  %v1943 = vsel %vm25, %v1850, 0
  %v1946 = vsel %vm25, %v1851, 0
  %v1949 = vsel %vm25, %v1852, 0
  %v1952 = vsel %vm526, %v1854, 0
  %1954 = vmatprep.subr.bf16.mxu0 0
  %1955 = vmatpush1.bf16.msra.mxu0 %v1952
  %1956 = vmatprep.subr.bf16.mxu0 0
  %1957 = vmatpush1.bf16.msra.mxu0 0
  %1958 = vmatprep.subr.bf16.mxu0 0
  %1959 = vmatpush1.bf16.msra.mxu0 0
  %1960 = vmatprep.subr.bf16.mxu0 0
  %1961 = vmatpush1.bf16.msra.mxu0 0
  %1962 = vmatprep.subr.bf16.mxu0 0
  %1963 = vmatpush1.bf16.msra.mxu0 0
  %1964 = vmatprep.subr.bf16.mxu0 0
  %1965 = vmatpush1.bf16.msra.mxu0 0
  %1966 = vmatprep.subr.bf16.mxu0 0
  %1967 = vmatpush1.bf16.msra.mxu0 0
  %1968 = vmatprep.subr.bf16.mxu0 0
  %1969 = vmatpush1.bf16.msra.mxu0 0
  %1970 = vmatprep.subr.bf16.mxu0 0
  %1971 = vmatpush1.bf16.msra.mxu0 0
  %1972 = vmatprep.subr.bf16.mxu0 0
  %1973 = vmatpush1.bf16.msra.mxu0 0
  %1974 = vmatprep.subr.bf16.mxu0 0
  %1975 = vmatpush1.bf16.msra.mxu0 0
  %1976 = vmatprep.subr.bf16.mxu0 0
  %1977 = vmatpush1.bf16.msra.mxu0 0
  %1978 = vmatprep.subr.bf16.mxu0 0
  %1979 = vmatpush1.bf16.msra.mxu0 0
  %1980 = vmatprep.subr.bf16.mxu0 0
  %1981 = vmatpush1.bf16.msra.mxu0 0
  %1982 = vmatprep.subr.bf16.mxu0 0
  %1983 = vmatpush1.bf16.msra.mxu0 0
  %1984 = vmatprep.subr.bf16.mxu0 0
  %1985 = vmatpush1.bf16.msra.mxu0 0
  %1986 = vmatprep.mubr.bf16.mxu0 0
  %1987 = vmatmul.mubr.bf16.gmra.mrb[0].mxu0 %v1856
  %v1988 = vpop.f32.mrb[0].mxu0
  %v1989 = vadd.f32 0.0, %v1988
  %v1990 = vpop.f32.mrb[0].mxu0
  %v1991 = vpop.f32.mrb[0].mxu0
  %v1992 = vadd.f32 0.0, %v1991
  %v1993 = vpop.f32.mrb[0].mxu0
  %1994 = vmatprep.mubr.bf16.mxu0 0
  %1995 = vmatmul.mubr.bf16.gmra.mrb[0].mxu0 %v1859
  %v1996 = vpop.f32.mrb[0].mxu0
  %v1997 = vadd.f32 0.0, %v1996
  %v1998 = vpop.f32.mrb[0].mxu0
  %v1999 = vpop.f32.mrb[0].mxu0
  %v2000 = vadd.f32 0.0, %v1999
  %v2001 = vpop.f32.mrb[0].mxu0
  %2002 = vmatprep.mubr.bf16.mxu0 0
  %2003 = vmatmul.mubr.bf16.gmra.mrb[0].mxu0 %v1862
  %v2004 = vpop.f32.mrb[0].mxu0
  %v2005 = vadd.f32 0.0, %v2004
  %v2006 = vpop.f32.mrb[0].mxu0
  %v2007 = vpop.f32.mrb[0].mxu0
  %v2008 = vadd.f32 0.0, %v2007
  %v2009 = vpop.f32.mrb[0].mxu0
  %2010 = vmatprep.mubr.bf16.mxu0 0
  %2011 = vmatmul.mubr.bf16.gmra.mrb[0].mxu0 %v1865
  %v2012 = vpop.f32.mrb[0].mxu0
  %v2013 = vadd.f32 0.0, %v2012
  %v2014 = vpop.f32.mrb[0].mxu0
  %v2015 = vpop.f32.mrb[0].mxu0
  %v2016 = vadd.f32 0.0, %v2015
  %v2017 = vpop.f32.mrb[0].mxu0
  %2018 = vmatprep.mubr.bf16.mxu0 0
  %2019 = vmatmul.mubr.bf16.gmra.mrb[0].mxu0 %v1868
  %v2020 = vpop.f32.mrb[0].mxu0
  %v2021 = vadd.f32 0.0, %v2020
  %v2022 = vpop.f32.mrb[0].mxu0
  %v2023 = vpop.f32.mrb[0].mxu0
  %v2024 = vadd.f32 0.0, %v2023
  %v2025 = vpop.f32.mrb[0].mxu0
  %2026 = vmatprep.mubr.bf16.mxu0 0
  %2027 = vmatmul.mubr.bf16.gmra.mrb[0].mxu0 %v1871
  %v2028 = vpop.f32.mrb[0].mxu0
  %v2029 = vadd.f32 0.0, %v2028
  %v2030 = vpop.f32.mrb[0].mxu0
  %v2031 = vpop.f32.mrb[0].mxu0
  %v2032 = vadd.f32 0.0, %v2031
  %v2033 = vpop.f32.mrb[0].mxu0
  %2034 = vmatprep.mubr.bf16.mxu0 0
  %2035 = vmatmul.mubr.bf16.gmra.mrb[0].mxu0 %v1874
  %v2036 = vpop.f32.mrb[0].mxu0
  %v2037 = vadd.f32 0.0, %v2036
  %v2038 = vpop.f32.mrb[0].mxu0
  %v2039 = vpop.f32.mrb[0].mxu0
  %v2040 = vadd.f32 0.0, %v2039
  %v2041 = vpop.f32.mrb[0].mxu0
  %2042 = vmatprep.mubr.bf16.mxu0 0
  %2043 = vmatmul.mubr.bf16.gmra.mrb[0].mxu0 %v1877
  %v2044 = vpop.f32.mrb[0].mxu0
  %v2045 = vadd.f32 0.0, %v2044
  %v2046 = vpop.f32.mrb[0].mxu0
  %v2047 = vpop.f32.mrb[0].mxu0
  %v2048 = vadd.f32 0.0, %v2047
  %v2049 = vpop.f32.mrb[0].mxu0
  %2050 = vmatprep.mubr.bf16.mxu0 0
  %2051 = vmatmul.mubr.bf16.gmra.mrb[0].mxu0 %v1880
  %v2052 = vpop.f32.mrb[0].mxu0
  %v2053 = vadd.f32 0.0, %v2052
  %v2054 = vpop.f32.mrb[0].mxu0
  %v2055 = vpop.f32.mrb[0].mxu0
  %v2056 = vadd.f32 0.0, %v2055
  %v2057 = vpop.f32.mrb[0].mxu0
  %2058 = vmatprep.mubr.bf16.mxu0 0
  %2059 = vmatmul.mubr.bf16.gmra.mrb[0].mxu0 %v1883
  %v2060 = vpop.f32.mrb[0].mxu0
  %v2061 = vadd.f32 0.0, %v2060
  %v2062 = vpop.f32.mrb[0].mxu0
  %v2063 = vpop.f32.mrb[0].mxu0
  %v2064 = vadd.f32 0.0, %v2063
  %v2065 = vpop.f32.mrb[0].mxu0
  %2066 = vmatprep.mubr.bf16.mxu0 0
  %2067 = vmatmul.mubr.bf16.gmra.mrb[0].mxu0 %v1886
  %v2068 = vpop.f32.mrb[0].mxu0
  %v2069 = vadd.f32 0.0, %v2068
  %v2070 = vpop.f32.mrb[0].mxu0
  %v2071 = vpop.f32.mrb[0].mxu0
  %v2072 = vadd.f32 0.0, %v2071
  %v2073 = vpop.f32.mrb[0].mxu0
  %2074 = vmatprep.mubr.bf16.mxu0 0
  %2075 = vmatmul.mubr.bf16.gmra.mrb[0].mxu0 %v1889
  %v2076 = vpop.f32.mrb[0].mxu0
  %v2077 = vadd.f32 0.0, %v2076
  %v2078 = vpop.f32.mrb[0].mxu0
  %v2079 = vpop.f32.mrb[0].mxu0
  %v2080 = vadd.f32 0.0, %v2079
  %v2081 = vpop.f32.mrb[0].mxu0
  %2082 = vmatprep.mubr.bf16.mxu0 0
  %2083 = vmatmul.mubr.bf16.gmra.mrb[0].mxu0 %v1892
  %v2084 = vpop.f32.mrb[0].mxu0
  %v2085 = vadd.f32 0.0, %v2084
  %v2086 = vpop.f32.mrb[0].mxu0
  %v2087 = vpop.f32.mrb[0].mxu0
  %v2088 = vadd.f32 0.0, %v2087
  %v2089 = vpop.f32.mrb[0].mxu0
  %2090 = vmatprep.mubr.bf16.mxu0 0
  %2091 = vmatmul.mubr.bf16.gmra.mrb[0].mxu0 %v1895
  %v2092 = vpop.f32.mrb[0].mxu0
  %v2093 = vadd.f32 0.0, %v2092
  %v2094 = vpop.f32.mrb[0].mxu0
  %v2095 = vpop.f32.mrb[0].mxu0
  %v2096 = vadd.f32 0.0, %v2095
  %v2097 = vpop.f32.mrb[0].mxu0
  %2098 = vmatprep.mubr.bf16.mxu0 0
  %2099 = vmatmul.mubr.bf16.gmra.mrb[0].mxu0 %v1898
  %v2100 = vpop.f32.mrb[0].mxu0
  %v2101 = vadd.f32 0.0, %v2100
  %v2102 = vpop.f32.mrb[0].mxu0
  %v2103 = vpop.f32.mrb[0].mxu0
  %v2104 = vadd.f32 0.0, %v2103
  %v2105 = vpop.f32.mrb[0].mxu0
  %2106 = vmatprep.mubr.bf16.mxu0 0
  %2107 = vmatmul.mubr.bf16.gmra.mrb[0].mxu0 %v1901
  %v2108 = vpop.f32.mrb[0].mxu0
  %v2109 = vadd.f32 0.0, %v2108
  %v2110 = vpop.f32.mrb[0].mxu0
  %v2111 = vpop.f32.mrb[0].mxu0
  %v2112 = vadd.f32 0.0, %v2111
  %v2113 = vpop.f32.mrb[0].mxu0
  %2114 = vmatprep.mubr.bf16.mxu0 0
  %2115 = vmatmul.mubr.bf16.gmra.mrb[0].mxu0 %v1904
  %v2116 = vpop.f32.mrb[0].mxu0
  %v2117 = vadd.f32 0.0, %v2116
  %v2118 = vpop.f32.mrb[0].mxu0
  %v2119 = vpop.f32.mrb[0].mxu0
  %v2120 = vadd.f32 0.0, %v2119
  %v2121 = vpop.f32.mrb[0].mxu0
  %2122 = vmatprep.mubr.bf16.mxu0 0
  %2123 = vmatmul.mubr.bf16.gmra.mrb[0].mxu0 %v1907
  %v2124 = vpop.f32.mrb[0].mxu0
  %v2125 = vadd.f32 0.0, %v2124
  %v2126 = vpop.f32.mrb[0].mxu0
  %v2127 = vpop.f32.mrb[0].mxu0
  %v2128 = vadd.f32 0.0, %v2127
  %v2129 = vpop.f32.mrb[0].mxu0
  %2130 = vmatprep.mubr.bf16.mxu0 0
  %2131 = vmatmul.mubr.bf16.gmra.mrb[0].mxu0 %v1910
  %v2132 = vpop.f32.mrb[0].mxu0
  %v2133 = vadd.f32 0.0, %v2132
  %v2134 = vpop.f32.mrb[0].mxu0
  %v2135 = vpop.f32.mrb[0].mxu0
  %v2136 = vadd.f32 0.0, %v2135
  %v2137 = vpop.f32.mrb[0].mxu0
  %2138 = vmatprep.mubr.bf16.mxu0 0
  %2139 = vmatmul.mubr.bf16.gmra.mrb[0].mxu0 %v1913
  %v2140 = vpop.f32.mrb[0].mxu0
  %v2141 = vadd.f32 0.0, %v2140
  %v2142 = vpop.f32.mrb[0].mxu0
  %v2143 = vpop.f32.mrb[0].mxu0
  %v2144 = vadd.f32 0.0, %v2143
  %v2145 = vpop.f32.mrb[0].mxu0
  %2146 = vmatprep.mubr.bf16.mxu0 0
  %2147 = vmatmul.mubr.bf16.gmra.mrb[0].mxu0 %v1916
  %v2148 = vpop.f32.mrb[0].mxu0
  %v2149 = vadd.f32 0.0, %v2148
  %v2150 = vpop.f32.mrb[0].mxu0
  %v2151 = vpop.f32.mrb[0].mxu0
  %v2152 = vadd.f32 0.0, %v2151
  %v2153 = vpop.f32.mrb[0].mxu0
  %2154 = vmatprep.mubr.bf16.mxu0 0
  %2155 = vmatmul.mubr.bf16.gmra.mrb[0].mxu0 %v1919
  %v2156 = vpop.f32.mrb[0].mxu0
  %v2157 = vadd.f32 0.0, %v2156
  %v2158 = vpop.f32.mrb[0].mxu0
  %v2159 = vpop.f32.mrb[0].mxu0
  %v2160 = vadd.f32 0.0, %v2159
  %v2161 = vpop.f32.mrb[0].mxu0
  %2162 = vmatprep.mubr.bf16.mxu0 0
  %2163 = vmatmul.mubr.bf16.gmra.mrb[0].mxu0 %v1922
  %v2164 = vpop.f32.mrb[0].mxu0
  %v2165 = vadd.f32 0.0, %v2164
  %v2166 = vpop.f32.mrb[0].mxu0
  %v2167 = vpop.f32.mrb[0].mxu0
  %v2168 = vadd.f32 0.0, %v2167
  %v2169 = vpop.f32.mrb[0].mxu0
  %2170 = vmatprep.mubr.bf16.mxu0 0
  %2171 = vmatmul.mubr.bf16.gmra.mrb[0].mxu0 %v1925
  %v2172 = vpop.f32.mrb[0].mxu0
  %v2173 = vadd.f32 0.0, %v2172
  %v2174 = vpop.f32.mrb[0].mxu0
  %v2175 = vpop.f32.mrb[0].mxu0
  %v2176 = vadd.f32 0.0, %v2175
  %v2177 = vpop.f32.mrb[0].mxu0
  %2178 = vmatprep.mubr.bf16.mxu0 0
  %2179 = vmatmul.mubr.bf16.gmra.mrb[0].mxu0 %v1928
  %v2180 = vpop.f32.mrb[0].mxu0
  %v2181 = vadd.f32 0.0, %v2180
  %v2182 = vpop.f32.mrb[0].mxu0
  %v2183 = vpop.f32.mrb[0].mxu0
  %v2184 = vadd.f32 0.0, %v2183
  %v2185 = vpop.f32.mrb[0].mxu0
  %2186 = vmatprep.mubr.bf16.mxu0 0
  %2187 = vmatmul.mubr.bf16.gmra.mrb[0].mxu0 %v1931
  %v2188 = vpop.f32.mrb[0].mxu0
  %v2189 = vadd.f32 0.0, %v2188
  %v2190 = vpop.f32.mrb[0].mxu0
  %v2191 = vpop.f32.mrb[0].mxu0
  %v2192 = vadd.f32 0.0, %v2191
  %v2193 = vpop.f32.mrb[0].mxu0
  %2194 = vmatprep.mubr.bf16.mxu0 0
  %2195 = vmatmul.mubr.bf16.gmra.mrb[0].mxu0 %v1934
  %v2196 = vpop.f32.mrb[0].mxu0
  %v2197 = vadd.f32 0.0, %v2196
  %v2198 = vpop.f32.mrb[0].mxu0
  %v2199 = vpop.f32.mrb[0].mxu0
  %v2200 = vadd.f32 0.0, %v2199
  %v2201 = vpop.f32.mrb[0].mxu0
  %2202 = vmatprep.mubr.bf16.mxu0 0
  %2203 = vmatmul.mubr.bf16.gmra.mrb[0].mxu0 %v1937
  %v2204 = vpop.f32.mrb[0].mxu0
  %v2205 = vadd.f32 0.0, %v2204
  %v2206 = vpop.f32.mrb[0].mxu0
  %v2207 = vpop.f32.mrb[0].mxu0
  %v2208 = vadd.f32 0.0, %v2207
  %v2209 = vpop.f32.mrb[0].mxu0
  %2210 = vmatprep.mubr.bf16.mxu0 0
  %2211 = vmatmul.mubr.bf16.gmra.mrb[0].mxu0 %v1940
  %v2212 = vpop.f32.mrb[0].mxu0
  %v2213 = vadd.f32 0.0, %v2212
  %v2214 = vpop.f32.mrb[0].mxu0
  %v2215 = vpop.f32.mrb[0].mxu0
  %v2216 = vadd.f32 0.0, %v2215
  %v2217 = vpop.f32.mrb[0].mxu0
  %2218 = vmatprep.mubr.bf16.mxu0 0
  %2219 = vmatmul.mubr.bf16.gmra.mrb[0].mxu0 %v1943
  %v2220 = vpop.f32.mrb[0].mxu0
  %v2221 = vadd.f32 0.0, %v2220
  %v2222 = vpop.f32.mrb[0].mxu0
  %v2223 = vpop.f32.mrb[0].mxu0
  %v2224 = vadd.f32 0.0, %v2223
  %v2225 = vpop.f32.mrb[0].mxu0
  %2226 = vmatprep.mubr.bf16.mxu0 0
  %2227 = vmatmul.mubr.bf16.gmra.mrb[0].mxu0 %v1946
  %v2228 = vpop.f32.mrb[0].mxu0
  %v2229 = vadd.f32 0.0, %v2228
  %v2230 = vpop.f32.mrb[0].mxu0
  %v2231 = vpop.f32.mrb[0].mxu0
  %v2232 = vadd.f32 0.0, %v2231
  %v2233 = vpop.f32.mrb[0].mxu0
  %2234 = vmatprep.mubr.bf16.mxu0 0
  %2235 = vmatmul.mubr.bf16.gmra.mrb[0].mxu0 %v1949
  %v2236 = vpop.f32.mrb[0].mxu0
  %v2237 = vadd.f32 0.0, %v2236
  %v2238 = vpop.f32.mrb[0].mxu0
  %v2239 = vpop.f32.mrb[0].mxu0
  %v2240 = vadd.f32 0.0, %v2239
  %v2241 = vpop.f32.mrb[0].mxu0
  %2242 = vdwg.mxu0
  %v2243 = vadd.f32 %v1693, %v1989
  %v2244 = vadd.f32 %v1694, %v1992
  %v2245 = vadd.f32 %v1695, %v1997
  %v2246 = vadd.f32 %v1696, %v2000
  %v2247 = vadd.f32 %v1697, %v2005
  %v2248 = vadd.f32 %v1698, %v2008
  %v2249 = vadd.f32 %v1699, %v2013
  %v2250 = vadd.f32 %v1700, %v2016
  %v2251 = vadd.f32 %v1701, %v2021
  %v2252 = vadd.f32 %v1702, %v2024
  %v2253 = vadd.f32 %v1703, %v2029
  %v2254 = vadd.f32 %v1704, %v2032
  %v2255 = vadd.f32 %v1705, %v2037
  %v2256 = vadd.f32 %v1706, %v2040
  %v2257 = vadd.f32 %v1707, %v2045
  %v2258 = vadd.f32 %v1708, %v2048
  %v2259 = vadd.f32 %v1709, %v2053
  %v2260 = vadd.f32 %v1710, %v2056
  %v2261 = vadd.f32 %v1711, %v2061
  %v2262 = vadd.f32 %v1712, %v2064
  %v2263 = vadd.f32 %v1713, %v2069
  %v2264 = vadd.f32 %v1714, %v2072
  %v2265 = vadd.f32 %v1715, %v2077
  %v2266 = vadd.f32 %v1716, %v2080
  %v2267 = vadd.f32 %v1717, %v2085
  %v2268 = vadd.f32 %v1718, %v2088
  %v2269 = vadd.f32 %v1719, %v2093
  %v2270 = vadd.f32 %v1720, %v2096
  %v2271 = vadd.f32 %v1721, %v2101
  %v2272 = vadd.f32 %v1722, %v2104
  %v2273 = vadd.f32 %v1723, %v2109
  %v2274 = vadd.f32 %v1724, %v2112
  %v2275 = vadd.f32 %v1725, %v2117
  %v2276 = vadd.f32 %v1726, %v2120
  %v2277 = vadd.f32 %v1727, %v2125
  %v2278 = vadd.f32 %v1728, %v2128
  %v2279 = vadd.f32 %v1729, %v2133
  %v2280 = vadd.f32 %v1730, %v2136
  %v2281 = vadd.f32 %v1731, %v2141
  %v2282 = vadd.f32 %v1732, %v2144
  %v2283 = vadd.f32 %v1733, %v2149
  %v2284 = vadd.f32 %v1734, %v2152
  %v2285 = vadd.f32 %v1735, %v2157
  %v2286 = vadd.f32 %v1736, %v2160
  %v2287 = vadd.f32 %v1737, %v2165
  %v2288 = vadd.f32 %v1738, %v2168
  %v2289 = vadd.f32 %v1739, %v2173
  %v2290 = vadd.f32 %v1740, %v2176
  %v2291 = vadd.f32 %v1741, %v2181
  %v2292 = vadd.f32 %v1742, %v2184
  %v2293 = vadd.f32 %v1743, %v2189
  %v2294 = vadd.f32 %v1744, %v2192
  %v2295 = vadd.f32 %v1745, %v2197
  %v2296 = vadd.f32 %v1746, %v2200
  %v2297 = vadd.f32 %v1747, %v2205
  %v2298 = vadd.f32 %v1748, %v2208
  %v2299 = vadd.f32 %v1749, %v2213
  %v2300 = vadd.f32 %v1750, %v2216
  %v2301 = vadd.f32 %v1751, %v2221
  %v2302 = vadd.f32 %v1752, %v2224
  %v2303 = vadd.f32 %v1753, %v2229
  %v2304 = vadd.f32 %v1754, %v2232
  %v2305 = vadd.f32 %v1755, %v2237
  %v2306 = vadd.f32 %v1756, %v2240
  %v2307 = vld [vmem:[%s40 + $0x1] sm:$0xff]
  %v2308 = vld [vmem:[%s40 + $0x9] sm:$0xff]
  %v2309 = vld [vmem:[%s40 + $0x19] sm:$0xff]
  %v2310 = vld [vmem:[%s40 + $0x21] sm:$0xff]
  %v2311 = vld [vmem:[%s40 + $0x31] sm:$0xff]
  %v2312 = vld [vmem:[%s40 + $0x39] sm:$0xff]
  %v2313 = vld [vmem:[%s40 + $0x49] sm:$0xff]
  %v2314 = vld [vmem:[%s40 + $0x51] sm:$0xff]
  %v2315 = vld [vmem:[%s40 + $0x61] sm:$0xff]
  %v2316 = vld [vmem:[%s40 + $0x69] sm:$0xff]
  %v2317 = vld [vmem:[%s40 + $0x79] sm:$0xff]
  %v2318 = vld [vmem:[%s40 + $0x81] sm:$0xff]
  %v2319 = vld [vmem:[%s40 + $0x91] sm:$0xff]
  %v2320 = vld [vmem:[%s40 + $0x99] sm:$0xff]
  %v2321 = vld [vmem:[%s40 + $0xa9] sm:$0xff]
  %v2322 = vld [vmem:[%s40 + $0xb1] sm:$0xff]
  %v2323 = vld [vmem:[%s40 + $0xc1] sm:$0xff]
  %v2324 = vld [vmem:[%s40 + $0xc9] sm:$0xff]
  %v2325 = vld [vmem:[%s40 + $0xd9] sm:$0xff]
  %v2326 = vld [vmem:[%s40 + $0xe1] sm:$0xff]
  %v2327 = vld [vmem:[%s40 + $0xf1] sm:$0xff]
  %v2328 = vld [vmem:[%s40 + $0xf9] sm:$0xff]
  %v2329 = vld [vmem:[%s40 + $0x109] sm:$0xff]
  %v2330 = vld [vmem:[%s40 + $0x111] sm:$0xff]
  %v2331 = vld [vmem:[%s40 + $0x121] sm:$0xff]
  %v2332 = vld [vmem:[%s40 + $0x129] sm:$0xff]
  %v2333 = vld [vmem:[%s40 + $0x139] sm:$0xff]
  %v2334 = vld [vmem:[%s40 + $0x141] sm:$0xff]
  %v2335 = vld [vmem:[%s40 + $0x151] sm:$0xff]
  %v2336 = vld [vmem:[%s40 + $0x159] sm:$0xff]
  %v2337 = vld [vmem:[%s40 + $0x169] sm:$0xff]
  %v2338 = vld [vmem:[%s40 + $0x171] sm:$0xff]
  %v2339 = vld [vmem:[%s40 + $0x1b1] sm:$0xff]
  %v2340 = vld [vmem:[%s40 + $0x1b9] sm:$0xff]
  %v2341 = vld [vmem:[%s40 + $0x1c9] sm:$0xff]
  %v2342 = vld [vmem:[%s40 + $0x1d1] sm:$0xff]
  %v2343 = vld [vmem:[%s40 + $0x1e1] sm:$0xff]
  %v2344 = vld [vmem:[%s40 + $0x1e9] sm:$0xff]
  %v2345 = vld [vmem:[%s40 + $0x1f9] sm:$0xff]
  %v2346 = vld [vmem:[%s40 + $0x201] sm:$0xff]
  %v2347 = vld [vmem:[%s40 + $0x211] sm:$0xff]
  %v2348 = vld [vmem:[%s40 + $0x219] sm:$0xff]
  %v2349 = vld [vmem:[%s40 + $0x229] sm:$0xff]
  %v2350 = vld [vmem:[%s40 + $0x231] sm:$0xff]
  %v2351 = vld [vmem:[%s40 + $0x241] sm:$0xff]
  %v2352 = vld [vmem:[%s40 + $0x249] sm:$0xff]
  %v2353 = vld [vmem:[%s40 + $0x259] sm:$0xff]
  %v2354 = vld [vmem:[%s40 + $0x261] sm:$0xff]
  %v2355 = vld [vmem:[%s40 + $0x271] sm:$0xff]
  %v2356 = vld [vmem:[%s40 + $0x279] sm:$0xff]
  %v2357 = vld [vmem:[%s40 + $0x289] sm:$0xff]
  %v2358 = vld [vmem:[%s40 + $0x291] sm:$0xff]
  %v2359 = vld [vmem:[%s40 + $0x2a1] sm:$0xff]
  %v2360 = vld [vmem:[%s40 + $0x2a9] sm:$0xff]
  %v2361 = vld [vmem:[%s40 + $0x2b9] sm:$0xff]
  %v2362 = vld [vmem:[%s40 + $0x2c1] sm:$0xff]
  %v2363 = vld [vmem:[%s40 + $0x2d1] sm:$0xff]
  %v2364 = vld [vmem:[%s40 + $0x2d9] sm:$0xff]
  %v2365 = vld [vmem:[%s40 + $0x2e9] sm:$0xff]
  %v2366 = vld [vmem:[%s40 + $0x2f1] sm:$0xff]
  %v2367 = vld [vmem:[%s40 + $0x301] sm:$0xff]
  %v2368 = vld [vmem:[%s40 + $0x309] sm:$0xff]
  %v2369 = vld [vmem:[%s40 + $0x319] sm:$0xff]
  %v2370 = vld [vmem:[%s40 + $0x321] sm:$0xff]
  %v2371 = vpack.c.bf16 %v2308, %v2307
  %v2372 = vpack.c.bf16 %v2310, %v2309
  %v2373 = vpack.c.bf16 %v2312, %v2311
  %v2374 = vpack.c.bf16 %v2314, %v2313
  %v2375 = vpack.c.bf16 %v2316, %v2315
  %v2376 = vpack.c.bf16 %v2318, %v2317
  %v2377 = vpack.c.bf16 %v2320, %v2319
  %v2378 = vpack.c.bf16 %v2322, %v2321
  %v2379 = vpack.c.bf16 %v2324, %v2323
  %v2380 = vpack.c.bf16 %v2326, %v2325
  %v2381 = vpack.c.bf16 %v2328, %v2327
  %v2382 = vpack.c.bf16 %v2330, %v2329
  %v2383 = vpack.c.bf16 %v2332, %v2331
  %v2384 = vpack.c.bf16 %v2334, %v2333
  %v2385 = vpack.c.bf16 %v2336, %v2335
  %v2386 = vpack.c.bf16 %v2338, %v2337
  %v2387 = vpack.c.bf16 %v2340, %v2339
  %v2388 = vpack.c.bf16 %v2342, %v2341
  %v2389 = vpack.c.bf16 %v2344, %v2343
  %v2390 = vpack.c.bf16 %v2346, %v2345
  %v2391 = vpack.c.bf16 %v2348, %v2347
  %v2392 = vpack.c.bf16 %v2350, %v2349
  %v2393 = vpack.c.bf16 %v2352, %v2351
  %v2394 = vpack.c.bf16 %v2354, %v2353
  %v2395 = vpack.c.bf16 %v2356, %v2355
  %v2396 = vpack.c.bf16 %v2358, %v2357
  %v2397 = vpack.c.bf16 %v2360, %v2359
  %v2398 = vpack.c.bf16 %v2362, %v2361
  %v2399 = vpack.c.bf16 %v2364, %v2363
  %v2400 = vpack.c.bf16 %v2366, %v2365
  %v2401 = vpack.c.bf16 %v2368, %v2367
  %v2402 = vpack.c.bf16 %v2370, %v2369
  %v2404 = vsel %vm25, %v2371, 0
  %v2407 = vsel %vm25, %v2372, 0
  %v2410 = vsel %vm25, %v2373, 0
  %v2413 = vsel %vm25, %v2374, 0
  %v2416 = vsel %vm25, %v2375, 0
  %v2419 = vsel %vm25, %v2376, 0
  %v2422 = vsel %vm25, %v2377, 0
  %v2425 = vsel %vm25, %v2378, 0
  %v2428 = vsel %vm25, %v2379, 0
  %v2431 = vsel %vm25, %v2380, 0
  %v2434 = vsel %vm25, %v2381, 0
  %v2437 = vsel %vm25, %v2382, 0
  %v2440 = vsel %vm25, %v2383, 0
  %v2443 = vsel %vm25, %v2384, 0
  %v2446 = vsel %vm25, %v2385, 0
  %v2449 = vsel %vm25, %v2386, 0
  %v2452 = vsel %vm25, %v2387, 0
  %v2455 = vsel %vm25, %v2388, 0
  %v2458 = vsel %vm25, %v2389, 0
  %v2461 = vsel %vm25, %v2390, 0
  %v2464 = vsel %vm25, %v2391, 0
  %v2467 = vsel %vm25, %v2392, 0
  %v2470 = vsel %vm25, %v2393, 0
  %v2473 = vsel %vm25, %v2394, 0
  %v2476 = vsel %vm25, %v2395, 0
  %v2479 = vsel %vm25, %v2396, 0
  %v2482 = vsel %vm25, %v2397, 0
  %v2485 = vsel %vm25, %v2398, 0
  %v2488 = vsel %vm25, %v2399, 0
  %v2491 = vsel %vm25, %v2400, 0
  %v2494 = vsel %vm25, %v2401, 0
  %v2497 = vsel %vm25, %v2402, 0
  %v2500 = vsel %vm526, %v234, 0
  %2502 = vmatprep.subr.bf16.mxu0 0
  %2503 = vmatpush1.bf16.msra.mxu0 %v2500
  %2504 = vmatprep.subr.bf16.mxu0 0
  %2505 = vmatpush1.bf16.msra.mxu0 0
  %2506 = vmatprep.subr.bf16.mxu0 0
  %2507 = vmatpush1.bf16.msra.mxu0 0
  %2508 = vmatprep.subr.bf16.mxu0 0
  %2509 = vmatpush1.bf16.msra.mxu0 0
  %2510 = vmatprep.subr.bf16.mxu0 0
  %2511 = vmatpush1.bf16.msra.mxu0 0
  %2512 = vmatprep.subr.bf16.mxu0 0
  %2513 = vmatpush1.bf16.msra.mxu0 0
  %2514 = vmatprep.subr.bf16.mxu0 0
  %2515 = vmatpush1.bf16.msra.mxu0 0
  %2516 = vmatprep.subr.bf16.mxu0 0
  %2517 = vmatpush1.bf16.msra.mxu0 0
  %2518 = vmatprep.subr.bf16.mxu0 0
  %2519 = vmatpush1.bf16.msra.mxu0 0
  %2520 = vmatprep.subr.bf16.mxu0 0
  %2521 = vmatpush1.bf16.msra.mxu0 0
  %2522 = vmatprep.subr.bf16.mxu0 0
  %2523 = vmatpush1.bf16.msra.mxu0 0
  %2524 = vmatprep.subr.bf16.mxu0 0
  %2525 = vmatpush1.bf16.msra.mxu0 0
  %2526 = vmatprep.subr.bf16.mxu0 0
  %2527 = vmatpush1.bf16.msra.mxu0 0
  %2528 = vmatprep.subr.bf16.mxu0 0
  %2529 = vmatpush1.bf16.msra.mxu0 0
  %2530 = vmatprep.subr.bf16.mxu0 0
  %2531 = vmatpush1.bf16.msra.mxu0 0
  %2532 = vmatprep.subr.bf16.mxu0 0
  %2533 = vmatpush1.bf16.msra.mxu0 0
  %2534 = vmatprep.mubr.bf16.mxu0 0
  %2535 = vmatmul.mubr.bf16.gmra.mrb[0].mxu0 %v2404
  %v2536 = vpop.f32.mrb[0].mxu0
  %v2537 = vadd.f32 0.0, %v2536
  %v2538 = vpop.f32.mrb[0].mxu0
  %v2539 = vpop.f32.mrb[0].mxu0
  %v2540 = vadd.f32 0.0, %v2539
  %v2541 = vpop.f32.mrb[0].mxu0
  %2542 = vmatprep.mubr.bf16.mxu0 0
  %2543 = vmatmul.mubr.bf16.gmra.mrb[0].mxu0 %v2407
  %v2544 = vpop.f32.mrb[0].mxu0
  %v2545 = vadd.f32 0.0, %v2544
  %v2546 = vpop.f32.mrb[0].mxu0
  %v2547 = vpop.f32.mrb[0].mxu0
  %v2548 = vadd.f32 0.0, %v2547
  %v2549 = vpop.f32.mrb[0].mxu0
  %2550 = vmatprep.mubr.bf16.mxu0 0
  %2551 = vmatmul.mubr.bf16.gmra.mrb[0].mxu0 %v2410
  %v2552 = vpop.f32.mrb[0].mxu0
  %v2553 = vadd.f32 0.0, %v2552
  %v2554 = vpop.f32.mrb[0].mxu0
  %v2555 = vpop.f32.mrb[0].mxu0
  %v2556 = vadd.f32 0.0, %v2555
  %v2557 = vpop.f32.mrb[0].mxu0
  %2558 = vmatprep.mubr.bf16.mxu0 0
  %2559 = vmatmul.mubr.bf16.gmra.mrb[0].mxu0 %v2413
  %v2560 = vpop.f32.mrb[0].mxu0
  %v2561 = vadd.f32 0.0, %v2560
  %v2562 = vpop.f32.mrb[0].mxu0
  %v2563 = vpop.f32.mrb[0].mxu0
  %v2564 = vadd.f32 0.0, %v2563
  %v2565 = vpop.f32.mrb[0].mxu0
  %2566 = vmatprep.mubr.bf16.mxu0 0
  %2567 = vmatmul.mubr.bf16.gmra.mrb[0].mxu0 %v2416
  %v2568 = vpop.f32.mrb[0].mxu0
  %v2569 = vadd.f32 0.0, %v2568
  %v2570 = vpop.f32.mrb[0].mxu0
  %v2571 = vpop.f32.mrb[0].mxu0
  %v2572 = vadd.f32 0.0, %v2571
  %v2573 = vpop.f32.mrb[0].mxu0
  %2574 = vmatprep.mubr.bf16.mxu0 0
  %2575 = vmatmul.mubr.bf16.gmra.mrb[0].mxu0 %v2419
  %v2576 = vpop.f32.mrb[0].mxu0
  %v2577 = vadd.f32 0.0, %v2576
  %v2578 = vpop.f32.mrb[0].mxu0
  %v2579 = vpop.f32.mrb[0].mxu0
  %v2580 = vadd.f32 0.0, %v2579
  %v2581 = vpop.f32.mrb[0].mxu0
  %2582 = vmatprep.mubr.bf16.mxu0 0
  %2583 = vmatmul.mubr.bf16.gmra.mrb[0].mxu0 %v2422
  %v2584 = vpop.f32.mrb[0].mxu0
  %v2585 = vadd.f32 0.0, %v2584
  %v2586 = vpop.f32.mrb[0].mxu0
  %v2587 = vpop.f32.mrb[0].mxu0
  %v2588 = vadd.f32 0.0, %v2587
  %v2589 = vpop.f32.mrb[0].mxu0
  %2590 = vmatprep.mubr.bf16.mxu0 0
  %2591 = vmatmul.mubr.bf16.gmra.mrb[0].mxu0 %v2425
  %v2592 = vpop.f32.mrb[0].mxu0
  %v2593 = vadd.f32 0.0, %v2592
  %v2594 = vpop.f32.mrb[0].mxu0
  %v2595 = vpop.f32.mrb[0].mxu0
  %v2596 = vadd.f32 0.0, %v2595
  %v2597 = vpop.f32.mrb[0].mxu0
  %2598 = vmatprep.mubr.bf16.mxu0 0
  %2599 = vmatmul.mubr.bf16.gmra.mrb[0].mxu0 %v2428
  %v2600 = vpop.f32.mrb[0].mxu0
  %v2601 = vadd.f32 0.0, %v2600
  %v2602 = vpop.f32.mrb[0].mxu0
  %v2603 = vpop.f32.mrb[0].mxu0
  %v2604 = vadd.f32 0.0, %v2603
  %v2605 = vpop.f32.mrb[0].mxu0
  %2606 = vmatprep.mubr.bf16.mxu0 0
  %2607 = vmatmul.mubr.bf16.gmra.mrb[0].mxu0 %v2431
  %v2608 = vpop.f32.mrb[0].mxu0
  %v2609 = vadd.f32 0.0, %v2608
  %v2610 = vpop.f32.mrb[0].mxu0
  %v2611 = vpop.f32.mrb[0].mxu0
  %v2612 = vadd.f32 0.0, %v2611
  %v2613 = vpop.f32.mrb[0].mxu0
  %2614 = vmatprep.mubr.bf16.mxu0 0
  %2615 = vmatmul.mubr.bf16.gmra.mrb[0].mxu0 %v2434
  %v2616 = vpop.f32.mrb[0].mxu0
  %v2617 = vadd.f32 0.0, %v2616
  %v2618 = vpop.f32.mrb[0].mxu0
  %v2619 = vpop.f32.mrb[0].mxu0
  %v2620 = vadd.f32 0.0, %v2619
  %v2621 = vpop.f32.mrb[0].mxu0
  %2622 = vmatprep.mubr.bf16.mxu0 0
  %2623 = vmatmul.mubr.bf16.gmra.mrb[0].mxu0 %v2437
  %v2624 = vpop.f32.mrb[0].mxu0
  %v2625 = vadd.f32 0.0, %v2624
  %v2626 = vpop.f32.mrb[0].mxu0
  %v2627 = vpop.f32.mrb[0].mxu0
  %v2628 = vadd.f32 0.0, %v2627
  %v2629 = vpop.f32.mrb[0].mxu0
  %2630 = vmatprep.mubr.bf16.mxu0 0
  %2631 = vmatmul.mubr.bf16.gmra.mrb[0].mxu0 %v2440
  %v2632 = vpop.f32.mrb[0].mxu0
  %v2633 = vadd.f32 0.0, %v2632
  %v2634 = vpop.f32.mrb[0].mxu0
  %v2635 = vpop.f32.mrb[0].mxu0
  %v2636 = vadd.f32 0.0, %v2635
  %v2637 = vpop.f32.mrb[0].mxu0
  %2638 = vmatprep.mubr.bf16.mxu0 0
  %2639 = vmatmul.mubr.bf16.gmra.mrb[0].mxu0 %v2443
  %v2640 = vpop.f32.mrb[0].mxu0
  %v2641 = vadd.f32 0.0, %v2640
  %v2642 = vpop.f32.mrb[0].mxu0
  %v2643 = vpop.f32.mrb[0].mxu0
  %v2644 = vadd.f32 0.0, %v2643
  %v2645 = vpop.f32.mrb[0].mxu0
  %2646 = vmatprep.mubr.bf16.mxu0 0
  %2647 = vmatmul.mubr.bf16.gmra.mrb[0].mxu0 %v2446
  %v2648 = vpop.f32.mrb[0].mxu0
  %v2649 = vadd.f32 0.0, %v2648
  %v2650 = vpop.f32.mrb[0].mxu0
  %v2651 = vpop.f32.mrb[0].mxu0
  %v2652 = vadd.f32 0.0, %v2651
  %v2653 = vpop.f32.mrb[0].mxu0
  %2654 = vmatprep.mubr.bf16.mxu0 0
  %2655 = vmatmul.mubr.bf16.gmra.mrb[0].mxu0 %v2449
  %v2656 = vpop.f32.mrb[0].mxu0
  %v2657 = vadd.f32 0.0, %v2656
  %v2658 = vpop.f32.mrb[0].mxu0
  %v2659 = vpop.f32.mrb[0].mxu0
  %v2660 = vadd.f32 0.0, %v2659
  %v2661 = vpop.f32.mrb[0].mxu0
  %2662 = vmatprep.mubr.bf16.mxu0 0
  %2663 = vmatmul.mubr.bf16.gmra.mrb[0].mxu0 %v2452
  %v2664 = vpop.f32.mrb[0].mxu0
  %v2665 = vadd.f32 0.0, %v2664
  %v2666 = vpop.f32.mrb[0].mxu0
  %v2667 = vpop.f32.mrb[0].mxu0
  %v2668 = vadd.f32 0.0, %v2667
  %v2669 = vpop.f32.mrb[0].mxu0
  %2670 = vmatprep.mubr.bf16.mxu0 0
  %2671 = vmatmul.mubr.bf16.gmra.mrb[0].mxu0 %v2455
  %v2672 = vpop.f32.mrb[0].mxu0
  %v2673 = vadd.f32 0.0, %v2672
  %v2674 = vpop.f32.mrb[0].mxu0
  %v2675 = vpop.f32.mrb[0].mxu0
  %v2676 = vadd.f32 0.0, %v2675
  %v2677 = vpop.f32.mrb[0].mxu0
  %2678 = vmatprep.mubr.bf16.mxu0 0
  %2679 = vmatmul.mubr.bf16.gmra.mrb[0].mxu0 %v2458
  %v2680 = vpop.f32.mrb[0].mxu0
  %v2681 = vadd.f32 0.0, %v2680
  %v2682 = vpop.f32.mrb[0].mxu0
  %v2683 = vpop.f32.mrb[0].mxu0
  %v2684 = vadd.f32 0.0, %v2683
  %v2685 = vpop.f32.mrb[0].mxu0
  %2686 = vmatprep.mubr.bf16.mxu0 0
  %2687 = vmatmul.mubr.bf16.gmra.mrb[0].mxu0 %v2461
  %v2688 = vpop.f32.mrb[0].mxu0
  %v2689 = vadd.f32 0.0, %v2688
  %v2690 = vpop.f32.mrb[0].mxu0
  %v2691 = vpop.f32.mrb[0].mxu0
  %v2692 = vadd.f32 0.0, %v2691
  %v2693 = vpop.f32.mrb[0].mxu0
  %2694 = vmatprep.mubr.bf16.mxu0 0
  %2695 = vmatmul.mubr.bf16.gmra.mrb[0].mxu0 %v2464
  %v2696 = vpop.f32.mrb[0].mxu0
  %v2697 = vadd.f32 0.0, %v2696
  %v2698 = vpop.f32.mrb[0].mxu0
  %v2699 = vpop.f32.mrb[0].mxu0
  %v2700 = vadd.f32 0.0, %v2699
  %v2701 = vpop.f32.mrb[0].mxu0
  %2702 = vmatprep.mubr.bf16.mxu0 0
  %2703 = vmatmul.mubr.bf16.gmra.mrb[0].mxu0 %v2467
  %v2704 = vpop.f32.mrb[0].mxu0
  %v2705 = vadd.f32 0.0, %v2704
  %v2706 = vpop.f32.mrb[0].mxu0
  %v2707 = vpop.f32.mrb[0].mxu0
  %v2708 = vadd.f32 0.0, %v2707
  %v2709 = vpop.f32.mrb[0].mxu0
  %2710 = vmatprep.mubr.bf16.mxu0 0
  %2711 = vmatmul.mubr.bf16.gmra.mrb[0].mxu0 %v2470
  %v2712 = vpop.f32.mrb[0].mxu0
  %v2713 = vadd.f32 0.0, %v2712
  %v2714 = vpop.f32.mrb[0].mxu0
  %v2715 = vpop.f32.mrb[0].mxu0
  %v2716 = vadd.f32 0.0, %v2715
  %v2717 = vpop.f32.mrb[0].mxu0
  %2718 = vmatprep.mubr.bf16.mxu0 0
  %2719 = vmatmul.mubr.bf16.gmra.mrb[0].mxu0 %v2473
  %v2720 = vpop.f32.mrb[0].mxu0
  %v2721 = vadd.f32 0.0, %v2720
  %v2722 = vpop.f32.mrb[0].mxu0
  %v2723 = vpop.f32.mrb[0].mxu0
  %v2724 = vadd.f32 0.0, %v2723
  %v2725 = vpop.f32.mrb[0].mxu0
  %2726 = vmatprep.mubr.bf16.mxu0 0
  %2727 = vmatmul.mubr.bf16.gmra.mrb[0].mxu0 %v2476
  %v2728 = vpop.f32.mrb[0].mxu0
  %v2729 = vadd.f32 0.0, %v2728
  %v2730 = vpop.f32.mrb[0].mxu0
  %v2731 = vpop.f32.mrb[0].mxu0
  %v2732 = vadd.f32 0.0, %v2731
  %v2733 = vpop.f32.mrb[0].mxu0
  %2734 = vmatprep.mubr.bf16.mxu0 0
  %2735 = vmatmul.mubr.bf16.gmra.mrb[0].mxu0 %v2479
  %v2736 = vpop.f32.mrb[0].mxu0
  %v2737 = vadd.f32 0.0, %v2736
  %v2738 = vpop.f32.mrb[0].mxu0
  %v2739 = vpop.f32.mrb[0].mxu0
  %v2740 = vadd.f32 0.0, %v2739
  %v2741 = vpop.f32.mrb[0].mxu0
  %2742 = vmatprep.mubr.bf16.mxu0 0
  %2743 = vmatmul.mubr.bf16.gmra.mrb[0].mxu0 %v2482
  %v2744 = vpop.f32.mrb[0].mxu0
  %v2745 = vadd.f32 0.0, %v2744
  %v2746 = vpop.f32.mrb[0].mxu0
  %v2747 = vpop.f32.mrb[0].mxu0
  %v2748 = vadd.f32 0.0, %v2747
  %v2749 = vpop.f32.mrb[0].mxu0
  %2750 = vmatprep.mubr.bf16.mxu0 0
  %2751 = vmatmul.mubr.bf16.gmra.mrb[0].mxu0 %v2485
  %v2752 = vpop.f32.mrb[0].mxu0
  %v2753 = vadd.f32 0.0, %v2752
  %v2754 = vpop.f32.mrb[0].mxu0
  %v2755 = vpop.f32.mrb[0].mxu0
  %v2756 = vadd.f32 0.0, %v2755
  %v2757 = vpop.f32.mrb[0].mxu0
  %2758 = vmatprep.mubr.bf16.mxu0 0
  %2759 = vmatmul.mubr.bf16.gmra.mrb[0].mxu0 %v2488
  %v2760 = vpop.f32.mrb[0].mxu0
  %v2761 = vadd.f32 0.0, %v2760
  %v2762 = vpop.f32.mrb[0].mxu0
  %v2763 = vpop.f32.mrb[0].mxu0
  %v2764 = vadd.f32 0.0, %v2763
  %v2765 = vpop.f32.mrb[0].mxu0
  %2766 = vmatprep.mubr.bf16.mxu0 0
  %2767 = vmatmul.mubr.bf16.gmra.mrb[0].mxu0 %v2491
  %v2768 = vpop.f32.mrb[0].mxu0
  %v2769 = vadd.f32 0.0, %v2768
  %v2770 = vpop.f32.mrb[0].mxu0
  %v2771 = vpop.f32.mrb[0].mxu0
  %v2772 = vadd.f32 0.0, %v2771
  %v2773 = vpop.f32.mrb[0].mxu0
  %2774 = vmatprep.mubr.bf16.mxu0 0
  %2775 = vmatmul.mubr.bf16.gmra.mrb[0].mxu0 %v2494
  %v2776 = vpop.f32.mrb[0].mxu0
  %v2777 = vadd.f32 0.0, %v2776
  %v2778 = vpop.f32.mrb[0].mxu0
  %v2779 = vpop.f32.mrb[0].mxu0
  %v2780 = vadd.f32 0.0, %v2779
  %v2781 = vpop.f32.mrb[0].mxu0
  %2782 = vmatprep.mubr.bf16.mxu0 0
  %2783 = vmatmul.mubr.bf16.gmra.mrb[0].mxu0 %v2497
  %v2784 = vpop.f32.mrb[0].mxu0
  %v2785 = vadd.f32 0.0, %v2784
  %v2786 = vpop.f32.mrb[0].mxu0
  %v2787 = vpop.f32.mrb[0].mxu0
  %v2788 = vadd.f32 0.0, %v2787
  %v2789 = vpop.f32.mrb[0].mxu0
  %2790 = vdwg.mxu0
  %v2791 = vadd.f32 %v2243, %v2537
  %v2792 = vadd.f32 %v2244, %v2540
  %v2793 = vadd.f32 %v2245, %v2545
  %v2794 = vadd.f32 %v2246, %v2548
  %v2795 = vadd.f32 %v2247, %v2553
  %v2796 = vadd.f32 %v2248, %v2556
  %v2797 = vadd.f32 %v2249, %v2561
  %v2798 = vadd.f32 %v2250, %v2564
  %v2799 = vadd.f32 %v2251, %v2569
  %v2800 = vadd.f32 %v2252, %v2572
  %v2801 = vadd.f32 %v2253, %v2577
  %v2802 = vadd.f32 %v2254, %v2580
  %v2803 = vadd.f32 %v2255, %v2585
  %v2804 = vadd.f32 %v2256, %v2588
  %v2805 = vadd.f32 %v2257, %v2593
  %v2806 = vadd.f32 %v2258, %v2596
  %v2807 = vadd.f32 %v2259, %v2601
  %v2808 = vadd.f32 %v2260, %v2604
  %v2809 = vadd.f32 %v2261, %v2609
  %v2810 = vadd.f32 %v2262, %v2612
  %v2811 = vadd.f32 %v2263, %v2617
  %v2812 = vadd.f32 %v2264, %v2620
  %v2813 = vadd.f32 %v2265, %v2625
  %v2814 = vadd.f32 %v2266, %v2628
  %v2815 = vadd.f32 %v2267, %v2633
  %v2816 = vadd.f32 %v2268, %v2636
  %v2817 = vadd.f32 %v2269, %v2641
  %v2818 = vadd.f32 %v2270, %v2644
  %v2819 = vadd.f32 %v2271, %v2649
  %v2820 = vadd.f32 %v2272, %v2652
  %v2821 = vadd.f32 %v2273, %v2657
  %v2822 = vadd.f32 %v2274, %v2660
  %v2823 = vadd.f32 %v2275, %v2665
  %v2824 = vadd.f32 %v2276, %v2668
  %v2825 = vadd.f32 %v2277, %v2673
  %v2826 = vadd.f32 %v2278, %v2676
  %v2827 = vadd.f32 %v2279, %v2681
  %v2828 = vadd.f32 %v2280, %v2684
  %v2829 = vadd.f32 %v2281, %v2689
  %v2830 = vadd.f32 %v2282, %v2692
  %v2831 = vadd.f32 %v2283, %v2697
  %v2832 = vadd.f32 %v2284, %v2700
  %v2833 = vadd.f32 %v2285, %v2705
  %v2834 = vadd.f32 %v2286, %v2708
  %v2835 = vadd.f32 %v2287, %v2713
  %v2836 = vadd.f32 %v2288, %v2716
  %v2837 = vadd.f32 %v2289, %v2721
  %v2838 = vadd.f32 %v2290, %v2724
  %v2839 = vadd.f32 %v2291, %v2729
  %v2840 = vadd.f32 %v2292, %v2732
  %v2841 = vadd.f32 %v2293, %v2737
  %v2842 = vadd.f32 %v2294, %v2740
  %v2843 = vadd.f32 %v2295, %v2745
  %v2844 = vadd.f32 %v2296, %v2748
  %v2845 = vadd.f32 %v2297, %v2753
  %v2846 = vadd.f32 %v2298, %v2756
  %v2847 = vadd.f32 %v2299, %v2761
  %v2848 = vadd.f32 %v2300, %v2764
  %v2849 = vadd.f32 %v2301, %v2769
  %v2850 = vadd.f32 %v2302, %v2772
  %v2851 = vadd.f32 %v2303, %v2777
  %v2852 = vadd.f32 %v2304, %v2780
  %v2853 = vadd.f32 %v2305, %v2785
  %v2854 = vadd.f32 %v2306, %v2788
  %v2855 = vld [vmem:[%s40 + $0x2] sm:$0xff]
  %v2856 = vld [vmem:[%s40 + $0xa] sm:$0xff]
  %v2857 = vld [vmem:[%s40 + $0x1a] sm:$0xff]
  %v2858 = vld [vmem:[%s40 + $0x22] sm:$0xff]
  %v2859 = vld [vmem:[%s40 + $0x32] sm:$0xff]
  %v2860 = vld [vmem:[%s40 + $0x3a] sm:$0xff]
  %v2861 = vld [vmem:[%s40 + $0x4a] sm:$0xff]
  %v2862 = vld [vmem:[%s40 + $0x52] sm:$0xff]
  %v2863 = vld [vmem:[%s40 + $0x62] sm:$0xff]
  %v2864 = vld [vmem:[%s40 + $0x6a] sm:$0xff]
  %v2865 = vld [vmem:[%s40 + $0x7a] sm:$0xff]
  %v2866 = vld [vmem:[%s40 + $0x82] sm:$0xff]
  %v2867 = vld [vmem:[%s40 + $0x92] sm:$0xff]
  %v2868 = vld [vmem:[%s40 + $0x9a] sm:$0xff]
  %v2869 = vld [vmem:[%s40 + $0xaa] sm:$0xff]
  %v2870 = vld [vmem:[%s40 + $0xb2] sm:$0xff]
  %v2871 = vld [vmem:[%s40 + $0xc2] sm:$0xff]
  %v2872 = vld [vmem:[%s40 + $0xca] sm:$0xff]
  %v2873 = vld [vmem:[%s40 + $0xda] sm:$0xff]
  %v2874 = vld [vmem:[%s40 + $0xe2] sm:$0xff]
  %v2875 = vld [vmem:[%s40 + $0xf2] sm:$0xff]
  %v2876 = vld [vmem:[%s40 + $0xfa] sm:$0xff]
  %v2877 = vld [vmem:[%s40 + $0x10a] sm:$0xff]
  %v2878 = vld [vmem:[%s40 + $0x112] sm:$0xff]
  %v2879 = vld [vmem:[%s40 + $0x122] sm:$0xff]
  %v2880 = vld [vmem:[%s40 + $0x12a] sm:$0xff]
  %v2881 = vld [vmem:[%s40 + $0x13a] sm:$0xff]
  %v2882 = vld [vmem:[%s40 + $0x142] sm:$0xff]
  %v2883 = vld [vmem:[%s40 + $0x152] sm:$0xff]
  %v2884 = vld [vmem:[%s40 + $0x15a] sm:$0xff]
  %v2885 = vld [vmem:[%s40 + $0x16a] sm:$0xff]
  %v2886 = vld [vmem:[%s40 + $0x172] sm:$0xff]
  %v2887 = vld [vmem:[%s40 + $0x1b2] sm:$0xff]
  %v2888 = vld [vmem:[%s40 + $0x1ba] sm:$0xff]
  %v2889 = vld [vmem:[%s40 + $0x1ca] sm:$0xff]
  %v2890 = vld [vmem:[%s40 + $0x1d2] sm:$0xff]
  %v2891 = vld [vmem:[%s40 + $0x1e2] sm:$0xff]
  %v2892 = vld [vmem:[%s40 + $0x1ea] sm:$0xff]
  %v2893 = vld [vmem:[%s40 + $0x1fa] sm:$0xff]
  %v2894 = vld [vmem:[%s40 + $0x202] sm:$0xff]
  %v2895 = vld [vmem:[%s40 + $0x212] sm:$0xff]
  %v2896 = vld [vmem:[%s40 + $0x21a] sm:$0xff]
  %v2897 = vld [vmem:[%s40 + $0x22a] sm:$0xff]
  %v2898 = vld [vmem:[%s40 + $0x232] sm:$0xff]
  %v2899 = vld [vmem:[%s40 + $0x242] sm:$0xff]
  %v2900 = vld [vmem:[%s40 + $0x24a] sm:$0xff]
  %v2901 = vld [vmem:[%s40 + $0x25a] sm:$0xff]
  %v2902 = vld [vmem:[%s40 + $0x262] sm:$0xff]
  %v2903 = vld [vmem:[%s40 + $0x272] sm:$0xff]
  %v2904 = vld [vmem:[%s40 + $0x27a] sm:$0xff]
  %v2905 = vld [vmem:[%s40 + $0x28a] sm:$0xff]
  %v2906 = vld [vmem:[%s40 + $0x292] sm:$0xff]
  %v2907 = vld [vmem:[%s40 + $0x2a2] sm:$0xff]
  %v2908 = vld [vmem:[%s40 + $0x2aa] sm:$0xff]
  %v2909 = vld [vmem:[%s40 + $0x2ba] sm:$0xff]
  %v2910 = vld [vmem:[%s40 + $0x2c2] sm:$0xff]
  %v2911 = vld [vmem:[%s40 + $0x2d2] sm:$0xff]
  %v2912 = vld [vmem:[%s40 + $0x2da] sm:$0xff]
  %v2913 = vld [vmem:[%s40 + $0x2ea] sm:$0xff]
  %v2914 = vld [vmem:[%s40 + $0x2f2] sm:$0xff]
  %v2915 = vld [vmem:[%s40 + $0x302] sm:$0xff]
  %v2916 = vld [vmem:[%s40 + $0x30a] sm:$0xff]
  %v2917 = vld [vmem:[%s40 + $0x31a] sm:$0xff]
  %v2918 = vld [vmem:[%s40 + $0x322] sm:$0xff]
  %v2919 = vpack.c.bf16 %v2856, %v2855
  %v2920 = vpack.c.bf16 %v2858, %v2857
  %v2921 = vpack.c.bf16 %v2860, %v2859
  %v2922 = vpack.c.bf16 %v2862, %v2861
  %v2923 = vpack.c.bf16 %v2864, %v2863
  %v2924 = vpack.c.bf16 %v2866, %v2865
  %v2925 = vpack.c.bf16 %v2868, %v2867
  %v2926 = vpack.c.bf16 %v2870, %v2869
  %v2927 = vpack.c.bf16 %v2872, %v2871
  %v2928 = vpack.c.bf16 %v2874, %v2873
  %v2929 = vpack.c.bf16 %v2876, %v2875
  %v2930 = vpack.c.bf16 %v2878, %v2877
  %v2931 = vpack.c.bf16 %v2880, %v2879
  %v2932 = vpack.c.bf16 %v2882, %v2881
  %v2933 = vpack.c.bf16 %v2884, %v2883
  %v2934 = vpack.c.bf16 %v2886, %v2885
  %v2935 = vpack.c.bf16 %v2888, %v2887
  %v2936 = vpack.c.bf16 %v2890, %v2889
  %v2937 = vpack.c.bf16 %v2892, %v2891
  %v2938 = vpack.c.bf16 %v2894, %v2893
  %v2939 = vpack.c.bf16 %v2896, %v2895
  %v2940 = vpack.c.bf16 %v2898, %v2897
  %v2941 = vpack.c.bf16 %v2900, %v2899
  %v2942 = vpack.c.bf16 %v2902, %v2901
  %v2943 = vpack.c.bf16 %v2904, %v2903
  %v2944 = vpack.c.bf16 %v2906, %v2905
  %v2945 = vpack.c.bf16 %v2908, %v2907
  %v2946 = vpack.c.bf16 %v2910, %v2909
  %v2947 = vpack.c.bf16 %v2912, %v2911
  %v2948 = vpack.c.bf16 %v2914, %v2913
  %v2949 = vpack.c.bf16 %v2916, %v2915
  %v2950 = vpack.c.bf16 %v2918, %v2917
  %s2951 = scalar_lea.vmem %s1, 10
  %v2952 = vld [vmem:[%s2951] sm:$0x3]
  %v2954 = vsel %vm25, %v2919, 0
  %v2957 = vsel %vm25, %v2920, 0
  %v2960 = vsel %vm25, %v2921, 0
  %v2963 = vsel %vm25, %v2922, 0
  %v2966 = vsel %vm25, %v2923, 0
  %v2969 = vsel %vm25, %v2924, 0
  %v2972 = vsel %vm25, %v2925, 0
  %v2975 = vsel %vm25, %v2926, 0
  %v2978 = vsel %vm25, %v2927, 0
  %v2981 = vsel %vm25, %v2928, 0
  %v2984 = vsel %vm25, %v2929, 0
  %v2987 = vsel %vm25, %v2930, 0
  %v2990 = vsel %vm25, %v2931, 0
  %v2993 = vsel %vm25, %v2932, 0
  %v2996 = vsel %vm25, %v2933, 0
  %v2999 = vsel %vm25, %v2934, 0
  %v3002 = vsel %vm25, %v2935, 0
  %v3005 = vsel %vm25, %v2936, 0
  %v3008 = vsel %vm25, %v2937, 0
  %v3011 = vsel %vm25, %v2938, 0
  %v3014 = vsel %vm25, %v2939, 0
  %v3017 = vsel %vm25, %v2940, 0
  %v3020 = vsel %vm25, %v2941, 0
  %v3023 = vsel %vm25, %v2942, 0
  %v3026 = vsel %vm25, %v2943, 0
  %v3029 = vsel %vm25, %v2944, 0
  %v3032 = vsel %vm25, %v2945, 0
  %v3035 = vsel %vm25, %v2946, 0
  %v3038 = vsel %vm25, %v2947, 0
  %v3041 = vsel %vm25, %v2948, 0
  %v3044 = vsel %vm25, %v2949, 0
  %v3047 = vsel %vm25, %v2950, 0
  %v3050 = vsel %vm526, %v2952, 0
  %3052 = vmatprep.subr.bf16.mxu0 0
  %3053 = vmatpush1.bf16.msra.mxu0 %v3050
  %3054 = vmatprep.subr.bf16.mxu0 0
  %3055 = vmatpush1.bf16.msra.mxu0 0
  %3056 = vmatprep.subr.bf16.mxu0 0
  %3057 = vmatpush1.bf16.msra.mxu0 0
  %3058 = vmatprep.subr.bf16.mxu0 0
  %3059 = vmatpush1.bf16.msra.mxu0 0
  %3060 = vmatprep.subr.bf16.mxu0 0
  %3061 = vmatpush1.bf16.msra.mxu0 0
  %3062 = vmatprep.subr.bf16.mxu0 0
  %3063 = vmatpush1.bf16.msra.mxu0 0
  %3064 = vmatprep.subr.bf16.mxu0 0
  %3065 = vmatpush1.bf16.msra.mxu0 0
  %3066 = vmatprep.subr.bf16.mxu0 0
  %3067 = vmatpush1.bf16.msra.mxu0 0
  %3068 = vmatprep.subr.bf16.mxu0 0
  %3069 = vmatpush1.bf16.msra.mxu0 0
  %3070 = vmatprep.subr.bf16.mxu0 0
  %3071 = vmatpush1.bf16.msra.mxu0 0
  %3072 = vmatprep.subr.bf16.mxu0 0
  %3073 = vmatpush1.bf16.msra.mxu0 0
  %3074 = vmatprep.subr.bf16.mxu0 0
  %3075 = vmatpush1.bf16.msra.mxu0 0
  %3076 = vmatprep.subr.bf16.mxu0 0
  %3077 = vmatpush1.bf16.msra.mxu0 0
  %3078 = vmatprep.subr.bf16.mxu0 0
  %3079 = vmatpush1.bf16.msra.mxu0 0
  %3080 = vmatprep.subr.bf16.mxu0 0
  %3081 = vmatpush1.bf16.msra.mxu0 0
  %3082 = vmatprep.subr.bf16.mxu0 0
  %3083 = vmatpush1.bf16.msra.mxu0 0
  %3084 = vmatprep.mubr.bf16.mxu0 0
  %3085 = vmatmul.mubr.bf16.gmra.mrb[0].mxu0 %v2954
  %v3086 = vpop.f32.mrb[0].mxu0
  %v3087 = vadd.f32 0.0, %v3086
  %v3088 = vpop.f32.mrb[0].mxu0
  %v3089 = vpop.f32.mrb[0].mxu0
  %v3090 = vadd.f32 0.0, %v3089
  %v3091 = vpop.f32.mrb[0].mxu0
  %3092 = vmatprep.mubr.bf16.mxu0 0
  %3093 = vmatmul.mubr.bf16.gmra.mrb[0].mxu0 %v2957
  %v3094 = vpop.f32.mrb[0].mxu0
  %v3095 = vadd.f32 0.0, %v3094
  %v3096 = vpop.f32.mrb[0].mxu0
  %v3097 = vpop.f32.mrb[0].mxu0
  %v3098 = vadd.f32 0.0, %v3097
  %v3099 = vpop.f32.mrb[0].mxu0
  %3100 = vmatprep.mubr.bf16.mxu0 0
  %3101 = vmatmul.mubr.bf16.gmra.mrb[0].mxu0 %v2960
  %v3102 = vpop.f32.mrb[0].mxu0
  %v3103 = vadd.f32 0.0, %v3102
  %v3104 = vpop.f32.mrb[0].mxu0
  %v3105 = vpop.f32.mrb[0].mxu0
  %v3106 = vadd.f32 0.0, %v3105
  %v3107 = vpop.f32.mrb[0].mxu0
  %3108 = vmatprep.mubr.bf16.mxu0 0
  %3109 = vmatmul.mubr.bf16.gmra.mrb[0].mxu0 %v2963
  %v3110 = vpop.f32.mrb[0].mxu0
  %v3111 = vadd.f32 0.0, %v3110
  %v3112 = vpop.f32.mrb[0].mxu0
  %v3113 = vpop.f32.mrb[0].mxu0
  %v3114 = vadd.f32 0.0, %v3113
  %v3115 = vpop.f32.mrb[0].mxu0
  %3116 = vmatprep.mubr.bf16.mxu0 0
  %3117 = vmatmul.mubr.bf16.gmra.mrb[0].mxu0 %v2966
  %v3118 = vpop.f32.mrb[0].mxu0
  %v3119 = vadd.f32 0.0, %v3118
  %v3120 = vpop.f32.mrb[0].mxu0
  %v3121 = vpop.f32.mrb[0].mxu0
  %v3122 = vadd.f32 0.0, %v3121
  %v3123 = vpop.f32.mrb[0].mxu0
  %3124 = vmatprep.mubr.bf16.mxu0 0
  %3125 = vmatmul.mubr.bf16.gmra.mrb[0].mxu0 %v2969
  %v3126 = vpop.f32.mrb[0].mxu0
  %v3127 = vadd.f32 0.0, %v3126
  %v3128 = vpop.f32.mrb[0].mxu0
  %v3129 = vpop.f32.mrb[0].mxu0
  %v3130 = vadd.f32 0.0, %v3129
  %v3131 = vpop.f32.mrb[0].mxu0
  %3132 = vmatprep.mubr.bf16.mxu0 0
  %3133 = vmatmul.mubr.bf16.gmra.mrb[0].mxu0 %v2972
  %v3134 = vpop.f32.mrb[0].mxu0
  %v3135 = vadd.f32 0.0, %v3134
  %v3136 = vpop.f32.mrb[0].mxu0
  %v3137 = vpop.f32.mrb[0].mxu0
  %v3138 = vadd.f32 0.0, %v3137
  %v3139 = vpop.f32.mrb[0].mxu0
  %3140 = vmatprep.mubr.bf16.mxu0 0
  %3141 = vmatmul.mubr.bf16.gmra.mrb[0].mxu0 %v2975
  %v3142 = vpop.f32.mrb[0].mxu0
  %v3143 = vadd.f32 0.0, %v3142
  %v3144 = vpop.f32.mrb[0].mxu0
  %v3145 = vpop.f32.mrb[0].mxu0
  %v3146 = vadd.f32 0.0, %v3145
  %v3147 = vpop.f32.mrb[0].mxu0
  %3148 = vmatprep.mubr.bf16.mxu0 0
  %3149 = vmatmul.mubr.bf16.gmra.mrb[0].mxu0 %v2978
  %v3150 = vpop.f32.mrb[0].mxu0
  %v3151 = vadd.f32 0.0, %v3150
  %v3152 = vpop.f32.mrb[0].mxu0
  %v3153 = vpop.f32.mrb[0].mxu0
  %v3154 = vadd.f32 0.0, %v3153
  %v3155 = vpop.f32.mrb[0].mxu0
  %3156 = vmatprep.mubr.bf16.mxu0 0
  %3157 = vmatmul.mubr.bf16.gmra.mrb[0].mxu0 %v2981
  %v3158 = vpop.f32.mrb[0].mxu0
  %v3159 = vadd.f32 0.0, %v3158
  %v3160 = vpop.f32.mrb[0].mxu0
  %v3161 = vpop.f32.mrb[0].mxu0
  %v3162 = vadd.f32 0.0, %v3161
  %v3163 = vpop.f32.mrb[0].mxu0
  %3164 = vmatprep.mubr.bf16.mxu0 0
  %3165 = vmatmul.mubr.bf16.gmra.mrb[0].mxu0 %v2984
  %v3166 = vpop.f32.mrb[0].mxu0
  %v3167 = vadd.f32 0.0, %v3166
  %v3168 = vpop.f32.mrb[0].mxu0
  %v3169 = vpop.f32.mrb[0].mxu0
  %v3170 = vadd.f32 0.0, %v3169
  %v3171 = vpop.f32.mrb[0].mxu0
  %3172 = vmatprep.mubr.bf16.mxu0 0
  %3173 = vmatmul.mubr.bf16.gmra.mrb[0].mxu0 %v2987
  %v3174 = vpop.f32.mrb[0].mxu0
  %v3175 = vadd.f32 0.0, %v3174
  %v3176 = vpop.f32.mrb[0].mxu0
  %v3177 = vpop.f32.mrb[0].mxu0
  %v3178 = vadd.f32 0.0, %v3177
  %v3179 = vpop.f32.mrb[0].mxu0
  %3180 = vmatprep.mubr.bf16.mxu0 0
  %3181 = vmatmul.mubr.bf16.gmra.mrb[0].mxu0 %v2990
  %v3182 = vpop.f32.mrb[0].mxu0
  %v3183 = vadd.f32 0.0, %v3182
  %v3184 = vpop.f32.mrb[0].mxu0
  %v3185 = vpop.f32.mrb[0].mxu0
  %v3186 = vadd.f32 0.0, %v3185
  %v3187 = vpop.f32.mrb[0].mxu0
  %3188 = vmatprep.mubr.bf16.mxu0 0
  %3189 = vmatmul.mubr.bf16.gmra.mrb[0].mxu0 %v2993
  %v3190 = vpop.f32.mrb[0].mxu0
  %v3191 = vadd.f32 0.0, %v3190
  %v3192 = vpop.f32.mrb[0].mxu0
  %v3193 = vpop.f32.mrb[0].mxu0
  %v3194 = vadd.f32 0.0, %v3193
  %v3195 = vpop.f32.mrb[0].mxu0
  %3196 = vmatprep.mubr.bf16.mxu0 0
  %3197 = vmatmul.mubr.bf16.gmra.mrb[0].mxu0 %v2996
  %v3198 = vpop.f32.mrb[0].mxu0
  %v3199 = vadd.f32 0.0, %v3198
  %v3200 = vpop.f32.mrb[0].mxu0
  %v3201 = vpop.f32.mrb[0].mxu0
  %v3202 = vadd.f32 0.0, %v3201
  %v3203 = vpop.f32.mrb[0].mxu0
  %3204 = vmatprep.mubr.bf16.mxu0 0
  %3205 = vmatmul.mubr.bf16.gmra.mrb[0].mxu0 %v2999
  %v3206 = vpop.f32.mrb[0].mxu0
  %v3207 = vadd.f32 0.0, %v3206
  %v3208 = vpop.f32.mrb[0].mxu0
  %v3209 = vpop.f32.mrb[0].mxu0
  %v3210 = vadd.f32 0.0, %v3209
  %v3211 = vpop.f32.mrb[0].mxu0
  %3212 = vmatprep.mubr.bf16.mxu0 0
  %3213 = vmatmul.mubr.bf16.gmra.mrb[0].mxu0 %v3002
  %v3214 = vpop.f32.mrb[0].mxu0
  %v3215 = vadd.f32 0.0, %v3214
  %v3216 = vpop.f32.mrb[0].mxu0
  %v3217 = vpop.f32.mrb[0].mxu0
  %v3218 = vadd.f32 0.0, %v3217
  %v3219 = vpop.f32.mrb[0].mxu0
  %3220 = vmatprep.mubr.bf16.mxu0 0
  %3221 = vmatmul.mubr.bf16.gmra.mrb[0].mxu0 %v3005
  %v3222 = vpop.f32.mrb[0].mxu0
  %v3223 = vadd.f32 0.0, %v3222
  %v3224 = vpop.f32.mrb[0].mxu0
  %v3225 = vpop.f32.mrb[0].mxu0
  %v3226 = vadd.f32 0.0, %v3225
  %v3227 = vpop.f32.mrb[0].mxu0
  %3228 = vmatprep.mubr.bf16.mxu0 0
  %3229 = vmatmul.mubr.bf16.gmra.mrb[0].mxu0 %v3008
  %v3230 = vpop.f32.mrb[0].mxu0
  %v3231 = vadd.f32 0.0, %v3230
  %v3232 = vpop.f32.mrb[0].mxu0
  %v3233 = vpop.f32.mrb[0].mxu0
  %v3234 = vadd.f32 0.0, %v3233
  %v3235 = vpop.f32.mrb[0].mxu0
  %3236 = vmatprep.mubr.bf16.mxu0 0
  %3237 = vmatmul.mubr.bf16.gmra.mrb[0].mxu0 %v3011
  %v3238 = vpop.f32.mrb[0].mxu0
  %v3239 = vadd.f32 0.0, %v3238
  %v3240 = vpop.f32.mrb[0].mxu0
  %v3241 = vpop.f32.mrb[0].mxu0
  %v3242 = vadd.f32 0.0, %v3241
  %v3243 = vpop.f32.mrb[0].mxu0
  %3244 = vmatprep.mubr.bf16.mxu0 0
  %3245 = vmatmul.mubr.bf16.gmra.mrb[0].mxu0 %v3014
  %v3246 = vpop.f32.mrb[0].mxu0
  %v3247 = vadd.f32 0.0, %v3246
  %v3248 = vpop.f32.mrb[0].mxu0
  %v3249 = vpop.f32.mrb[0].mxu0
  %v3250 = vadd.f32 0.0, %v3249
  %v3251 = vpop.f32.mrb[0].mxu0
  %3252 = vmatprep.mubr.bf16.mxu0 0
  %3253 = vmatmul.mubr.bf16.gmra.mrb[0].mxu0 %v3017
  %v3254 = vpop.f32.mrb[0].mxu0
  %v3255 = vadd.f32 0.0, %v3254
  %v3256 = vpop.f32.mrb[0].mxu0
  %v3257 = vpop.f32.mrb[0].mxu0
  %v3258 = vadd.f32 0.0, %v3257
  %v3259 = vpop.f32.mrb[0].mxu0
  %3260 = vmatprep.mubr.bf16.mxu0 0
  %3261 = vmatmul.mubr.bf16.gmra.mrb[0].mxu0 %v3020
  %v3262 = vpop.f32.mrb[0].mxu0
  %v3263 = vadd.f32 0.0, %v3262
  %v3264 = vpop.f32.mrb[0].mxu0
  %v3265 = vpop.f32.mrb[0].mxu0
  %v3266 = vadd.f32 0.0, %v3265
  %v3267 = vpop.f32.mrb[0].mxu0
  %3268 = vmatprep.mubr.bf16.mxu0 0
  %3269 = vmatmul.mubr.bf16.gmra.mrb[0].mxu0 %v3023
  %v3270 = vpop.f32.mrb[0].mxu0
  %v3271 = vadd.f32 0.0, %v3270
  %v3272 = vpop.f32.mrb[0].mxu0
  %v3273 = vpop.f32.mrb[0].mxu0
  %v3274 = vadd.f32 0.0, %v3273
  %v3275 = vpop.f32.mrb[0].mxu0
  %3276 = vmatprep.mubr.bf16.mxu0 0
  %3277 = vmatmul.mubr.bf16.gmra.mrb[0].mxu0 %v3026
  %v3278 = vpop.f32.mrb[0].mxu0
  %v3279 = vadd.f32 0.0, %v3278
  %v3280 = vpop.f32.mrb[0].mxu0
  %v3281 = vpop.f32.mrb[0].mxu0
  %v3282 = vadd.f32 0.0, %v3281
  %v3283 = vpop.f32.mrb[0].mxu0
  %3284 = vmatprep.mubr.bf16.mxu0 0
  %3285 = vmatmul.mubr.bf16.gmra.mrb[0].mxu0 %v3029
  %v3286 = vpop.f32.mrb[0].mxu0
  %v3287 = vadd.f32 0.0, %v3286
  %v3288 = vpop.f32.mrb[0].mxu0
  %v3289 = vpop.f32.mrb[0].mxu0
  %v3290 = vadd.f32 0.0, %v3289
  %v3291 = vpop.f32.mrb[0].mxu0
  %3292 = vmatprep.mubr.bf16.mxu0 0
  %3293 = vmatmul.mubr.bf16.gmra.mrb[0].mxu0 %v3032
  %v3294 = vpop.f32.mrb[0].mxu0
  %v3295 = vadd.f32 0.0, %v3294
  %v3296 = vpop.f32.mrb[0].mxu0
  %v3297 = vpop.f32.mrb[0].mxu0
  %v3298 = vadd.f32 0.0, %v3297
  %v3299 = vpop.f32.mrb[0].mxu0
  %3300 = vmatprep.mubr.bf16.mxu0 0
  %3301 = vmatmul.mubr.bf16.gmra.mrb[0].mxu0 %v3035
  %v3302 = vpop.f32.mrb[0].mxu0
  %v3303 = vadd.f32 0.0, %v3302
  %v3304 = vpop.f32.mrb[0].mxu0
  %v3305 = vpop.f32.mrb[0].mxu0
  %v3306 = vadd.f32 0.0, %v3305
  %v3307 = vpop.f32.mrb[0].mxu0
  %3308 = vmatprep.mubr.bf16.mxu0 0
  %3309 = vmatmul.mubr.bf16.gmra.mrb[0].mxu0 %v3038
  %v3310 = vpop.f32.mrb[0].mxu0
  %v3311 = vadd.f32 0.0, %v3310
  %v3312 = vpop.f32.mrb[0].mxu0
  %v3313 = vpop.f32.mrb[0].mxu0
  %v3314 = vadd.f32 0.0, %v3313
  %v3315 = vpop.f32.mrb[0].mxu0
  %3316 = vmatprep.mubr.bf16.mxu0 0
  %3317 = vmatmul.mubr.bf16.gmra.mrb[0].mxu0 %v3041
  %v3318 = vpop.f32.mrb[0].mxu0
  %v3319 = vadd.f32 0.0, %v3318
  %v3320 = vpop.f32.mrb[0].mxu0
  %v3321 = vpop.f32.mrb[0].mxu0
  %v3322 = vadd.f32 0.0, %v3321
  %v3323 = vpop.f32.mrb[0].mxu0
  %3324 = vmatprep.mubr.bf16.mxu0 0
  %3325 = vmatmul.mubr.bf16.gmra.mrb[0].mxu0 %v3044
  %v3326 = vpop.f32.mrb[0].mxu0
  %v3327 = vadd.f32 0.0, %v3326
  %v3328 = vpop.f32.mrb[0].mxu0
  %v3329 = vpop.f32.mrb[0].mxu0
  %v3330 = vadd.f32 0.0, %v3329
  %v3331 = vpop.f32.mrb[0].mxu0
  %3332 = vmatprep.mubr.bf16.mxu0 0
  %3333 = vmatmul.mubr.bf16.gmra.mrb[0].mxu0 %v3047
  %v3334 = vpop.f32.mrb[0].mxu0
  %v3335 = vadd.f32 0.0, %v3334
  %v3336 = vpop.f32.mrb[0].mxu0
  %v3337 = vpop.f32.mrb[0].mxu0
  %v3338 = vadd.f32 0.0, %v3337
  %v3339 = vpop.f32.mrb[0].mxu0
  %3340 = vdwg.mxu0
  %v3341 = vadd.f32 %v2791, %v3087
  %v3342 = vadd.f32 %v2792, %v3090
  %v3343 = vadd.f32 %v2793, %v3095
  %v3344 = vadd.f32 %v2794, %v3098
  %v3345 = vadd.f32 %v2795, %v3103
  %v3346 = vadd.f32 %v2796, %v3106
  %v3347 = vadd.f32 %v2797, %v3111
  %v3348 = vadd.f32 %v2798, %v3114
  %v3349 = vadd.f32 %v2799, %v3119
  %v3350 = vadd.f32 %v2800, %v3122
  %v3351 = vadd.f32 %v2801, %v3127
  %v3352 = vadd.f32 %v2802, %v3130
  %v3353 = vadd.f32 %v2803, %v3135
  %v3354 = vadd.f32 %v2804, %v3138
  %v3355 = vadd.f32 %v2805, %v3143
  %v3356 = vadd.f32 %v2806, %v3146
  %v3357 = vadd.f32 %v2807, %v3151
  %v3358 = vadd.f32 %v2808, %v3154
  %v3359 = vadd.f32 %v2809, %v3159
  %v3360 = vadd.f32 %v2810, %v3162
  %v3361 = vadd.f32 %v2811, %v3167
  %v3362 = vadd.f32 %v2812, %v3170
  %v3363 = vadd.f32 %v2813, %v3175
  %v3364 = vadd.f32 %v2814, %v3178
  %v3365 = vadd.f32 %v2815, %v3183
  %v3366 = vadd.f32 %v2816, %v3186
  %v3367 = vadd.f32 %v2817, %v3191
  %v3368 = vadd.f32 %v2818, %v3194
  %v3369 = vadd.f32 %v2819, %v3199
  %v3370 = vadd.f32 %v2820, %v3202
  %v3371 = vadd.f32 %v2821, %v3207
  %v3372 = vadd.f32 %v2822, %v3210
  %v3373 = vadd.f32 %v2823, %v3215
  %v3374 = vadd.f32 %v2824, %v3218
  %v3375 = vadd.f32 %v2825, %v3223
  %v3376 = vadd.f32 %v2826, %v3226
  %v3377 = vadd.f32 %v2827, %v3231
  %v3378 = vadd.f32 %v2828, %v3234
  %v3379 = vadd.f32 %v2829, %v3239
  %v3380 = vadd.f32 %v2830, %v3242
  %v3381 = vadd.f32 %v2831, %v3247
  %v3382 = vadd.f32 %v2832, %v3250
  %v3383 = vadd.f32 %v2833, %v3255
  %v3384 = vadd.f32 %v2834, %v3258
  %v3385 = vadd.f32 %v2835, %v3263
  %v3386 = vadd.f32 %v2836, %v3266
  %v3387 = vadd.f32 %v2837, %v3271
  %v3388 = vadd.f32 %v2838, %v3274
  %v3389 = vadd.f32 %v2839, %v3279
  %v3390 = vadd.f32 %v2840, %v3282
  %v3391 = vadd.f32 %v2841, %v3287
  %v3392 = vadd.f32 %v2842, %v3290
  %v3393 = vadd.f32 %v2843, %v3295
  %v3394 = vadd.f32 %v2844, %v3298
  %v3395 = vadd.f32 %v2845, %v3303
  %v3396 = vadd.f32 %v2846, %v3306
  %v3397 = vadd.f32 %v2847, %v3311
  %v3398 = vadd.f32 %v2848, %v3314
  %v3399 = vadd.f32 %v2849, %v3319
  %v3400 = vadd.f32 %v2850, %v3322
  %v3401 = vadd.f32 %v2851, %v3327
  %v3402 = vadd.f32 %v2852, %v3330
  %v3403 = vadd.f32 %v2853, %v3335
  %v3404 = vadd.f32 %v2854, %v3338
  %s3405 = scalar_lea.vmem [#allocation2], 48
  %v3406 = vld [vmem:[%s3405] sm:$0xff]
  %v3407 = vld [vmem:[%s3405 + $0x8] sm:$0xff]
  %v3408 = vld [vmem:[%s3405 + $0x18] sm:$0xff]
  %v3409 = vld [vmem:[%s3405 + $0x20] sm:$0xff]
  %v3410 = vld [vmem:[%s3405 + $0x30] sm:$0xff]
  %v3411 = vld [vmem:[%s3405 + $0x38] sm:$0xff]
  %v3412 = vld [vmem:[%s3405 + $0x48] sm:$0xff]
  %v3413 = vld [vmem:[%s3405 + $0x50] sm:$0xff]
  %v3414 = vld [vmem:[%s3405 + $0x60] sm:$0xff]
  %v3415 = vld [vmem:[%s3405 + $0x68] sm:$0xff]
  %v3416 = vld [vmem:[%s3405 + $0x78] sm:$0xff]
  %v3417 = vld [vmem:[%s3405 + $0x80] sm:$0xff]
  %v3418 = vld [vmem:[%s3405 + $0x90] sm:$0xff]
  %v3419 = vld [vmem:[%s3405 + $0x98] sm:$0xff]
  %v3420 = vld [vmem:[%s3405 + $0xa8] sm:$0xff]
  %v3421 = vld [vmem:[%s3405 + $0xb0] sm:$0xff]
  %v3422 = vld [vmem:[%s3405 + $0xc0] sm:$0xff]
  %v3423 = vld [vmem:[%s3405 + $0xc8] sm:$0xff]
  %v3424 = vld [vmem:[%s3405 + $0xd8] sm:$0xff]
  %v3425 = vld [vmem:[%s3405 + $0xe0] sm:$0xff]
  %v3426 = vld [vmem:[%s3405 + $0xf0] sm:$0xff]
  %v3427 = vld [vmem:[%s3405 + $0xf8] sm:$0xff]
  %v3428 = vld [vmem:[%s3405 + $0x108] sm:$0xff]
  %v3429 = vld [vmem:[%s3405 + $0x110] sm:$0xff]
  %v3430 = vld [vmem:[%s3405 + $0x120] sm:$0xff]
  %v3431 = vld [vmem:[%s3405 + $0x128] sm:$0xff]
  %v3432 = vld [vmem:[%s3405 + $0x138] sm:$0xff]
  %v3433 = vld [vmem:[%s3405 + $0x140] sm:$0xff]
  %v3434 = vld [vmem:[%s3405 + $0x150] sm:$0xff]
  %v3435 = vld [vmem:[%s3405 + $0x158] sm:$0xff]
  %v3436 = vld [vmem:[%s3405 + $0x168] sm:$0xff]
  %v3437 = vld [vmem:[%s3405 + $0x170] sm:$0xff]
  %v3438 = vld [vmem:[%s3405 + $0x1b0] sm:$0xff]
  %v3439 = vld [vmem:[%s3405 + $0x1b8] sm:$0xff]
  %v3440 = vld [vmem:[%s3405 + $0x1c8] sm:$0xff]
  %v3441 = vld [vmem:[%s3405 + $0x1d0] sm:$0xff]
  %v3442 = vld [vmem:[%s3405 + $0x1e0] sm:$0xff]
  %v3443 = vld [vmem:[%s3405 + $0x1e8] sm:$0xff]
  %v3444 = vld [vmem:[%s3405 + $0x1f8] sm:$0xff]
  %v3445 = vld [vmem:[%s3405 + $0x200] sm:$0xff]
  %v3446 = vld [vmem:[%s3405 + $0x210] sm:$0xff]
  %v3447 = vld [vmem:[%s3405 + $0x218] sm:$0xff]
  %v3448 = vld [vmem:[%s3405 + $0x228] sm:$0xff]
  %v3449 = vld [vmem:[%s3405 + $0x230] sm:$0xff]
  %v3450 = vld [vmem:[%s3405 + $0x240] sm:$0xff]
  %v3451 = vld [vmem:[%s3405 + $0x248] sm:$0xff]
  %v3452 = vld [vmem:[%s3405 + $0x258] sm:$0xff]
  %v3453 = vld [vmem:[%s3405 + $0x260] sm:$0xff]
  %v3454 = vld [vmem:[%s3405 + $0x270] sm:$0xff]
  %v3455 = vld [vmem:[%s3405 + $0x278] sm:$0xff]
  %v3456 = vld [vmem:[%s3405 + $0x288] sm:$0xff]
  %v3457 = vld [vmem:[%s3405 + $0x290] sm:$0xff]
  %v3458 = vld [vmem:[%s3405 + $0x2a0] sm:$0xff]
  %v3459 = vld [vmem:[%s3405 + $0x2a8] sm:$0xff]
  %v3460 = vld [vmem:[%s3405 + $0x2b8] sm:$0xff]
  %v3461 = vld [vmem:[%s3405 + $0x2c0] sm:$0xff]
  %v3462 = vld [vmem:[%s3405 + $0x2d0] sm:$0xff]
  %v3463 = vld [vmem:[%s3405 + $0x2d8] sm:$0xff]
  %v3464 = vld [vmem:[%s3405 + $0x2e8] sm:$0xff]
  %v3465 = vld [vmem:[%s3405 + $0x2f0] sm:$0xff]
  %v3466 = vld [vmem:[%s3405 + $0x300] sm:$0xff]
  %v3467 = vld [vmem:[%s3405 + $0x308] sm:$0xff]
  %v3468 = vld [vmem:[%s3405 + $0x318] sm:$0xff]
  %v3469 = vld [vmem:[%s3405 + $0x320] sm:$0xff]
  %v3470 = vpack.c.bf16 %v3407, %v3406
  %v3471 = vpack.c.bf16 %v3409, %v3408
  %v3472 = vpack.c.bf16 %v3411, %v3410
  %v3473 = vpack.c.bf16 %v3413, %v3412
  %v3474 = vpack.c.bf16 %v3415, %v3414
  %v3475 = vpack.c.bf16 %v3417, %v3416
  %v3476 = vpack.c.bf16 %v3419, %v3418
  %v3477 = vpack.c.bf16 %v3421, %v3420
  %v3478 = vpack.c.bf16 %v3423, %v3422
  %v3479 = vpack.c.bf16 %v3425, %v3424
  %v3480 = vpack.c.bf16 %v3427, %v3426
  %v3481 = vpack.c.bf16 %v3429, %v3428
  %v3482 = vpack.c.bf16 %v3431, %v3430
  %v3483 = vpack.c.bf16 %v3433, %v3432
  %v3484 = vpack.c.bf16 %v3435, %v3434
  %v3485 = vpack.c.bf16 %v3437, %v3436
  %v3486 = vpack.c.bf16 %v3439, %v3438
  %v3487 = vpack.c.bf16 %v3441, %v3440
  %v3488 = vpack.c.bf16 %v3443, %v3442
  %v3489 = vpack.c.bf16 %v3445, %v3444
  %v3490 = vpack.c.bf16 %v3447, %v3446
  %v3491 = vpack.c.bf16 %v3449, %v3448
  %v3492 = vpack.c.bf16 %v3451, %v3450
  %v3493 = vpack.c.bf16 %v3453, %v3452
  %v3494 = vpack.c.bf16 %v3455, %v3454
  %v3495 = vpack.c.bf16 %v3457, %v3456
  %v3496 = vpack.c.bf16 %v3459, %v3458
  %v3497 = vpack.c.bf16 %v3461, %v3460
  %v3498 = vpack.c.bf16 %v3463, %v3462
  %v3499 = vpack.c.bf16 %v3465, %v3464
  %v3500 = vpack.c.bf16 %v3467, %v3466
  %v3501 = vpack.c.bf16 %v3469, %v3468
  %s3502 = scalar_lea.vmem %s1, 12
  %v3503 = vld [vmem:[%s3502] sm:$0x3]
  %v3505 = vsel %vm25, %v3470, 0
  %v3508 = vsel %vm25, %v3471, 0
  %v3511 = vsel %vm25, %v3472, 0
  %v3514 = vsel %vm25, %v3473, 0
  %v3517 = vsel %vm25, %v3474, 0
  %v3520 = vsel %vm25, %v3475, 0
  %v3523 = vsel %vm25, %v3476, 0
  %v3526 = vsel %vm25, %v3477, 0
  %v3529 = vsel %vm25, %v3478, 0
  %v3532 = vsel %vm25, %v3479, 0
  %v3535 = vsel %vm25, %v3480, 0
  %v3538 = vsel %vm25, %v3481, 0
  %v3541 = vsel %vm25, %v3482, 0
  %v3544 = vsel %vm25, %v3483, 0
  %v3547 = vsel %vm25, %v3484, 0
  %v3550 = vsel %vm25, %v3485, 0
  %v3553 = vsel %vm25, %v3486, 0
  %v3556 = vsel %vm25, %v3487, 0
  %v3559 = vsel %vm25, %v3488, 0
  %v3562 = vsel %vm25, %v3489, 0
  %v3565 = vsel %vm25, %v3490, 0
  %v3568 = vsel %vm25, %v3491, 0
  %v3571 = vsel %vm25, %v3492, 0
  %v3574 = vsel %vm25, %v3493, 0
  %v3577 = vsel %vm25, %v3494, 0
  %v3580 = vsel %vm25, %v3495, 0
  %v3583 = vsel %vm25, %v3496, 0
  %v3586 = vsel %vm25, %v3497, 0
  %v3589 = vsel %vm25, %v3498, 0
  %v3592 = vsel %vm25, %v3499, 0
  %v3595 = vsel %vm25, %v3500, 0
  %v3598 = vsel %vm25, %v3501, 0
  %v3601 = vsel %vm526, %v3503, 0
  %3603 = vmatprep.subr.bf16.mxu0 0
  %3604 = vmatpush1.bf16.msra.mxu0 %v3601
  %3605 = vmatprep.subr.bf16.mxu0 0
  %3606 = vmatpush1.bf16.msra.mxu0 0
  %3607 = vmatprep.subr.bf16.mxu0 0
  %3608 = vmatpush1.bf16.msra.mxu0 0
  %3609 = vmatprep.subr.bf16.mxu0 0
  %3610 = vmatpush1.bf16.msra.mxu0 0
  %3611 = vmatprep.subr.bf16.mxu0 0
  %3612 = vmatpush1.bf16.msra.mxu0 0
  %3613 = vmatprep.subr.bf16.mxu0 0
  %3614 = vmatpush1.bf16.msra.mxu0 0
  %3615 = vmatprep.subr.bf16.mxu0 0
  %3616 = vmatpush1.bf16.msra.mxu0 0
  %3617 = vmatprep.subr.bf16.mxu0 0
  %3618 = vmatpush1.bf16.msra.mxu0 0
  %3619 = vmatprep.subr.bf16.mxu0 0
  %3620 = vmatpush1.bf16.msra.mxu0 0
  %3621 = vmatprep.subr.bf16.mxu0 0
  %3622 = vmatpush1.bf16.msra.mxu0 0
  %3623 = vmatprep.subr.bf16.mxu0 0
  %3624 = vmatpush1.bf16.msra.mxu0 0
  %3625 = vmatprep.subr.bf16.mxu0 0
  %3626 = vmatpush1.bf16.msra.mxu0 0
  %3627 = vmatprep.subr.bf16.mxu0 0
  %3628 = vmatpush1.bf16.msra.mxu0 0
  %3629 = vmatprep.subr.bf16.mxu0 0
  %3630 = vmatpush1.bf16.msra.mxu0 0
  %3631 = vmatprep.subr.bf16.mxu0 0
  %3632 = vmatpush1.bf16.msra.mxu0 0
  %3633 = vmatprep.subr.bf16.mxu0 0
  %3634 = vmatpush1.bf16.msra.mxu0 0
  %3635 = vmatprep.mubr.bf16.mxu0 0
  %3636 = vmatmul.mubr.bf16.gmra.mrb[0].mxu0 %v3505
  %v3637 = vpop.f32.mrb[0].mxu0
  %v3638 = vadd.f32 0.0, %v3637
  %v3639 = vpop.f32.mrb[0].mxu0
  %v3640 = vpop.f32.mrb[0].mxu0
  %v3641 = vadd.f32 0.0, %v3640
  %v3642 = vpop.f32.mrb[0].mxu0
  %3643 = vmatprep.mubr.bf16.mxu0 0
  %3644 = vmatmul.mubr.bf16.gmra.mrb[0].mxu0 %v3508
  %v3645 = vpop.f32.mrb[0].mxu0
  %v3646 = vadd.f32 0.0, %v3645
  %v3647 = vpop.f32.mrb[0].mxu0
  %v3648 = vpop.f32.mrb[0].mxu0
  %v3649 = vadd.f32 0.0, %v3648
  %v3650 = vpop.f32.mrb[0].mxu0
  %3651 = vmatprep.mubr.bf16.mxu0 0
  %3652 = vmatmul.mubr.bf16.gmra.mrb[0].mxu0 %v3511
  %v3653 = vpop.f32.mrb[0].mxu0
  %v3654 = vadd.f32 0.0, %v3653
  %v3655 = vpop.f32.mrb[0].mxu0
  %v3656 = vpop.f32.mrb[0].mxu0
  %v3657 = vadd.f32 0.0, %v3656
  %v3658 = vpop.f32.mrb[0].mxu0
  %3659 = vmatprep.mubr.bf16.mxu0 0
  %3660 = vmatmul.mubr.bf16.gmra.mrb[0].mxu0 %v3514
  %v3661 = vpop.f32.mrb[0].mxu0
  %v3662 = vadd.f32 0.0, %v3661
  %v3663 = vpop.f32.mrb[0].mxu0
  %v3664 = vpop.f32.mrb[0].mxu0
  %v3665 = vadd.f32 0.0, %v3664
  %v3666 = vpop.f32.mrb[0].mxu0
  %3667 = vmatprep.mubr.bf16.mxu0 0
  %3668 = vmatmul.mubr.bf16.gmra.mrb[0].mxu0 %v3517
  %v3669 = vpop.f32.mrb[0].mxu0
  %v3670 = vadd.f32 0.0, %v3669
  %v3671 = vpop.f32.mrb[0].mxu0
  %v3672 = vpop.f32.mrb[0].mxu0
  %v3673 = vadd.f32 0.0, %v3672
  %v3674 = vpop.f32.mrb[0].mxu0
  %3675 = vmatprep.mubr.bf16.mxu0 0
  %3676 = vmatmul.mubr.bf16.gmra.mrb[0].mxu0 %v3520
  %v3677 = vpop.f32.mrb[0].mxu0
  %v3678 = vadd.f32 0.0, %v3677
  %v3679 = vpop.f32.mrb[0].mxu0
  %v3680 = vpop.f32.mrb[0].mxu0
  %v3681 = vadd.f32 0.0, %v3680
  %v3682 = vpop.f32.mrb[0].mxu0
  %3683 = vmatprep.mubr.bf16.mxu0 0
  %3684 = vmatmul.mubr.bf16.gmra.mrb[0].mxu0 %v3523
  %v3685 = vpop.f32.mrb[0].mxu0
  %v3686 = vadd.f32 0.0, %v3685
  %v3687 = vpop.f32.mrb[0].mxu0
  %v3688 = vpop.f32.mrb[0].mxu0
  %v3689 = vadd.f32 0.0, %v3688
  %v3690 = vpop.f32.mrb[0].mxu0
  %3691 = vmatprep.mubr.bf16.mxu0 0
  %3692 = vmatmul.mubr.bf16.gmra.mrb[0].mxu0 %v3526
  %v3693 = vpop.f32.mrb[0].mxu0
  %v3694 = vadd.f32 0.0, %v3693
  %v3695 = vpop.f32.mrb[0].mxu0
  %v3696 = vpop.f32.mrb[0].mxu0
  %v3697 = vadd.f32 0.0, %v3696
  %v3698 = vpop.f32.mrb[0].mxu0
  %3699 = vmatprep.mubr.bf16.mxu0 0
  %3700 = vmatmul.mubr.bf16.gmra.mrb[0].mxu0 %v3529
  %v3701 = vpop.f32.mrb[0].mxu0
  %v3702 = vadd.f32 0.0, %v3701
  %v3703 = vpop.f32.mrb[0].mxu0
  %v3704 = vpop.f32.mrb[0].mxu0
  %v3705 = vadd.f32 0.0, %v3704
  %v3706 = vpop.f32.mrb[0].mxu0
  %3707 = vmatprep.mubr.bf16.mxu0 0
  %3708 = vmatmul.mubr.bf16.gmra.mrb[0].mxu0 %v3532
  %v3709 = vpop.f32.mrb[0].mxu0
  %v3710 = vadd.f32 0.0, %v3709
  %v3711 = vpop.f32.mrb[0].mxu0
  %v3712 = vpop.f32.mrb[0].mxu0
  %v3713 = vadd.f32 0.0, %v3712
  %v3714 = vpop.f32.mrb[0].mxu0
  %3715 = vmatprep.mubr.bf16.mxu0 0
  %3716 = vmatmul.mubr.bf16.gmra.mrb[0].mxu0 %v3535
  %v3717 = vpop.f32.mrb[0].mxu0
  %v3718 = vadd.f32 0.0, %v3717
  %v3719 = vpop.f32.mrb[0].mxu0
  %v3720 = vpop.f32.mrb[0].mxu0
  %v3721 = vadd.f32 0.0, %v3720
  %v3722 = vpop.f32.mrb[0].mxu0
  %3723 = vmatprep.mubr.bf16.mxu0 0
  %3724 = vmatmul.mubr.bf16.gmra.mrb[0].mxu0 %v3538
  %v3725 = vpop.f32.mrb[0].mxu0
  %v3726 = vadd.f32 0.0, %v3725
  %v3727 = vpop.f32.mrb[0].mxu0
  %v3728 = vpop.f32.mrb[0].mxu0
  %v3729 = vadd.f32 0.0, %v3728
  %v3730 = vpop.f32.mrb[0].mxu0
  %3731 = vmatprep.mubr.bf16.mxu0 0
  %3732 = vmatmul.mubr.bf16.gmra.mrb[0].mxu0 %v3541
  %v3733 = vpop.f32.mrb[0].mxu0
  %v3734 = vadd.f32 0.0, %v3733
  %v3735 = vpop.f32.mrb[0].mxu0
  %v3736 = vpop.f32.mrb[0].mxu0
  %v3737 = vadd.f32 0.0, %v3736
  %v3738 = vpop.f32.mrb[0].mxu0
  %3739 = vmatprep.mubr.bf16.mxu0 0
  %3740 = vmatmul.mubr.bf16.gmra.mrb[0].mxu0 %v3544
  %v3741 = vpop.f32.mrb[0].mxu0
  %v3742 = vadd.f32 0.0, %v3741
  %v3743 = vpop.f32.mrb[0].mxu0
  %v3744 = vpop.f32.mrb[0].mxu0
  %v3745 = vadd.f32 0.0, %v3744
  %v3746 = vpop.f32.mrb[0].mxu0
  %3747 = vmatprep.mubr.bf16.mxu0 0
  %3748 = vmatmul.mubr.bf16.gmra.mrb[0].mxu0 %v3547
  %v3749 = vpop.f32.mrb[0].mxu0
  %v3750 = vadd.f32 0.0, %v3749
  %v3751 = vpop.f32.mrb[0].mxu0
  %v3752 = vpop.f32.mrb[0].mxu0
  %v3753 = vadd.f32 0.0, %v3752
  %v3754 = vpop.f32.mrb[0].mxu0
  %3755 = vmatprep.mubr.bf16.mxu0 0
  %3756 = vmatmul.mubr.bf16.gmra.mrb[0].mxu0 %v3550
  %v3757 = vpop.f32.mrb[0].mxu0
  %v3758 = vadd.f32 0.0, %v3757
  %v3759 = vpop.f32.mrb[0].mxu0
  %v3760 = vpop.f32.mrb[0].mxu0
  %v3761 = vadd.f32 0.0, %v3760
  %v3762 = vpop.f32.mrb[0].mxu0
  %3763 = vmatprep.mubr.bf16.mxu0 0
  %3764 = vmatmul.mubr.bf16.gmra.mrb[0].mxu0 %v3553
  %v3765 = vpop.f32.mrb[0].mxu0
  %v3766 = vadd.f32 0.0, %v3765
  %v3767 = vpop.f32.mrb[0].mxu0
  %v3768 = vpop.f32.mrb[0].mxu0
  %v3769 = vadd.f32 0.0, %v3768
  %v3770 = vpop.f32.mrb[0].mxu0
  %3771 = vmatprep.mubr.bf16.mxu0 0
  %3772 = vmatmul.mubr.bf16.gmra.mrb[0].mxu0 %v3556
  %v3773 = vpop.f32.mrb[0].mxu0
  %v3774 = vadd.f32 0.0, %v3773
  %v3775 = vpop.f32.mrb[0].mxu0
  %v3776 = vpop.f32.mrb[0].mxu0
  %v3777 = vadd.f32 0.0, %v3776
  %v3778 = vpop.f32.mrb[0].mxu0
  %3779 = vmatprep.mubr.bf16.mxu0 0
  %3780 = vmatmul.mubr.bf16.gmra.mrb[0].mxu0 %v3559
  %v3781 = vpop.f32.mrb[0].mxu0
  %v3782 = vadd.f32 0.0, %v3781
  %v3783 = vpop.f32.mrb[0].mxu0
  %v3784 = vpop.f32.mrb[0].mxu0
  %v3785 = vadd.f32 0.0, %v3784
  %v3786 = vpop.f32.mrb[0].mxu0
  %3787 = vmatprep.mubr.bf16.mxu0 0
  %3788 = vmatmul.mubr.bf16.gmra.mrb[0].mxu0 %v3562
  %v3789 = vpop.f32.mrb[0].mxu0
  %v3790 = vadd.f32 0.0, %v3789
  %v3791 = vpop.f32.mrb[0].mxu0
  %v3792 = vpop.f32.mrb[0].mxu0
  %v3793 = vadd.f32 0.0, %v3792
  %v3794 = vpop.f32.mrb[0].mxu0
  %3795 = vmatprep.mubr.bf16.mxu0 0
  %3796 = vmatmul.mubr.bf16.gmra.mrb[0].mxu0 %v3565
  %v3797 = vpop.f32.mrb[0].mxu0
  %v3798 = vadd.f32 0.0, %v3797
  %v3799 = vpop.f32.mrb[0].mxu0
  %v3800 = vpop.f32.mrb[0].mxu0
  %v3801 = vadd.f32 0.0, %v3800
  %v3802 = vpop.f32.mrb[0].mxu0
  %3803 = vmatprep.mubr.bf16.mxu0 0
  %3804 = vmatmul.mubr.bf16.gmra.mrb[0].mxu0 %v3568
  %v3805 = vpop.f32.mrb[0].mxu0
  %v3806 = vadd.f32 0.0, %v3805
  %v3807 = vpop.f32.mrb[0].mxu0
  %v3808 = vpop.f32.mrb[0].mxu0
  %v3809 = vadd.f32 0.0, %v3808
  %v3810 = vpop.f32.mrb[0].mxu0
  %3811 = vmatprep.mubr.bf16.mxu0 0
  %3812 = vmatmul.mubr.bf16.gmra.mrb[0].mxu0 %v3571
  %v3813 = vpop.f32.mrb[0].mxu0
  %v3814 = vadd.f32 0.0, %v3813
  %v3815 = vpop.f32.mrb[0].mxu0
  %v3816 = vpop.f32.mrb[0].mxu0
  %v3817 = vadd.f32 0.0, %v3816
  %v3818 = vpop.f32.mrb[0].mxu0
  %3819 = vmatprep.mubr.bf16.mxu0 0
  %3820 = vmatmul.mubr.bf16.gmra.mrb[0].mxu0 %v3574
  %v3821 = vpop.f32.mrb[0].mxu0
  %v3822 = vadd.f32 0.0, %v3821
  %v3823 = vpop.f32.mrb[0].mxu0
  %v3824 = vpop.f32.mrb[0].mxu0
  %v3825 = vadd.f32 0.0, %v3824
  %v3826 = vpop.f32.mrb[0].mxu0
  %3827 = vmatprep.mubr.bf16.mxu0 0
  %3828 = vmatmul.mubr.bf16.gmra.mrb[0].mxu0 %v3577
  %v3829 = vpop.f32.mrb[0].mxu0
  %v3830 = vadd.f32 0.0, %v3829
  %v3831 = vpop.f32.mrb[0].mxu0
  %v3832 = vpop.f32.mrb[0].mxu0
  %v3833 = vadd.f32 0.0, %v3832
  %v3834 = vpop.f32.mrb[0].mxu0
  %3835 = vmatprep.mubr.bf16.mxu0 0
  %3836 = vmatmul.mubr.bf16.gmra.mrb[0].mxu0 %v3580
  %v3837 = vpop.f32.mrb[0].mxu0
  %v3838 = vadd.f32 0.0, %v3837
  %v3839 = vpop.f32.mrb[0].mxu0
  %v3840 = vpop.f32.mrb[0].mxu0
  %v3841 = vadd.f32 0.0, %v3840
  %v3842 = vpop.f32.mrb[0].mxu0
  %3843 = vmatprep.mubr.bf16.mxu0 0
  %3844 = vmatmul.mubr.bf16.gmra.mrb[0].mxu0 %v3583
  %v3845 = vpop.f32.mrb[0].mxu0
  %v3846 = vadd.f32 0.0, %v3845
  %v3847 = vpop.f32.mrb[0].mxu0
  %v3848 = vpop.f32.mrb[0].mxu0
  %v3849 = vadd.f32 0.0, %v3848
  %v3850 = vpop.f32.mrb[0].mxu0
  %3851 = vmatprep.mubr.bf16.mxu0 0
  %3852 = vmatmul.mubr.bf16.gmra.mrb[0].mxu0 %v3586
  %v3853 = vpop.f32.mrb[0].mxu0
  %v3854 = vadd.f32 0.0, %v3853
  %v3855 = vpop.f32.mrb[0].mxu0
  %v3856 = vpop.f32.mrb[0].mxu0
  %v3857 = vadd.f32 0.0, %v3856
  %v3858 = vpop.f32.mrb[0].mxu0
  %3859 = vmatprep.mubr.bf16.mxu0 0
  %3860 = vmatmul.mubr.bf16.gmra.mrb[0].mxu0 %v3589
  %v3861 = vpop.f32.mrb[0].mxu0
  %v3862 = vadd.f32 0.0, %v3861
  %v3863 = vpop.f32.mrb[0].mxu0
  %v3864 = vpop.f32.mrb[0].mxu0
  %v3865 = vadd.f32 0.0, %v3864
  %v3866 = vpop.f32.mrb[0].mxu0
  %3867 = vmatprep.mubr.bf16.mxu0 0
  %3868 = vmatmul.mubr.bf16.gmra.mrb[0].mxu0 %v3592
  %v3869 = vpop.f32.mrb[0].mxu0
  %v3870 = vadd.f32 0.0, %v3869
  %v3871 = vpop.f32.mrb[0].mxu0
  %v3872 = vpop.f32.mrb[0].mxu0
  %v3873 = vadd.f32 0.0, %v3872
  %v3874 = vpop.f32.mrb[0].mxu0
  %3875 = vmatprep.mubr.bf16.mxu0 0
  %3876 = vmatmul.mubr.bf16.gmra.mrb[0].mxu0 %v3595
  %v3877 = vpop.f32.mrb[0].mxu0
  %v3878 = vadd.f32 0.0, %v3877
  %v3879 = vpop.f32.mrb[0].mxu0
  %v3880 = vpop.f32.mrb[0].mxu0
  %v3881 = vadd.f32 0.0, %v3880
  %v3882 = vpop.f32.mrb[0].mxu0
  %3883 = vmatprep.mubr.bf16.mxu0 0
  %3884 = vmatmul.mubr.bf16.gmra.mrb[0].mxu0 %v3598
  %v3885 = vpop.f32.mrb[0].mxu0
  %v3886 = vadd.f32 0.0, %v3885
  %v3887 = vpop.f32.mrb[0].mxu0
  %v3888 = vpop.f32.mrb[0].mxu0
  %v3889 = vadd.f32 0.0, %v3888
  %v3890 = vpop.f32.mrb[0].mxu0
  %3891 = vdwg.mxu0
  %v3892 = vadd.f32 %v3341, %v3638
  %v3893 = vadd.f32 %v3342, %v3641
  %v3894 = vadd.f32 %v3343, %v3646
  %v3895 = vadd.f32 %v3344, %v3649
  %v3896 = vadd.f32 %v3345, %v3654
  %v3897 = vadd.f32 %v3346, %v3657
  %v3898 = vadd.f32 %v3347, %v3662
  %v3899 = vadd.f32 %v3348, %v3665
  %v3900 = vadd.f32 %v3349, %v3670
  %v3901 = vadd.f32 %v3350, %v3673
  %v3902 = vadd.f32 %v3351, %v3678
  %v3903 = vadd.f32 %v3352, %v3681
  %v3904 = vadd.f32 %v3353, %v3686
  %v3905 = vadd.f32 %v3354, %v3689
  %v3906 = vadd.f32 %v3355, %v3694
  %v3907 = vadd.f32 %v3356, %v3697
  %v3908 = vadd.f32 %v3357, %v3702
  %v3909 = vadd.f32 %v3358, %v3705
  %v3910 = vadd.f32 %v3359, %v3710
  %v3911 = vadd.f32 %v3360, %v3713
  %v3912 = vadd.f32 %v3361, %v3718
  %v3913 = vadd.f32 %v3362, %v3721
  %v3914 = vadd.f32 %v3363, %v3726
  %v3915 = vadd.f32 %v3364, %v3729
  %v3916 = vadd.f32 %v3365, %v3734
  %v3917 = vadd.f32 %v3366, %v3737
  %v3918 = vadd.f32 %v3367, %v3742
  %v3919 = vadd.f32 %v3368, %v3745
  %v3920 = vadd.f32 %v3369, %v3750
  %v3921 = vadd.f32 %v3370, %v3753
  %v3922 = vadd.f32 %v3371, %v3758
  %v3923 = vadd.f32 %v3372, %v3761
  %v3924 = vadd.f32 %v3373, %v3766
  %v3925 = vadd.f32 %v3374, %v3769
  %v3926 = vadd.f32 %v3375, %v3774
  %v3927 = vadd.f32 %v3376, %v3777
  %v3928 = vadd.f32 %v3377, %v3782
  %v3929 = vadd.f32 %v3378, %v3785
  %v3930 = vadd.f32 %v3379, %v3790
  %v3931 = vadd.f32 %v3380, %v3793
  %v3932 = vadd.f32 %v3381, %v3798
  %v3933 = vadd.f32 %v3382, %v3801
  %v3934 = vadd.f32 %v3383, %v3806
  %v3935 = vadd.f32 %v3384, %v3809
  %v3936 = vadd.f32 %v3385, %v3814
  %v3937 = vadd.f32 %v3386, %v3817
  %v3938 = vadd.f32 %v3387, %v3822
  %v3939 = vadd.f32 %v3388, %v3825
  %v3940 = vadd.f32 %v3389, %v3830
  %v3941 = vadd.f32 %v3390, %v3833
  %v3942 = vadd.f32 %v3391, %v3838
  %v3943 = vadd.f32 %v3392, %v3841
  %v3944 = vadd.f32 %v3393, %v3846
  %v3945 = vadd.f32 %v3394, %v3849
  %v3946 = vadd.f32 %v3395, %v3854
  %v3947 = vadd.f32 %v3396, %v3857
  %v3948 = vadd.f32 %v3397, %v3862
  %v3949 = vadd.f32 %v3398, %v3865
  %v3950 = vadd.f32 %v3399, %v3870
  %v3951 = vadd.f32 %v3400, %v3873
  %v3952 = vadd.f32 %v3401, %v3878
  %v3953 = vadd.f32 %v3402, %v3881
  %v3954 = vadd.f32 %v3403, %v3886
  %v3955 = vadd.f32 %v3404, %v3889
  %v3956 = vld [vmem:[%s3405 + $0x1] sm:$0xff]
  %v3957 = vld [vmem:[%s3405 + $0x9] sm:$0xff]
  %v3958 = vld [vmem:[%s3405 + $0x19] sm:$0xff]
  %v3959 = vld [vmem:[%s3405 + $0x21] sm:$0xff]
  %v3960 = vld [vmem:[%s3405 + $0x31] sm:$0xff]
  %v3961 = vld [vmem:[%s3405 + $0x39] sm:$0xff]
  %v3962 = vld [vmem:[%s3405 + $0x49] sm:$0xff]
  %v3963 = vld [vmem:[%s3405 + $0x51] sm:$0xff]
  %v3964 = vld [vmem:[%s3405 + $0x61] sm:$0xff]
  %v3965 = vld [vmem:[%s3405 + $0x69] sm:$0xff]
  %v3966 = vld [vmem:[%s3405 + $0x79] sm:$0xff]
  %v3967 = vld [vmem:[%s3405 + $0x81] sm:$0xff]
  %v3968 = vld [vmem:[%s3405 + $0x91] sm:$0xff]
  %v3969 = vld [vmem:[%s3405 + $0x99] sm:$0xff]
  %v3970 = vld [vmem:[%s3405 + $0xa9] sm:$0xff]
  %v3971 = vld [vmem:[%s3405 + $0xb1] sm:$0xff]
  %v3972 = vld [vmem:[%s3405 + $0xc1] sm:$0xff]
  %v3973 = vld [vmem:[%s3405 + $0xc9] sm:$0xff]
  %v3974 = vld [vmem:[%s3405 + $0xd9] sm:$0xff]
  %v3975 = vld [vmem:[%s3405 + $0xe1] sm:$0xff]
  %v3976 = vld [vmem:[%s3405 + $0xf1] sm:$0xff]
  %v3977 = vld [vmem:[%s3405 + $0xf9] sm:$0xff]
  %v3978 = vld [vmem:[%s3405 + $0x109] sm:$0xff]
  %v3979 = vld [vmem:[%s3405 + $0x111] sm:$0xff]
  %v3980 = vld [vmem:[%s3405 + $0x121] sm:$0xff]
  %v3981 = vld [vmem:[%s3405 + $0x129] sm:$0xff]
  %v3982 = vld [vmem:[%s3405 + $0x139] sm:$0xff]
  %v3983 = vld [vmem:[%s3405 + $0x141] sm:$0xff]
  %v3984 = vld [vmem:[%s3405 + $0x151] sm:$0xff]
  %v3985 = vld [vmem:[%s3405 + $0x159] sm:$0xff]
  %v3986 = vld [vmem:[%s3405 + $0x169] sm:$0xff]
  %v3987 = vld [vmem:[%s3405 + $0x171] sm:$0xff]
  %v3988 = vld [vmem:[%s3405 + $0x1b1] sm:$0xff]
  %v3989 = vld [vmem:[%s3405 + $0x1b9] sm:$0xff]
  %v3990 = vld [vmem:[%s3405 + $0x1c9] sm:$0xff]
  %v3991 = vld [vmem:[%s3405 + $0x1d1] sm:$0xff]
  %v3992 = vld [vmem:[%s3405 + $0x1e1] sm:$0xff]
  %v3993 = vld [vmem:[%s3405 + $0x1e9] sm:$0xff]
  %v3994 = vld [vmem:[%s3405 + $0x1f9] sm:$0xff]
  %v3995 = vld [vmem:[%s3405 + $0x201] sm:$0xff]
  %v3996 = vld [vmem:[%s3405 + $0x211] sm:$0xff]
  %v3997 = vld [vmem:[%s3405 + $0x219] sm:$0xff]
  %v3998 = vld [vmem:[%s3405 + $0x229] sm:$0xff]
  %v3999 = vld [vmem:[%s3405 + $0x231] sm:$0xff]
  %v4000 = vld [vmem:[%s3405 + $0x241] sm:$0xff]
  %v4001 = vld [vmem:[%s3405 + $0x249] sm:$0xff]
  %v4002 = vld [vmem:[%s3405 + $0x259] sm:$0xff]
  %v4003 = vld [vmem:[%s3405 + $0x261] sm:$0xff]
  %v4004 = vld [vmem:[%s3405 + $0x271] sm:$0xff]
  %v4005 = vld [vmem:[%s3405 + $0x279] sm:$0xff]
  %v4006 = vld [vmem:[%s3405 + $0x289] sm:$0xff]
  %v4007 = vld [vmem:[%s3405 + $0x291] sm:$0xff]
  %v4008 = vld [vmem:[%s3405 + $0x2a1] sm:$0xff]
  %v4009 = vld [vmem:[%s3405 + $0x2a9] sm:$0xff]
  %v4010 = vld [vmem:[%s3405 + $0x2b9] sm:$0xff]
  %v4011 = vld [vmem:[%s3405 + $0x2c1] sm:$0xff]
  %v4012 = vld [vmem:[%s3405 + $0x2d1] sm:$0xff]
  %v4013 = vld [vmem:[%s3405 + $0x2d9] sm:$0xff]
  %v4014 = vld [vmem:[%s3405 + $0x2e9] sm:$0xff]
  %v4015 = vld [vmem:[%s3405 + $0x2f1] sm:$0xff]
  %v4016 = vld [vmem:[%s3405 + $0x301] sm:$0xff]
  %v4017 = vld [vmem:[%s3405 + $0x309] sm:$0xff]
  %v4018 = vld [vmem:[%s3405 + $0x319] sm:$0xff]
  %v4019 = vld [vmem:[%s3405 + $0x321] sm:$0xff]
  %v4020 = vpack.c.bf16 %v3957, %v3956
  %v4021 = vpack.c.bf16 %v3959, %v3958
  %v4022 = vpack.c.bf16 %v3961, %v3960
  %v4023 = vpack.c.bf16 %v3963, %v3962
  %v4024 = vpack.c.bf16 %v3965, %v3964
  %v4025 = vpack.c.bf16 %v3967, %v3966
  %v4026 = vpack.c.bf16 %v3969, %v3968
  %v4027 = vpack.c.bf16 %v3971, %v3970
  %v4028 = vpack.c.bf16 %v3973, %v3972
  %v4029 = vpack.c.bf16 %v3975, %v3974
  %v4030 = vpack.c.bf16 %v3977, %v3976
  %v4031 = vpack.c.bf16 %v3979, %v3978
  %v4032 = vpack.c.bf16 %v3981, %v3980
  %v4033 = vpack.c.bf16 %v3983, %v3982
  %v4034 = vpack.c.bf16 %v3985, %v3984
  %v4035 = vpack.c.bf16 %v3987, %v3986
  %v4036 = vpack.c.bf16 %v3989, %v3988
  %v4037 = vpack.c.bf16 %v3991, %v3990
  %v4038 = vpack.c.bf16 %v3993, %v3992
  %v4039 = vpack.c.bf16 %v3995, %v3994
  %v4040 = vpack.c.bf16 %v3997, %v3996
  %v4041 = vpack.c.bf16 %v3999, %v3998
  %v4042 = vpack.c.bf16 %v4001, %v4000
  %v4043 = vpack.c.bf16 %v4003, %v4002
  %v4044 = vpack.c.bf16 %v4005, %v4004
  %v4045 = vpack.c.bf16 %v4007, %v4006
  %v4046 = vpack.c.bf16 %v4009, %v4008
  %v4047 = vpack.c.bf16 %v4011, %v4010
  %v4048 = vpack.c.bf16 %v4013, %v4012
  %v4049 = vpack.c.bf16 %v4015, %v4014
  %v4050 = vpack.c.bf16 %v4017, %v4016
  %v4051 = vpack.c.bf16 %v4019, %v4018
  %s4052 = scalar_lea.vmem %s1, 14
  %v4053 = vld [vmem:[%s4052] sm:$0x3]
  %v4055 = vsel %vm25, %v4020, 0
  %v4058 = vsel %vm25, %v4021, 0
  %v4061 = vsel %vm25, %v4022, 0
  %v4064 = vsel %vm25, %v4023, 0
  %v4067 = vsel %vm25, %v4024, 0
  %v4070 = vsel %vm25, %v4025, 0
  %v4073 = vsel %vm25, %v4026, 0
  %v4076 = vsel %vm25, %v4027, 0
  %v4079 = vsel %vm25, %v4028, 0
  %v4082 = vsel %vm25, %v4029, 0
  %v4085 = vsel %vm25, %v4030, 0
  %v4088 = vsel %vm25, %v4031, 0
  %v4091 = vsel %vm25, %v4032, 0
  %v4094 = vsel %vm25, %v4033, 0
  %v4097 = vsel %vm25, %v4034, 0
  %v4100 = vsel %vm25, %v4035, 0
  %v4103 = vsel %vm25, %v4036, 0
  %v4106 = vsel %vm25, %v4037, 0
  %v4109 = vsel %vm25, %v4038, 0
  %v4112 = vsel %vm25, %v4039, 0
  %v4115 = vsel %vm25, %v4040, 0
  %v4118 = vsel %vm25, %v4041, 0
  %v4121 = vsel %vm25, %v4042, 0
  %v4124 = vsel %vm25, %v4043, 0
  %v4127 = vsel %vm25, %v4044, 0
  %v4130 = vsel %vm25, %v4045, 0
  %v4133 = vsel %vm25, %v4046, 0
  %v4136 = vsel %vm25, %v4047, 0
  %v4139 = vsel %vm25, %v4048, 0
  %v4142 = vsel %vm25, %v4049, 0
  %v4145 = vsel %vm25, %v4050, 0
  %v4148 = vsel %vm25, %v4051, 0
  %v4151 = vsel %vm526, %v4053, 0
  %4153 = vmatprep.subr.bf16.mxu0 0
  %4154 = vmatpush1.bf16.msra.mxu0 %v4151
  %4155 = vmatprep.subr.bf16.mxu0 0
  %4156 = vmatpush1.bf16.msra.mxu0 0
  %4157 = vmatprep.subr.bf16.mxu0 0
  %4158 = vmatpush1.bf16.msra.mxu0 0
  %4159 = vmatprep.subr.bf16.mxu0 0
  %4160 = vmatpush1.bf16.msra.mxu0 0
  %4161 = vmatprep.subr.bf16.mxu0 0
  %4162 = vmatpush1.bf16.msra.mxu0 0
  %4163 = vmatprep.subr.bf16.mxu0 0
  %4164 = vmatpush1.bf16.msra.mxu0 0
  %4165 = vmatprep.subr.bf16.mxu0 0
  %4166 = vmatpush1.bf16.msra.mxu0 0
  %4167 = vmatprep.subr.bf16.mxu0 0
  %4168 = vmatpush1.bf16.msra.mxu0 0
  %4169 = vmatprep.subr.bf16.mxu0 0
  %4170 = vmatpush1.bf16.msra.mxu0 0
  %4171 = vmatprep.subr.bf16.mxu0 0
  %4172 = vmatpush1.bf16.msra.mxu0 0
  %4173 = vmatprep.subr.bf16.mxu0 0
  %4174 = vmatpush1.bf16.msra.mxu0 0
  %4175 = vmatprep.subr.bf16.mxu0 0
  %4176 = vmatpush1.bf16.msra.mxu0 0
  %4177 = vmatprep.subr.bf16.mxu0 0
  %4178 = vmatpush1.bf16.msra.mxu0 0
  %4179 = vmatprep.subr.bf16.mxu0 0
  %4180 = vmatpush1.bf16.msra.mxu0 0
  %4181 = vmatprep.subr.bf16.mxu0 0
  %4182 = vmatpush1.bf16.msra.mxu0 0
  %4183 = vmatprep.subr.bf16.mxu0 0
  %4184 = vmatpush1.bf16.msra.mxu0 0
  %4185 = vmatprep.mubr.bf16.mxu0 0
  %4186 = vmatmul.mubr.bf16.gmra.mrb[0].mxu0 %v4055
  %v4187 = vpop.f32.mrb[0].mxu0
  %v4188 = vadd.f32 0.0, %v4187
  %v4189 = vpop.f32.mrb[0].mxu0
  %v4190 = vpop.f32.mrb[0].mxu0
  %v4191 = vadd.f32 0.0, %v4190
  %v4192 = vpop.f32.mrb[0].mxu0
  %4193 = vmatprep.mubr.bf16.mxu0 0
  %4194 = vmatmul.mubr.bf16.gmra.mrb[0].mxu0 %v4058
  %v4195 = vpop.f32.mrb[0].mxu0
  %v4196 = vadd.f32 0.0, %v4195
  %v4197 = vpop.f32.mrb[0].mxu0
  %v4198 = vpop.f32.mrb[0].mxu0
  %v4199 = vadd.f32 0.0, %v4198
  %v4200 = vpop.f32.mrb[0].mxu0
  %4201 = vmatprep.mubr.bf16.mxu0 0
  %4202 = vmatmul.mubr.bf16.gmra.mrb[0].mxu0 %v4061
  %v4203 = vpop.f32.mrb[0].mxu0
  %v4204 = vadd.f32 0.0, %v4203
  %v4205 = vpop.f32.mrb[0].mxu0
  %v4206 = vpop.f32.mrb[0].mxu0
  %v4207 = vadd.f32 0.0, %v4206
  %v4208 = vpop.f32.mrb[0].mxu0
  %4209 = vmatprep.mubr.bf16.mxu0 0
  %4210 = vmatmul.mubr.bf16.gmra.mrb[0].mxu0 %v4064
  %v4211 = vpop.f32.mrb[0].mxu0
  %v4212 = vadd.f32 0.0, %v4211
  %v4213 = vpop.f32.mrb[0].mxu0
  %v4214 = vpop.f32.mrb[0].mxu0
  %v4215 = vadd.f32 0.0, %v4214
  %v4216 = vpop.f32.mrb[0].mxu0
  %4217 = vmatprep.mubr.bf16.mxu0 0
  %4218 = vmatmul.mubr.bf16.gmra.mrb[0].mxu0 %v4067
  %v4219 = vpop.f32.mrb[0].mxu0
  %v4220 = vadd.f32 0.0, %v4219
  %v4221 = vpop.f32.mrb[0].mxu0
  %v4222 = vpop.f32.mrb[0].mxu0
  %v4223 = vadd.f32 0.0, %v4222
  %v4224 = vpop.f32.mrb[0].mxu0
  %4225 = vmatprep.mubr.bf16.mxu0 0
  %4226 = vmatmul.mubr.bf16.gmra.mrb[0].mxu0 %v4070
  %v4227 = vpop.f32.mrb[0].mxu0
  %v4228 = vadd.f32 0.0, %v4227
  %v4229 = vpop.f32.mrb[0].mxu0
  %v4230 = vpop.f32.mrb[0].mxu0
  %v4231 = vadd.f32 0.0, %v4230
  %v4232 = vpop.f32.mrb[0].mxu0
  %4233 = vmatprep.mubr.bf16.mxu0 0
  %4234 = vmatmul.mubr.bf16.gmra.mrb[0].mxu0 %v4073
  %v4235 = vpop.f32.mrb[0].mxu0
  %v4236 = vadd.f32 0.0, %v4235
  %v4237 = vpop.f32.mrb[0].mxu0
  %v4238 = vpop.f32.mrb[0].mxu0
  %v4239 = vadd.f32 0.0, %v4238
  %v4240 = vpop.f32.mrb[0].mxu0
  %4241 = vmatprep.mubr.bf16.mxu0 0
  %4242 = vmatmul.mubr.bf16.gmra.mrb[0].mxu0 %v4076
  %v4243 = vpop.f32.mrb[0].mxu0
  %v4244 = vadd.f32 0.0, %v4243
  %v4245 = vpop.f32.mrb[0].mxu0
  %v4246 = vpop.f32.mrb[0].mxu0
  %v4247 = vadd.f32 0.0, %v4246
  %v4248 = vpop.f32.mrb[0].mxu0
  %4249 = vmatprep.mubr.bf16.mxu0 0
  %4250 = vmatmul.mubr.bf16.gmra.mrb[0].mxu0 %v4079
  %v4251 = vpop.f32.mrb[0].mxu0
  %v4252 = vadd.f32 0.0, %v4251
  %v4253 = vpop.f32.mrb[0].mxu0
  %v4254 = vpop.f32.mrb[0].mxu0
  %v4255 = vadd.f32 0.0, %v4254
  %v4256 = vpop.f32.mrb[0].mxu0
  %4257 = vmatprep.mubr.bf16.mxu0 0
  %4258 = vmatmul.mubr.bf16.gmra.mrb[0].mxu0 %v4082
  %v4259 = vpop.f32.mrb[0].mxu0
  %v4260 = vadd.f32 0.0, %v4259
  %v4261 = vpop.f32.mrb[0].mxu0
  %v4262 = vpop.f32.mrb[0].mxu0
  %v4263 = vadd.f32 0.0, %v4262
  %v4264 = vpop.f32.mrb[0].mxu0
  %4265 = vmatprep.mubr.bf16.mxu0 0
  %4266 = vmatmul.mubr.bf16.gmra.mrb[0].mxu0 %v4085
  %v4267 = vpop.f32.mrb[0].mxu0
  %v4268 = vadd.f32 0.0, %v4267
  %v4269 = vpop.f32.mrb[0].mxu0
  %v4270 = vpop.f32.mrb[0].mxu0
  %v4271 = vadd.f32 0.0, %v4270
  %v4272 = vpop.f32.mrb[0].mxu0
  %4273 = vmatprep.mubr.bf16.mxu0 0
  %4274 = vmatmul.mubr.bf16.gmra.mrb[0].mxu0 %v4088
  %v4275 = vpop.f32.mrb[0].mxu0
  %v4276 = vadd.f32 0.0, %v4275
  %v4277 = vpop.f32.mrb[0].mxu0
  %v4278 = vpop.f32.mrb[0].mxu0
  %v4279 = vadd.f32 0.0, %v4278
  %v4280 = vpop.f32.mrb[0].mxu0
  %4281 = vmatprep.mubr.bf16.mxu0 0
  %4282 = vmatmul.mubr.bf16.gmra.mrb[0].mxu0 %v4091
  %v4283 = vpop.f32.mrb[0].mxu0
  %v4284 = vadd.f32 0.0, %v4283
  %v4285 = vpop.f32.mrb[0].mxu0
  %v4286 = vpop.f32.mrb[0].mxu0
  %v4287 = vadd.f32 0.0, %v4286
  %v4288 = vpop.f32.mrb[0].mxu0
  %4289 = vmatprep.mubr.bf16.mxu0 0
  %4290 = vmatmul.mubr.bf16.gmra.mrb[0].mxu0 %v4094
  %v4291 = vpop.f32.mrb[0].mxu0
  %v4292 = vadd.f32 0.0, %v4291
  %v4293 = vpop.f32.mrb[0].mxu0
  %v4294 = vpop.f32.mrb[0].mxu0
  %v4295 = vadd.f32 0.0, %v4294
  %v4296 = vpop.f32.mrb[0].mxu0
  %4297 = vmatprep.mubr.bf16.mxu0 0
  %4298 = vmatmul.mubr.bf16.gmra.mrb[0].mxu0 %v4097
  %v4299 = vpop.f32.mrb[0].mxu0
  %v4300 = vadd.f32 0.0, %v4299
  %v4301 = vpop.f32.mrb[0].mxu0
  %v4302 = vpop.f32.mrb[0].mxu0
  %v4303 = vadd.f32 0.0, %v4302
  %v4304 = vpop.f32.mrb[0].mxu0
  %4305 = vmatprep.mubr.bf16.mxu0 0
  %4306 = vmatmul.mubr.bf16.gmra.mrb[0].mxu0 %v4100
  %v4307 = vpop.f32.mrb[0].mxu0
  %v4308 = vadd.f32 0.0, %v4307
  %v4309 = vpop.f32.mrb[0].mxu0
  %v4310 = vpop.f32.mrb[0].mxu0
  %v4311 = vadd.f32 0.0, %v4310
  %v4312 = vpop.f32.mrb[0].mxu0
  %4313 = vmatprep.mubr.bf16.mxu0 0
  %4314 = vmatmul.mubr.bf16.gmra.mrb[0].mxu0 %v4103
  %v4315 = vpop.f32.mrb[0].mxu0
  %v4316 = vadd.f32 0.0, %v4315
  %v4317 = vpop.f32.mrb[0].mxu0
  %v4318 = vpop.f32.mrb[0].mxu0
  %v4319 = vadd.f32 0.0, %v4318
  %v4320 = vpop.f32.mrb[0].mxu0
  %4321 = vmatprep.mubr.bf16.mxu0 0
  %4322 = vmatmul.mubr.bf16.gmra.mrb[0].mxu0 %v4106
  %v4323 = vpop.f32.mrb[0].mxu0
  %v4324 = vadd.f32 0.0, %v4323
  %v4325 = vpop.f32.mrb[0].mxu0
  %v4326 = vpop.f32.mrb[0].mxu0
  %v4327 = vadd.f32 0.0, %v4326
  %v4328 = vpop.f32.mrb[0].mxu0
  %4329 = vmatprep.mubr.bf16.mxu0 0
  %4330 = vmatmul.mubr.bf16.gmra.mrb[0].mxu0 %v4109
  %v4331 = vpop.f32.mrb[0].mxu0
  %v4332 = vadd.f32 0.0, %v4331
  %v4333 = vpop.f32.mrb[0].mxu0
  %v4334 = vpop.f32.mrb[0].mxu0
  %v4335 = vadd.f32 0.0, %v4334
  %v4336 = vpop.f32.mrb[0].mxu0
  %4337 = vmatprep.mubr.bf16.mxu0 0
  %4338 = vmatmul.mubr.bf16.gmra.mrb[0].mxu0 %v4112
  %v4339 = vpop.f32.mrb[0].mxu0
  %v4340 = vadd.f32 0.0, %v4339
  %v4341 = vpop.f32.mrb[0].mxu0
  %v4342 = vpop.f32.mrb[0].mxu0
  %v4343 = vadd.f32 0.0, %v4342
  %v4344 = vpop.f32.mrb[0].mxu0
  %4345 = vmatprep.mubr.bf16.mxu0 0
  %4346 = vmatmul.mubr.bf16.gmra.mrb[0].mxu0 %v4115
  %v4347 = vpop.f32.mrb[0].mxu0
  %v4348 = vadd.f32 0.0, %v4347
  %v4349 = vpop.f32.mrb[0].mxu0
  %v4350 = vpop.f32.mrb[0].mxu0
  %v4351 = vadd.f32 0.0, %v4350
  %v4352 = vpop.f32.mrb[0].mxu0
  %4353 = vmatprep.mubr.bf16.mxu0 0
  %4354 = vmatmul.mubr.bf16.gmra.mrb[0].mxu0 %v4118
  %v4355 = vpop.f32.mrb[0].mxu0
  %v4356 = vadd.f32 0.0, %v4355
  %v4357 = vpop.f32.mrb[0].mxu0
  %v4358 = vpop.f32.mrb[0].mxu0
  %v4359 = vadd.f32 0.0, %v4358
  %v4360 = vpop.f32.mrb[0].mxu0
  %4361 = vmatprep.mubr.bf16.mxu0 0
  %4362 = vmatmul.mubr.bf16.gmra.mrb[0].mxu0 %v4121
  %v4363 = vpop.f32.mrb[0].mxu0
  %v4364 = vadd.f32 0.0, %v4363
  %v4365 = vpop.f32.mrb[0].mxu0
  %v4366 = vpop.f32.mrb[0].mxu0
  %v4367 = vadd.f32 0.0, %v4366
  %v4368 = vpop.f32.mrb[0].mxu0
  %4369 = vmatprep.mubr.bf16.mxu0 0
  %4370 = vmatmul.mubr.bf16.gmra.mrb[0].mxu0 %v4124
  %v4371 = vpop.f32.mrb[0].mxu0
  %v4372 = vadd.f32 0.0, %v4371
  %v4373 = vpop.f32.mrb[0].mxu0
  %v4374 = vpop.f32.mrb[0].mxu0
  %v4375 = vadd.f32 0.0, %v4374
  %v4376 = vpop.f32.mrb[0].mxu0
  %4377 = vmatprep.mubr.bf16.mxu0 0
  %4378 = vmatmul.mubr.bf16.gmra.mrb[0].mxu0 %v4127
  %v4379 = vpop.f32.mrb[0].mxu0
  %v4380 = vadd.f32 0.0, %v4379
  %v4381 = vpop.f32.mrb[0].mxu0
  %v4382 = vpop.f32.mrb[0].mxu0
  %v4383 = vadd.f32 0.0, %v4382
  %v4384 = vpop.f32.mrb[0].mxu0
  %4385 = vmatprep.mubr.bf16.mxu0 0
  %4386 = vmatmul.mubr.bf16.gmra.mrb[0].mxu0 %v4130
  %v4387 = vpop.f32.mrb[0].mxu0
  %v4388 = vadd.f32 0.0, %v4387
  %v4389 = vpop.f32.mrb[0].mxu0
  %v4390 = vpop.f32.mrb[0].mxu0
  %v4391 = vadd.f32 0.0, %v4390
  %v4392 = vpop.f32.mrb[0].mxu0
  %4393 = vmatprep.mubr.bf16.mxu0 0
  %4394 = vmatmul.mubr.bf16.gmra.mrb[0].mxu0 %v4133
  %v4395 = vpop.f32.mrb[0].mxu0
  %v4396 = vadd.f32 0.0, %v4395
  %v4397 = vpop.f32.mrb[0].mxu0
  %v4398 = vpop.f32.mrb[0].mxu0
  %v4399 = vadd.f32 0.0, %v4398
  %v4400 = vpop.f32.mrb[0].mxu0
  %4401 = vmatprep.mubr.bf16.mxu0 0
  %4402 = vmatmul.mubr.bf16.gmra.mrb[0].mxu0 %v4136
  %v4403 = vpop.f32.mrb[0].mxu0
  %v4404 = vadd.f32 0.0, %v4403
  %v4405 = vpop.f32.mrb[0].mxu0
  %v4406 = vpop.f32.mrb[0].mxu0
  %v4407 = vadd.f32 0.0, %v4406
  %v4408 = vpop.f32.mrb[0].mxu0
  %4409 = vmatprep.mubr.bf16.mxu0 0
  %4410 = vmatmul.mubr.bf16.gmra.mrb[0].mxu0 %v4139
  %v4411 = vpop.f32.mrb[0].mxu0
  %v4412 = vadd.f32 0.0, %v4411
  %v4413 = vpop.f32.mrb[0].mxu0
  %v4414 = vpop.f32.mrb[0].mxu0
  %v4415 = vadd.f32 0.0, %v4414
  %v4416 = vpop.f32.mrb[0].mxu0
  %4417 = vmatprep.mubr.bf16.mxu0 0
  %4418 = vmatmul.mubr.bf16.gmra.mrb[0].mxu0 %v4142
  %v4419 = vpop.f32.mrb[0].mxu0
  %v4420 = vadd.f32 0.0, %v4419
  %v4421 = vpop.f32.mrb[0].mxu0
  %v4422 = vpop.f32.mrb[0].mxu0
  %v4423 = vadd.f32 0.0, %v4422
  %v4424 = vpop.f32.mrb[0].mxu0
  %4425 = vmatprep.mubr.bf16.mxu0 0
  %4426 = vmatmul.mubr.bf16.gmra.mrb[0].mxu0 %v4145
  %v4427 = vpop.f32.mrb[0].mxu0
  %v4428 = vadd.f32 0.0, %v4427
  %v4429 = vpop.f32.mrb[0].mxu0
  %v4430 = vpop.f32.mrb[0].mxu0
  %v4431 = vadd.f32 0.0, %v4430
  %v4432 = vpop.f32.mrb[0].mxu0
  %4433 = vmatprep.mubr.bf16.mxu0 0
  %4434 = vmatmul.mubr.bf16.gmra.mrb[0].mxu0 %v4148
  %v4435 = vpop.f32.mrb[0].mxu0
  %v4436 = vadd.f32 0.0, %v4435
  %v4437 = vpop.f32.mrb[0].mxu0
  %v4438 = vpop.f32.mrb[0].mxu0
  %v4439 = vadd.f32 0.0, %v4438
  %v4440 = vpop.f32.mrb[0].mxu0
  %4441 = vdwg.mxu0
  %v4442 = vadd.f32 %v3892, %v4188
  %v4443 = vadd.f32 %v3893, %v4191
  %v4444 = vadd.f32 %v3894, %v4196
  %v4445 = vadd.f32 %v3895, %v4199
  %v4446 = vadd.f32 %v3896, %v4204
  %v4447 = vadd.f32 %v3897, %v4207
  %v4448 = vadd.f32 %v3898, %v4212
  %v4449 = vadd.f32 %v3899, %v4215
  %v4450 = vadd.f32 %v3900, %v4220
  %v4451 = vadd.f32 %v3901, %v4223
  %v4452 = vadd.f32 %v3902, %v4228
  %v4453 = vadd.f32 %v3903, %v4231
  %v4454 = vadd.f32 %v3904, %v4236
  %v4455 = vadd.f32 %v3905, %v4239
  %v4456 = vadd.f32 %v3906, %v4244
  %v4457 = vadd.f32 %v3907, %v4247
  %v4458 = vadd.f32 %v3908, %v4252
  %v4459 = vadd.f32 %v3909, %v4255
  %v4460 = vadd.f32 %v3910, %v4260
  %v4461 = vadd.f32 %v3911, %v4263
  %v4462 = vadd.f32 %v3912, %v4268
  %v4463 = vadd.f32 %v3913, %v4271
  %v4464 = vadd.f32 %v3914, %v4276
  %v4465 = vadd.f32 %v3915, %v4279
  %v4466 = vadd.f32 %v3916, %v4284
  %v4467 = vadd.f32 %v3917, %v4287
  %v4468 = vadd.f32 %v3918, %v4292
  %v4469 = vadd.f32 %v3919, %v4295
  %v4470 = vadd.f32 %v3920, %v4300
  %v4471 = vadd.f32 %v3921, %v4303
  %v4472 = vadd.f32 %v3922, %v4308
  %v4473 = vadd.f32 %v3923, %v4311
  %v4474 = vadd.f32 %v3924, %v4316
  %v4475 = vadd.f32 %v3925, %v4319
  %v4476 = vadd.f32 %v3926, %v4324
  %v4477 = vadd.f32 %v3927, %v4327
  %v4478 = vadd.f32 %v3928, %v4332
  %v4479 = vadd.f32 %v3929, %v4335
  %v4480 = vadd.f32 %v3930, %v4340
  %v4481 = vadd.f32 %v3931, %v4343
  %v4482 = vadd.f32 %v3932, %v4348
  %v4483 = vadd.f32 %v3933, %v4351
  %v4484 = vadd.f32 %v3934, %v4356
  %v4485 = vadd.f32 %v3935, %v4359
  %v4486 = vadd.f32 %v3936, %v4364
  %v4487 = vadd.f32 %v3937, %v4367
  %v4488 = vadd.f32 %v3938, %v4372
  %v4489 = vadd.f32 %v3939, %v4375
  %v4490 = vadd.f32 %v3940, %v4380
  %v4491 = vadd.f32 %v3941, %v4383
  %v4492 = vadd.f32 %v3942, %v4388
  %v4493 = vadd.f32 %v3943, %v4391
  %v4494 = vadd.f32 %v3944, %v4396
  %v4495 = vadd.f32 %v3945, %v4399
  %v4496 = vadd.f32 %v3946, %v4404
  %v4497 = vadd.f32 %v3947, %v4407
  %v4498 = vadd.f32 %v3948, %v4412
  %v4499 = vadd.f32 %v3949, %v4415
  %v4500 = vadd.f32 %v3950, %v4420
  %v4501 = vadd.f32 %v3951, %v4423
  %v4502 = vadd.f32 %v3952, %v4428
  %v4503 = vadd.f32 %v3953, %v4431
  %v4504 = vadd.f32 %v3954, %v4436
  %v4505 = vadd.f32 %v3955, %v4439
  %v4506 = vld [vmem:[%s3405 + $0x2] sm:$0xff]
  %v4507 = vld [vmem:[%s3405 + $0xa] sm:$0xff]
  %v4508 = vld [vmem:[%s3405 + $0x1a] sm:$0xff]
  %v4509 = vld [vmem:[%s3405 + $0x22] sm:$0xff]
  %v4510 = vld [vmem:[%s3405 + $0x32] sm:$0xff]
  %v4511 = vld [vmem:[%s3405 + $0x3a] sm:$0xff]
  %v4512 = vld [vmem:[%s3405 + $0x4a] sm:$0xff]
  %v4513 = vld [vmem:[%s3405 + $0x52] sm:$0xff]
  %v4514 = vld [vmem:[%s3405 + $0x62] sm:$0xff]
  %v4515 = vld [vmem:[%s3405 + $0x6a] sm:$0xff]
  %v4516 = vld [vmem:[%s3405 + $0x7a] sm:$0xff]
  %v4517 = vld [vmem:[%s3405 + $0x82] sm:$0xff]
  %v4518 = vld [vmem:[%s3405 + $0x92] sm:$0xff]
  %v4519 = vld [vmem:[%s3405 + $0x9a] sm:$0xff]
  %v4520 = vld [vmem:[%s3405 + $0xaa] sm:$0xff]
  %v4521 = vld [vmem:[%s3405 + $0xb2] sm:$0xff]
  %v4522 = vld [vmem:[%s3405 + $0xc2] sm:$0xff]
  %v4523 = vld [vmem:[%s3405 + $0xca] sm:$0xff]
  %v4524 = vld [vmem:[%s3405 + $0xda] sm:$0xff]
  %v4525 = vld [vmem:[%s3405 + $0xe2] sm:$0xff]
  %v4526 = vld [vmem:[%s3405 + $0xf2] sm:$0xff]
  %v4527 = vld [vmem:[%s3405 + $0xfa] sm:$0xff]
  %v4528 = vld [vmem:[%s3405 + $0x10a] sm:$0xff]
  %v4529 = vld [vmem:[%s3405 + $0x112] sm:$0xff]
  %v4530 = vld [vmem:[%s3405 + $0x122] sm:$0xff]
  %v4531 = vld [vmem:[%s3405 + $0x12a] sm:$0xff]
  %v4532 = vld [vmem:[%s3405 + $0x13a] sm:$0xff]
  %v4533 = vld [vmem:[%s3405 + $0x142] sm:$0xff]
  %v4534 = vld [vmem:[%s3405 + $0x152] sm:$0xff]
  %v4535 = vld [vmem:[%s3405 + $0x15a] sm:$0xff]
  %v4536 = vld [vmem:[%s3405 + $0x16a] sm:$0xff]
  %v4537 = vld [vmem:[%s3405 + $0x172] sm:$0xff]
  %v4538 = vld [vmem:[%s3405 + $0x1b2] sm:$0xff]
  %v4539 = vld [vmem:[%s3405 + $0x1ba] sm:$0xff]
  %v4540 = vld [vmem:[%s3405 + $0x1ca] sm:$0xff]
  %v4541 = vld [vmem:[%s3405 + $0x1d2] sm:$0xff]
  %v4542 = vld [vmem:[%s3405 + $0x1e2] sm:$0xff]
  %v4543 = vld [vmem:[%s3405 + $0x1ea] sm:$0xff]
  %v4544 = vld [vmem:[%s3405 + $0x1fa] sm:$0xff]
  %v4545 = vld [vmem:[%s3405 + $0x202] sm:$0xff]
  %v4546 = vld [vmem:[%s3405 + $0x212] sm:$0xff]
  %v4547 = vld [vmem:[%s3405 + $0x21a] sm:$0xff]
  %v4548 = vld [vmem:[%s3405 + $0x22a] sm:$0xff]
  %v4549 = vld [vmem:[%s3405 + $0x232] sm:$0xff]
  %v4550 = vld [vmem:[%s3405 + $0x242] sm:$0xff]
  %v4551 = vld [vmem:[%s3405 + $0x24a] sm:$0xff]
  %v4552 = vld [vmem:[%s3405 + $0x25a] sm:$0xff]
  %v4553 = vld [vmem:[%s3405 + $0x262] sm:$0xff]
  %v4554 = vld [vmem:[%s3405 + $0x272] sm:$0xff]
  %v4555 = vld [vmem:[%s3405 + $0x27a] sm:$0xff]
  %v4556 = vld [vmem:[%s3405 + $0x28a] sm:$0xff]
  %v4557 = vld [vmem:[%s3405 + $0x292] sm:$0xff]
  %v4558 = vld [vmem:[%s3405 + $0x2a2] sm:$0xff]
  %v4559 = vld [vmem:[%s3405 + $0x2aa] sm:$0xff]
  %v4560 = vld [vmem:[%s3405 + $0x2ba] sm:$0xff]
  %v4561 = vld [vmem:[%s3405 + $0x2c2] sm:$0xff]
  %v4562 = vld [vmem:[%s3405 + $0x2d2] sm:$0xff]
  %v4563 = vld [vmem:[%s3405 + $0x2da] sm:$0xff]
  %v4564 = vld [vmem:[%s3405 + $0x2ea] sm:$0xff]
  %v4565 = vld [vmem:[%s3405 + $0x2f2] sm:$0xff]
  %v4566 = vld [vmem:[%s3405 + $0x302] sm:$0xff]
  %v4567 = vld [vmem:[%s3405 + $0x30a] sm:$0xff]
  %v4568 = vld [vmem:[%s3405 + $0x31a] sm:$0xff]
  %v4569 = vld [vmem:[%s3405 + $0x322] sm:$0xff]
  %v4570 = vpack.c.bf16 %v4507, %v4506
  %v4571 = vpack.c.bf16 %v4509, %v4508
  %v4572 = vpack.c.bf16 %v4511, %v4510
  %v4573 = vpack.c.bf16 %v4513, %v4512
  %v4574 = vpack.c.bf16 %v4515, %v4514
  %v4575 = vpack.c.bf16 %v4517, %v4516
  %v4576 = vpack.c.bf16 %v4519, %v4518
  %v4577 = vpack.c.bf16 %v4521, %v4520
  %v4578 = vpack.c.bf16 %v4523, %v4522
  %v4579 = vpack.c.bf16 %v4525, %v4524
  %v4580 = vpack.c.bf16 %v4527, %v4526
  %v4581 = vpack.c.bf16 %v4529, %v4528
  %v4582 = vpack.c.bf16 %v4531, %v4530
  %v4583 = vpack.c.bf16 %v4533, %v4532
  %v4584 = vpack.c.bf16 %v4535, %v4534
  %v4585 = vpack.c.bf16 %v4537, %v4536
  %v4586 = vpack.c.bf16 %v4539, %v4538
  %v4587 = vpack.c.bf16 %v4541, %v4540
  %v4588 = vpack.c.bf16 %v4543, %v4542
  %v4589 = vpack.c.bf16 %v4545, %v4544
  %v4590 = vpack.c.bf16 %v4547, %v4546
  %v4591 = vpack.c.bf16 %v4549, %v4548
  %v4592 = vpack.c.bf16 %v4551, %v4550
  %v4593 = vpack.c.bf16 %v4553, %v4552
  %v4594 = vpack.c.bf16 %v4555, %v4554
  %v4595 = vpack.c.bf16 %v4557, %v4556
  %v4596 = vpack.c.bf16 %v4559, %v4558
  %v4597 = vpack.c.bf16 %v4561, %v4560
  %v4598 = vpack.c.bf16 %v4563, %v4562
  %v4599 = vpack.c.bf16 %v4565, %v4564
  %v4600 = vpack.c.bf16 %v4567, %v4566
  %v4601 = vpack.c.bf16 %v4569, %v4568
  %s4602 = scalar_lea.vmem %s1, 16
  %v4603 = vld [vmem:[%s4602] sm:$0x3]
  %v4605 = vsel %vm25, %v4570, 0
  %v4608 = vsel %vm25, %v4571, 0
  %v4611 = vsel %vm25, %v4572, 0
  %v4614 = vsel %vm25, %v4573, 0
  %v4617 = vsel %vm25, %v4574, 0
  %v4620 = vsel %vm25, %v4575, 0
  %v4623 = vsel %vm25, %v4576, 0
  %v4626 = vsel %vm25, %v4577, 0
  %v4629 = vsel %vm25, %v4578, 0
  %v4632 = vsel %vm25, %v4579, 0
  %v4635 = vsel %vm25, %v4580, 0
  %v4638 = vsel %vm25, %v4581, 0
  %v4641 = vsel %vm25, %v4582, 0
  %v4644 = vsel %vm25, %v4583, 0
  %v4647 = vsel %vm25, %v4584, 0
  %v4650 = vsel %vm25, %v4585, 0
  %v4653 = vsel %vm25, %v4586, 0
  %v4656 = vsel %vm25, %v4587, 0
  %v4659 = vsel %vm25, %v4588, 0
  %v4662 = vsel %vm25, %v4589, 0
  %v4665 = vsel %vm25, %v4590, 0
  %v4668 = vsel %vm25, %v4591, 0
  %v4671 = vsel %vm25, %v4592, 0
  %v4674 = vsel %vm25, %v4593, 0
  %v4677 = vsel %vm25, %v4594, 0
  %v4680 = vsel %vm25, %v4595, 0
  %v4683 = vsel %vm25, %v4596, 0
  %v4686 = vsel %vm25, %v4597, 0
  %v4689 = vsel %vm25, %v4598, 0
  %v4692 = vsel %vm25, %v4599, 0
  %v4695 = vsel %vm25, %v4600, 0
  %v4698 = vsel %vm25, %v4601, 0
  %v4701 = vsel %vm526, %v4603, 0
  %4703 = vmatprep.subr.bf16.mxu0 0
  %4704 = vmatpush1.bf16.msra.mxu0 %v4701
  %4705 = vmatprep.subr.bf16.mxu0 0
  %4706 = vmatpush1.bf16.msra.mxu0 0
  %4707 = vmatprep.subr.bf16.mxu0 0
  %4708 = vmatpush1.bf16.msra.mxu0 0
  %4709 = vmatprep.subr.bf16.mxu0 0
  %4710 = vmatpush1.bf16.msra.mxu0 0
  %4711 = vmatprep.subr.bf16.mxu0 0
  %4712 = vmatpush1.bf16.msra.mxu0 0
  %4713 = vmatprep.subr.bf16.mxu0 0
  %4714 = vmatpush1.bf16.msra.mxu0 0
  %4715 = vmatprep.subr.bf16.mxu0 0
  %4716 = vmatpush1.bf16.msra.mxu0 0
  %4717 = vmatprep.subr.bf16.mxu0 0
  %4718 = vmatpush1.bf16.msra.mxu0 0
  %4719 = vmatprep.subr.bf16.mxu0 0
  %4720 = vmatpush1.bf16.msra.mxu0 0
  %4721 = vmatprep.subr.bf16.mxu0 0
  %4722 = vmatpush1.bf16.msra.mxu0 0
  %4723 = vmatprep.subr.bf16.mxu0 0
  %4724 = vmatpush1.bf16.msra.mxu0 0
  %4725 = vmatprep.subr.bf16.mxu0 0
  %4726 = vmatpush1.bf16.msra.mxu0 0
  %4727 = vmatprep.subr.bf16.mxu0 0
  %4728 = vmatpush1.bf16.msra.mxu0 0
  %4729 = vmatprep.subr.bf16.mxu0 0
  %4730 = vmatpush1.bf16.msra.mxu0 0
  %4731 = vmatprep.subr.bf16.mxu0 0
  %4732 = vmatpush1.bf16.msra.mxu0 0
  %4733 = vmatprep.subr.bf16.mxu0 0
  %4734 = vmatpush1.bf16.msra.mxu0 0
  %4735 = vmatprep.mubr.bf16.mxu0 0
  %4736 = vmatmul.mubr.bf16.gmra.mrb[0].mxu0 %v4605
  %v4737 = vpop.f32.mrb[0].mxu0
  %v4738 = vadd.f32 0.0, %v4737
  %v4739 = vpop.f32.mrb[0].mxu0
  %v4740 = vpop.f32.mrb[0].mxu0
  %v4741 = vadd.f32 0.0, %v4740
  %v4742 = vpop.f32.mrb[0].mxu0
  %4743 = vmatprep.mubr.bf16.mxu0 0
  %4744 = vmatmul.mubr.bf16.gmra.mrb[0].mxu0 %v4608
  %v4745 = vpop.f32.mrb[0].mxu0
  %v4746 = vadd.f32 0.0, %v4745
  %v4747 = vpop.f32.mrb[0].mxu0
  %v4748 = vpop.f32.mrb[0].mxu0
  %v4749 = vadd.f32 0.0, %v4748
  %v4750 = vpop.f32.mrb[0].mxu0
  %4751 = vmatprep.mubr.bf16.mxu0 0
  %4752 = vmatmul.mubr.bf16.gmra.mrb[0].mxu0 %v4611
  %v4753 = vpop.f32.mrb[0].mxu0
  %v4754 = vadd.f32 0.0, %v4753
  %v4755 = vpop.f32.mrb[0].mxu0
  %v4756 = vpop.f32.mrb[0].mxu0
  %v4757 = vadd.f32 0.0, %v4756
  %v4758 = vpop.f32.mrb[0].mxu0
  %4759 = vmatprep.mubr.bf16.mxu0 0
  %4760 = vmatmul.mubr.bf16.gmra.mrb[0].mxu0 %v4614
  %v4761 = vpop.f32.mrb[0].mxu0
  %v4762 = vadd.f32 0.0, %v4761
  %v4763 = vpop.f32.mrb[0].mxu0
  %v4764 = vpop.f32.mrb[0].mxu0
  %v4765 = vadd.f32 0.0, %v4764
  %v4766 = vpop.f32.mrb[0].mxu0
  %4767 = vmatprep.mubr.bf16.mxu0 0
  %4768 = vmatmul.mubr.bf16.gmra.mrb[0].mxu0 %v4617
  %v4769 = vpop.f32.mrb[0].mxu0
  %v4770 = vadd.f32 0.0, %v4769
  %v4771 = vpop.f32.mrb[0].mxu0
  %v4772 = vpop.f32.mrb[0].mxu0
  %v4773 = vadd.f32 0.0, %v4772
  %v4774 = vpop.f32.mrb[0].mxu0
  %4775 = vmatprep.mubr.bf16.mxu0 0
  %4776 = vmatmul.mubr.bf16.gmra.mrb[0].mxu0 %v4620
  %v4777 = vpop.f32.mrb[0].mxu0
  %v4778 = vadd.f32 0.0, %v4777
  %v4779 = vpop.f32.mrb[0].mxu0
  %v4780 = vpop.f32.mrb[0].mxu0
  %v4781 = vadd.f32 0.0, %v4780
  %v4782 = vpop.f32.mrb[0].mxu0
  %4783 = vmatprep.mubr.bf16.mxu0 0
  %4784 = vmatmul.mubr.bf16.gmra.mrb[0].mxu0 %v4623
  %v4785 = vpop.f32.mrb[0].mxu0
  %v4786 = vadd.f32 0.0, %v4785
  %v4787 = vpop.f32.mrb[0].mxu0
  %v4788 = vpop.f32.mrb[0].mxu0
  %v4789 = vadd.f32 0.0, %v4788
  %v4790 = vpop.f32.mrb[0].mxu0
  %4791 = vmatprep.mubr.bf16.mxu0 0
  %4792 = vmatmul.mubr.bf16.gmra.mrb[0].mxu0 %v4626
  %v4793 = vpop.f32.mrb[0].mxu0
  %v4794 = vadd.f32 0.0, %v4793
  %v4795 = vpop.f32.mrb[0].mxu0
  %v4796 = vpop.f32.mrb[0].mxu0
  %v4797 = vadd.f32 0.0, %v4796
  %v4798 = vpop.f32.mrb[0].mxu0
  %4799 = vmatprep.mubr.bf16.mxu0 0
  %4800 = vmatmul.mubr.bf16.gmra.mrb[0].mxu0 %v4629
  %v4801 = vpop.f32.mrb[0].mxu0
  %v4802 = vadd.f32 0.0, %v4801
  %v4803 = vpop.f32.mrb[0].mxu0
  %v4804 = vpop.f32.mrb[0].mxu0
  %v4805 = vadd.f32 0.0, %v4804
  %v4806 = vpop.f32.mrb[0].mxu0
  %4807 = vmatprep.mubr.bf16.mxu0 0
  %4808 = vmatmul.mubr.bf16.gmra.mrb[0].mxu0 %v4632
  %v4809 = vpop.f32.mrb[0].mxu0
  %v4810 = vadd.f32 0.0, %v4809
  %v4811 = vpop.f32.mrb[0].mxu0
  %v4812 = vpop.f32.mrb[0].mxu0
  %v4813 = vadd.f32 0.0, %v4812
  %v4814 = vpop.f32.mrb[0].mxu0
  %4815 = vmatprep.mubr.bf16.mxu0 0
  %4816 = vmatmul.mubr.bf16.gmra.mrb[0].mxu0 %v4635
  %v4817 = vpop.f32.mrb[0].mxu0
  %v4818 = vadd.f32 0.0, %v4817
  %v4819 = vpop.f32.mrb[0].mxu0
  %v4820 = vpop.f32.mrb[0].mxu0
  %v4821 = vadd.f32 0.0, %v4820
  %v4822 = vpop.f32.mrb[0].mxu0
  %4823 = vmatprep.mubr.bf16.mxu0 0
  %4824 = vmatmul.mubr.bf16.gmra.mrb[0].mxu0 %v4638
  %v4825 = vpop.f32.mrb[0].mxu0
  %v4826 = vadd.f32 0.0, %v4825
  %v4827 = vpop.f32.mrb[0].mxu0
  %v4828 = vpop.f32.mrb[0].mxu0
  %v4829 = vadd.f32 0.0, %v4828
  %v4830 = vpop.f32.mrb[0].mxu0
  %4831 = vmatprep.mubr.bf16.mxu0 0
  %4832 = vmatmul.mubr.bf16.gmra.mrb[0].mxu0 %v4641
  %v4833 = vpop.f32.mrb[0].mxu0
  %v4834 = vadd.f32 0.0, %v4833
  %v4835 = vpop.f32.mrb[0].mxu0
  %v4836 = vpop.f32.mrb[0].mxu0
  %v4837 = vadd.f32 0.0, %v4836
  %v4838 = vpop.f32.mrb[0].mxu0
  %4839 = vmatprep.mubr.bf16.mxu0 0
  %4840 = vmatmul.mubr.bf16.gmra.mrb[0].mxu0 %v4644
  %v4841 = vpop.f32.mrb[0].mxu0
  %v4842 = vadd.f32 0.0, %v4841
  %v4843 = vpop.f32.mrb[0].mxu0
  %v4844 = vpop.f32.mrb[0].mxu0
  %v4845 = vadd.f32 0.0, %v4844
  %v4846 = vpop.f32.mrb[0].mxu0
  %4847 = vmatprep.mubr.bf16.mxu0 0
  %4848 = vmatmul.mubr.bf16.gmra.mrb[0].mxu0 %v4647
  %v4849 = vpop.f32.mrb[0].mxu0
  %v4850 = vadd.f32 0.0, %v4849
  %v4851 = vpop.f32.mrb[0].mxu0
  %v4852 = vpop.f32.mrb[0].mxu0
  %v4853 = vadd.f32 0.0, %v4852
  %v4854 = vpop.f32.mrb[0].mxu0
  %4855 = vmatprep.mubr.bf16.mxu0 0
  %4856 = vmatmul.mubr.bf16.gmra.mrb[0].mxu0 %v4650
  %v4857 = vpop.f32.mrb[0].mxu0
  %v4858 = vadd.f32 0.0, %v4857
  %v4859 = vpop.f32.mrb[0].mxu0
  %v4860 = vpop.f32.mrb[0].mxu0
  %v4861 = vadd.f32 0.0, %v4860
  %v4862 = vpop.f32.mrb[0].mxu0
  %4863 = vmatprep.mubr.bf16.mxu0 0
  %4864 = vmatmul.mubr.bf16.gmra.mrb[0].mxu0 %v4653
  %v4865 = vpop.f32.mrb[0].mxu0
  %v4866 = vadd.f32 0.0, %v4865
  %v4867 = vpop.f32.mrb[0].mxu0
  %v4868 = vpop.f32.mrb[0].mxu0
  %v4869 = vadd.f32 0.0, %v4868
  %v4870 = vpop.f32.mrb[0].mxu0
  %4871 = vmatprep.mubr.bf16.mxu0 0
  %4872 = vmatmul.mubr.bf16.gmra.mrb[0].mxu0 %v4656
  %v4873 = vpop.f32.mrb[0].mxu0
  %v4874 = vadd.f32 0.0, %v4873
  %v4875 = vpop.f32.mrb[0].mxu0
  %v4876 = vpop.f32.mrb[0].mxu0
  %v4877 = vadd.f32 0.0, %v4876
  %v4878 = vpop.f32.mrb[0].mxu0
  %4879 = vmatprep.mubr.bf16.mxu0 0
  %4880 = vmatmul.mubr.bf16.gmra.mrb[0].mxu0 %v4659
  %v4881 = vpop.f32.mrb[0].mxu0
  %v4882 = vadd.f32 0.0, %v4881
  %v4883 = vpop.f32.mrb[0].mxu0
  %v4884 = vpop.f32.mrb[0].mxu0
  %v4885 = vadd.f32 0.0, %v4884
  %v4886 = vpop.f32.mrb[0].mxu0
  %4887 = vmatprep.mubr.bf16.mxu0 0
  %4888 = vmatmul.mubr.bf16.gmra.mrb[0].mxu0 %v4662
  %v4889 = vpop.f32.mrb[0].mxu0
  %v4890 = vadd.f32 0.0, %v4889
  %v4891 = vpop.f32.mrb[0].mxu0
  %v4892 = vpop.f32.mrb[0].mxu0
  %v4893 = vadd.f32 0.0, %v4892
  %v4894 = vpop.f32.mrb[0].mxu0
  %4895 = vmatprep.mubr.bf16.mxu0 0
  %4896 = vmatmul.mubr.bf16.gmra.mrb[0].mxu0 %v4665
  %v4897 = vpop.f32.mrb[0].mxu0
  %v4898 = vadd.f32 0.0, %v4897
  %v4899 = vpop.f32.mrb[0].mxu0
  %v4900 = vpop.f32.mrb[0].mxu0
  %v4901 = vadd.f32 0.0, %v4900
  %v4902 = vpop.f32.mrb[0].mxu0
  %4903 = vmatprep.mubr.bf16.mxu0 0
  %4904 = vmatmul.mubr.bf16.gmra.mrb[0].mxu0 %v4668
  %v4905 = vpop.f32.mrb[0].mxu0
  %v4906 = vadd.f32 0.0, %v4905
  %v4907 = vpop.f32.mrb[0].mxu0
  %v4908 = vpop.f32.mrb[0].mxu0
  %v4909 = vadd.f32 0.0, %v4908
  %v4910 = vpop.f32.mrb[0].mxu0
  %4911 = vmatprep.mubr.bf16.mxu0 0
  %4912 = vmatmul.mubr.bf16.gmra.mrb[0].mxu0 %v4671
  %v4913 = vpop.f32.mrb[0].mxu0
  %v4914 = vadd.f32 0.0, %v4913
  %v4915 = vpop.f32.mrb[0].mxu0
  %v4916 = vpop.f32.mrb[0].mxu0
  %v4917 = vadd.f32 0.0, %v4916
  %v4918 = vpop.f32.mrb[0].mxu0
  %4919 = vmatprep.mubr.bf16.mxu0 0
  %4920 = vmatmul.mubr.bf16.gmra.mrb[0].mxu0 %v4674
  %v4921 = vpop.f32.mrb[0].mxu0
  %v4922 = vadd.f32 0.0, %v4921
  %v4923 = vpop.f32.mrb[0].mxu0
  %v4924 = vpop.f32.mrb[0].mxu0
  %v4925 = vadd.f32 0.0, %v4924
  %v4926 = vpop.f32.mrb[0].mxu0
  %4927 = vmatprep.mubr.bf16.mxu0 0
  %4928 = vmatmul.mubr.bf16.gmra.mrb[0].mxu0 %v4677
  %v4929 = vpop.f32.mrb[0].mxu0
  %v4930 = vadd.f32 0.0, %v4929
  %v4931 = vpop.f32.mrb[0].mxu0
  %v4932 = vpop.f32.mrb[0].mxu0
  %v4933 = vadd.f32 0.0, %v4932
  %v4934 = vpop.f32.mrb[0].mxu0
  %4935 = vmatprep.mubr.bf16.mxu0 0
  %4936 = vmatmul.mubr.bf16.gmra.mrb[0].mxu0 %v4680
  %v4937 = vpop.f32.mrb[0].mxu0
  %v4938 = vadd.f32 0.0, %v4937
  %v4939 = vpop.f32.mrb[0].mxu0
  %v4940 = vpop.f32.mrb[0].mxu0
  %v4941 = vadd.f32 0.0, %v4940
  %v4942 = vpop.f32.mrb[0].mxu0
  %4943 = vmatprep.mubr.bf16.mxu0 0
  %4944 = vmatmul.mubr.bf16.gmra.mrb[0].mxu0 %v4683
  %v4945 = vpop.f32.mrb[0].mxu0
  %v4946 = vadd.f32 0.0, %v4945
  %v4947 = vpop.f32.mrb[0].mxu0
  %v4948 = vpop.f32.mrb[0].mxu0
  %v4949 = vadd.f32 0.0, %v4948
  %v4950 = vpop.f32.mrb[0].mxu0
  %4951 = vmatprep.mubr.bf16.mxu0 0
  %4952 = vmatmul.mubr.bf16.gmra.mrb[0].mxu0 %v4686
  %v4953 = vpop.f32.mrb[0].mxu0
  %v4954 = vadd.f32 0.0, %v4953
  %v4955 = vpop.f32.mrb[0].mxu0
  %v4956 = vpop.f32.mrb[0].mxu0
  %v4957 = vadd.f32 0.0, %v4956
  %v4958 = vpop.f32.mrb[0].mxu0
  %4959 = vmatprep.mubr.bf16.mxu0 0
  %4960 = vmatmul.mubr.bf16.gmra.mrb[0].mxu0 %v4689
  %v4961 = vpop.f32.mrb[0].mxu0
  %v4962 = vadd.f32 0.0, %v4961
  %v4963 = vpop.f32.mrb[0].mxu0
  %v4964 = vpop.f32.mrb[0].mxu0
  %v4965 = vadd.f32 0.0, %v4964
  %v4966 = vpop.f32.mrb[0].mxu0
  %4967 = vmatprep.mubr.bf16.mxu0 0
  %4968 = vmatmul.mubr.bf16.gmra.mrb[0].mxu0 %v4692
  %v4969 = vpop.f32.mrb[0].mxu0
  %v4970 = vadd.f32 0.0, %v4969
  %v4971 = vpop.f32.mrb[0].mxu0
  %v4972 = vpop.f32.mrb[0].mxu0
  %v4973 = vadd.f32 0.0, %v4972
  %v4974 = vpop.f32.mrb[0].mxu0
  %4975 = vmatprep.mubr.bf16.mxu0 0
  %4976 = vmatmul.mubr.bf16.gmra.mrb[0].mxu0 %v4695
  %v4977 = vpop.f32.mrb[0].mxu0
  %v4978 = vadd.f32 0.0, %v4977
  %v4979 = vpop.f32.mrb[0].mxu0
  %v4980 = vpop.f32.mrb[0].mxu0
  %v4981 = vadd.f32 0.0, %v4980
  %v4982 = vpop.f32.mrb[0].mxu0
  %4983 = vmatprep.mubr.bf16.mxu0 0
  %4984 = vmatmul.mubr.bf16.gmra.mrb[0].mxu0 %v4698
  %v4985 = vpop.f32.mrb[0].mxu0
  %v4986 = vadd.f32 0.0, %v4985
  %v4987 = vpop.f32.mrb[0].mxu0
  %v4988 = vpop.f32.mrb[0].mxu0
  %v4989 = vadd.f32 0.0, %v4988
  %v4990 = vpop.f32.mrb[0].mxu0
  %4991 = vdwg.mxu0
  %v4992 = vadd.f32 %v4442, %v4738
  %v4993 = vadd.f32 %v4443, %v4741
  %v4994 = vadd.f32 %v4444, %v4746
  %v4995 = vadd.f32 %v4445, %v4749
  %v4996 = vadd.f32 %v4446, %v4754
  %v4997 = vadd.f32 %v4447, %v4757
  %v4998 = vadd.f32 %v4448, %v4762
  %v4999 = vadd.f32 %v4449, %v4765
  %v5000 = vadd.f32 %v4450, %v4770
  %v5001 = vadd.f32 %v4451, %v4773
  %v5002 = vadd.f32 %v4452, %v4778
  %v5003 = vadd.f32 %v4453, %v4781
  %v5004 = vadd.f32 %v4454, %v4786
  %v5005 = vadd.f32 %v4455, %v4789
  %v5006 = vadd.f32 %v4456, %v4794
  %v5007 = vadd.f32 %v4457, %v4797
  %v5008 = vadd.f32 %v4458, %v4802
  %v5009 = vadd.f32 %v4459, %v4805
  %v5010 = vadd.f32 %v4460, %v4810
  %v5011 = vadd.f32 %v4461, %v4813
  %v5012 = vadd.f32 %v4462, %v4818
  %v5013 = vadd.f32 %v4463, %v4821
  %v5014 = vadd.f32 %v4464, %v4826
  %v5015 = vadd.f32 %v4465, %v4829
  %v5016 = vadd.f32 %v4466, %v4834
  %v5017 = vadd.f32 %v4467, %v4837
  %v5018 = vadd.f32 %v4468, %v4842
  %v5019 = vadd.f32 %v4469, %v4845
  %v5020 = vadd.f32 %v4470, %v4850
  %v5021 = vadd.f32 %v4471, %v4853
  %v5022 = vadd.f32 %v4472, %v4858
  %v5023 = vadd.f32 %v4473, %v4861
  %v5024 = vadd.f32 %v4474, %v4866
  %v5025 = vadd.f32 %v4475, %v4869
  %v5026 = vadd.f32 %v4476, %v4874
  %v5027 = vadd.f32 %v4477, %v4877
  %v5028 = vadd.f32 %v4478, %v4882
  %v5029 = vadd.f32 %v4479, %v4885
  %v5030 = vadd.f32 %v4480, %v4890
  %v5031 = vadd.f32 %v4481, %v4893
  %v5032 = vadd.f32 %v4482, %v4898
  %v5033 = vadd.f32 %v4483, %v4901
  %v5034 = vadd.f32 %v4484, %v4906
  %v5035 = vadd.f32 %v4485, %v4909
  %v5036 = vadd.f32 %v4486, %v4914
  %v5037 = vadd.f32 %v4487, %v4917
  %v5038 = vadd.f32 %v4488, %v4922
  %v5039 = vadd.f32 %v4489, %v4925
  %v5040 = vadd.f32 %v4490, %v4930
  %v5041 = vadd.f32 %v4491, %v4933
  %v5042 = vadd.f32 %v4492, %v4938
  %v5043 = vadd.f32 %v4493, %v4941
  %v5044 = vadd.f32 %v4494, %v4946
  %v5045 = vadd.f32 %v4495, %v4949
  %v5046 = vadd.f32 %v4496, %v4954
  %v5047 = vadd.f32 %v4497, %v4957
  %v5048 = vadd.f32 %v4498, %v4962
  %v5049 = vadd.f32 %v4499, %v4965
  %v5050 = vadd.f32 %v4500, %v4970
  %v5051 = vadd.f32 %v4501, %v4973
  %v5052 = vadd.f32 %v4502, %v4978
  %v5053 = vadd.f32 %v4503, %v4981
  %v5054 = vadd.f32 %v4504, %v4986
  %v5055 = vadd.f32 %v4505, %v4989
  %vm5056 = vcmask 64512
  %v5057 = vsel %vm5056, %v4992, 0.0
  %v5058 = vsel %vm5056, %v4993, 0.0
  %v5059 = vadd.f32 %v5057, %v5058
  %v5060 = vsel %vm5056, %v4994, 0.0
  %v5061 = vadd.f32 %v5059, %v5060
  %v5062 = vsel %vm5056, %v4995, 0.0
  %v5063 = vadd.f32 %v5061, %v5062
  %v5064 = vsel %vm5056, %v4996, 0.0
  %v5065 = vadd.f32 %v5063, %v5064
  %v5066 = vsel %vm5056, %v4997, 0.0
  %v5067 = vadd.f32 %v5065, %v5066
  %v5068 = vsel %vm5056, %v4998, 0.0
  %v5069 = vadd.f32 %v5067, %v5068
  %v5070 = vsel %vm5056, %v4999, 0.0
  %v5071 = vadd.f32 %v5069, %v5070
  %v5072 = vsel %vm5056, %v5000, 0.0
  %v5073 = vadd.f32 %v5071, %v5072
  %v5074 = vsel %vm5056, %v5001, 0.0
  %v5075 = vadd.f32 %v5073, %v5074
  %v5076 = vsel %vm5056, %v5002, 0.0
  %v5077 = vadd.f32 %v5075, %v5076
  %v5078 = vsel %vm5056, %v5003, 0.0
  %v5079 = vadd.f32 %v5077, %v5078
  %v5080 = vsel %vm5056, %v5004, 0.0
  %v5081 = vadd.f32 %v5079, %v5080
  %v5082 = vsel %vm5056, %v5005, 0.0
  %v5083 = vadd.f32 %v5081, %v5082
  %v5084 = vsel %vm5056, %v5006, 0.0
  %v5085 = vadd.f32 %v5083, %v5084
  %v5086 = vsel %vm5056, %v5007, 0.0
  %v5087 = vadd.f32 %v5085, %v5086
  %v5088 = vsel %vm5056, %v5008, 0.0
  %v5089 = vadd.f32 %v5087, %v5088
  %v5090 = vsel %vm5056, %v5009, 0.0
  %v5091 = vadd.f32 %v5089, %v5090
  %v5092 = vsel %vm5056, %v5010, 0.0
  %v5093 = vadd.f32 %v5091, %v5092
  %v5094 = vsel %vm5056, %v5011, 0.0
  %v5095 = vadd.f32 %v5093, %v5094
  %v5096 = vsel %vm5056, %v5012, 0.0
  %v5097 = vadd.f32 %v5095, %v5096
  %v5098 = vsel %vm5056, %v5013, 0.0
  %v5099 = vadd.f32 %v5097, %v5098
  %v5100 = vsel %vm5056, %v5014, 0.0
  %v5101 = vadd.f32 %v5099, %v5100
  %v5102 = vsel %vm5056, %v5015, 0.0
  %v5103 = vadd.f32 %v5101, %v5102
  %v5104 = vsel %vm5056, %v5016, 0.0
  %v5105 = vadd.f32 %v5103, %v5104
  %v5106 = vsel %vm5056, %v5017, 0.0
  %v5107 = vadd.f32 %v5105, %v5106
  %v5108 = vsel %vm5056, %v5018, 0.0
  %v5109 = vadd.f32 %v5107, %v5108
  %v5110 = vsel %vm5056, %v5019, 0.0
  %v5111 = vadd.f32 %v5109, %v5110
  %v5112 = vsel %vm5056, %v5020, 0.0
  %v5113 = vadd.f32 %v5111, %v5112
  %v5114 = vsel %vm5056, %v5021, 0.0
  %v5115 = vadd.f32 %v5113, %v5114
  %v5116 = vsel %vm5056, %v5022, 0.0
  %v5117 = vadd.f32 %v5115, %v5116
  %v5118 = vsel %vm5056, %v5023, 0.0
  %v5119 = vadd.f32 %v5117, %v5118
  %v5120 = vsel %vm5056, %v5024, 0.0
  %v5121 = vadd.f32 %v5119, %v5120
  %v5122 = vsel %vm5056, %v5025, 0.0
  %v5123 = vadd.f32 %v5121, %v5122
  %v5124 = vsel %vm5056, %v5026, 0.0
  %v5125 = vadd.f32 %v5123, %v5124
  %v5126 = vsel %vm5056, %v5027, 0.0
  %v5127 = vadd.f32 %v5125, %v5126
  %v5128 = vsel %vm5056, %v5028, 0.0
  %v5129 = vadd.f32 %v5127, %v5128
  %v5130 = vsel %vm5056, %v5029, 0.0
  %v5131 = vadd.f32 %v5129, %v5130
  %v5132 = vsel %vm5056, %v5030, 0.0
  %v5133 = vadd.f32 %v5131, %v5132
  %v5134 = vsel %vm5056, %v5031, 0.0
  %v5135 = vadd.f32 %v5133, %v5134
  %v5136 = vsel %vm5056, %v5032, 0.0
  %v5137 = vadd.f32 %v5135, %v5136
  %v5138 = vsel %vm5056, %v5033, 0.0
  %v5139 = vadd.f32 %v5137, %v5138
  %v5140 = vsel %vm5056, %v5034, 0.0
  %v5141 = vadd.f32 %v5139, %v5140
  %v5142 = vsel %vm5056, %v5035, 0.0
  %v5143 = vadd.f32 %v5141, %v5142
  %v5144 = vsel %vm5056, %v5036, 0.0
  %v5145 = vadd.f32 %v5143, %v5144
  %v5146 = vsel %vm5056, %v5037, 0.0
  %v5147 = vadd.f32 %v5145, %v5146
  %v5148 = vsel %vm5056, %v5038, 0.0
  %v5149 = vadd.f32 %v5147, %v5148
  %v5150 = vsel %vm5056, %v5039, 0.0
  %v5151 = vadd.f32 %v5149, %v5150
  %v5152 = vsel %vm5056, %v5040, 0.0
  %v5153 = vadd.f32 %v5151, %v5152
  %v5154 = vsel %vm5056, %v5041, 0.0
  %v5155 = vadd.f32 %v5153, %v5154
  %v5156 = vsel %vm5056, %v5042, 0.0
  %v5157 = vadd.f32 %v5155, %v5156
  %v5158 = vsel %vm5056, %v5043, 0.0
  %v5159 = vadd.f32 %v5157, %v5158
  %v5160 = vsel %vm5056, %v5044, 0.0
  %v5161 = vadd.f32 %v5159, %v5160
  %v5162 = vsel %vm5056, %v5045, 0.0
  %v5163 = vadd.f32 %v5161, %v5162
  %v5164 = vsel %vm5056, %v5046, 0.0
  %v5165 = vadd.f32 %v5163, %v5164
  %v5166 = vsel %vm5056, %v5047, 0.0
  %v5167 = vadd.f32 %v5165, %v5166
  %v5168 = vsel %vm5056, %v5048, 0.0
  %v5169 = vadd.f32 %v5167, %v5168
  %v5170 = vsel %vm5056, %v5049, 0.0
  %v5171 = vadd.f32 %v5169, %v5170
  %v5172 = vsel %vm5056, %v5050, 0.0
  %v5173 = vadd.f32 %v5171, %v5172
  %v5174 = vsel %vm5056, %v5051, 0.0
  %v5175 = vadd.f32 %v5173, %v5174
  %v5176 = vsel %vm5056, %v5052, 0.0
  %v5177 = vadd.f32 %v5175, %v5176
  %v5178 = vsel %vm5056, %v5053, 0.0
  %v5179 = vadd.f32 %v5177, %v5178
  %v5180 = vsel %vm5056, %v5054, 0.0
  %v5181 = vadd.f32 %v5179, %v5180
  %v5182 = vsel %vm5056, %v5055, 0.0
  %v5183 = vadd.f32 %v5181, %v5182
  %v5184 = vrot.slane %v5183, 4
  %v5185 = vadd.f32 %v5183, %v5184
  %v5186 = vrot.slane %v5185, 2
  %v5187 = vadd.f32 %v5185, %v5186
  %v5188 = vrot.slane %v5187, 1
  %v5189 = vadd.f32 %v5187, %v5188
  %v5190 = vmul.f32 %v5189, 0.001953125
  %v5191 = vsub.f32 %v4992, %v5190
  %v5192 = vsub.f32 %v4993, %v5190
  %v5193 = vsub.f32 %v4994, %v5190
  %v5194 = vsub.f32 %v4995, %v5190
  %v5195 = vsub.f32 %v4996, %v5190
  %v5196 = vsub.f32 %v4997, %v5190
  %v5197 = vsub.f32 %v4998, %v5190
  %v5198 = vsub.f32 %v4999, %v5190
  %v5199 = vsub.f32 %v5000, %v5190
  %v5200 = vsub.f32 %v5001, %v5190
  %v5201 = vsub.f32 %v5002, %v5190
  %v5202 = vsub.f32 %v5003, %v5190
  %v5203 = vsub.f32 %v5004, %v5190
  %v5204 = vsub.f32 %v5005, %v5190
  %v5205 = vsub.f32 %v5006, %v5190
  %v5206 = vsub.f32 %v5007, %v5190
  %v5207 = vsub.f32 %v5008, %v5190
  %v5208 = vsub.f32 %v5009, %v5190
  %v5209 = vsub.f32 %v5010, %v5190
  %v5210 = vsub.f32 %v5011, %v5190
  %v5211 = vsub.f32 %v5012, %v5190
  %v5212 = vsub.f32 %v5013, %v5190
  %v5213 = vsub.f32 %v5014, %v5190
  %v5214 = vsub.f32 %v5015, %v5190
  %v5215 = vsub.f32 %v5016, %v5190
  %v5216 = vsub.f32 %v5017, %v5190
  %v5217 = vsub.f32 %v5018, %v5190
  %v5218 = vsub.f32 %v5019, %v5190
  %v5219 = vsub.f32 %v5020, %v5190
  %v5220 = vsub.f32 %v5021, %v5190
  %v5221 = vsub.f32 %v5022, %v5190
  %v5222 = vsub.f32 %v5023, %v5190
  %v5223 = vsub.f32 %v5024, %v5190
  %v5224 = vsub.f32 %v5025, %v5190
  %v5225 = vsub.f32 %v5026, %v5190
  %v5226 = vsub.f32 %v5027, %v5190
  %v5227 = vsub.f32 %v5028, %v5190
  %v5228 = vsub.f32 %v5029, %v5190
  %v5229 = vsub.f32 %v5030, %v5190
  %v5230 = vsub.f32 %v5031, %v5190
  %v5231 = vsub.f32 %v5032, %v5190
  %v5232 = vsub.f32 %v5033, %v5190
  %v5233 = vsub.f32 %v5034, %v5190
  %v5234 = vsub.f32 %v5035, %v5190
  %v5235 = vsub.f32 %v5036, %v5190
  %v5236 = vsub.f32 %v5037, %v5190
  %v5237 = vsub.f32 %v5038, %v5190
  %v5238 = vsub.f32 %v5039, %v5190
  %v5239 = vsub.f32 %v5040, %v5190
  %v5240 = vsub.f32 %v5041, %v5190
  %v5241 = vsub.f32 %v5042, %v5190
  %v5242 = vsub.f32 %v5043, %v5190
  %v5243 = vsub.f32 %v5044, %v5190
  %v5244 = vsub.f32 %v5045, %v5190
  %v5245 = vsub.f32 %v5046, %v5190
  %v5246 = vsub.f32 %v5047, %v5190
  %v5247 = vsub.f32 %v5048, %v5190
  %v5248 = vsub.f32 %v5049, %v5190
  %v5249 = vsub.f32 %v5050, %v5190
  %v5250 = vsub.f32 %v5051, %v5190
  %v5251 = vsub.f32 %v5052, %v5190
  %v5252 = vsub.f32 %v5053, %v5190
  %v5253 = vsub.f32 %v5054, %v5190
  %v5254 = vsub.f32 %v5055, %v5190
  %v5255 = vmul.f32 %v5191, %v5191
  %v5256 = vmul.f32 %v5192, %v5192
  %v5257 = vmul.f32 %v5193, %v5193
  %v5258 = vmul.f32 %v5194, %v5194
  %v5259 = vmul.f32 %v5195, %v5195
  %v5260 = vmul.f32 %v5196, %v5196
  %v5261 = vmul.f32 %v5197, %v5197
  %v5262 = vmul.f32 %v5198, %v5198
  %v5263 = vmul.f32 %v5199, %v5199
  %v5264 = vmul.f32 %v5200, %v5200
  %v5265 = vmul.f32 %v5201, %v5201
  %v5266 = vmul.f32 %v5202, %v5202
  %v5267 = vmul.f32 %v5203, %v5203
  %v5268 = vmul.f32 %v5204, %v5204
  %v5269 = vmul.f32 %v5205, %v5205
  %v5270 = vmul.f32 %v5206, %v5206
  %v5271 = vmul.f32 %v5207, %v5207
  %v5272 = vmul.f32 %v5208, %v5208
  %v5273 = vmul.f32 %v5209, %v5209
  %v5274 = vmul.f32 %v5210, %v5210
  %v5275 = vmul.f32 %v5211, %v5211
  %v5276 = vmul.f32 %v5212, %v5212
  %v5277 = vmul.f32 %v5213, %v5213
  %v5278 = vmul.f32 %v5214, %v5214
  %v5279 = vmul.f32 %v5215, %v5215
  %v5280 = vmul.f32 %v5216, %v5216
  %v5281 = vmul.f32 %v5217, %v5217
  %v5282 = vmul.f32 %v5218, %v5218
  %v5283 = vmul.f32 %v5219, %v5219
  %v5284 = vmul.f32 %v5220, %v5220
  %v5285 = vmul.f32 %v5221, %v5221
  %v5286 = vmul.f32 %v5222, %v5222
  %v5287 = vmul.f32 %v5223, %v5223
  %v5288 = vmul.f32 %v5224, %v5224
  %v5289 = vmul.f32 %v5225, %v5225
  %v5290 = vmul.f32 %v5226, %v5226
  %v5291 = vmul.f32 %v5227, %v5227
  %v5292 = vmul.f32 %v5228, %v5228
  %v5293 = vmul.f32 %v5229, %v5229
  %v5294 = vmul.f32 %v5230, %v5230
  %v5295 = vmul.f32 %v5231, %v5231
  %v5296 = vmul.f32 %v5232, %v5232
  %v5297 = vmul.f32 %v5233, %v5233
  %v5298 = vmul.f32 %v5234, %v5234
  %v5299 = vmul.f32 %v5235, %v5235
  %v5300 = vmul.f32 %v5236, %v5236
  %v5301 = vmul.f32 %v5237, %v5237
  %v5302 = vmul.f32 %v5238, %v5238
  %v5303 = vmul.f32 %v5239, %v5239
  %v5304 = vmul.f32 %v5240, %v5240
  %v5305 = vmul.f32 %v5241, %v5241
  %v5306 = vmul.f32 %v5242, %v5242
  %v5307 = vmul.f32 %v5243, %v5243
  %v5308 = vmul.f32 %v5244, %v5244
  %v5309 = vmul.f32 %v5245, %v5245
  %v5310 = vmul.f32 %v5246, %v5246
  %v5311 = vmul.f32 %v5247, %v5247
  %v5312 = vmul.f32 %v5248, %v5248
  %v5313 = vmul.f32 %v5249, %v5249
  %v5314 = vmul.f32 %v5250, %v5250
  %v5315 = vmul.f32 %v5251, %v5251
  %v5316 = vmul.f32 %v5252, %v5252
  %v5317 = vmul.f32 %v5253, %v5253
  %v5318 = vmul.f32 %v5254, %v5254
  %v5319 = vsel %vm5056, %v5255, 0.0
  %v5320 = vsel %vm5056, %v5256, 0.0
  %v5321 = vadd.f32 %v5319, %v5320
  %v5322 = vsel %vm5056, %v5257, 0.0
  %v5323 = vadd.f32 %v5321, %v5322
  %v5324 = vsel %vm5056, %v5258, 0.0
  %v5325 = vadd.f32 %v5323, %v5324
  %v5326 = vsel %vm5056, %v5259, 0.0
  %v5327 = vadd.f32 %v5325, %v5326
  %v5328 = vsel %vm5056, %v5260, 0.0
  %v5329 = vadd.f32 %v5327, %v5328
  %v5330 = vsel %vm5056, %v5261, 0.0
  %v5331 = vadd.f32 %v5329, %v5330
  %v5332 = vsel %vm5056, %v5262, 0.0
  %v5333 = vadd.f32 %v5331, %v5332
  %v5334 = vsel %vm5056, %v5263, 0.0
  %v5335 = vadd.f32 %v5333, %v5334
  %v5336 = vsel %vm5056, %v5264, 0.0
  %v5337 = vadd.f32 %v5335, %v5336
  %v5338 = vsel %vm5056, %v5265, 0.0
  %v5339 = vadd.f32 %v5337, %v5338
  %v5340 = vsel %vm5056, %v5266, 0.0
  %v5341 = vadd.f32 %v5339, %v5340
  %v5342 = vsel %vm5056, %v5267, 0.0
  %v5343 = vadd.f32 %v5341, %v5342
  %v5344 = vsel %vm5056, %v5268, 0.0
  %v5345 = vadd.f32 %v5343, %v5344
  %v5346 = vsel %vm5056, %v5269, 0.0
  %v5347 = vadd.f32 %v5345, %v5346
  %v5348 = vsel %vm5056, %v5270, 0.0
  %v5349 = vadd.f32 %v5347, %v5348
  %v5350 = vsel %vm5056, %v5271, 0.0
  %v5351 = vadd.f32 %v5349, %v5350
  %v5352 = vsel %vm5056, %v5272, 0.0
  %v5353 = vadd.f32 %v5351, %v5352
  %v5354 = vsel %vm5056, %v5273, 0.0
  %v5355 = vadd.f32 %v5353, %v5354
  %v5356 = vsel %vm5056, %v5274, 0.0
  %v5357 = vadd.f32 %v5355, %v5356
  %v5358 = vsel %vm5056, %v5275, 0.0
  %v5359 = vadd.f32 %v5357, %v5358
  %v5360 = vsel %vm5056, %v5276, 0.0
  %v5361 = vadd.f32 %v5359, %v5360
  %v5362 = vsel %vm5056, %v5277, 0.0
  %v5363 = vadd.f32 %v5361, %v5362
  %v5364 = vsel %vm5056, %v5278, 0.0
  %v5365 = vadd.f32 %v5363, %v5364
  %v5366 = vsel %vm5056, %v5279, 0.0
  %v5367 = vadd.f32 %v5365, %v5366
  %v5368 = vsel %vm5056, %v5280, 0.0
  %v5369 = vadd.f32 %v5367, %v5368
  %v5370 = vsel %vm5056, %v5281, 0.0
  %v5371 = vadd.f32 %v5369, %v5370
  %v5372 = vsel %vm5056, %v5282, 0.0
  %v5373 = vadd.f32 %v5371, %v5372
  %v5374 = vsel %vm5056, %v5283, 0.0
  %v5375 = vadd.f32 %v5373, %v5374
  %v5376 = vsel %vm5056, %v5284, 0.0
  %v5377 = vadd.f32 %v5375, %v5376
  %v5378 = vsel %vm5056, %v5285, 0.0
  %v5379 = vadd.f32 %v5377, %v5378
  %v5380 = vsel %vm5056, %v5286, 0.0
  %v5381 = vadd.f32 %v5379, %v5380
  %v5382 = vsel %vm5056, %v5287, 0.0
  %v5383 = vadd.f32 %v5381, %v5382
  %v5384 = vsel %vm5056, %v5288, 0.0
  %v5385 = vadd.f32 %v5383, %v5384
  %v5386 = vsel %vm5056, %v5289, 0.0
  %v5387 = vadd.f32 %v5385, %v5386
  %v5388 = vsel %vm5056, %v5290, 0.0
  %v5389 = vadd.f32 %v5387, %v5388
  %v5390 = vsel %vm5056, %v5291, 0.0
  %v5391 = vadd.f32 %v5389, %v5390
  %v5392 = vsel %vm5056, %v5292, 0.0
  %v5393 = vadd.f32 %v5391, %v5392
  %v5394 = vsel %vm5056, %v5293, 0.0
  %v5395 = vadd.f32 %v5393, %v5394
  %v5396 = vsel %vm5056, %v5294, 0.0
  %v5397 = vadd.f32 %v5395, %v5396
  %v5398 = vsel %vm5056, %v5295, 0.0
  %v5399 = vadd.f32 %v5397, %v5398
  %v5400 = vsel %vm5056, %v5296, 0.0
  %v5401 = vadd.f32 %v5399, %v5400
  %v5402 = vsel %vm5056, %v5297, 0.0
  %v5403 = vadd.f32 %v5401, %v5402
  %v5404 = vsel %vm5056, %v5298, 0.0
  %v5405 = vadd.f32 %v5403, %v5404
  %v5406 = vsel %vm5056, %v5299, 0.0
  %v5407 = vadd.f32 %v5405, %v5406
  %v5408 = vsel %vm5056, %v5300, 0.0
  %v5409 = vadd.f32 %v5407, %v5408
  %v5410 = vsel %vm5056, %v5301, 0.0
  %v5411 = vadd.f32 %v5409, %v5410
  %v5412 = vsel %vm5056, %v5302, 0.0
  %v5413 = vadd.f32 %v5411, %v5412
  %v5414 = vsel %vm5056, %v5303, 0.0
  %v5415 = vadd.f32 %v5413, %v5414
  %v5416 = vsel %vm5056, %v5304, 0.0
  %v5417 = vadd.f32 %v5415, %v5416
  %v5418 = vsel %vm5056, %v5305, 0.0
  %v5419 = vadd.f32 %v5417, %v5418
  %v5420 = vsel %vm5056, %v5306, 0.0
  %v5421 = vadd.f32 %v5419, %v5420
  %v5422 = vsel %vm5056, %v5307, 0.0
  %v5423 = vadd.f32 %v5421, %v5422
  %v5424 = vsel %vm5056, %v5308, 0.0
  %v5425 = vadd.f32 %v5423, %v5424
  %v5426 = vsel %vm5056, %v5309, 0.0
  %v5427 = vadd.f32 %v5425, %v5426
  %v5428 = vsel %vm5056, %v5310, 0.0
  %v5429 = vadd.f32 %v5427, %v5428
  %v5430 = vsel %vm5056, %v5311, 0.0
  %v5431 = vadd.f32 %v5429, %v5430
  %v5432 = vsel %vm5056, %v5312, 0.0
  %v5433 = vadd.f32 %v5431, %v5432
  %v5434 = vsel %vm5056, %v5313, 0.0
  %v5435 = vadd.f32 %v5433, %v5434
  %v5436 = vsel %vm5056, %v5314, 0.0
  %v5437 = vadd.f32 %v5435, %v5436
  %v5438 = vsel %vm5056, %v5315, 0.0
  %v5439 = vadd.f32 %v5437, %v5438
  %v5440 = vsel %vm5056, %v5316, 0.0
  %v5441 = vadd.f32 %v5439, %v5440
  %v5442 = vsel %vm5056, %v5317, 0.0
  %v5443 = vadd.f32 %v5441, %v5442
  %v5444 = vsel %vm5056, %v5318, 0.0
  %v5445 = vadd.f32 %v5443, %v5444
  %v5446 = vrot.slane %v5445, 4
  %v5447 = vadd.f32 %v5445, %v5446
  %v5448 = vrot.slane %v5447, 2
  %v5449 = vadd.f32 %v5447, %v5448
  %v5450 = vrot.slane %v5449, 1
  %v5451 = vadd.f32 %v5449, %v5450
  %v5452 = vmul.f32 %v5451, 0.001953125
  %v5453 = vadd.f32 %v5452, 1e-05
  %v5454 = vrsqrt.pop %v5453
  %v5455 = vmul.f32 %v21, %v5454
  %v5456 = vmul.f32 %v5190, %v5455
  %v5457 = vsub.f32 %v22, %v5456
  %v5458 = vlaneseq
  %v5459 = vshrl.u32 %v5458, 7
  %v5460 = vsub.s32 0, %v5459
  %v5461 = vrot.slane %v5455, %v5460
  %v5462 = vmul.f32 %v4992, %v5461
  %v5463 = vmul.f32 %v4993, %v5461
  %v5464 = vmul.f32 %v4994, %v5461
  %v5465 = vmul.f32 %v4995, %v5461
  %v5466 = vmul.f32 %v4996, %v5461
  %v5467 = vmul.f32 %v4997, %v5461
  %v5468 = vmul.f32 %v4998, %v5461
  %v5469 = vmul.f32 %v4999, %v5461
  %v5470 = vmul.f32 %v5000, %v5461
  %v5471 = vmul.f32 %v5001, %v5461
  %v5472 = vmul.f32 %v5002, %v5461
  %v5473 = vmul.f32 %v5003, %v5461
  %v5474 = vmul.f32 %v5004, %v5461
  %v5475 = vmul.f32 %v5005, %v5461
  %v5476 = vmul.f32 %v5006, %v5461
  %v5477 = vmul.f32 %v5007, %v5461
  %v5478 = vmul.f32 %v5008, %v5461
  %v5479 = vmul.f32 %v5009, %v5461
  %v5480 = vmul.f32 %v5010, %v5461
  %v5481 = vmul.f32 %v5011, %v5461
  %v5482 = vmul.f32 %v5012, %v5461
  %v5483 = vmul.f32 %v5013, %v5461
  %v5484 = vmul.f32 %v5014, %v5461
  %v5485 = vmul.f32 %v5015, %v5461
  %v5486 = vmul.f32 %v5016, %v5461
  %v5487 = vmul.f32 %v5017, %v5461
  %v5488 = vmul.f32 %v5018, %v5461
  %v5489 = vmul.f32 %v5019, %v5461
  %v5490 = vmul.f32 %v5020, %v5461
  %v5491 = vmul.f32 %v5021, %v5461
  %v5492 = vmul.f32 %v5022, %v5461
  %v5493 = vmul.f32 %v5023, %v5461
  %v5494 = vmul.f32 %v5024, %v5461
  %v5495 = vmul.f32 %v5025, %v5461
  %v5496 = vmul.f32 %v5026, %v5461
  %v5497 = vmul.f32 %v5027, %v5461
  %v5498 = vmul.f32 %v5028, %v5461
  %v5499 = vmul.f32 %v5029, %v5461
  %v5500 = vmul.f32 %v5030, %v5461
  %v5501 = vmul.f32 %v5031, %v5461
  %v5502 = vmul.f32 %v5032, %v5461
  %v5503 = vmul.f32 %v5033, %v5461
  %v5504 = vmul.f32 %v5034, %v5461
  %v5505 = vmul.f32 %v5035, %v5461
  %v5506 = vmul.f32 %v5036, %v5461
  %v5507 = vmul.f32 %v5037, %v5461
  %v5508 = vmul.f32 %v5038, %v5461
  %v5509 = vmul.f32 %v5039, %v5461
  %v5510 = vmul.f32 %v5040, %v5461
  %v5511 = vmul.f32 %v5041, %v5461
  %v5512 = vmul.f32 %v5042, %v5461
  %v5513 = vmul.f32 %v5043, %v5461
  %v5514 = vmul.f32 %v5044, %v5461
  %v5515 = vmul.f32 %v5045, %v5461
  %v5516 = vmul.f32 %v5046, %v5461
  %v5517 = vmul.f32 %v5047, %v5461
  %v5518 = vmul.f32 %v5048, %v5461
  %v5519 = vmul.f32 %v5049, %v5461
  %v5520 = vmul.f32 %v5050, %v5461
  %v5521 = vmul.f32 %v5051, %v5461
  %v5522 = vmul.f32 %v5052, %v5461
  %v5523 = vmul.f32 %v5053, %v5461
  %v5524 = vmul.f32 %v5054, %v5461
  %v5525 = vmul.f32 %v5055, %v5461
  %v5526 = vlaneseq
  %v5527 = vshrl.u32 %v5526, 7
  %v5528 = vsub.s32 0, %v5527
  %v5529 = vrot.slane %v5457, %v5528
  %v5530 = vadd.f32 %v5462, %v5529
  %v5531 = vadd.f32 %v5463, %v5529
  %v5532 = vadd.f32 %v5464, %v5529
  %v5533 = vadd.f32 %v5465, %v5529
  %v5534 = vadd.f32 %v5466, %v5529
  %v5535 = vadd.f32 %v5467, %v5529
  %v5536 = vadd.f32 %v5468, %v5529
  %v5537 = vadd.f32 %v5469, %v5529
  %v5538 = vadd.f32 %v5470, %v5529
  %v5539 = vadd.f32 %v5471, %v5529
  %v5540 = vadd.f32 %v5472, %v5529
  %v5541 = vadd.f32 %v5473, %v5529
  %v5542 = vadd.f32 %v5474, %v5529
  %v5543 = vadd.f32 %v5475, %v5529
  %v5544 = vadd.f32 %v5476, %v5529
  %v5545 = vadd.f32 %v5477, %v5529
  %v5546 = vadd.f32 %v5478, %v5529
  %v5547 = vadd.f32 %v5479, %v5529
  %v5548 = vadd.f32 %v5480, %v5529
  %v5549 = vadd.f32 %v5481, %v5529
  %v5550 = vadd.f32 %v5482, %v5529
  %v5551 = vadd.f32 %v5483, %v5529
  %v5552 = vadd.f32 %v5484, %v5529
  %v5553 = vadd.f32 %v5485, %v5529
  %v5554 = vadd.f32 %v5486, %v5529
  %v5555 = vadd.f32 %v5487, %v5529
  %v5556 = vadd.f32 %v5488, %v5529
  %v5557 = vadd.f32 %v5489, %v5529
  %v5558 = vadd.f32 %v5490, %v5529
  %v5559 = vadd.f32 %v5491, %v5529
  %v5560 = vadd.f32 %v5492, %v5529
  %v5561 = vadd.f32 %v5493, %v5529
  %v5562 = vadd.f32 %v5494, %v5529
  %v5563 = vadd.f32 %v5495, %v5529
  %v5564 = vadd.f32 %v5496, %v5529
  %v5565 = vadd.f32 %v5497, %v5529
  %v5566 = vadd.f32 %v5498, %v5529
  %v5567 = vadd.f32 %v5499, %v5529
  %v5568 = vadd.f32 %v5500, %v5529
  %v5569 = vadd.f32 %v5501, %v5529
  %v5570 = vadd.f32 %v5502, %v5529
  %v5571 = vadd.f32 %v5503, %v5529
  %v5572 = vadd.f32 %v5504, %v5529
  %v5573 = vadd.f32 %v5505, %v5529
  %v5574 = vadd.f32 %v5506, %v5529
  %v5575 = vadd.f32 %v5507, %v5529
  %v5576 = vadd.f32 %v5508, %v5529
  %v5577 = vadd.f32 %v5509, %v5529
  %v5578 = vadd.f32 %v5510, %v5529
  %v5579 = vadd.f32 %v5511, %v5529
  %v5580 = vadd.f32 %v5512, %v5529
  %v5581 = vadd.f32 %v5513, %v5529
  %v5582 = vadd.f32 %v5514, %v5529
  %v5583 = vadd.f32 %v5515, %v5529
  %v5584 = vadd.f32 %v5516, %v5529
  %v5585 = vadd.f32 %v5517, %v5529
  %v5586 = vadd.f32 %v5518, %v5529
  %v5587 = vadd.f32 %v5519, %v5529
  %v5588 = vadd.f32 %v5520, %v5529
  %v5589 = vadd.f32 %v5521, %v5529
  %v5590 = vadd.f32 %v5522, %v5529
  %v5591 = vadd.f32 %v5523, %v5529
  %v5592 = vadd.f32 %v5524, %v5529
  %v5593 = vadd.f32 %v5525, %v5529
  %v5594 = vmax.f32 %v5530, 0.0
  %v5595 = vmax.f32 %v5531, 0.0
  %v5596 = vmax.f32 %v5532, 0.0
  %v5597 = vmax.f32 %v5533, 0.0
  %v5598 = vmax.f32 %v5534, 0.0
  %v5599 = vmax.f32 %v5535, 0.0
  %v5600 = vmax.f32 %v5536, 0.0
  %v5601 = vmax.f32 %v5537, 0.0
  %v5602 = vmax.f32 %v5538, 0.0
  %v5603 = vmax.f32 %v5539, 0.0
  %v5604 = vmax.f32 %v5540, 0.0
  %v5605 = vmax.f32 %v5541, 0.0
  %v5606 = vmax.f32 %v5542, 0.0
  %v5607 = vmax.f32 %v5543, 0.0
  %v5608 = vmax.f32 %v5544, 0.0
  %v5609 = vmax.f32 %v5545, 0.0
  %v5610 = vmax.f32 %v5546, 0.0
  %v5611 = vmax.f32 %v5547, 0.0
  %v5612 = vmax.f32 %v5548, 0.0
  %v5613 = vmax.f32 %v5549, 0.0
  %v5614 = vmax.f32 %v5550, 0.0
  %v5615 = vmax.f32 %v5551, 0.0
  %v5616 = vmax.f32 %v5552, 0.0
  %v5617 = vmax.f32 %v5553, 0.0
  %v5618 = vmax.f32 %v5554, 0.0
  %v5619 = vmax.f32 %v5555, 0.0
  %v5620 = vmax.f32 %v5556, 0.0
  %v5621 = vmax.f32 %v5557, 0.0
  %v5622 = vmax.f32 %v5558, 0.0
  %v5623 = vmax.f32 %v5559, 0.0
  %v5624 = vmax.f32 %v5560, 0.0
  %v5625 = vmax.f32 %v5561, 0.0
  %v5626 = vmax.f32 %v5562, 0.0
  %v5627 = vmax.f32 %v5563, 0.0
  %v5628 = vmax.f32 %v5564, 0.0
  %v5629 = vmax.f32 %v5565, 0.0
  %v5630 = vmax.f32 %v5566, 0.0
  %v5631 = vmax.f32 %v5567, 0.0
  %v5632 = vmax.f32 %v5568, 0.0
  %v5633 = vmax.f32 %v5569, 0.0
  %v5634 = vmax.f32 %v5570, 0.0
  %v5635 = vmax.f32 %v5571, 0.0
  %v5636 = vmax.f32 %v5572, 0.0
  %v5637 = vmax.f32 %v5573, 0.0
  %v5638 = vmax.f32 %v5574, 0.0
  %v5639 = vmax.f32 %v5575, 0.0
  %v5640 = vmax.f32 %v5576, 0.0
  %v5641 = vmax.f32 %v5577, 0.0
  %v5642 = vmax.f32 %v5578, 0.0
  %v5643 = vmax.f32 %v5579, 0.0
  %v5644 = vmax.f32 %v5580, 0.0
  %v5645 = vmax.f32 %v5581, 0.0
  %v5646 = vmax.f32 %v5582, 0.0
  %v5647 = vmax.f32 %v5583, 0.0
  %v5648 = vmax.f32 %v5584, 0.0
  %v5649 = vmax.f32 %v5585, 0.0
  %v5650 = vmax.f32 %v5586, 0.0
  %v5651 = vmax.f32 %v5587, 0.0
  %v5652 = vmax.f32 %v5588, 0.0
  %v5653 = vmax.f32 %v5589, 0.0
  %v5654 = vmax.f32 %v5590, 0.0
  %v5655 = vmax.f32 %v5591, 0.0
  %v5656 = vmax.f32 %v5592, 0.0
  %v5657 = vmax.f32 %v5593, 0.0
  %5658 = vst.msk [vmem:[#allocation3] sm:$0xff] %vm5056, 0.0
  %5659 = vst.msk [vmem:[#allocation3 + $0x8] sm:$0xff] %vm5056, 0.0
  %vm5660 = vcmask 58368
  %5661 = vst.msk [vmem:[#allocation3 + $0x10] sm:$0x3] %vm5660, 0.0
  %5662 = vst.msk [vmem:[#allocation3 + $0x1b0] sm:$0xff] %vm5056, 0.0
  %5663 = vst.msk [vmem:[#allocation3 + $0x1b8] sm:$0xff] %vm5056, 0.0
  %5664 = vst.msk [vmem:[#allocation3 + $0x1c0] sm:$0x3] %vm5660, 0.0
  %s5665 = scalar_lea.vmem [#allocation3], 408
  %5666 = vst.msk [vmem:[%s5665] sm:$0xff] %vm5056, 0.0
  %5667 = vst.msk [vmem:[%s5665 + $0x8] sm:$0xff] %vm5056, 0.0
  %5668 = vst.msk [vmem:[%s5665 + $0x10] sm:$0x3] %vm5660, 0.0
  %5669 = vst.msk [vmem:[%s5665 + $0x1b0] sm:$0xff] %vm5056, 0.0
  %5670 = vst.msk [vmem:[%s5665 + $0x1b8] sm:$0xff] %vm5056, 0.0
  %5671 = vst.msk [vmem:[%s5665 + $0x1c0] sm:$0x3] %vm5660, 0.0
  %s5672 = scalar_lea.vmem [#allocation3], 24
  %vm5673 = vcmask 57344
  %5674 = vst.msk [vmem:[%s5672] sm:$0x1] %vm5673, 0.0
  %5675 = vst.msk [vmem:[%s5672 + $0x18] sm:$0x1] %vm5673, 0.0
  %5676 = vst.msk [vmem:[%s5672 + $0x30] sm:$0x1] %vm5673, 0.0
  %5677 = vst.msk [vmem:[%s5672 + $0x48] sm:$0x1] %vm5673, 0.0
  %5678 = vst.msk [vmem:[%s5672 + $0x60] sm:$0x1] %vm5673, 0.0
  %5679 = vst.msk [vmem:[%s5672 + $0x78] sm:$0x1] %vm5673, 0.0
  %5680 = vst.msk [vmem:[%s5672 + $0x90] sm:$0x1] %vm5673, 0.0
  %5681 = vst.msk [vmem:[%s5672 + $0xa8] sm:$0x1] %vm5673, 0.0
  %5682 = vst.msk [vmem:[%s5672 + $0xc0] sm:$0x1] %vm5673, 0.0
  %5683 = vst.msk [vmem:[%s5672 + $0xd8] sm:$0x1] %vm5673, 0.0
  %5684 = vst.msk [vmem:[%s5672 + $0xf0] sm:$0x1] %vm5673, 0.0
  %5685 = vst.msk [vmem:[%s5672 + $0x108] sm:$0x1] %vm5673, 0.0
  %5686 = vst.msk [vmem:[%s5672 + $0x120] sm:$0x1] %vm5673, 0.0
  %5687 = vst.msk [vmem:[%s5672 + $0x138] sm:$0x1] %vm5673, 0.0
  %5688 = vst.msk [vmem:[%s5672 + $0x150] sm:$0x1] %vm5673, 0.0
  %5689 = vst.msk [vmem:[%s5672 + $0x168] sm:$0x1] %vm5673, 0.0
  %5690 = vst.msk [vmem:[%s5672 + $0x1b0] sm:$0x1] %vm5673, 0.0
  %5691 = vst.msk [vmem:[%s5672 + $0x1c8] sm:$0x1] %vm5673, 0.0
  %5692 = vst.msk [vmem:[%s5672 + $0x1e0] sm:$0x1] %vm5673, 0.0
  %5693 = vst.msk [vmem:[%s5672 + $0x1f8] sm:$0x1] %vm5673, 0.0
  %5694 = vst.msk [vmem:[%s5672 + $0x210] sm:$0x1] %vm5673, 0.0
  %5695 = vst.msk [vmem:[%s5672 + $0x228] sm:$0x1] %vm5673, 0.0
  %5696 = vst.msk [vmem:[%s5672 + $0x240] sm:$0x1] %vm5673, 0.0
  %5697 = vst.msk [vmem:[%s5672 + $0x258] sm:$0x1] %vm5673, 0.0
  %5698 = vst.msk [vmem:[%s5672 + $0x270] sm:$0x1] %vm5673, 0.0
  %5699 = vst.msk [vmem:[%s5672 + $0x288] sm:$0x1] %vm5673, 0.0
  %5700 = vst.msk [vmem:[%s5672 + $0x2a0] sm:$0x1] %vm5673, 0.0
  %5701 = vst.msk [vmem:[%s5672 + $0x2b8] sm:$0x1] %vm5673, 0.0
  %5702 = vst.msk [vmem:[%s5672 + $0x2d0] sm:$0x1] %vm5673, 0.0
  %5703 = vst.msk [vmem:[%s5672 + $0x2e8] sm:$0x1] %vm5673, 0.0
  %5704 = vst.msk [vmem:[%s5672 + $0x300] sm:$0x1] %vm5673, 0.0
  %5705 = vst.msk [vmem:[%s5672 + $0x318] sm:$0x1] %vm5673, 0.0
  %5706 = vst.msk [vmem:[%s5672 + $0x11] sm:$0x1] %vm5673, 0.0
  %5707 = vst.msk [vmem:[%s5672 + $0x29] sm:$0x1] %vm5673, 0.0
  %5708 = vst.msk [vmem:[%s5672 + $0x41] sm:$0x1] %vm5673, 0.0
  %5709 = vst.msk [vmem:[%s5672 + $0x59] sm:$0x1] %vm5673, 0.0
  %5710 = vst.msk [vmem:[%s5672 + $0x71] sm:$0x1] %vm5673, 0.0
  %5711 = vst.msk [vmem:[%s5672 + $0x89] sm:$0x1] %vm5673, 0.0
  %5712 = vst.msk [vmem:[%s5672 + $0xa1] sm:$0x1] %vm5673, 0.0
  %5713 = vst.msk [vmem:[%s5672 + $0xb9] sm:$0x1] %vm5673, 0.0
  %5714 = vst.msk [vmem:[%s5672 + $0xd1] sm:$0x1] %vm5673, 0.0
  %5715 = vst.msk [vmem:[%s5672 + $0xe9] sm:$0x1] %vm5673, 0.0
  %5716 = vst.msk [vmem:[%s5672 + $0x101] sm:$0x1] %vm5673, 0.0
  %5717 = vst.msk [vmem:[%s5672 + $0x119] sm:$0x1] %vm5673, 0.0
  %5718 = vst.msk [vmem:[%s5672 + $0x131] sm:$0x1] %vm5673, 0.0
  %5719 = vst.msk [vmem:[%s5672 + $0x149] sm:$0x1] %vm5673, 0.0
  %5720 = vst.msk [vmem:[%s5672 + $0x161] sm:$0x1] %vm5673, 0.0
  %5721 = vst.msk [vmem:[%s5672 + $0x179] sm:$0x1] %vm5673, 0.0
  %5722 = vst.msk [vmem:[%s5672 + $0x1c1] sm:$0x1] %vm5673, 0.0
  %5723 = vst.msk [vmem:[%s5672 + $0x1d9] sm:$0x1] %vm5673, 0.0
  %5724 = vst.msk [vmem:[%s5672 + $0x1f1] sm:$0x1] %vm5673, 0.0
  %5725 = vst.msk [vmem:[%s5672 + $0x209] sm:$0x1] %vm5673, 0.0
  %5726 = vst.msk [vmem:[%s5672 + $0x221] sm:$0x1] %vm5673, 0.0
  %5727 = vst.msk [vmem:[%s5672 + $0x239] sm:$0x1] %vm5673, 0.0
  %5728 = vst.msk [vmem:[%s5672 + $0x251] sm:$0x1] %vm5673, 0.0
  %5729 = vst.msk [vmem:[%s5672 + $0x269] sm:$0x1] %vm5673, 0.0
  %5730 = vst.msk [vmem:[%s5672 + $0x281] sm:$0x1] %vm5673, 0.0
  %5731 = vst.msk [vmem:[%s5672 + $0x299] sm:$0x1] %vm5673, 0.0
  %5732 = vst.msk [vmem:[%s5672 + $0x2b1] sm:$0x1] %vm5673, 0.0
  %5733 = vst.msk [vmem:[%s5672 + $0x2c9] sm:$0x1] %vm5673, 0.0
  %5734 = vst.msk [vmem:[%s5672 + $0x2e1] sm:$0x1] %vm5673, 0.0
  %5735 = vst.msk [vmem:[%s5672 + $0x2f9] sm:$0x1] %vm5673, 0.0
  %5736 = vst.msk [vmem:[%s5672 + $0x311] sm:$0x1] %vm5673, 0.0
  %5737 = vst.msk [vmem:[%s5672 + $0x329] sm:$0x1] %vm5673, 0.0
  %5738 = vst.msk [vmem:[%s5672 + $0x1] sm:$0xff] %vm5056, %v5594
  %5739 = vst.msk [vmem:[%s5672 + $0x9] sm:$0xff] %vm5056, %v5595
  %5740 = vst.msk [vmem:[%s5672 + $0x19] sm:$0xff] %vm5056, %v5596
  %5741 = vst.msk [vmem:[%s5672 + $0x21] sm:$0xff] %vm5056, %v5597
  %5742 = vst.msk [vmem:[%s5672 + $0x31] sm:$0xff] %vm5056, %v5598
  %5743 = vst.msk [vmem:[%s5672 + $0x39] sm:$0xff] %vm5056, %v5599
  %5744 = vst.msk [vmem:[%s5672 + $0x49] sm:$0xff] %vm5056, %v5600
  %5745 = vst.msk [vmem:[%s5672 + $0x51] sm:$0xff] %vm5056, %v5601
  %5746 = vst.msk [vmem:[%s5672 + $0x61] sm:$0xff] %vm5056, %v5602
  %5747 = vst.msk [vmem:[%s5672 + $0x69] sm:$0xff] %vm5056, %v5603
  %5748 = vst.msk [vmem:[%s5672 + $0x79] sm:$0xff] %vm5056, %v5604
  %5749 = vst.msk [vmem:[%s5672 + $0x81] sm:$0xff] %vm5056, %v5605
  %5750 = vst.msk [vmem:[%s5672 + $0x91] sm:$0xff] %vm5056, %v5606
  %5751 = vst.msk [vmem:[%s5672 + $0x99] sm:$0xff] %vm5056, %v5607
  %5752 = vst.msk [vmem:[%s5672 + $0xa9] sm:$0xff] %vm5056, %v5608
  %5753 = vst.msk [vmem:[%s5672 + $0xb1] sm:$0xff] %vm5056, %v5609
  %5754 = vst.msk [vmem:[%s5672 + $0xc1] sm:$0xff] %vm5056, %v5610
  %5755 = vst.msk [vmem:[%s5672 + $0xc9] sm:$0xff] %vm5056, %v5611
  %5756 = vst.msk [vmem:[%s5672 + $0xd9] sm:$0xff] %vm5056, %v5612
  %5757 = vst.msk [vmem:[%s5672 + $0xe1] sm:$0xff] %vm5056, %v5613
  %5758 = vst.msk [vmem:[%s5672 + $0xf1] sm:$0xff] %vm5056, %v5614
  %5759 = vst.msk [vmem:[%s5672 + $0xf9] sm:$0xff] %vm5056, %v5615
  %5760 = vst.msk [vmem:[%s5672 + $0x109] sm:$0xff] %vm5056, %v5616
  %5761 = vst.msk [vmem:[%s5672 + $0x111] sm:$0xff] %vm5056, %v5617
  %5762 = vst.msk [vmem:[%s5672 + $0x121] sm:$0xff] %vm5056, %v5618
  %5763 = vst.msk [vmem:[%s5672 + $0x129] sm:$0xff] %vm5056, %v5619
  %5764 = vst.msk [vmem:[%s5672 + $0x139] sm:$0xff] %vm5056, %v5620
  %5765 = vst.msk [vmem:[%s5672 + $0x141] sm:$0xff] %vm5056, %v5621
  %5766 = vst.msk [vmem:[%s5672 + $0x151] sm:$0xff] %vm5056, %v5622
  %5767 = vst.msk [vmem:[%s5672 + $0x159] sm:$0xff] %vm5056, %v5623
  %5768 = vst.msk [vmem:[%s5672 + $0x169] sm:$0xff] %vm5056, %v5624
  %5769 = vst.msk [vmem:[%s5672 + $0x171] sm:$0xff] %vm5056, %v5625
  %5770 = vst.msk [vmem:[%s5672 + $0x1b1] sm:$0xff] %vm5056, %v5626
  %5771 = vst.msk [vmem:[%s5672 + $0x1b9] sm:$0xff] %vm5056, %v5627
  %5772 = vst.msk [vmem:[%s5672 + $0x1c9] sm:$0xff] %vm5056, %v5628
  %5773 = vst.msk [vmem:[%s5672 + $0x1d1] sm:$0xff] %vm5056, %v5629
  %5774 = vst.msk [vmem:[%s5672 + $0x1e1] sm:$0xff] %vm5056, %v5630
  %5775 = vst.msk [vmem:[%s5672 + $0x1e9] sm:$0xff] %vm5056, %v5631
  %5776 = vst.msk [vmem:[%s5672 + $0x1f9] sm:$0xff] %vm5056, %v5632
  %5777 = vst.msk [vmem:[%s5672 + $0x201] sm:$0xff] %vm5056, %v5633
  %5778 = vst.msk [vmem:[%s5672 + $0x211] sm:$0xff] %vm5056, %v5634
  %5779 = vst.msk [vmem:[%s5672 + $0x219] sm:$0xff] %vm5056, %v5635
  %5780 = vst.msk [vmem:[%s5672 + $0x229] sm:$0xff] %vm5056, %v5636
  %5781 = vst.msk [vmem:[%s5672 + $0x231] sm:$0xff] %vm5056, %v5637
  %5782 = vst.msk [vmem:[%s5672 + $0x241] sm:$0xff] %vm5056, %v5638
  %5783 = vst.msk [vmem:[%s5672 + $0x249] sm:$0xff] %vm5056, %v5639
  %5784 = vst.msk [vmem:[%s5672 + $0x259] sm:$0xff] %vm5056, %v5640
  %5785 = vst.msk [vmem:[%s5672 + $0x261] sm:$0xff] %vm5056, %v5641
  %5786 = vst.msk [vmem:[%s5672 + $0x271] sm:$0xff] %vm5056, %v5642
  %5787 = vst.msk [vmem:[%s5672 + $0x279] sm:$0xff] %vm5056, %v5643
  %5788 = vst.msk [vmem:[%s5672 + $0x289] sm:$0xff] %vm5056, %v5644
  %5789 = vst.msk [vmem:[%s5672 + $0x291] sm:$0xff] %vm5056, %v5645
  %5790 = vst.msk [vmem:[%s5672 + $0x2a1] sm:$0xff] %vm5056, %v5646
  %5791 = vst.msk [vmem:[%s5672 + $0x2a9] sm:$0xff] %vm5056, %v5647
  %5792 = vst.msk [vmem:[%s5672 + $0x2b9] sm:$0xff] %vm5056, %v5648
  %5793 = vst.msk [vmem:[%s5672 + $0x2c1] sm:$0xff] %vm5056, %v5649
  %5794 = vst.msk [vmem:[%s5672 + $0x2d1] sm:$0xff] %vm5056, %v5650
  %5795 = vst.msk [vmem:[%s5672 + $0x2d9] sm:$0xff] %vm5056, %v5651
  %5796 = vst.msk [vmem:[%s5672 + $0x2e9] sm:$0xff] %vm5056, %v5652
  %5797 = vst.msk [vmem:[%s5672 + $0x2f1] sm:$0xff] %vm5056, %v5653
  %5798 = vst.msk [vmem:[%s5672 + $0x301] sm:$0xff] %vm5056, %v5654
  %5799 = vst.msk [vmem:[%s5672 + $0x309] sm:$0xff] %vm5056, %v5655
  %5800 = vst.msk [vmem:[%s5672 + $0x319] sm:$0xff] %vm5056, %v5656
  %5801 = vst.msk [vmem:[%s5672 + $0x321] sm:$0xff] %vm5056, %v5657
  %v5802 = vld [vmem:[#allocation3] sm:$0xff]
  %v5803 = vld [vmem:[#allocation3 + $0x8] sm:$0xff]
  %v5804 = vld [vmem:[#allocation3 + $0x18] sm:$0xff]
  %v5805 = vld [vmem:[#allocation3 + $0x20] sm:$0xff]
  %v5806 = vld [vmem:[#allocation3 + $0x30] sm:$0xff]
  %v5807 = vld [vmem:[#allocation3 + $0x38] sm:$0xff]
  %v5808 = vld [vmem:[#allocation3 + $0x48] sm:$0xff]
  %v5809 = vld [vmem:[#allocation3 + $0x50] sm:$0xff]
  %v5810 = vld [vmem:[#allocation3 + $0x60] sm:$0xff]
  %v5811 = vld [vmem:[#allocation3 + $0x68] sm:$0xff]
  %v5812 = vld [vmem:[#allocation3 + $0x78] sm:$0xff]
  %v5813 = vld [vmem:[#allocation3 + $0x80] sm:$0xff]
  %v5814 = vld [vmem:[#allocation3 + $0x90] sm:$0xff]
  %v5815 = vld [vmem:[#allocation3 + $0x98] sm:$0xff]
  %v5816 = vld [vmem:[#allocation3 + $0xa8] sm:$0xff]
  %v5817 = vld [vmem:[#allocation3 + $0xb0] sm:$0xff]
  %v5818 = vld [vmem:[#allocation3 + $0xc0] sm:$0xff]
  %v5819 = vld [vmem:[#allocation3 + $0xc8] sm:$0xff]
  %v5820 = vld [vmem:[#allocation3 + $0xd8] sm:$0xff]
  %v5821 = vld [vmem:[#allocation3 + $0xe0] sm:$0xff]
  %v5822 = vld [vmem:[#allocation3 + $0xf0] sm:$0xff]
  %v5823 = vld [vmem:[#allocation3 + $0xf8] sm:$0xff]
  %v5824 = vld [vmem:[#allocation3 + $0x108] sm:$0xff]
  %v5825 = vld [vmem:[#allocation3 + $0x110] sm:$0xff]
  %v5826 = vld [vmem:[#allocation3 + $0x120] sm:$0xff]
  %v5827 = vld [vmem:[#allocation3 + $0x128] sm:$0xff]
  %v5828 = vld [vmem:[#allocation3 + $0x138] sm:$0xff]
  %v5829 = vld [vmem:[#allocation3 + $0x140] sm:$0xff]
  %v5830 = vld [vmem:[#allocation3 + $0x150] sm:$0xff]
  %v5831 = vld [vmem:[#allocation3 + $0x158] sm:$0xff]
  %v5832 = vld [vmem:[#allocation3 + $0x168] sm:$0xff]
  %v5833 = vld [vmem:[#allocation3 + $0x170] sm:$0xff]
  %v5834 = vld [vmem:[#allocation3 + $0x1b0] sm:$0xff]
  %v5835 = vld [vmem:[#allocation3 + $0x1b8] sm:$0xff]
  %v5836 = vld [vmem:[#allocation3 + $0x1c8] sm:$0xff]
  %v5837 = vld [vmem:[#allocation3 + $0x1d0] sm:$0xff]
  %v5838 = vld [vmem:[#allocation3 + $0x1e0] sm:$0xff]
  %v5839 = vld [vmem:[#allocation3 + $0x1e8] sm:$0xff]
  %v5840 = vld [vmem:[#allocation3 + $0x1f8] sm:$0xff]
  %v5841 = vld [vmem:[#allocation3 + $0x200] sm:$0xff]
  %v5842 = vld [vmem:[#allocation3 + $0x210] sm:$0xff]
  %v5843 = vld [vmem:[#allocation3 + $0x218] sm:$0xff]
  %v5844 = vld [vmem:[#allocation3 + $0x228] sm:$0xff]
  %v5845 = vld [vmem:[#allocation3 + $0x230] sm:$0xff]
  %v5846 = vld [vmem:[#allocation3 + $0x240] sm:$0xff]
  %v5847 = vld [vmem:[#allocation3 + $0x248] sm:$0xff]
  %v5848 = vld [vmem:[#allocation3 + $0x258] sm:$0xff]
  %v5849 = vld [vmem:[#allocation3 + $0x260] sm:$0xff]
  %v5850 = vld [vmem:[#allocation3 + $0x270] sm:$0xff]
  %v5851 = vld [vmem:[#allocation3 + $0x278] sm:$0xff]
  %v5852 = vld [vmem:[#allocation3 + $0x288] sm:$0xff]
  %v5853 = vld [vmem:[#allocation3 + $0x290] sm:$0xff]
  %v5854 = vld [vmem:[#allocation3 + $0x2a0] sm:$0xff]
  %v5855 = vld [vmem:[#allocation3 + $0x2a8] sm:$0xff]
  %v5856 = vld [vmem:[#allocation3 + $0x2b8] sm:$0xff]
  %v5857 = vld [vmem:[#allocation3 + $0x2c0] sm:$0xff]
  %v5858 = vld [vmem:[#allocation3 + $0x2d0] sm:$0xff]
  %v5859 = vld [vmem:[#allocation3 + $0x2d8] sm:$0xff]
  %v5860 = vld [vmem:[#allocation3 + $0x2e8] sm:$0xff]
  %v5861 = vld [vmem:[#allocation3 + $0x2f0] sm:$0xff]
  %v5862 = vld [vmem:[#allocation3 + $0x300] sm:$0xff]
  %v5863 = vld [vmem:[#allocation3 + $0x308] sm:$0xff]
  %v5864 = vld [vmem:[#allocation3 + $0x318] sm:$0xff]
  %v5865 = vld [vmem:[#allocation3 + $0x320] sm:$0xff]
  %v5866 = vpack.c.bf16 %v5803, %v5802
  %v5867 = vpack.c.bf16 %v5805, %v5804
  %v5868 = vpack.c.bf16 %v5807, %v5806
  %v5869 = vpack.c.bf16 %v5809, %v5808
  %v5870 = vpack.c.bf16 %v5811, %v5810
  %v5871 = vpack.c.bf16 %v5813, %v5812
  %v5872 = vpack.c.bf16 %v5815, %v5814
  %v5873 = vpack.c.bf16 %v5817, %v5816
  %v5874 = vpack.c.bf16 %v5819, %v5818
  %v5875 = vpack.c.bf16 %v5821, %v5820
  %v5876 = vpack.c.bf16 %v5823, %v5822
  %v5877 = vpack.c.bf16 %v5825, %v5824
  %v5878 = vpack.c.bf16 %v5827, %v5826
  %v5879 = vpack.c.bf16 %v5829, %v5828
  %v5880 = vpack.c.bf16 %v5831, %v5830
  %v5881 = vpack.c.bf16 %v5833, %v5832
  %v5882 = vpack.c.bf16 %v5835, %v5834
  %v5883 = vpack.c.bf16 %v5837, %v5836
  %v5884 = vpack.c.bf16 %v5839, %v5838
  %v5885 = vpack.c.bf16 %v5841, %v5840
  %v5886 = vpack.c.bf16 %v5843, %v5842
  %v5887 = vpack.c.bf16 %v5845, %v5844
  %v5888 = vpack.c.bf16 %v5847, %v5846
  %v5889 = vpack.c.bf16 %v5849, %v5848
  %v5890 = vpack.c.bf16 %v5851, %v5850
  %v5891 = vpack.c.bf16 %v5853, %v5852
  %v5892 = vpack.c.bf16 %v5855, %v5854
  %v5893 = vpack.c.bf16 %v5857, %v5856
  %v5894 = vpack.c.bf16 %v5859, %v5858
  %v5895 = vpack.c.bf16 %v5861, %v5860
  %v5896 = vpack.c.bf16 %v5863, %v5862
  %v5897 = vpack.c.bf16 %v5865, %v5864
  %v5898 = vld [vmem:[%s2] sm:$0xf]
  %v5899 = vld [vmem:[#allocation3 + $0x1] sm:$0xff]
  %v5900 = vld [vmem:[#allocation3 + $0x9] sm:$0xff]
  %v5901 = vld [vmem:[#allocation3 + $0x19] sm:$0xff]
  %v5902 = vld [vmem:[#allocation3 + $0x21] sm:$0xff]
  %v5903 = vld [vmem:[#allocation3 + $0x31] sm:$0xff]
  %v5904 = vld [vmem:[#allocation3 + $0x39] sm:$0xff]
  %v5905 = vld [vmem:[#allocation3 + $0x49] sm:$0xff]
  %v5906 = vld [vmem:[#allocation3 + $0x51] sm:$0xff]
  %v5907 = vld [vmem:[#allocation3 + $0x61] sm:$0xff]
  %v5908 = vld [vmem:[#allocation3 + $0x69] sm:$0xff]
  %v5909 = vld [vmem:[#allocation3 + $0x79] sm:$0xff]
  %v5910 = vld [vmem:[#allocation3 + $0x81] sm:$0xff]
  %v5911 = vld [vmem:[#allocation3 + $0x91] sm:$0xff]
  %v5912 = vld [vmem:[#allocation3 + $0x99] sm:$0xff]
  %v5913 = vld [vmem:[#allocation3 + $0xa9] sm:$0xff]
  %v5914 = vld [vmem:[#allocation3 + $0xb1] sm:$0xff]
  %v5915 = vld [vmem:[#allocation3 + $0xc1] sm:$0xff]
  %v5916 = vld [vmem:[#allocation3 + $0xc9] sm:$0xff]
  %v5917 = vld [vmem:[#allocation3 + $0xd9] sm:$0xff]
  %v5918 = vld [vmem:[#allocation3 + $0xe1] sm:$0xff]
  %v5919 = vld [vmem:[#allocation3 + $0xf1] sm:$0xff]
  %v5920 = vld [vmem:[#allocation3 + $0xf9] sm:$0xff]
  %v5921 = vld [vmem:[#allocation3 + $0x109] sm:$0xff]
  %v5922 = vld [vmem:[#allocation3 + $0x111] sm:$0xff]
  %v5923 = vld [vmem:[#allocation3 + $0x121] sm:$0xff]
  %v5924 = vld [vmem:[#allocation3 + $0x129] sm:$0xff]
  %v5925 = vld [vmem:[#allocation3 + $0x139] sm:$0xff]
  %v5926 = vld [vmem:[#allocation3 + $0x141] sm:$0xff]
  %v5927 = vld [vmem:[#allocation3 + $0x151] sm:$0xff]
  %v5928 = vld [vmem:[#allocation3 + $0x159] sm:$0xff]
  %v5929 = vld [vmem:[#allocation3 + $0x169] sm:$0xff]
  %v5930 = vld [vmem:[#allocation3 + $0x171] sm:$0xff]
  %v5931 = vld [vmem:[#allocation3 + $0x1b1] sm:$0xff]
  %v5932 = vld [vmem:[#allocation3 + $0x1b9] sm:$0xff]
  %v5933 = vld [vmem:[#allocation3 + $0x1c9] sm:$0xff]
  %v5934 = vld [vmem:[#allocation3 + $0x1d1] sm:$0xff]
  %v5935 = vld [vmem:[#allocation3 + $0x1e1] sm:$0xff]
  %v5936 = vld [vmem:[#allocation3 + $0x1e9] sm:$0xff]
  %v5937 = vld [vmem:[#allocation3 + $0x1f9] sm:$0xff]
  %v5938 = vld [vmem:[#allocation3 + $0x201] sm:$0xff]
  %v5939 = vld [vmem:[#allocation3 + $0x211] sm:$0xff]
  %v5940 = vld [vmem:[#allocation3 + $0x219] sm:$0xff]
  %v5941 = vld [vmem:[#allocation3 + $0x229] sm:$0xff]
  %v5942 = vld [vmem:[#allocation3 + $0x231] sm:$0xff]
  %v5943 = vld [vmem:[#allocation3 + $0x241] sm:$0xff]
  %v5944 = vld [vmem:[#allocation3 + $0x249] sm:$0xff]
  %v5945 = vld [vmem:[#allocation3 + $0x259] sm:$0xff]
  %v5946 = vld [vmem:[#allocation3 + $0x261] sm:$0xff]
  %v5947 = vld [vmem:[#allocation3 + $0x271] sm:$0xff]
  %v5948 = vld [vmem:[#allocation3 + $0x279] sm:$0xff]
  %v5949 = vld [vmem:[#allocation3 + $0x289] sm:$0xff]
  %v5950 = vld [vmem:[#allocation3 + $0x291] sm:$0xff]
  %v5951 = vld [vmem:[#allocation3 + $0x2a1] sm:$0xff]
  %v5952 = vld [vmem:[#allocation3 + $0x2a9] sm:$0xff]
  %v5953 = vld [vmem:[#allocation3 + $0x2b9] sm:$0xff]
  %v5954 = vld [vmem:[#allocation3 + $0x2c1] sm:$0xff]
  %v5955 = vld [vmem:[#allocation3 + $0x2d1] sm:$0xff]
  %v5956 = vld [vmem:[#allocation3 + $0x2d9] sm:$0xff]
  %v5957 = vld [vmem:[#allocation3 + $0x2e9] sm:$0xff]
  %v5958 = vld [vmem:[#allocation3 + $0x2f1] sm:$0xff]
  %v5959 = vld [vmem:[#allocation3 + $0x301] sm:$0xff]
  %v5960 = vld [vmem:[#allocation3 + $0x309] sm:$0xff]
  %v5961 = vld [vmem:[#allocation3 + $0x319] sm:$0xff]
  %v5962 = vld [vmem:[#allocation3 + $0x321] sm:$0xff]
  %v5963 = vpack.c.bf16 %v5900, %v5899
  %v5964 = vpack.c.bf16 %v5902, %v5901
  %v5965 = vpack.c.bf16 %v5904, %v5903
  %v5966 = vpack.c.bf16 %v5906, %v5905
  %v5967 = vpack.c.bf16 %v5908, %v5907
  %v5968 = vpack.c.bf16 %v5910, %v5909
  %v5969 = vpack.c.bf16 %v5912, %v5911
  %v5970 = vpack.c.bf16 %v5914, %v5913
  %v5971 = vpack.c.bf16 %v5916, %v5915
  %v5972 = vpack.c.bf16 %v5918, %v5917
  %v5973 = vpack.c.bf16 %v5920, %v5919
  %v5974 = vpack.c.bf16 %v5922, %v5921
  %v5975 = vpack.c.bf16 %v5924, %v5923
  %v5976 = vpack.c.bf16 %v5926, %v5925
  %v5977 = vpack.c.bf16 %v5928, %v5927
  %v5978 = vpack.c.bf16 %v5930, %v5929
  %v5979 = vpack.c.bf16 %v5932, %v5931
  %v5980 = vpack.c.bf16 %v5934, %v5933
  %v5981 = vpack.c.bf16 %v5936, %v5935
  %v5982 = vpack.c.bf16 %v5938, %v5937
  %v5983 = vpack.c.bf16 %v5940, %v5939
  %v5984 = vpack.c.bf16 %v5942, %v5941
  %v5985 = vpack.c.bf16 %v5944, %v5943
  %v5986 = vpack.c.bf16 %v5946, %v5945
  %v5987 = vpack.c.bf16 %v5948, %v5947
  %v5988 = vpack.c.bf16 %v5950, %v5949
  %v5989 = vpack.c.bf16 %v5952, %v5951
  %v5990 = vpack.c.bf16 %v5954, %v5953
  %v5991 = vpack.c.bf16 %v5956, %v5955
  %v5992 = vpack.c.bf16 %v5958, %v5957
  %v5993 = vpack.c.bf16 %v5960, %v5959
  %v5994 = vpack.c.bf16 %v5962, %v5961
  %s5995 = scalar_lea.vmem %s2, 4
  %v5996 = vld [vmem:[%s5995] sm:$0xf]
  %v5998 = vsel %vm5056, %v5963, 0
  %v6001 = vsel %vm5056, %v5964, 0
  %v6004 = vsel %vm5056, %v5965, 0
  %v6007 = vsel %vm5056, %v5966, 0
  %v6010 = vsel %vm5056, %v5967, 0
  %v6013 = vsel %vm5056, %v5968, 0
  %v6016 = vsel %vm5056, %v5969, 0
  %v6019 = vsel %vm5056, %v5970, 0
  %v6022 = vsel %vm5056, %v5971, 0
  %v6025 = vsel %vm5056, %v5972, 0
  %v6028 = vsel %vm5056, %v5973, 0
  %v6031 = vsel %vm5056, %v5974, 0
  %v6034 = vsel %vm5056, %v5975, 0
  %v6037 = vsel %vm5056, %v5976, 0
  %v6040 = vsel %vm5056, %v5977, 0
  %v6043 = vsel %vm5056, %v5978, 0
  %v6046 = vsel %vm5056, %v5979, 0
  %v6049 = vsel %vm5056, %v5980, 0
  %v6052 = vsel %vm5056, %v5981, 0
  %v6055 = vsel %vm5056, %v5982, 0
  %v6058 = vsel %vm5056, %v5983, 0
  %v6061 = vsel %vm5056, %v5984, 0
  %v6064 = vsel %vm5056, %v5985, 0
  %v6067 = vsel %vm5056, %v5986, 0
  %v6070 = vsel %vm5056, %v5987, 0
  %v6073 = vsel %vm5056, %v5988, 0
  %v6076 = vsel %vm5056, %v5989, 0
  %v6079 = vsel %vm5056, %v5990, 0
  %v6082 = vsel %vm5056, %v5991, 0
  %v6085 = vsel %vm5056, %v5992, 0
  %v6088 = vsel %vm5056, %v5993, 0
  %v6091 = vsel %vm5056, %v5994, 0
  %vm6093 = vcmask 1043456
  %v6095 = vsel %vm6093, %v5996, 0
  %6097 = vmatprep.subr.bf16.mxu0 0
  %6098 = vmatpush1.bf16.msra.mxu0 %v6095
  %6099 = vmatprep.subr.bf16.mxu0 0
  %6100 = vmatpush1.bf16.msra.mxu0 0
  %6101 = vmatprep.subr.bf16.mxu0 0
  %6102 = vmatpush1.bf16.msra.mxu0 0
  %6103 = vmatprep.subr.bf16.mxu0 0
  %6104 = vmatpush1.bf16.msra.mxu0 0
  %6105 = vmatprep.subr.bf16.mxu0 0
  %6106 = vmatpush1.bf16.msra.mxu0 0
  %6107 = vmatprep.subr.bf16.mxu0 0
  %6108 = vmatpush1.bf16.msra.mxu0 0
  %6109 = vmatprep.subr.bf16.mxu0 0
  %6110 = vmatpush1.bf16.msra.mxu0 0
  %6111 = vmatprep.subr.bf16.mxu0 0
  %6112 = vmatpush1.bf16.msra.mxu0 0
  %6113 = vmatprep.subr.bf16.mxu0 0
  %6114 = vmatpush1.bf16.msra.mxu0 0
  %6115 = vmatprep.subr.bf16.mxu0 0
  %6116 = vmatpush1.bf16.msra.mxu0 0
  %6117 = vmatprep.subr.bf16.mxu0 0
  %6118 = vmatpush1.bf16.msra.mxu0 0
  %6119 = vmatprep.subr.bf16.mxu0 0
  %6120 = vmatpush1.bf16.msra.mxu0 0
  %6121 = vmatprep.subr.bf16.mxu0 0
  %6122 = vmatpush1.bf16.msra.mxu0 0
  %6123 = vmatprep.subr.bf16.mxu0 0
  %6124 = vmatpush1.bf16.msra.mxu0 0
  %6125 = vmatprep.subr.bf16.mxu0 0
  %6126 = vmatpush1.bf16.msra.mxu0 0
  %6127 = vmatprep.subr.bf16.mxu0 0
  %6128 = vmatpush1.bf16.msra.mxu0 0
  %6129 = vmatprep.mubr.bf16.mxu0 0
  %6130 = vmatmul.mubr.bf16.gmra.mrb[0].mxu0 %v5998
  %v6131 = vpop.f32.mrb[0].mxu0
  %v6132 = vadd.f32 0.0, %v6131
  %v6133 = vpop.f32.mrb[0].mxu0
  %v6134 = vpop.f32.mrb[0].mxu0
  %v6135 = vadd.f32 0.0, %v6134
  %v6136 = vpop.f32.mrb[0].mxu0
  %6137 = vmatprep.mubr.bf16.mxu0 0
  %6138 = vmatmul.mubr.bf16.gmra.mrb[0].mxu0 %v6001
  %v6139 = vpop.f32.mrb[0].mxu0
  %v6140 = vadd.f32 0.0, %v6139
  %v6141 = vpop.f32.mrb[0].mxu0
  %v6142 = vpop.f32.mrb[0].mxu0
  %v6143 = vadd.f32 0.0, %v6142
  %v6144 = vpop.f32.mrb[0].mxu0
  %6145 = vmatprep.mubr.bf16.mxu0 0
  %6146 = vmatmul.mubr.bf16.gmra.mrb[0].mxu0 %v6004
  %v6147 = vpop.f32.mrb[0].mxu0
  %v6148 = vadd.f32 0.0, %v6147
  %v6149 = vpop.f32.mrb[0].mxu0
  %v6150 = vpop.f32.mrb[0].mxu0
  %v6151 = vadd.f32 0.0, %v6150
  %v6152 = vpop.f32.mrb[0].mxu0
  %6153 = vmatprep.mubr.bf16.mxu0 0
  %6154 = vmatmul.mubr.bf16.gmra.mrb[0].mxu0 %v6007
  %v6155 = vpop.f32.mrb[0].mxu0
  %v6156 = vadd.f32 0.0, %v6155
  %v6157 = vpop.f32.mrb[0].mxu0
  %v6158 = vpop.f32.mrb[0].mxu0
  %v6159 = vadd.f32 0.0, %v6158
  %v6160 = vpop.f32.mrb[0].mxu0
  %6161 = vmatprep.mubr.bf16.mxu0 0
  %6162 = vmatmul.mubr.bf16.gmra.mrb[0].mxu0 %v6010
  %v6163 = vpop.f32.mrb[0].mxu0
  %v6164 = vadd.f32 0.0, %v6163
  %v6165 = vpop.f32.mrb[0].mxu0
  %v6166 = vpop.f32.mrb[0].mxu0
  %v6167 = vadd.f32 0.0, %v6166
  %v6168 = vpop.f32.mrb[0].mxu0
  %6169 = vmatprep.mubr.bf16.mxu0 0
  %6170 = vmatmul.mubr.bf16.gmra.mrb[0].mxu0 %v6013
  %v6171 = vpop.f32.mrb[0].mxu0
  %v6172 = vadd.f32 0.0, %v6171
  %v6173 = vpop.f32.mrb[0].mxu0
  %v6174 = vpop.f32.mrb[0].mxu0
  %v6175 = vadd.f32 0.0, %v6174
  %v6176 = vpop.f32.mrb[0].mxu0
  %6177 = vmatprep.mubr.bf16.mxu0 0
  %6178 = vmatmul.mubr.bf16.gmra.mrb[0].mxu0 %v6016
  %v6179 = vpop.f32.mrb[0].mxu0
  %v6180 = vadd.f32 0.0, %v6179
  %v6181 = vpop.f32.mrb[0].mxu0
  %v6182 = vpop.f32.mrb[0].mxu0
  %v6183 = vadd.f32 0.0, %v6182
  %v6184 = vpop.f32.mrb[0].mxu0
  %6185 = vmatprep.mubr.bf16.mxu0 0
  %6186 = vmatmul.mubr.bf16.gmra.mrb[0].mxu0 %v6019
  %v6187 = vpop.f32.mrb[0].mxu0
  %v6188 = vadd.f32 0.0, %v6187
  %v6189 = vpop.f32.mrb[0].mxu0
  %v6190 = vpop.f32.mrb[0].mxu0
  %v6191 = vadd.f32 0.0, %v6190
  %v6192 = vpop.f32.mrb[0].mxu0
  %6193 = vmatprep.mubr.bf16.mxu0 0
  %6194 = vmatmul.mubr.bf16.gmra.mrb[0].mxu0 %v6022
  %v6195 = vpop.f32.mrb[0].mxu0
  %v6196 = vadd.f32 0.0, %v6195
  %v6197 = vpop.f32.mrb[0].mxu0
  %v6198 = vpop.f32.mrb[0].mxu0
  %v6199 = vadd.f32 0.0, %v6198
  %v6200 = vpop.f32.mrb[0].mxu0
  %6201 = vmatprep.mubr.bf16.mxu0 0
  %6202 = vmatmul.mubr.bf16.gmra.mrb[0].mxu0 %v6025
  %v6203 = vpop.f32.mrb[0].mxu0
  %v6204 = vadd.f32 0.0, %v6203
  %v6205 = vpop.f32.mrb[0].mxu0
  %v6206 = vpop.f32.mrb[0].mxu0
  %v6207 = vadd.f32 0.0, %v6206
  %v6208 = vpop.f32.mrb[0].mxu0
  %6209 = vmatprep.mubr.bf16.mxu0 0
  %6210 = vmatmul.mubr.bf16.gmra.mrb[0].mxu0 %v6028
  %v6211 = vpop.f32.mrb[0].mxu0
  %v6212 = vadd.f32 0.0, %v6211
  %v6213 = vpop.f32.mrb[0].mxu0
  %v6214 = vpop.f32.mrb[0].mxu0
  %v6215 = vadd.f32 0.0, %v6214
  %v6216 = vpop.f32.mrb[0].mxu0
  %6217 = vmatprep.mubr.bf16.mxu0 0
  %6218 = vmatmul.mubr.bf16.gmra.mrb[0].mxu0 %v6031
  %v6219 = vpop.f32.mrb[0].mxu0
  %v6220 = vadd.f32 0.0, %v6219
  %v6221 = vpop.f32.mrb[0].mxu0
  %v6222 = vpop.f32.mrb[0].mxu0
  %v6223 = vadd.f32 0.0, %v6222
  %v6224 = vpop.f32.mrb[0].mxu0
  %6225 = vmatprep.mubr.bf16.mxu0 0
  %6226 = vmatmul.mubr.bf16.gmra.mrb[0].mxu0 %v6034
  %v6227 = vpop.f32.mrb[0].mxu0
  %v6228 = vadd.f32 0.0, %v6227
  %v6229 = vpop.f32.mrb[0].mxu0
  %v6230 = vpop.f32.mrb[0].mxu0
  %v6231 = vadd.f32 0.0, %v6230
  %v6232 = vpop.f32.mrb[0].mxu0
  %6233 = vmatprep.mubr.bf16.mxu0 0
  %6234 = vmatmul.mubr.bf16.gmra.mrb[0].mxu0 %v6037
  %v6235 = vpop.f32.mrb[0].mxu0
  %v6236 = vadd.f32 0.0, %v6235
  %v6237 = vpop.f32.mrb[0].mxu0
  %v6238 = vpop.f32.mrb[0].mxu0
  %v6239 = vadd.f32 0.0, %v6238
  %v6240 = vpop.f32.mrb[0].mxu0
  %6241 = vmatprep.mubr.bf16.mxu0 0
  %6242 = vmatmul.mubr.bf16.gmra.mrb[0].mxu0 %v6040
  %v6243 = vpop.f32.mrb[0].mxu0
  %v6244 = vadd.f32 0.0, %v6243
  %v6245 = vpop.f32.mrb[0].mxu0
  %v6246 = vpop.f32.mrb[0].mxu0
  %v6247 = vadd.f32 0.0, %v6246
  %v6248 = vpop.f32.mrb[0].mxu0
  %6249 = vmatprep.mubr.bf16.mxu0 0
  %6250 = vmatmul.mubr.bf16.gmra.mrb[0].mxu0 %v6043
  %v6251 = vpop.f32.mrb[0].mxu0
  %v6252 = vadd.f32 0.0, %v6251
  %v6253 = vpop.f32.mrb[0].mxu0
  %v6254 = vpop.f32.mrb[0].mxu0
  %v6255 = vadd.f32 0.0, %v6254
  %v6256 = vpop.f32.mrb[0].mxu0
  %6257 = vmatprep.mubr.bf16.mxu0 0
  %6258 = vmatmul.mubr.bf16.gmra.mrb[0].mxu0 %v6046
  %v6259 = vpop.f32.mrb[0].mxu0
  %v6260 = vadd.f32 0.0, %v6259
  %v6261 = vpop.f32.mrb[0].mxu0
  %v6262 = vpop.f32.mrb[0].mxu0
  %v6263 = vadd.f32 0.0, %v6262
  %v6264 = vpop.f32.mrb[0].mxu0
  %6265 = vmatprep.mubr.bf16.mxu0 0
  %6266 = vmatmul.mubr.bf16.gmra.mrb[0].mxu0 %v6049
  %v6267 = vpop.f32.mrb[0].mxu0
  %v6268 = vadd.f32 0.0, %v6267
  %v6269 = vpop.f32.mrb[0].mxu0
  %v6270 = vpop.f32.mrb[0].mxu0
  %v6271 = vadd.f32 0.0, %v6270
  %v6272 = vpop.f32.mrb[0].mxu0
  %6273 = vmatprep.mubr.bf16.mxu0 0
  %6274 = vmatmul.mubr.bf16.gmra.mrb[0].mxu0 %v6052
  %v6275 = vpop.f32.mrb[0].mxu0
  %v6276 = vadd.f32 0.0, %v6275
  %v6277 = vpop.f32.mrb[0].mxu0
  %v6278 = vpop.f32.mrb[0].mxu0
  %v6279 = vadd.f32 0.0, %v6278
  %v6280 = vpop.f32.mrb[0].mxu0
  %6281 = vmatprep.mubr.bf16.mxu0 0
  %6282 = vmatmul.mubr.bf16.gmra.mrb[0].mxu0 %v6055
  %v6283 = vpop.f32.mrb[0].mxu0
  %v6284 = vadd.f32 0.0, %v6283
  %v6285 = vpop.f32.mrb[0].mxu0
  %v6286 = vpop.f32.mrb[0].mxu0
  %v6287 = vadd.f32 0.0, %v6286
  %v6288 = vpop.f32.mrb[0].mxu0
  %6289 = vmatprep.mubr.bf16.mxu0 0
  %6290 = vmatmul.mubr.bf16.gmra.mrb[0].mxu0 %v6058
  %v6291 = vpop.f32.mrb[0].mxu0
  %v6292 = vadd.f32 0.0, %v6291
  %v6293 = vpop.f32.mrb[0].mxu0
  %v6294 = vpop.f32.mrb[0].mxu0
  %v6295 = vadd.f32 0.0, %v6294
  %v6296 = vpop.f32.mrb[0].mxu0
  %6297 = vmatprep.mubr.bf16.mxu0 0
  %6298 = vmatmul.mubr.bf16.gmra.mrb[0].mxu0 %v6061
  %v6299 = vpop.f32.mrb[0].mxu0
  %v6300 = vadd.f32 0.0, %v6299
  %v6301 = vpop.f32.mrb[0].mxu0
  %v6302 = vpop.f32.mrb[0].mxu0
  %v6303 = vadd.f32 0.0, %v6302
  %v6304 = vpop.f32.mrb[0].mxu0
  %6305 = vmatprep.mubr.bf16.mxu0 0
  %6306 = vmatmul.mubr.bf16.gmra.mrb[0].mxu0 %v6064
  %v6307 = vpop.f32.mrb[0].mxu0
  %v6308 = vadd.f32 0.0, %v6307
  %v6309 = vpop.f32.mrb[0].mxu0
  %v6310 = vpop.f32.mrb[0].mxu0
  %v6311 = vadd.f32 0.0, %v6310
  %v6312 = vpop.f32.mrb[0].mxu0
  %6313 = vmatprep.mubr.bf16.mxu0 0
  %6314 = vmatmul.mubr.bf16.gmra.mrb[0].mxu0 %v6067
  %v6315 = vpop.f32.mrb[0].mxu0
  %v6316 = vadd.f32 0.0, %v6315
  %v6317 = vpop.f32.mrb[0].mxu0
  %v6318 = vpop.f32.mrb[0].mxu0
  %v6319 = vadd.f32 0.0, %v6318
  %v6320 = vpop.f32.mrb[0].mxu0
  %6321 = vmatprep.mubr.bf16.mxu0 0
  %6322 = vmatmul.mubr.bf16.gmra.mrb[0].mxu0 %v6070
  %v6323 = vpop.f32.mrb[0].mxu0
  %v6324 = vadd.f32 0.0, %v6323
  %v6325 = vpop.f32.mrb[0].mxu0
  %v6326 = vpop.f32.mrb[0].mxu0
  %v6327 = vadd.f32 0.0, %v6326
  %v6328 = vpop.f32.mrb[0].mxu0
  %6329 = vmatprep.mubr.bf16.mxu0 0
  %6330 = vmatmul.mubr.bf16.gmra.mrb[0].mxu0 %v6073
  %v6331 = vpop.f32.mrb[0].mxu0
  %v6332 = vadd.f32 0.0, %v6331
  %v6333 = vpop.f32.mrb[0].mxu0
  %v6334 = vpop.f32.mrb[0].mxu0
  %v6335 = vadd.f32 0.0, %v6334
  %v6336 = vpop.f32.mrb[0].mxu0
  %6337 = vmatprep.mubr.bf16.mxu0 0
  %6338 = vmatmul.mubr.bf16.gmra.mrb[0].mxu0 %v6076
  %v6339 = vpop.f32.mrb[0].mxu0
  %v6340 = vadd.f32 0.0, %v6339
  %v6341 = vpop.f32.mrb[0].mxu0
  %v6342 = vpop.f32.mrb[0].mxu0
  %v6343 = vadd.f32 0.0, %v6342
  %v6344 = vpop.f32.mrb[0].mxu0
  %6345 = vmatprep.mubr.bf16.mxu0 0
  %6346 = vmatmul.mubr.bf16.gmra.mrb[0].mxu0 %v6079
  %v6347 = vpop.f32.mrb[0].mxu0
  %v6348 = vadd.f32 0.0, %v6347
  %v6349 = vpop.f32.mrb[0].mxu0
  %v6350 = vpop.f32.mrb[0].mxu0
  %v6351 = vadd.f32 0.0, %v6350
  %v6352 = vpop.f32.mrb[0].mxu0
  %6353 = vmatprep.mubr.bf16.mxu0 0
  %6354 = vmatmul.mubr.bf16.gmra.mrb[0].mxu0 %v6082
  %v6355 = vpop.f32.mrb[0].mxu0
  %v6356 = vadd.f32 0.0, %v6355
  %v6357 = vpop.f32.mrb[0].mxu0
  %v6358 = vpop.f32.mrb[0].mxu0
  %v6359 = vadd.f32 0.0, %v6358
  %v6360 = vpop.f32.mrb[0].mxu0
  %6361 = vmatprep.mubr.bf16.mxu0 0
  %6362 = vmatmul.mubr.bf16.gmra.mrb[0].mxu0 %v6085
  %v6363 = vpop.f32.mrb[0].mxu0
  %v6364 = vadd.f32 0.0, %v6363
  %v6365 = vpop.f32.mrb[0].mxu0
  %v6366 = vpop.f32.mrb[0].mxu0
  %v6367 = vadd.f32 0.0, %v6366
  %v6368 = vpop.f32.mrb[0].mxu0
  %6369 = vmatprep.mubr.bf16.mxu0 0
  %6370 = vmatmul.mubr.bf16.gmra.mrb[0].mxu0 %v6088
  %v6371 = vpop.f32.mrb[0].mxu0
  %v6372 = vadd.f32 0.0, %v6371
  %v6373 = vpop.f32.mrb[0].mxu0
  %v6374 = vpop.f32.mrb[0].mxu0
  %v6375 = vadd.f32 0.0, %v6374
  %v6376 = vpop.f32.mrb[0].mxu0
  %6377 = vmatprep.mubr.bf16.mxu0 0
  %6378 = vmatmul.mubr.bf16.gmra.mrb[0].mxu0 %v6091
  %v6379 = vpop.f32.mrb[0].mxu0
  %v6380 = vadd.f32 0.0, %v6379
  %v6381 = vpop.f32.mrb[0].mxu0
  %v6382 = vpop.f32.mrb[0].mxu0
  %v6383 = vadd.f32 0.0, %v6382
  %v6384 = vpop.f32.mrb[0].mxu0
  %6385 = vdwg.mxu0
  %v6387 = vsel %vm5056, %v5866, 0
  %v6390 = vsel %vm5056, %v5867, 0
  %v6393 = vsel %vm5056, %v5868, 0
  %v6396 = vsel %vm5056, %v5869, 0
  %v6399 = vsel %vm5056, %v5870, 0
  %v6402 = vsel %vm5056, %v5871, 0
  %v6405 = vsel %vm5056, %v5872, 0
  %v6408 = vsel %vm5056, %v5873, 0
  %v6411 = vsel %vm5056, %v5874, 0
  %v6414 = vsel %vm5056, %v5875, 0
  %v6417 = vsel %vm5056, %v5876, 0
  %v6420 = vsel %vm5056, %v5877, 0
  %v6423 = vsel %vm5056, %v5878, 0
  %v6426 = vsel %vm5056, %v5879, 0
  %v6429 = vsel %vm5056, %v5880, 0
  %v6432 = vsel %vm5056, %v5881, 0
  %v6435 = vsel %vm5056, %v5882, 0
  %v6438 = vsel %vm5056, %v5883, 0
  %v6441 = vsel %vm5056, %v5884, 0
  %v6444 = vsel %vm5056, %v5885, 0
  %v6447 = vsel %vm5056, %v5886, 0
  %v6450 = vsel %vm5056, %v5887, 0
  %v6453 = vsel %vm5056, %v5888, 0
  %v6456 = vsel %vm5056, %v5889, 0
  %v6459 = vsel %vm5056, %v5890, 0
  %v6462 = vsel %vm5056, %v5891, 0
  %v6465 = vsel %vm5056, %v5892, 0
  %v6468 = vsel %vm5056, %v5893, 0
  %v6471 = vsel %vm5056, %v5894, 0
  %v6474 = vsel %vm5056, %v5895, 0
  %v6477 = vsel %vm5056, %v5896, 0
  %v6480 = vsel %vm5056, %v5897, 0
  %v6483 = vsel %vm6093, %v5898, 0
  %6485 = vmatprep.subr.bf16.mxu0 0
  %6486 = vmatpush1.bf16.msra.mxu0 %v6483
  %6487 = vmatprep.subr.bf16.mxu0 0
  %6488 = vmatpush1.bf16.msra.mxu0 0
  %6489 = vmatprep.subr.bf16.mxu0 0
  %6490 = vmatpush1.bf16.msra.mxu0 0
  %6491 = vmatprep.subr.bf16.mxu0 0
  %6492 = vmatpush1.bf16.msra.mxu0 0
  %6493 = vmatprep.subr.bf16.mxu0 0
  %6494 = vmatpush1.bf16.msra.mxu0 0
  %6495 = vmatprep.subr.bf16.mxu0 0
  %6496 = vmatpush1.bf16.msra.mxu0 0
  %6497 = vmatprep.subr.bf16.mxu0 0
  %6498 = vmatpush1.bf16.msra.mxu0 0
  %6499 = vmatprep.subr.bf16.mxu0 0
  %6500 = vmatpush1.bf16.msra.mxu0 0
  %6501 = vmatprep.subr.bf16.mxu0 0
  %6502 = vmatpush1.bf16.msra.mxu0 0
  %6503 = vmatprep.subr.bf16.mxu0 0
  %6504 = vmatpush1.bf16.msra.mxu0 0
  %6505 = vmatprep.subr.bf16.mxu0 0
  %6506 = vmatpush1.bf16.msra.mxu0 0
  %6507 = vmatprep.subr.bf16.mxu0 0
  %6508 = vmatpush1.bf16.msra.mxu0 0
  %6509 = vmatprep.subr.bf16.mxu0 0
  %6510 = vmatpush1.bf16.msra.mxu0 0
  %6511 = vmatprep.subr.bf16.mxu0 0
  %6512 = vmatpush1.bf16.msra.mxu0 0
  %6513 = vmatprep.subr.bf16.mxu0 0
  %6514 = vmatpush1.bf16.msra.mxu0 0
  %6515 = vmatprep.subr.bf16.mxu0 0
  %6516 = vmatpush1.bf16.msra.mxu0 0
  %6517 = vmatprep.mubr.bf16.mxu0 0
  %6518 = vmatmul.mubr.bf16.gmra.mrb[0].mxu0 %v6387
  %v6519 = vpop.f32.mrb[0].mxu0
  %v6520 = vadd.f32 %v6132, %v6519
  %v6521 = vpop.f32.mrb[0].mxu0
  %v6522 = vpop.f32.mrb[0].mxu0
  %v6523 = vadd.f32 %v6135, %v6522
  %v6524 = vpop.f32.mrb[0].mxu0
  %6525 = vmatprep.mubr.bf16.mxu0 0
  %6526 = vmatmul.mubr.bf16.gmra.mrb[0].mxu0 %v6390
  %v6527 = vpop.f32.mrb[0].mxu0
  %v6528 = vadd.f32 %v6140, %v6527
  %v6529 = vpop.f32.mrb[0].mxu0
  %v6530 = vpop.f32.mrb[0].mxu0
  %v6531 = vadd.f32 %v6143, %v6530
  %v6532 = vpop.f32.mrb[0].mxu0
  %6533 = vmatprep.mubr.bf16.mxu0 0
  %6534 = vmatmul.mubr.bf16.gmra.mrb[0].mxu0 %v6393
  %v6535 = vpop.f32.mrb[0].mxu0
  %v6536 = vadd.f32 %v6148, %v6535
  %v6537 = vpop.f32.mrb[0].mxu0
  %v6538 = vpop.f32.mrb[0].mxu0
  %v6539 = vadd.f32 %v6151, %v6538
  %v6540 = vpop.f32.mrb[0].mxu0
  %6541 = vmatprep.mubr.bf16.mxu0 0
  %6542 = vmatmul.mubr.bf16.gmra.mrb[0].mxu0 %v6396
  %v6543 = vpop.f32.mrb[0].mxu0
  %v6544 = vadd.f32 %v6156, %v6543
  %v6545 = vpop.f32.mrb[0].mxu0
  %v6546 = vpop.f32.mrb[0].mxu0
  %v6547 = vadd.f32 %v6159, %v6546
  %v6548 = vpop.f32.mrb[0].mxu0
  %6549 = vmatprep.mubr.bf16.mxu0 0
  %6550 = vmatmul.mubr.bf16.gmra.mrb[0].mxu0 %v6399
  %v6551 = vpop.f32.mrb[0].mxu0
  %v6552 = vadd.f32 %v6164, %v6551
  %v6553 = vpop.f32.mrb[0].mxu0
  %v6554 = vpop.f32.mrb[0].mxu0
  %v6555 = vadd.f32 %v6167, %v6554
  %v6556 = vpop.f32.mrb[0].mxu0
  %6557 = vmatprep.mubr.bf16.mxu0 0
  %6558 = vmatmul.mubr.bf16.gmra.mrb[0].mxu0 %v6402
  %v6559 = vpop.f32.mrb[0].mxu0
  %v6560 = vadd.f32 %v6172, %v6559
  %v6561 = vpop.f32.mrb[0].mxu0
  %v6562 = vpop.f32.mrb[0].mxu0
  %v6563 = vadd.f32 %v6175, %v6562
  %v6564 = vpop.f32.mrb[0].mxu0
  %6565 = vmatprep.mubr.bf16.mxu0 0
  %6566 = vmatmul.mubr.bf16.gmra.mrb[0].mxu0 %v6405
  %v6567 = vpop.f32.mrb[0].mxu0
  %v6568 = vadd.f32 %v6180, %v6567
  %v6569 = vpop.f32.mrb[0].mxu0
  %v6570 = vpop.f32.mrb[0].mxu0
  %v6571 = vadd.f32 %v6183, %v6570
  %v6572 = vpop.f32.mrb[0].mxu0
  %6573 = vmatprep.mubr.bf16.mxu0 0
  %6574 = vmatmul.mubr.bf16.gmra.mrb[0].mxu0 %v6408
  %v6575 = vpop.f32.mrb[0].mxu0
  %v6576 = vadd.f32 %v6188, %v6575
  %v6577 = vpop.f32.mrb[0].mxu0
  %v6578 = vpop.f32.mrb[0].mxu0
  %v6579 = vadd.f32 %v6191, %v6578
  %v6580 = vpop.f32.mrb[0].mxu0
  %6581 = vmatprep.mubr.bf16.mxu0 0
  %6582 = vmatmul.mubr.bf16.gmra.mrb[0].mxu0 %v6411
  %v6583 = vpop.f32.mrb[0].mxu0
  %v6584 = vadd.f32 %v6196, %v6583
  %v6585 = vpop.f32.mrb[0].mxu0
  %v6586 = vpop.f32.mrb[0].mxu0
  %v6587 = vadd.f32 %v6199, %v6586
  %v6588 = vpop.f32.mrb[0].mxu0
  %6589 = vmatprep.mubr.bf16.mxu0 0
  %6590 = vmatmul.mubr.bf16.gmra.mrb[0].mxu0 %v6414
  %v6591 = vpop.f32.mrb[0].mxu0
  %v6592 = vadd.f32 %v6204, %v6591
  %v6593 = vpop.f32.mrb[0].mxu0
  %v6594 = vpop.f32.mrb[0].mxu0
  %v6595 = vadd.f32 %v6207, %v6594
  %v6596 = vpop.f32.mrb[0].mxu0
  %6597 = vmatprep.mubr.bf16.mxu0 0
  %6598 = vmatmul.mubr.bf16.gmra.mrb[0].mxu0 %v6417
  %v6599 = vpop.f32.mrb[0].mxu0
  %v6600 = vadd.f32 %v6212, %v6599
  %v6601 = vpop.f32.mrb[0].mxu0
  %v6602 = vpop.f32.mrb[0].mxu0
  %v6603 = vadd.f32 %v6215, %v6602
  %v6604 = vpop.f32.mrb[0].mxu0
  %6605 = vmatprep.mubr.bf16.mxu0 0
  %6606 = vmatmul.mubr.bf16.gmra.mrb[0].mxu0 %v6420
  %v6607 = vpop.f32.mrb[0].mxu0
  %v6608 = vadd.f32 %v6220, %v6607
  %v6609 = vpop.f32.mrb[0].mxu0
  %v6610 = vpop.f32.mrb[0].mxu0
  %v6611 = vadd.f32 %v6223, %v6610
  %v6612 = vpop.f32.mrb[0].mxu0
  %6613 = vmatprep.mubr.bf16.mxu0 0
  %6614 = vmatmul.mubr.bf16.gmra.mrb[0].mxu0 %v6423
  %v6615 = vpop.f32.mrb[0].mxu0
  %v6616 = vadd.f32 %v6228, %v6615
  %v6617 = vpop.f32.mrb[0].mxu0
  %v6618 = vpop.f32.mrb[0].mxu0
  %v6619 = vadd.f32 %v6231, %v6618
  %v6620 = vpop.f32.mrb[0].mxu0
  %6621 = vmatprep.mubr.bf16.mxu0 0
  %6622 = vmatmul.mubr.bf16.gmra.mrb[0].mxu0 %v6426
  %v6623 = vpop.f32.mrb[0].mxu0
  %v6624 = vadd.f32 %v6236, %v6623
  %v6625 = vpop.f32.mrb[0].mxu0
  %v6626 = vpop.f32.mrb[0].mxu0
  %v6627 = vadd.f32 %v6239, %v6626
  %v6628 = vpop.f32.mrb[0].mxu0
  %6629 = vmatprep.mubr.bf16.mxu0 0
  %6630 = vmatmul.mubr.bf16.gmra.mrb[0].mxu0 %v6429
  %v6631 = vpop.f32.mrb[0].mxu0
  %v6632 = vadd.f32 %v6244, %v6631
  %v6633 = vpop.f32.mrb[0].mxu0
  %v6634 = vpop.f32.mrb[0].mxu0
  %v6635 = vadd.f32 %v6247, %v6634
  %v6636 = vpop.f32.mrb[0].mxu0
  %6637 = vmatprep.mubr.bf16.mxu0 0
  %6638 = vmatmul.mubr.bf16.gmra.mrb[0].mxu0 %v6432
  %v6639 = vpop.f32.mrb[0].mxu0
  %v6640 = vadd.f32 %v6252, %v6639
  %v6641 = vpop.f32.mrb[0].mxu0
  %v6642 = vpop.f32.mrb[0].mxu0
  %v6643 = vadd.f32 %v6255, %v6642
  %v6644 = vpop.f32.mrb[0].mxu0
  %6645 = vmatprep.mubr.bf16.mxu0 0
  %6646 = vmatmul.mubr.bf16.gmra.mrb[0].mxu0 %v6435
  %v6647 = vpop.f32.mrb[0].mxu0
  %v6648 = vadd.f32 %v6260, %v6647
  %v6649 = vpop.f32.mrb[0].mxu0
  %v6650 = vpop.f32.mrb[0].mxu0
  %v6651 = vadd.f32 %v6263, %v6650
  %v6652 = vpop.f32.mrb[0].mxu0
  %6653 = vmatprep.mubr.bf16.mxu0 0
  %6654 = vmatmul.mubr.bf16.gmra.mrb[0].mxu0 %v6438
  %v6655 = vpop.f32.mrb[0].mxu0
  %v6656 = vadd.f32 %v6268, %v6655
  %v6657 = vpop.f32.mrb[0].mxu0
  %v6658 = vpop.f32.mrb[0].mxu0
  %v6659 = vadd.f32 %v6271, %v6658
  %v6660 = vpop.f32.mrb[0].mxu0
  %6661 = vmatprep.mubr.bf16.mxu0 0
  %6662 = vmatmul.mubr.bf16.gmra.mrb[0].mxu0 %v6441
  %v6663 = vpop.f32.mrb[0].mxu0
  %v6664 = vadd.f32 %v6276, %v6663
  %v6665 = vpop.f32.mrb[0].mxu0
  %v6666 = vpop.f32.mrb[0].mxu0
  %v6667 = vadd.f32 %v6279, %v6666
  %v6668 = vpop.f32.mrb[0].mxu0
  %6669 = vmatprep.mubr.bf16.mxu0 0
  %6670 = vmatmul.mubr.bf16.gmra.mrb[0].mxu0 %v6444
  %v6671 = vpop.f32.mrb[0].mxu0
  %v6672 = vadd.f32 %v6284, %v6671
  %v6673 = vpop.f32.mrb[0].mxu0
  %v6674 = vpop.f32.mrb[0].mxu0
  %v6675 = vadd.f32 %v6287, %v6674
  %v6676 = vpop.f32.mrb[0].mxu0
  %6677 = vmatprep.mubr.bf16.mxu0 0
  %6678 = vmatmul.mubr.bf16.gmra.mrb[0].mxu0 %v6447
  %v6679 = vpop.f32.mrb[0].mxu0
  %v6680 = vadd.f32 %v6292, %v6679
  %v6681 = vpop.f32.mrb[0].mxu0
  %v6682 = vpop.f32.mrb[0].mxu0
  %v6683 = vadd.f32 %v6295, %v6682
  %v6684 = vpop.f32.mrb[0].mxu0
  %6685 = vmatprep.mubr.bf16.mxu0 0
  %6686 = vmatmul.mubr.bf16.gmra.mrb[0].mxu0 %v6450
  %v6687 = vpop.f32.mrb[0].mxu0
  %v6688 = vadd.f32 %v6300, %v6687
  %v6689 = vpop.f32.mrb[0].mxu0
  %v6690 = vpop.f32.mrb[0].mxu0
  %v6691 = vadd.f32 %v6303, %v6690
  %v6692 = vpop.f32.mrb[0].mxu0
  %6693 = vmatprep.mubr.bf16.mxu0 0
  %6694 = vmatmul.mubr.bf16.gmra.mrb[0].mxu0 %v6453
  %v6695 = vpop.f32.mrb[0].mxu0
  %v6696 = vadd.f32 %v6308, %v6695
  %v6697 = vpop.f32.mrb[0].mxu0
  %v6698 = vpop.f32.mrb[0].mxu0
  %v6699 = vadd.f32 %v6311, %v6698
  %v6700 = vpop.f32.mrb[0].mxu0
  %6701 = vmatprep.mubr.bf16.mxu0 0
  %6702 = vmatmul.mubr.bf16.gmra.mrb[0].mxu0 %v6456
  %v6703 = vpop.f32.mrb[0].mxu0
  %v6704 = vadd.f32 %v6316, %v6703
  %v6705 = vpop.f32.mrb[0].mxu0
  %v6706 = vpop.f32.mrb[0].mxu0
  %v6707 = vadd.f32 %v6319, %v6706
  %v6708 = vpop.f32.mrb[0].mxu0
  %6709 = vmatprep.mubr.bf16.mxu0 0
  %6710 = vmatmul.mubr.bf16.gmra.mrb[0].mxu0 %v6459
  %v6711 = vpop.f32.mrb[0].mxu0
  %v6712 = vadd.f32 %v6324, %v6711
  %v6713 = vpop.f32.mrb[0].mxu0
  %v6714 = vpop.f32.mrb[0].mxu0
  %v6715 = vadd.f32 %v6327, %v6714
  %v6716 = vpop.f32.mrb[0].mxu0
  %6717 = vmatprep.mubr.bf16.mxu0 0
  %6718 = vmatmul.mubr.bf16.gmra.mrb[0].mxu0 %v6462
  %v6719 = vpop.f32.mrb[0].mxu0
  %v6720 = vadd.f32 %v6332, %v6719
  %v6721 = vpop.f32.mrb[0].mxu0
  %v6722 = vpop.f32.mrb[0].mxu0
  %v6723 = vadd.f32 %v6335, %v6722
  %v6724 = vpop.f32.mrb[0].mxu0
  %6725 = vmatprep.mubr.bf16.mxu0 0
  %6726 = vmatmul.mubr.bf16.gmra.mrb[0].mxu0 %v6465
  %v6727 = vpop.f32.mrb[0].mxu0
  %v6728 = vadd.f32 %v6340, %v6727
  %v6729 = vpop.f32.mrb[0].mxu0
  %v6730 = vpop.f32.mrb[0].mxu0
  %v6731 = vadd.f32 %v6343, %v6730
  %v6732 = vpop.f32.mrb[0].mxu0
  %6733 = vmatprep.mubr.bf16.mxu0 0
  %6734 = vmatmul.mubr.bf16.gmra.mrb[0].mxu0 %v6468
  %v6735 = vpop.f32.mrb[0].mxu0
  %v6736 = vadd.f32 %v6348, %v6735
  %v6737 = vpop.f32.mrb[0].mxu0
  %v6738 = vpop.f32.mrb[0].mxu0
  %v6739 = vadd.f32 %v6351, %v6738
  %v6740 = vpop.f32.mrb[0].mxu0
  %6741 = vmatprep.mubr.bf16.mxu0 0
  %6742 = vmatmul.mubr.bf16.gmra.mrb[0].mxu0 %v6471
  %v6743 = vpop.f32.mrb[0].mxu0
  %v6744 = vadd.f32 %v6356, %v6743
  %v6745 = vpop.f32.mrb[0].mxu0
  %v6746 = vpop.f32.mrb[0].mxu0
  %v6747 = vadd.f32 %v6359, %v6746
  %v6748 = vpop.f32.mrb[0].mxu0
  %6749 = vmatprep.mubr.bf16.mxu0 0
  %6750 = vmatmul.mubr.bf16.gmra.mrb[0].mxu0 %v6474
  %v6751 = vpop.f32.mrb[0].mxu0
  %v6752 = vadd.f32 %v6364, %v6751
  %v6753 = vpop.f32.mrb[0].mxu0
  %v6754 = vpop.f32.mrb[0].mxu0
  %v6755 = vadd.f32 %v6367, %v6754
  %v6756 = vpop.f32.mrb[0].mxu0
  %6757 = vmatprep.mubr.bf16.mxu0 0
  %6758 = vmatmul.mubr.bf16.gmra.mrb[0].mxu0 %v6477
  %v6759 = vpop.f32.mrb[0].mxu0
  %v6760 = vadd.f32 %v6372, %v6759
  %v6761 = vpop.f32.mrb[0].mxu0
  %v6762 = vpop.f32.mrb[0].mxu0
  %v6763 = vadd.f32 %v6375, %v6762
  %v6764 = vpop.f32.mrb[0].mxu0
  %6765 = vmatprep.mubr.bf16.mxu0 0
  %6766 = vmatmul.mubr.bf16.gmra.mrb[0].mxu0 %v6480
  %v6767 = vpop.f32.mrb[0].mxu0
  %v6768 = vadd.f32 %v6380, %v6767
  %v6769 = vpop.f32.mrb[0].mxu0
  %v6770 = vpop.f32.mrb[0].mxu0
  %v6771 = vadd.f32 %v6383, %v6770
  %v6772 = vpop.f32.mrb[0].mxu0
  %6773 = vdwg.mxu0
  %v6774 = vld [vmem:[#allocation3 + $0x2] sm:$0xff]
  %v6775 = vld [vmem:[#allocation3 + $0xa] sm:$0xff]
  %v6776 = vld [vmem:[#allocation3 + $0x1a] sm:$0xff]
  %v6777 = vld [vmem:[#allocation3 + $0x22] sm:$0xff]
  %v6778 = vld [vmem:[#allocation3 + $0x32] sm:$0xff]
  %v6779 = vld [vmem:[#allocation3 + $0x3a] sm:$0xff]
  %v6780 = vld [vmem:[#allocation3 + $0x4a] sm:$0xff]
  %v6781 = vld [vmem:[#allocation3 + $0x52] sm:$0xff]
  %v6782 = vld [vmem:[#allocation3 + $0x62] sm:$0xff]
  %v6783 = vld [vmem:[#allocation3 + $0x6a] sm:$0xff]
  %v6784 = vld [vmem:[#allocation3 + $0x7a] sm:$0xff]
  %v6785 = vld [vmem:[#allocation3 + $0x82] sm:$0xff]
  %v6786 = vld [vmem:[#allocation3 + $0x92] sm:$0xff]
  %v6787 = vld [vmem:[#allocation3 + $0x9a] sm:$0xff]
  %v6788 = vld [vmem:[#allocation3 + $0xaa] sm:$0xff]
  %v6789 = vld [vmem:[#allocation3 + $0xb2] sm:$0xff]
  %v6790 = vld [vmem:[#allocation3 + $0xc2] sm:$0xff]
  %v6791 = vld [vmem:[#allocation3 + $0xca] sm:$0xff]
  %v6792 = vld [vmem:[#allocation3 + $0xda] sm:$0xff]
  %v6793 = vld [vmem:[#allocation3 + $0xe2] sm:$0xff]
  %v6794 = vld [vmem:[#allocation3 + $0xf2] sm:$0xff]
  %v6795 = vld [vmem:[#allocation3 + $0xfa] sm:$0xff]
  %v6796 = vld [vmem:[#allocation3 + $0x10a] sm:$0xff]
  %v6797 = vld [vmem:[#allocation3 + $0x112] sm:$0xff]
  %v6798 = vld [vmem:[#allocation3 + $0x122] sm:$0xff]
  %v6799 = vld [vmem:[#allocation3 + $0x12a] sm:$0xff]
  %v6800 = vld [vmem:[#allocation3 + $0x13a] sm:$0xff]
  %v6801 = vld [vmem:[#allocation3 + $0x142] sm:$0xff]
  %v6802 = vld [vmem:[#allocation3 + $0x152] sm:$0xff]
  %v6803 = vld [vmem:[#allocation3 + $0x15a] sm:$0xff]
  %v6804 = vld [vmem:[#allocation3 + $0x16a] sm:$0xff]
  %v6805 = vld [vmem:[#allocation3 + $0x172] sm:$0xff]
  %v6806 = vld [vmem:[#allocation3 + $0x1b2] sm:$0xff]
  %v6807 = vld [vmem:[#allocation3 + $0x1ba] sm:$0xff]
  %v6808 = vld [vmem:[#allocation3 + $0x1ca] sm:$0xff]
  %v6809 = vld [vmem:[#allocation3 + $0x1d2] sm:$0xff]
  %v6810 = vld [vmem:[#allocation3 + $0x1e2] sm:$0xff]
  %v6811 = vld [vmem:[#allocation3 + $0x1ea] sm:$0xff]
  %v6812 = vld [vmem:[#allocation3 + $0x1fa] sm:$0xff]
  %v6813 = vld [vmem:[#allocation3 + $0x202] sm:$0xff]
  %v6814 = vld [vmem:[#allocation3 + $0x212] sm:$0xff]
  %v6815 = vld [vmem:[#allocation3 + $0x21a] sm:$0xff]
  %v6816 = vld [vmem:[#allocation3 + $0x22a] sm:$0xff]
  %v6817 = vld [vmem:[#allocation3 + $0x232] sm:$0xff]
  %v6818 = vld [vmem:[#allocation3 + $0x242] sm:$0xff]
  %v6819 = vld [vmem:[#allocation3 + $0x24a] sm:$0xff]
  %v6820 = vld [vmem:[#allocation3 + $0x25a] sm:$0xff]
  %v6821 = vld [vmem:[#allocation3 + $0x262] sm:$0xff]
  %v6822 = vld [vmem:[#allocation3 + $0x272] sm:$0xff]
  %v6823 = vld [vmem:[#allocation3 + $0x27a] sm:$0xff]
  %v6824 = vld [vmem:[#allocation3 + $0x28a] sm:$0xff]
  %v6825 = vld [vmem:[#allocation3 + $0x292] sm:$0xff]
  %v6826 = vld [vmem:[#allocation3 + $0x2a2] sm:$0xff]
  %v6827 = vld [vmem:[#allocation3 + $0x2aa] sm:$0xff]
  %v6828 = vld [vmem:[#allocation3 + $0x2ba] sm:$0xff]
  %v6829 = vld [vmem:[#allocation3 + $0x2c2] sm:$0xff]
  %v6830 = vld [vmem:[#allocation3 + $0x2d2] sm:$0xff]
  %v6831 = vld [vmem:[#allocation3 + $0x2da] sm:$0xff]
  %v6832 = vld [vmem:[#allocation3 + $0x2ea] sm:$0xff]
  %v6833 = vld [vmem:[#allocation3 + $0x2f2] sm:$0xff]
  %v6834 = vld [vmem:[#allocation3 + $0x302] sm:$0xff]
  %v6835 = vld [vmem:[#allocation3 + $0x30a] sm:$0xff]
  %v6836 = vld [vmem:[#allocation3 + $0x31a] sm:$0xff]
  %v6837 = vld [vmem:[#allocation3 + $0x322] sm:$0xff]
  %v6838 = vpack.c.bf16 %v6775, %v6774
  %v6839 = vpack.c.bf16 %v6777, %v6776
  %v6840 = vpack.c.bf16 %v6779, %v6778
  %v6841 = vpack.c.bf16 %v6781, %v6780
  %v6842 = vpack.c.bf16 %v6783, %v6782
  %v6843 = vpack.c.bf16 %v6785, %v6784
  %v6844 = vpack.c.bf16 %v6787, %v6786
  %v6845 = vpack.c.bf16 %v6789, %v6788
  %v6846 = vpack.c.bf16 %v6791, %v6790
  %v6847 = vpack.c.bf16 %v6793, %v6792
  %v6848 = vpack.c.bf16 %v6795, %v6794
  %v6849 = vpack.c.bf16 %v6797, %v6796
  %v6850 = vpack.c.bf16 %v6799, %v6798
  %v6851 = vpack.c.bf16 %v6801, %v6800
  %v6852 = vpack.c.bf16 %v6803, %v6802
  %v6853 = vpack.c.bf16 %v6805, %v6804
  %v6854 = vpack.c.bf16 %v6807, %v6806
  %v6855 = vpack.c.bf16 %v6809, %v6808
  %v6856 = vpack.c.bf16 %v6811, %v6810
  %v6857 = vpack.c.bf16 %v6813, %v6812
  %v6858 = vpack.c.bf16 %v6815, %v6814
  %v6859 = vpack.c.bf16 %v6817, %v6816
  %v6860 = vpack.c.bf16 %v6819, %v6818
  %v6861 = vpack.c.bf16 %v6821, %v6820
  %v6862 = vpack.c.bf16 %v6823, %v6822
  %v6863 = vpack.c.bf16 %v6825, %v6824
  %v6864 = vpack.c.bf16 %v6827, %v6826
  %v6865 = vpack.c.bf16 %v6829, %v6828
  %v6866 = vpack.c.bf16 %v6831, %v6830
  %v6867 = vpack.c.bf16 %v6833, %v6832
  %v6868 = vpack.c.bf16 %v6835, %v6834
  %v6869 = vpack.c.bf16 %v6837, %v6836
  %s6870 = scalar_lea.vmem %s2, 8
  %v6871 = vld [vmem:[%s6870] sm:$0xf]
  %v6873 = vsel %vm5056, %v6838, 0
  %v6876 = vsel %vm5056, %v6839, 0
  %v6879 = vsel %vm5056, %v6840, 0
  %v6882 = vsel %vm5056, %v6841, 0
  %v6885 = vsel %vm5056, %v6842, 0
  %v6888 = vsel %vm5056, %v6843, 0
  %v6891 = vsel %vm5056, %v6844, 0
  %v6894 = vsel %vm5056, %v6845, 0
  %v6897 = vsel %vm5056, %v6846, 0
  %v6900 = vsel %vm5056, %v6847, 0
  %v6903 = vsel %vm5056, %v6848, 0
  %v6906 = vsel %vm5056, %v6849, 0
  %v6909 = vsel %vm5056, %v6850, 0
  %v6912 = vsel %vm5056, %v6851, 0
  %v6915 = vsel %vm5056, %v6852, 0
  %v6918 = vsel %vm5056, %v6853, 0
  %v6921 = vsel %vm5056, %v6854, 0
  %v6924 = vsel %vm5056, %v6855, 0
  %v6927 = vsel %vm5056, %v6856, 0
  %v6930 = vsel %vm5056, %v6857, 0
  %v6933 = vsel %vm5056, %v6858, 0
  %v6936 = vsel %vm5056, %v6859, 0
  %v6939 = vsel %vm5056, %v6860, 0
  %v6942 = vsel %vm5056, %v6861, 0
  %v6945 = vsel %vm5056, %v6862, 0
  %v6948 = vsel %vm5056, %v6863, 0
  %v6951 = vsel %vm5056, %v6864, 0
  %v6954 = vsel %vm5056, %v6865, 0
  %v6957 = vsel %vm5056, %v6866, 0
  %v6960 = vsel %vm5056, %v6867, 0
  %v6963 = vsel %vm5056, %v6868, 0
  %v6966 = vsel %vm5056, %v6869, 0
  %v6969 = vsel %vm6093, %v6871, 0
  %6971 = vmatprep.subr.bf16.mxu0 0
  %6972 = vmatpush1.bf16.msra.mxu0 %v6969
  %6973 = vmatprep.subr.bf16.mxu0 0
  %6974 = vmatpush1.bf16.msra.mxu0 0
  %6975 = vmatprep.subr.bf16.mxu0 0
  %6976 = vmatpush1.bf16.msra.mxu0 0
  %6977 = vmatprep.subr.bf16.mxu0 0
  %6978 = vmatpush1.bf16.msra.mxu0 0
  %6979 = vmatprep.subr.bf16.mxu0 0
  %6980 = vmatpush1.bf16.msra.mxu0 0
  %6981 = vmatprep.subr.bf16.mxu0 0
  %6982 = vmatpush1.bf16.msra.mxu0 0
  %6983 = vmatprep.subr.bf16.mxu0 0
  %6984 = vmatpush1.bf16.msra.mxu0 0
  %6985 = vmatprep.subr.bf16.mxu0 0
  %6986 = vmatpush1.bf16.msra.mxu0 0
  %6987 = vmatprep.subr.bf16.mxu0 0
  %6988 = vmatpush1.bf16.msra.mxu0 0
  %6989 = vmatprep.subr.bf16.mxu0 0
  %6990 = vmatpush1.bf16.msra.mxu0 0
  %6991 = vmatprep.subr.bf16.mxu0 0
  %6992 = vmatpush1.bf16.msra.mxu0 0
  %6993 = vmatprep.subr.bf16.mxu0 0
  %6994 = vmatpush1.bf16.msra.mxu0 0
  %6995 = vmatprep.subr.bf16.mxu0 0
  %6996 = vmatpush1.bf16.msra.mxu0 0
  %6997 = vmatprep.subr.bf16.mxu0 0
  %6998 = vmatpush1.bf16.msra.mxu0 0
  %6999 = vmatprep.subr.bf16.mxu0 0
  %7000 = vmatpush1.bf16.msra.mxu0 0
  %7001 = vmatprep.subr.bf16.mxu0 0
  %7002 = vmatpush1.bf16.msra.mxu0 0
  %7003 = vmatprep.mubr.bf16.mxu0 0
  %7004 = vmatmul.mubr.bf16.gmra.mrb[0].mxu0 %v6873
  %v7005 = vpop.f32.mrb[0].mxu0
  %v7006 = vadd.f32 0.0, %v7005
  %v7007 = vpop.f32.mrb[0].mxu0
  %v7008 = vpop.f32.mrb[0].mxu0
  %v7009 = vadd.f32 0.0, %v7008
  %v7010 = vpop.f32.mrb[0].mxu0
  %7011 = vmatprep.mubr.bf16.mxu0 0
  %7012 = vmatmul.mubr.bf16.gmra.mrb[0].mxu0 %v6876
  %v7013 = vpop.f32.mrb[0].mxu0
  %v7014 = vadd.f32 0.0, %v7013
  %v7015 = vpop.f32.mrb[0].mxu0
  %v7016 = vpop.f32.mrb[0].mxu0
  %v7017 = vadd.f32 0.0, %v7016
  %v7018 = vpop.f32.mrb[0].mxu0
  %7019 = vmatprep.mubr.bf16.mxu0 0
  %7020 = vmatmul.mubr.bf16.gmra.mrb[0].mxu0 %v6879
  %v7021 = vpop.f32.mrb[0].mxu0
  %v7022 = vadd.f32 0.0, %v7021
  %v7023 = vpop.f32.mrb[0].mxu0
  %v7024 = vpop.f32.mrb[0].mxu0
  %v7025 = vadd.f32 0.0, %v7024
  %v7026 = vpop.f32.mrb[0].mxu0
  %7027 = vmatprep.mubr.bf16.mxu0 0
  %7028 = vmatmul.mubr.bf16.gmra.mrb[0].mxu0 %v6882
  %v7029 = vpop.f32.mrb[0].mxu0
  %v7030 = vadd.f32 0.0, %v7029
  %v7031 = vpop.f32.mrb[0].mxu0
  %v7032 = vpop.f32.mrb[0].mxu0
  %v7033 = vadd.f32 0.0, %v7032
  %v7034 = vpop.f32.mrb[0].mxu0
  %7035 = vmatprep.mubr.bf16.mxu0 0
  %7036 = vmatmul.mubr.bf16.gmra.mrb[0].mxu0 %v6885
  %v7037 = vpop.f32.mrb[0].mxu0
  %v7038 = vadd.f32 0.0, %v7037
  %v7039 = vpop.f32.mrb[0].mxu0
  %v7040 = vpop.f32.mrb[0].mxu0
  %v7041 = vadd.f32 0.0, %v7040
  %v7042 = vpop.f32.mrb[0].mxu0
  %7043 = vmatprep.mubr.bf16.mxu0 0
  %7044 = vmatmul.mubr.bf16.gmra.mrb[0].mxu0 %v6888
  %v7045 = vpop.f32.mrb[0].mxu0
  %v7046 = vadd.f32 0.0, %v7045
  %v7047 = vpop.f32.mrb[0].mxu0
  %v7048 = vpop.f32.mrb[0].mxu0
  %v7049 = vadd.f32 0.0, %v7048
  %v7050 = vpop.f32.mrb[0].mxu0
  %7051 = vmatprep.mubr.bf16.mxu0 0
  %7052 = vmatmul.mubr.bf16.gmra.mrb[0].mxu0 %v6891
  %v7053 = vpop.f32.mrb[0].mxu0
  %v7054 = vadd.f32 0.0, %v7053
  %v7055 = vpop.f32.mrb[0].mxu0
  %v7056 = vpop.f32.mrb[0].mxu0
  %v7057 = vadd.f32 0.0, %v7056
  %v7058 = vpop.f32.mrb[0].mxu0
  %7059 = vmatprep.mubr.bf16.mxu0 0
  %7060 = vmatmul.mubr.bf16.gmra.mrb[0].mxu0 %v6894
  %v7061 = vpop.f32.mrb[0].mxu0
  %v7062 = vadd.f32 0.0, %v7061
  %v7063 = vpop.f32.mrb[0].mxu0
  %v7064 = vpop.f32.mrb[0].mxu0
  %v7065 = vadd.f32 0.0, %v7064
  %v7066 = vpop.f32.mrb[0].mxu0
  %7067 = vmatprep.mubr.bf16.mxu0 0
  %7068 = vmatmul.mubr.bf16.gmra.mrb[0].mxu0 %v6897
  %v7069 = vpop.f32.mrb[0].mxu0
  %v7070 = vadd.f32 0.0, %v7069
  %v7071 = vpop.f32.mrb[0].mxu0
  %v7072 = vpop.f32.mrb[0].mxu0
  %v7073 = vadd.f32 0.0, %v7072
  %v7074 = vpop.f32.mrb[0].mxu0
  %7075 = vmatprep.mubr.bf16.mxu0 0
  %7076 = vmatmul.mubr.bf16.gmra.mrb[0].mxu0 %v6900
  %v7077 = vpop.f32.mrb[0].mxu0
  %v7078 = vadd.f32 0.0, %v7077
  %v7079 = vpop.f32.mrb[0].mxu0
  %v7080 = vpop.f32.mrb[0].mxu0
  %v7081 = vadd.f32 0.0, %v7080
  %v7082 = vpop.f32.mrb[0].mxu0
  %7083 = vmatprep.mubr.bf16.mxu0 0
  %7084 = vmatmul.mubr.bf16.gmra.mrb[0].mxu0 %v6903
  %v7085 = vpop.f32.mrb[0].mxu0
  %v7086 = vadd.f32 0.0, %v7085
  %v7087 = vpop.f32.mrb[0].mxu0
  %v7088 = vpop.f32.mrb[0].mxu0
  %v7089 = vadd.f32 0.0, %v7088
  %v7090 = vpop.f32.mrb[0].mxu0
  %7091 = vmatprep.mubr.bf16.mxu0 0
  %7092 = vmatmul.mubr.bf16.gmra.mrb[0].mxu0 %v6906
  %v7093 = vpop.f32.mrb[0].mxu0
  %v7094 = vadd.f32 0.0, %v7093
  %v7095 = vpop.f32.mrb[0].mxu0
  %v7096 = vpop.f32.mrb[0].mxu0
  %v7097 = vadd.f32 0.0, %v7096
  %v7098 = vpop.f32.mrb[0].mxu0
  %7099 = vmatprep.mubr.bf16.mxu0 0
  %7100 = vmatmul.mubr.bf16.gmra.mrb[0].mxu0 %v6909
  %v7101 = vpop.f32.mrb[0].mxu0
  %v7102 = vadd.f32 0.0, %v7101
  %v7103 = vpop.f32.mrb[0].mxu0
  %v7104 = vpop.f32.mrb[0].mxu0
  %v7105 = vadd.f32 0.0, %v7104
  %v7106 = vpop.f32.mrb[0].mxu0
  %7107 = vmatprep.mubr.bf16.mxu0 0
  %7108 = vmatmul.mubr.bf16.gmra.mrb[0].mxu0 %v6912
  %v7109 = vpop.f32.mrb[0].mxu0
  %v7110 = vadd.f32 0.0, %v7109
  %v7111 = vpop.f32.mrb[0].mxu0
  %v7112 = vpop.f32.mrb[0].mxu0
  %v7113 = vadd.f32 0.0, %v7112
  %v7114 = vpop.f32.mrb[0].mxu0
  %7115 = vmatprep.mubr.bf16.mxu0 0
  %7116 = vmatmul.mubr.bf16.gmra.mrb[0].mxu0 %v6915
  %v7117 = vpop.f32.mrb[0].mxu0
  %v7118 = vadd.f32 0.0, %v7117
  %v7119 = vpop.f32.mrb[0].mxu0
  %v7120 = vpop.f32.mrb[0].mxu0
  %v7121 = vadd.f32 0.0, %v7120
  %v7122 = vpop.f32.mrb[0].mxu0
  %7123 = vmatprep.mubr.bf16.mxu0 0
  %7124 = vmatmul.mubr.bf16.gmra.mrb[0].mxu0 %v6918
  %v7125 = vpop.f32.mrb[0].mxu0
  %v7126 = vadd.f32 0.0, %v7125
  %v7127 = vpop.f32.mrb[0].mxu0
  %v7128 = vpop.f32.mrb[0].mxu0
  %v7129 = vadd.f32 0.0, %v7128
  %v7130 = vpop.f32.mrb[0].mxu0
  %7131 = vmatprep.mubr.bf16.mxu0 0
  %7132 = vmatmul.mubr.bf16.gmra.mrb[0].mxu0 %v6921
  %v7133 = vpop.f32.mrb[0].mxu0
  %v7134 = vadd.f32 0.0, %v7133
  %v7135 = vpop.f32.mrb[0].mxu0
  %v7136 = vpop.f32.mrb[0].mxu0
  %v7137 = vadd.f32 0.0, %v7136
  %v7138 = vpop.f32.mrb[0].mxu0
  %7139 = vmatprep.mubr.bf16.mxu0 0
  %7140 = vmatmul.mubr.bf16.gmra.mrb[0].mxu0 %v6924
  %v7141 = vpop.f32.mrb[0].mxu0
  %v7142 = vadd.f32 0.0, %v7141
  %v7143 = vpop.f32.mrb[0].mxu0
  %v7144 = vpop.f32.mrb[0].mxu0
  %v7145 = vadd.f32 0.0, %v7144
  %v7146 = vpop.f32.mrb[0].mxu0
  %7147 = vmatprep.mubr.bf16.mxu0 0
  %7148 = vmatmul.mubr.bf16.gmra.mrb[0].mxu0 %v6927
  %v7149 = vpop.f32.mrb[0].mxu0
  %v7150 = vadd.f32 0.0, %v7149
  %v7151 = vpop.f32.mrb[0].mxu0
  %v7152 = vpop.f32.mrb[0].mxu0
  %v7153 = vadd.f32 0.0, %v7152
  %v7154 = vpop.f32.mrb[0].mxu0
  %7155 = vmatprep.mubr.bf16.mxu0 0
  %7156 = vmatmul.mubr.bf16.gmra.mrb[0].mxu0 %v6930
  %v7157 = vpop.f32.mrb[0].mxu0
  %v7158 = vadd.f32 0.0, %v7157
  %v7159 = vpop.f32.mrb[0].mxu0
  %v7160 = vpop.f32.mrb[0].mxu0
  %v7161 = vadd.f32 0.0, %v7160
  %v7162 = vpop.f32.mrb[0].mxu0
  %7163 = vmatprep.mubr.bf16.mxu0 0
  %7164 = vmatmul.mubr.bf16.gmra.mrb[0].mxu0 %v6933
  %v7165 = vpop.f32.mrb[0].mxu0
  %v7166 = vadd.f32 0.0, %v7165
  %v7167 = vpop.f32.mrb[0].mxu0
  %v7168 = vpop.f32.mrb[0].mxu0
  %v7169 = vadd.f32 0.0, %v7168
  %v7170 = vpop.f32.mrb[0].mxu0
  %7171 = vmatprep.mubr.bf16.mxu0 0
  %7172 = vmatmul.mubr.bf16.gmra.mrb[0].mxu0 %v6936
  %v7173 = vpop.f32.mrb[0].mxu0
  %v7174 = vadd.f32 0.0, %v7173
  %v7175 = vpop.f32.mrb[0].mxu0
  %v7176 = vpop.f32.mrb[0].mxu0
  %v7177 = vadd.f32 0.0, %v7176
  %v7178 = vpop.f32.mrb[0].mxu0
  %7179 = vmatprep.mubr.bf16.mxu0 0
  %7180 = vmatmul.mubr.bf16.gmra.mrb[0].mxu0 %v6939
  %v7181 = vpop.f32.mrb[0].mxu0
  %v7182 = vadd.f32 0.0, %v7181
  %v7183 = vpop.f32.mrb[0].mxu0
  %v7184 = vpop.f32.mrb[0].mxu0
  %v7185 = vadd.f32 0.0, %v7184
  %v7186 = vpop.f32.mrb[0].mxu0
  %7187 = vmatprep.mubr.bf16.mxu0 0
  %7188 = vmatmul.mubr.bf16.gmra.mrb[0].mxu0 %v6942
  %v7189 = vpop.f32.mrb[0].mxu0
  %v7190 = vadd.f32 0.0, %v7189
  %v7191 = vpop.f32.mrb[0].mxu0
  %v7192 = vpop.f32.mrb[0].mxu0
  %v7193 = vadd.f32 0.0, %v7192
  %v7194 = vpop.f32.mrb[0].mxu0
  %7195 = vmatprep.mubr.bf16.mxu0 0
  %7196 = vmatmul.mubr.bf16.gmra.mrb[0].mxu0 %v6945
  %v7197 = vpop.f32.mrb[0].mxu0
  %v7198 = vadd.f32 0.0, %v7197
  %v7199 = vpop.f32.mrb[0].mxu0
  %v7200 = vpop.f32.mrb[0].mxu0
  %v7201 = vadd.f32 0.0, %v7200
  %v7202 = vpop.f32.mrb[0].mxu0
  %7203 = vmatprep.mubr.bf16.mxu0 0
  %7204 = vmatmul.mubr.bf16.gmra.mrb[0].mxu0 %v6948
  %v7205 = vpop.f32.mrb[0].mxu0
  %v7206 = vadd.f32 0.0, %v7205
  %v7207 = vpop.f32.mrb[0].mxu0
  %v7208 = vpop.f32.mrb[0].mxu0
  %v7209 = vadd.f32 0.0, %v7208
  %v7210 = vpop.f32.mrb[0].mxu0
  %7211 = vmatprep.mubr.bf16.mxu0 0
  %7212 = vmatmul.mubr.bf16.gmra.mrb[0].mxu0 %v6951
  %v7213 = vpop.f32.mrb[0].mxu0
  %v7214 = vadd.f32 0.0, %v7213
  %v7215 = vpop.f32.mrb[0].mxu0
  %v7216 = vpop.f32.mrb[0].mxu0
  %v7217 = vadd.f32 0.0, %v7216
  %v7218 = vpop.f32.mrb[0].mxu0
  %7219 = vmatprep.mubr.bf16.mxu0 0
  %7220 = vmatmul.mubr.bf16.gmra.mrb[0].mxu0 %v6954
  %v7221 = vpop.f32.mrb[0].mxu0
  %v7222 = vadd.f32 0.0, %v7221
  %v7223 = vpop.f32.mrb[0].mxu0
  %v7224 = vpop.f32.mrb[0].mxu0
  %v7225 = vadd.f32 0.0, %v7224
  %v7226 = vpop.f32.mrb[0].mxu0
  %7227 = vmatprep.mubr.bf16.mxu0 0
  %7228 = vmatmul.mubr.bf16.gmra.mrb[0].mxu0 %v6957
  %v7229 = vpop.f32.mrb[0].mxu0
  %v7230 = vadd.f32 0.0, %v7229
  %v7231 = vpop.f32.mrb[0].mxu0
  %v7232 = vpop.f32.mrb[0].mxu0
  %v7233 = vadd.f32 0.0, %v7232
  %v7234 = vpop.f32.mrb[0].mxu0
  %7235 = vmatprep.mubr.bf16.mxu0 0
  %7236 = vmatmul.mubr.bf16.gmra.mrb[0].mxu0 %v6960
  %v7237 = vpop.f32.mrb[0].mxu0
  %v7238 = vadd.f32 0.0, %v7237
  %v7239 = vpop.f32.mrb[0].mxu0
  %v7240 = vpop.f32.mrb[0].mxu0
  %v7241 = vadd.f32 0.0, %v7240
  %v7242 = vpop.f32.mrb[0].mxu0
  %7243 = vmatprep.mubr.bf16.mxu0 0
  %7244 = vmatmul.mubr.bf16.gmra.mrb[0].mxu0 %v6963
  %v7245 = vpop.f32.mrb[0].mxu0
  %v7246 = vadd.f32 0.0, %v7245
  %v7247 = vpop.f32.mrb[0].mxu0
  %v7248 = vpop.f32.mrb[0].mxu0
  %v7249 = vadd.f32 0.0, %v7248
  %v7250 = vpop.f32.mrb[0].mxu0
  %7251 = vmatprep.mubr.bf16.mxu0 0
  %7252 = vmatmul.mubr.bf16.gmra.mrb[0].mxu0 %v6966
  %v7253 = vpop.f32.mrb[0].mxu0
  %v7254 = vadd.f32 0.0, %v7253
  %v7255 = vpop.f32.mrb[0].mxu0
  %v7256 = vpop.f32.mrb[0].mxu0
  %v7257 = vadd.f32 0.0, %v7256
  %v7258 = vpop.f32.mrb[0].mxu0
  %7259 = vdwg.mxu0
  %v7260 = vadd.f32 %v6520, %v7006
  %v7261 = vadd.f32 %v6523, %v7009
  %v7262 = vadd.f32 %v6528, %v7014
  %v7263 = vadd.f32 %v6531, %v7017
  %v7264 = vadd.f32 %v6536, %v7022
  %v7265 = vadd.f32 %v6539, %v7025
  %v7266 = vadd.f32 %v6544, %v7030
  %v7267 = vadd.f32 %v6547, %v7033
  %v7268 = vadd.f32 %v6552, %v7038
  %v7269 = vadd.f32 %v6555, %v7041
  %v7270 = vadd.f32 %v6560, %v7046
  %v7271 = vadd.f32 %v6563, %v7049
  %v7272 = vadd.f32 %v6568, %v7054
  %v7273 = vadd.f32 %v6571, %v7057
  %v7274 = vadd.f32 %v6576, %v7062
  %v7275 = vadd.f32 %v6579, %v7065
  %v7276 = vadd.f32 %v6584, %v7070
  %v7277 = vadd.f32 %v6587, %v7073
  %v7278 = vadd.f32 %v6592, %v7078
  %v7279 = vadd.f32 %v6595, %v7081
  %v7280 = vadd.f32 %v6600, %v7086
  %v7281 = vadd.f32 %v6603, %v7089
  %v7282 = vadd.f32 %v6608, %v7094
  %v7283 = vadd.f32 %v6611, %v7097
  %v7284 = vadd.f32 %v6616, %v7102
  %v7285 = vadd.f32 %v6619, %v7105
  %v7286 = vadd.f32 %v6624, %v7110
  %v7287 = vadd.f32 %v6627, %v7113
  %v7288 = vadd.f32 %v6632, %v7118
  %v7289 = vadd.f32 %v6635, %v7121
  %v7290 = vadd.f32 %v6640, %v7126
  %v7291 = vadd.f32 %v6643, %v7129
  %v7292 = vadd.f32 %v6648, %v7134
  %v7293 = vadd.f32 %v6651, %v7137
  %v7294 = vadd.f32 %v6656, %v7142
  %v7295 = vadd.f32 %v6659, %v7145
  %v7296 = vadd.f32 %v6664, %v7150
  %v7297 = vadd.f32 %v6667, %v7153
  %v7298 = vadd.f32 %v6672, %v7158
  %v7299 = vadd.f32 %v6675, %v7161
  %v7300 = vadd.f32 %v6680, %v7166
  %v7301 = vadd.f32 %v6683, %v7169
  %v7302 = vadd.f32 %v6688, %v7174
  %v7303 = vadd.f32 %v6691, %v7177
  %v7304 = vadd.f32 %v6696, %v7182
  %v7305 = vadd.f32 %v6699, %v7185
  %v7306 = vadd.f32 %v6704, %v7190
  %v7307 = vadd.f32 %v6707, %v7193
  %v7308 = vadd.f32 %v6712, %v7198
  %v7309 = vadd.f32 %v6715, %v7201
  %v7310 = vadd.f32 %v6720, %v7206
  %v7311 = vadd.f32 %v6723, %v7209
  %v7312 = vadd.f32 %v6728, %v7214
  %v7313 = vadd.f32 %v6731, %v7217
  %v7314 = vadd.f32 %v6736, %v7222
  %v7315 = vadd.f32 %v6739, %v7225
  %v7316 = vadd.f32 %v6744, %v7230
  %v7317 = vadd.f32 %v6747, %v7233
  %v7318 = vadd.f32 %v6752, %v7238
  %v7319 = vadd.f32 %v6755, %v7241
  %v7320 = vadd.f32 %v6760, %v7246
  %v7321 = vadd.f32 %v6763, %v7249
  %v7322 = vadd.f32 %v6768, %v7254
  %v7323 = vadd.f32 %v6771, %v7257
  %v7324 = vld [vmem:[%s5672] sm:$0xff]
  %v7325 = vld [vmem:[%s5672 + $0x8] sm:$0xff]
  %v7326 = vld [vmem:[%s5672 + $0x18] sm:$0xff]
  %v7327 = vld [vmem:[%s5672 + $0x20] sm:$0xff]
  %v7328 = vld [vmem:[%s5672 + $0x30] sm:$0xff]
  %v7329 = vld [vmem:[%s5672 + $0x38] sm:$0xff]
  %v7330 = vld [vmem:[%s5672 + $0x48] sm:$0xff]
  %v7331 = vld [vmem:[%s5672 + $0x50] sm:$0xff]
  %v7332 = vld [vmem:[%s5672 + $0x60] sm:$0xff]
  %v7333 = vld [vmem:[%s5672 + $0x68] sm:$0xff]
  %v7334 = vld [vmem:[%s5672 + $0x78] sm:$0xff]
  %v7335 = vld [vmem:[%s5672 + $0x80] sm:$0xff]
  %v7336 = vld [vmem:[%s5672 + $0x90] sm:$0xff]
  %v7337 = vld [vmem:[%s5672 + $0x98] sm:$0xff]
  %v7338 = vld [vmem:[%s5672 + $0xa8] sm:$0xff]
  %v7339 = vld [vmem:[%s5672 + $0xb0] sm:$0xff]
  %v7340 = vld [vmem:[%s5672 + $0xc0] sm:$0xff]
  %v7341 = vld [vmem:[%s5672 + $0xc8] sm:$0xff]
  %v7342 = vld [vmem:[%s5672 + $0xd8] sm:$0xff]
  %v7343 = vld [vmem:[%s5672 + $0xe0] sm:$0xff]
  %v7344 = vld [vmem:[%s5672 + $0xf0] sm:$0xff]
  %v7345 = vld [vmem:[%s5672 + $0xf8] sm:$0xff]
  %v7346 = vld [vmem:[%s5672 + $0x108] sm:$0xff]
  %v7347 = vld [vmem:[%s5672 + $0x110] sm:$0xff]
  %v7348 = vld [vmem:[%s5672 + $0x120] sm:$0xff]
  %v7349 = vld [vmem:[%s5672 + $0x128] sm:$0xff]
  %v7350 = vld [vmem:[%s5672 + $0x138] sm:$0xff]
  %v7351 = vld [vmem:[%s5672 + $0x140] sm:$0xff]
  %v7352 = vld [vmem:[%s5672 + $0x150] sm:$0xff]
  %v7353 = vld [vmem:[%s5672 + $0x158] sm:$0xff]
  %v7354 = vld [vmem:[%s5672 + $0x168] sm:$0xff]
  %v7355 = vld [vmem:[%s5672 + $0x170] sm:$0xff]
  %v7356 = vld [vmem:[%s5672 + $0x1b0] sm:$0xff]
  %v7357 = vld [vmem:[%s5672 + $0x1b8] sm:$0xff]
  %v7358 = vld [vmem:[%s5672 + $0x1c8] sm:$0xff]
  %v7359 = vld [vmem:[%s5672 + $0x1d0] sm:$0xff]
  %v7360 = vld [vmem:[%s5672 + $0x1e0] sm:$0xff]
  %v7361 = vld [vmem:[%s5672 + $0x1e8] sm:$0xff]
  %v7362 = vld [vmem:[%s5672 + $0x1f8] sm:$0xff]
  %v7363 = vld [vmem:[%s5672 + $0x200] sm:$0xff]
  %v7364 = vld [vmem:[%s5672 + $0x210] sm:$0xff]
  %v7365 = vld [vmem:[%s5672 + $0x218] sm:$0xff]
  %v7366 = vld [vmem:[%s5672 + $0x228] sm:$0xff]
  %v7367 = vld [vmem:[%s5672 + $0x230] sm:$0xff]
  %v7368 = vld [vmem:[%s5672 + $0x240] sm:$0xff]
  %v7369 = vld [vmem:[%s5672 + $0x248] sm:$0xff]
  %v7370 = vld [vmem:[%s5672 + $0x258] sm:$0xff]
  %v7371 = vld [vmem:[%s5672 + $0x260] sm:$0xff]
  %v7372 = vld [vmem:[%s5672 + $0x270] sm:$0xff]
  %v7373 = vld [vmem:[%s5672 + $0x278] sm:$0xff]
  %v7374 = vld [vmem:[%s5672 + $0x288] sm:$0xff]
  %v7375 = vld [vmem:[%s5672 + $0x290] sm:$0xff]
  %v7376 = vld [vmem:[%s5672 + $0x2a0] sm:$0xff]
  %v7377 = vld [vmem:[%s5672 + $0x2a8] sm:$0xff]
  %v7378 = vld [vmem:[%s5672 + $0x2b8] sm:$0xff]
  %v7379 = vld [vmem:[%s5672 + $0x2c0] sm:$0xff]
  %v7380 = vld [vmem:[%s5672 + $0x2d0] sm:$0xff]
  %v7381 = vld [vmem:[%s5672 + $0x2d8] sm:$0xff]
  %v7382 = vld [vmem:[%s5672 + $0x2e8] sm:$0xff]
  %v7383 = vld [vmem:[%s5672 + $0x2f0] sm:$0xff]
  %v7384 = vld [vmem:[%s5672 + $0x300] sm:$0xff]
  %v7385 = vld [vmem:[%s5672 + $0x308] sm:$0xff]
  %v7386 = vld [vmem:[%s5672 + $0x318] sm:$0xff]
  %v7387 = vld [vmem:[%s5672 + $0x320] sm:$0xff]
  %v7388 = vpack.c.bf16 %v7325, %v7324
  %v7389 = vpack.c.bf16 %v7327, %v7326
  %v7390 = vpack.c.bf16 %v7329, %v7328
  %v7391 = vpack.c.bf16 %v7331, %v7330
  %v7392 = vpack.c.bf16 %v7333, %v7332
  %v7393 = vpack.c.bf16 %v7335, %v7334
  %v7394 = vpack.c.bf16 %v7337, %v7336
  %v7395 = vpack.c.bf16 %v7339, %v7338
  %v7396 = vpack.c.bf16 %v7341, %v7340
  %v7397 = vpack.c.bf16 %v7343, %v7342
  %v7398 = vpack.c.bf16 %v7345, %v7344
  %v7399 = vpack.c.bf16 %v7347, %v7346
  %v7400 = vpack.c.bf16 %v7349, %v7348
  %v7401 = vpack.c.bf16 %v7351, %v7350
  %v7402 = vpack.c.bf16 %v7353, %v7352
  %v7403 = vpack.c.bf16 %v7355, %v7354
  %v7404 = vpack.c.bf16 %v7357, %v7356
  %v7405 = vpack.c.bf16 %v7359, %v7358
  %v7406 = vpack.c.bf16 %v7361, %v7360
  %v7407 = vpack.c.bf16 %v7363, %v7362
  %v7408 = vpack.c.bf16 %v7365, %v7364
  %v7409 = vpack.c.bf16 %v7367, %v7366
  %v7410 = vpack.c.bf16 %v7369, %v7368
  %v7411 = vpack.c.bf16 %v7371, %v7370
  %v7412 = vpack.c.bf16 %v7373, %v7372
  %v7413 = vpack.c.bf16 %v7375, %v7374
  %v7414 = vpack.c.bf16 %v7377, %v7376
  %v7415 = vpack.c.bf16 %v7379, %v7378
  %v7416 = vpack.c.bf16 %v7381, %v7380
  %v7417 = vpack.c.bf16 %v7383, %v7382
  %v7418 = vpack.c.bf16 %v7385, %v7384
  %v7419 = vpack.c.bf16 %v7387, %v7386
  %s7420 = scalar_lea.vmem %s2, 12
  %v7421 = vld [vmem:[%s7420] sm:$0xf]
  %v7423 = vsel %vm5056, %v7388, 0
  %v7426 = vsel %vm5056, %v7389, 0
  %v7429 = vsel %vm5056, %v7390, 0
  %v7432 = vsel %vm5056, %v7391, 0
  %v7435 = vsel %vm5056, %v7392, 0
  %v7438 = vsel %vm5056, %v7393, 0
  %v7441 = vsel %vm5056, %v7394, 0
  %v7444 = vsel %vm5056, %v7395, 0
  %v7447 = vsel %vm5056, %v7396, 0
  %v7450 = vsel %vm5056, %v7397, 0
  %v7453 = vsel %vm5056, %v7398, 0
  %v7456 = vsel %vm5056, %v7399, 0
  %v7459 = vsel %vm5056, %v7400, 0
  %v7462 = vsel %vm5056, %v7401, 0
  %v7465 = vsel %vm5056, %v7402, 0
  %v7468 = vsel %vm5056, %v7403, 0
  %v7471 = vsel %vm5056, %v7404, 0
  %v7474 = vsel %vm5056, %v7405, 0
  %v7477 = vsel %vm5056, %v7406, 0
  %v7480 = vsel %vm5056, %v7407, 0
  %v7483 = vsel %vm5056, %v7408, 0
  %v7486 = vsel %vm5056, %v7409, 0
  %v7489 = vsel %vm5056, %v7410, 0
  %v7492 = vsel %vm5056, %v7411, 0
  %v7495 = vsel %vm5056, %v7412, 0
  %v7498 = vsel %vm5056, %v7413, 0
  %v7501 = vsel %vm5056, %v7414, 0
  %v7504 = vsel %vm5056, %v7415, 0
  %v7507 = vsel %vm5056, %v7416, 0
  %v7510 = vsel %vm5056, %v7417, 0
  %v7513 = vsel %vm5056, %v7418, 0
  %v7516 = vsel %vm5056, %v7419, 0
  %v7519 = vsel %vm6093, %v7421, 0
  %7521 = vmatprep.subr.bf16.mxu0 0
  %7522 = vmatpush1.bf16.msra.mxu0 %v7519
  %7523 = vmatprep.subr.bf16.mxu0 0
  %7524 = vmatpush1.bf16.msra.mxu0 0
  %7525 = vmatprep.subr.bf16.mxu0 0
  %7526 = vmatpush1.bf16.msra.mxu0 0
  %7527 = vmatprep.subr.bf16.mxu0 0
  %7528 = vmatpush1.bf16.msra.mxu0 0
  %7529 = vmatprep.subr.bf16.mxu0 0
  %7530 = vmatpush1.bf16.msra.mxu0 0
  %7531 = vmatprep.subr.bf16.mxu0 0
  %7532 = vmatpush1.bf16.msra.mxu0 0
  %7533 = vmatprep.subr.bf16.mxu0 0
  %7534 = vmatpush1.bf16.msra.mxu0 0
  %7535 = vmatprep.subr.bf16.mxu0 0
  %7536 = vmatpush1.bf16.msra.mxu0 0
  %7537 = vmatprep.subr.bf16.mxu0 0
  %7538 = vmatpush1.bf16.msra.mxu0 0
  %7539 = vmatprep.subr.bf16.mxu0 0
  %7540 = vmatpush1.bf16.msra.mxu0 0
  %7541 = vmatprep.subr.bf16.mxu0 0
  %7542 = vmatpush1.bf16.msra.mxu0 0
  %7543 = vmatprep.subr.bf16.mxu0 0
  %7544 = vmatpush1.bf16.msra.mxu0 0
  %7545 = vmatprep.subr.bf16.mxu0 0
  %7546 = vmatpush1.bf16.msra.mxu0 0
  %7547 = vmatprep.subr.bf16.mxu0 0
  %7548 = vmatpush1.bf16.msra.mxu0 0
  %7549 = vmatprep.subr.bf16.mxu0 0
  %7550 = vmatpush1.bf16.msra.mxu0 0
  %7551 = vmatprep.subr.bf16.mxu0 0
  %7552 = vmatpush1.bf16.msra.mxu0 0
  %7553 = vmatprep.mubr.bf16.mxu0 0
  %7554 = vmatmul.mubr.bf16.gmra.mrb[0].mxu0 %v7423
  %v7555 = vpop.f32.mrb[0].mxu0
  %v7556 = vadd.f32 0.0, %v7555
  %v7557 = vpop.f32.mrb[0].mxu0
  %v7558 = vpop.f32.mrb[0].mxu0
  %v7559 = vadd.f32 0.0, %v7558
  %v7560 = vpop.f32.mrb[0].mxu0
  %7561 = vmatprep.mubr.bf16.mxu0 0
  %7562 = vmatmul.mubr.bf16.gmra.mrb[0].mxu0 %v7426
  %v7563 = vpop.f32.mrb[0].mxu0
  %v7564 = vadd.f32 0.0, %v7563
  %v7565 = vpop.f32.mrb[0].mxu0
  %v7566 = vpop.f32.mrb[0].mxu0
  %v7567 = vadd.f32 0.0, %v7566
  %v7568 = vpop.f32.mrb[0].mxu0
  %7569 = vmatprep.mubr.bf16.mxu0 0
  %7570 = vmatmul.mubr.bf16.gmra.mrb[0].mxu0 %v7429
  %v7571 = vpop.f32.mrb[0].mxu0
  %v7572 = vadd.f32 0.0, %v7571
  %v7573 = vpop.f32.mrb[0].mxu0
  %v7574 = vpop.f32.mrb[0].mxu0
  %v7575 = vadd.f32 0.0, %v7574
  %v7576 = vpop.f32.mrb[0].mxu0
  %7577 = vmatprep.mubr.bf16.mxu0 0
  %7578 = vmatmul.mubr.bf16.gmra.mrb[0].mxu0 %v7432
  %v7579 = vpop.f32.mrb[0].mxu0
  %v7580 = vadd.f32 0.0, %v7579
  %v7581 = vpop.f32.mrb[0].mxu0
  %v7582 = vpop.f32.mrb[0].mxu0
  %v7583 = vadd.f32 0.0, %v7582
  %v7584 = vpop.f32.mrb[0].mxu0
  %7585 = vmatprep.mubr.bf16.mxu0 0
  %7586 = vmatmul.mubr.bf16.gmra.mrb[0].mxu0 %v7435
  %v7587 = vpop.f32.mrb[0].mxu0
  %v7588 = vadd.f32 0.0, %v7587
  %v7589 = vpop.f32.mrb[0].mxu0
  %v7590 = vpop.f32.mrb[0].mxu0
  %v7591 = vadd.f32 0.0, %v7590
  %v7592 = vpop.f32.mrb[0].mxu0
  %7593 = vmatprep.mubr.bf16.mxu0 0
  %7594 = vmatmul.mubr.bf16.gmra.mrb[0].mxu0 %v7438
  %v7595 = vpop.f32.mrb[0].mxu0
  %v7596 = vadd.f32 0.0, %v7595
  %v7597 = vpop.f32.mrb[0].mxu0
  %v7598 = vpop.f32.mrb[0].mxu0
  %v7599 = vadd.f32 0.0, %v7598
  %v7600 = vpop.f32.mrb[0].mxu0
  %7601 = vmatprep.mubr.bf16.mxu0 0
  %7602 = vmatmul.mubr.bf16.gmra.mrb[0].mxu0 %v7441
  %v7603 = vpop.f32.mrb[0].mxu0
  %v7604 = vadd.f32 0.0, %v7603
  %v7605 = vpop.f32.mrb[0].mxu0
  %v7606 = vpop.f32.mrb[0].mxu0
  %v7607 = vadd.f32 0.0, %v7606
  %v7608 = vpop.f32.mrb[0].mxu0
  %7609 = vmatprep.mubr.bf16.mxu0 0
  %7610 = vmatmul.mubr.bf16.gmra.mrb[0].mxu0 %v7444
  %v7611 = vpop.f32.mrb[0].mxu0
  %v7612 = vadd.f32 0.0, %v7611
  %v7613 = vpop.f32.mrb[0].mxu0
  %v7614 = vpop.f32.mrb[0].mxu0
  %v7615 = vadd.f32 0.0, %v7614
  %v7616 = vpop.f32.mrb[0].mxu0
  %7617 = vmatprep.mubr.bf16.mxu0 0
  %7618 = vmatmul.mubr.bf16.gmra.mrb[0].mxu0 %v7447
  %v7619 = vpop.f32.mrb[0].mxu0
  %v7620 = vadd.f32 0.0, %v7619
  %v7621 = vpop.f32.mrb[0].mxu0
  %v7622 = vpop.f32.mrb[0].mxu0
  %v7623 = vadd.f32 0.0, %v7622
  %v7624 = vpop.f32.mrb[0].mxu0
  %7625 = vmatprep.mubr.bf16.mxu0 0
  %7626 = vmatmul.mubr.bf16.gmra.mrb[0].mxu0 %v7450
  %v7627 = vpop.f32.mrb[0].mxu0
  %v7628 = vadd.f32 0.0, %v7627
  %v7629 = vpop.f32.mrb[0].mxu0
  %v7630 = vpop.f32.mrb[0].mxu0
  %v7631 = vadd.f32 0.0, %v7630
  %v7632 = vpop.f32.mrb[0].mxu0
  %7633 = vmatprep.mubr.bf16.mxu0 0
  %7634 = vmatmul.mubr.bf16.gmra.mrb[0].mxu0 %v7453
  %v7635 = vpop.f32.mrb[0].mxu0
  %v7636 = vadd.f32 0.0, %v7635
  %v7637 = vpop.f32.mrb[0].mxu0
  %v7638 = vpop.f32.mrb[0].mxu0
  %v7639 = vadd.f32 0.0, %v7638
  %v7640 = vpop.f32.mrb[0].mxu0
  %7641 = vmatprep.mubr.bf16.mxu0 0
  %7642 = vmatmul.mubr.bf16.gmra.mrb[0].mxu0 %v7456
  %v7643 = vpop.f32.mrb[0].mxu0
  %v7644 = vadd.f32 0.0, %v7643
  %v7645 = vpop.f32.mrb[0].mxu0
  %v7646 = vpop.f32.mrb[0].mxu0
  %v7647 = vadd.f32 0.0, %v7646
  %v7648 = vpop.f32.mrb[0].mxu0
  %7649 = vmatprep.mubr.bf16.mxu0 0
  %7650 = vmatmul.mubr.bf16.gmra.mrb[0].mxu0 %v7459
  %v7651 = vpop.f32.mrb[0].mxu0
  %v7652 = vadd.f32 0.0, %v7651
  %v7653 = vpop.f32.mrb[0].mxu0
  %v7654 = vpop.f32.mrb[0].mxu0
  %v7655 = vadd.f32 0.0, %v7654
  %v7656 = vpop.f32.mrb[0].mxu0
  %7657 = vmatprep.mubr.bf16.mxu0 0
  %7658 = vmatmul.mubr.bf16.gmra.mrb[0].mxu0 %v7462
  %v7659 = vpop.f32.mrb[0].mxu0
  %v7660 = vadd.f32 0.0, %v7659
  %v7661 = vpop.f32.mrb[0].mxu0
  %v7662 = vpop.f32.mrb[0].mxu0
  %v7663 = vadd.f32 0.0, %v7662
  %v7664 = vpop.f32.mrb[0].mxu0
  %7665 = vmatprep.mubr.bf16.mxu0 0
  %7666 = vmatmul.mubr.bf16.gmra.mrb[0].mxu0 %v7465
  %v7667 = vpop.f32.mrb[0].mxu0
  %v7668 = vadd.f32 0.0, %v7667
  %v7669 = vpop.f32.mrb[0].mxu0
  %v7670 = vpop.f32.mrb[0].mxu0
  %v7671 = vadd.f32 0.0, %v7670
  %v7672 = vpop.f32.mrb[0].mxu0
  %7673 = vmatprep.mubr.bf16.mxu0 0
  %7674 = vmatmul.mubr.bf16.gmra.mrb[0].mxu0 %v7468
  %v7675 = vpop.f32.mrb[0].mxu0
  %v7676 = vadd.f32 0.0, %v7675
  %v7677 = vpop.f32.mrb[0].mxu0
  %v7678 = vpop.f32.mrb[0].mxu0
  %v7679 = vadd.f32 0.0, %v7678
  %v7680 = vpop.f32.mrb[0].mxu0
  %7681 = vmatprep.mubr.bf16.mxu0 0
  %7682 = vmatmul.mubr.bf16.gmra.mrb[0].mxu0 %v7471
  %v7683 = vpop.f32.mrb[0].mxu0
  %v7684 = vadd.f32 0.0, %v7683
  %v7685 = vpop.f32.mrb[0].mxu0
  %v7686 = vpop.f32.mrb[0].mxu0
  %v7687 = vadd.f32 0.0, %v7686
  %v7688 = vpop.f32.mrb[0].mxu0
  %7689 = vmatprep.mubr.bf16.mxu0 0
  %7690 = vmatmul.mubr.bf16.gmra.mrb[0].mxu0 %v7474
  %v7691 = vpop.f32.mrb[0].mxu0
  %v7692 = vadd.f32 0.0, %v7691
  %v7693 = vpop.f32.mrb[0].mxu0
  %v7694 = vpop.f32.mrb[0].mxu0
  %v7695 = vadd.f32 0.0, %v7694
  %v7696 = vpop.f32.mrb[0].mxu0
  %7697 = vmatprep.mubr.bf16.mxu0 0
  %7698 = vmatmul.mubr.bf16.gmra.mrb[0].mxu0 %v7477
  %v7699 = vpop.f32.mrb[0].mxu0
  %v7700 = vadd.f32 0.0, %v7699
  %v7701 = vpop.f32.mrb[0].mxu0
  %v7702 = vpop.f32.mrb[0].mxu0
  %v7703 = vadd.f32 0.0, %v7702
  %v7704 = vpop.f32.mrb[0].mxu0
  %7705 = vmatprep.mubr.bf16.mxu0 0
  %7706 = vmatmul.mubr.bf16.gmra.mrb[0].mxu0 %v7480
  %v7707 = vpop.f32.mrb[0].mxu0
  %v7708 = vadd.f32 0.0, %v7707
  %v7709 = vpop.f32.mrb[0].mxu0
  %v7710 = vpop.f32.mrb[0].mxu0
  %v7711 = vadd.f32 0.0, %v7710
  %v7712 = vpop.f32.mrb[0].mxu0
  %7713 = vmatprep.mubr.bf16.mxu0 0
  %7714 = vmatmul.mubr.bf16.gmra.mrb[0].mxu0 %v7483
  %v7715 = vpop.f32.mrb[0].mxu0
  %v7716 = vadd.f32 0.0, %v7715
  %v7717 = vpop.f32.mrb[0].mxu0
  %v7718 = vpop.f32.mrb[0].mxu0
  %v7719 = vadd.f32 0.0, %v7718
  %v7720 = vpop.f32.mrb[0].mxu0
  %7721 = vmatprep.mubr.bf16.mxu0 0
  %7722 = vmatmul.mubr.bf16.gmra.mrb[0].mxu0 %v7486
  %v7723 = vpop.f32.mrb[0].mxu0
  %v7724 = vadd.f32 0.0, %v7723
  %v7725 = vpop.f32.mrb[0].mxu0
  %v7726 = vpop.f32.mrb[0].mxu0
  %v7727 = vadd.f32 0.0, %v7726
  %v7728 = vpop.f32.mrb[0].mxu0
  %7729 = vmatprep.mubr.bf16.mxu0 0
  %7730 = vmatmul.mubr.bf16.gmra.mrb[0].mxu0 %v7489
  %v7731 = vpop.f32.mrb[0].mxu0
  %v7732 = vadd.f32 0.0, %v7731
  %v7733 = vpop.f32.mrb[0].mxu0
  %v7734 = vpop.f32.mrb[0].mxu0
  %v7735 = vadd.f32 0.0, %v7734
  %v7736 = vpop.f32.mrb[0].mxu0
  %7737 = vmatprep.mubr.bf16.mxu0 0
  %7738 = vmatmul.mubr.bf16.gmra.mrb[0].mxu0 %v7492
  %v7739 = vpop.f32.mrb[0].mxu0
  %v7740 = vadd.f32 0.0, %v7739
  %v7741 = vpop.f32.mrb[0].mxu0
  %v7742 = vpop.f32.mrb[0].mxu0
  %v7743 = vadd.f32 0.0, %v7742
  %v7744 = vpop.f32.mrb[0].mxu0
  %7745 = vmatprep.mubr.bf16.mxu0 0
  %7746 = vmatmul.mubr.bf16.gmra.mrb[0].mxu0 %v7495
  %v7747 = vpop.f32.mrb[0].mxu0
  %v7748 = vadd.f32 0.0, %v7747
  %v7749 = vpop.f32.mrb[0].mxu0
  %v7750 = vpop.f32.mrb[0].mxu0
  %v7751 = vadd.f32 0.0, %v7750
  %v7752 = vpop.f32.mrb[0].mxu0
  %7753 = vmatprep.mubr.bf16.mxu0 0
  %7754 = vmatmul.mubr.bf16.gmra.mrb[0].mxu0 %v7498
  %v7755 = vpop.f32.mrb[0].mxu0
  %v7756 = vadd.f32 0.0, %v7755
  %v7757 = vpop.f32.mrb[0].mxu0
  %v7758 = vpop.f32.mrb[0].mxu0
  %v7759 = vadd.f32 0.0, %v7758
  %v7760 = vpop.f32.mrb[0].mxu0
  %7761 = vmatprep.mubr.bf16.mxu0 0
  %7762 = vmatmul.mubr.bf16.gmra.mrb[0].mxu0 %v7501
  %v7763 = vpop.f32.mrb[0].mxu0
  %v7764 = vadd.f32 0.0, %v7763
  %v7765 = vpop.f32.mrb[0].mxu0
  %v7766 = vpop.f32.mrb[0].mxu0
  %v7767 = vadd.f32 0.0, %v7766
  %v7768 = vpop.f32.mrb[0].mxu0
  %7769 = vmatprep.mubr.bf16.mxu0 0
  %7770 = vmatmul.mubr.bf16.gmra.mrb[0].mxu0 %v7504
  %v7771 = vpop.f32.mrb[0].mxu0
  %v7772 = vadd.f32 0.0, %v7771
  %v7773 = vpop.f32.mrb[0].mxu0
  %v7774 = vpop.f32.mrb[0].mxu0
  %v7775 = vadd.f32 0.0, %v7774
  %v7776 = vpop.f32.mrb[0].mxu0
  %7777 = vmatprep.mubr.bf16.mxu0 0
  %7778 = vmatmul.mubr.bf16.gmra.mrb[0].mxu0 %v7507
  %v7779 = vpop.f32.mrb[0].mxu0
  %v7780 = vadd.f32 0.0, %v7779
  %v7781 = vpop.f32.mrb[0].mxu0
  %v7782 = vpop.f32.mrb[0].mxu0
  %v7783 = vadd.f32 0.0, %v7782
  %v7784 = vpop.f32.mrb[0].mxu0
  %7785 = vmatprep.mubr.bf16.mxu0 0
  %7786 = vmatmul.mubr.bf16.gmra.mrb[0].mxu0 %v7510
  %v7787 = vpop.f32.mrb[0].mxu0
  %v7788 = vadd.f32 0.0, %v7787
  %v7789 = vpop.f32.mrb[0].mxu0
  %v7790 = vpop.f32.mrb[0].mxu0
  %v7791 = vadd.f32 0.0, %v7790
  %v7792 = vpop.f32.mrb[0].mxu0
  %7793 = vmatprep.mubr.bf16.mxu0 0
  %7794 = vmatmul.mubr.bf16.gmra.mrb[0].mxu0 %v7513
  %v7795 = vpop.f32.mrb[0].mxu0
  %v7796 = vadd.f32 0.0, %v7795
  %v7797 = vpop.f32.mrb[0].mxu0
  %v7798 = vpop.f32.mrb[0].mxu0
  %v7799 = vadd.f32 0.0, %v7798
  %v7800 = vpop.f32.mrb[0].mxu0
  %7801 = vmatprep.mubr.bf16.mxu0 0
  %7802 = vmatmul.mubr.bf16.gmra.mrb[0].mxu0 %v7516
  %v7803 = vpop.f32.mrb[0].mxu0
  %v7804 = vadd.f32 0.0, %v7803
  %v7805 = vpop.f32.mrb[0].mxu0
  %v7806 = vpop.f32.mrb[0].mxu0
  %v7807 = vadd.f32 0.0, %v7806
  %v7808 = vpop.f32.mrb[0].mxu0
  %7809 = vdwg.mxu0
  %v7810 = vadd.f32 %v7260, %v7556
  %v7811 = vadd.f32 %v7261, %v7559
  %v7812 = vadd.f32 %v7262, %v7564
  %v7813 = vadd.f32 %v7263, %v7567
  %v7814 = vadd.f32 %v7264, %v7572
  %v7815 = vadd.f32 %v7265, %v7575
  %v7816 = vadd.f32 %v7266, %v7580
  %v7817 = vadd.f32 %v7267, %v7583
  %v7818 = vadd.f32 %v7268, %v7588
  %v7819 = vadd.f32 %v7269, %v7591
  %v7820 = vadd.f32 %v7270, %v7596
  %v7821 = vadd.f32 %v7271, %v7599
  %v7822 = vadd.f32 %v7272, %v7604
  %v7823 = vadd.f32 %v7273, %v7607
  %v7824 = vadd.f32 %v7274, %v7612
  %v7825 = vadd.f32 %v7275, %v7615
  %v7826 = vadd.f32 %v7276, %v7620
  %v7827 = vadd.f32 %v7277, %v7623
  %v7828 = vadd.f32 %v7278, %v7628
  %v7829 = vadd.f32 %v7279, %v7631
  %v7830 = vadd.f32 %v7280, %v7636
  %v7831 = vadd.f32 %v7281, %v7639
  %v7832 = vadd.f32 %v7282, %v7644
  %v7833 = vadd.f32 %v7283, %v7647
  %v7834 = vadd.f32 %v7284, %v7652
  %v7835 = vadd.f32 %v7285, %v7655
  %v7836 = vadd.f32 %v7286, %v7660
  %v7837 = vadd.f32 %v7287, %v7663
  %v7838 = vadd.f32 %v7288, %v7668
  %v7839 = vadd.f32 %v7289, %v7671
  %v7840 = vadd.f32 %v7290, %v7676
  %v7841 = vadd.f32 %v7291, %v7679
  %v7842 = vadd.f32 %v7292, %v7684
  %v7843 = vadd.f32 %v7293, %v7687
  %v7844 = vadd.f32 %v7294, %v7692
  %v7845 = vadd.f32 %v7295, %v7695
  %v7846 = vadd.f32 %v7296, %v7700
  %v7847 = vadd.f32 %v7297, %v7703
  %v7848 = vadd.f32 %v7298, %v7708
  %v7849 = vadd.f32 %v7299, %v7711
  %v7850 = vadd.f32 %v7300, %v7716
  %v7851 = vadd.f32 %v7301, %v7719
  %v7852 = vadd.f32 %v7302, %v7724
  %v7853 = vadd.f32 %v7303, %v7727
  %v7854 = vadd.f32 %v7304, %v7732
  %v7855 = vadd.f32 %v7305, %v7735
  %v7856 = vadd.f32 %v7306, %v7740
  %v7857 = vadd.f32 %v7307, %v7743
  %v7858 = vadd.f32 %v7308, %v7748
  %v7859 = vadd.f32 %v7309, %v7751
  %v7860 = vadd.f32 %v7310, %v7756
  %v7861 = vadd.f32 %v7311, %v7759
  %v7862 = vadd.f32 %v7312, %v7764
  %v7863 = vadd.f32 %v7313, %v7767
  %v7864 = vadd.f32 %v7314, %v7772
  %v7865 = vadd.f32 %v7315, %v7775
  %v7866 = vadd.f32 %v7316, %v7780
  %v7867 = vadd.f32 %v7317, %v7783
  %v7868 = vadd.f32 %v7318, %v7788
  %v7869 = vadd.f32 %v7319, %v7791
  %v7870 = vadd.f32 %v7320, %v7796
  %v7871 = vadd.f32 %v7321, %v7799
  %v7872 = vadd.f32 %v7322, %v7804
  %v7873 = vadd.f32 %v7323, %v7807
  %v7874 = vld [vmem:[%s5672 + $0x1] sm:$0xff]
  %v7875 = vld [vmem:[%s5672 + $0x9] sm:$0xff]
  %v7876 = vld [vmem:[%s5672 + $0x19] sm:$0xff]
  %v7877 = vld [vmem:[%s5672 + $0x21] sm:$0xff]
  %v7878 = vld [vmem:[%s5672 + $0x31] sm:$0xff]
  %v7879 = vld [vmem:[%s5672 + $0x39] sm:$0xff]
  %v7880 = vld [vmem:[%s5672 + $0x49] sm:$0xff]
  %v7881 = vld [vmem:[%s5672 + $0x51] sm:$0xff]
  %v7882 = vld [vmem:[%s5672 + $0x61] sm:$0xff]
  %v7883 = vld [vmem:[%s5672 + $0x69] sm:$0xff]
  %v7884 = vld [vmem:[%s5672 + $0x79] sm:$0xff]
  %v7885 = vld [vmem:[%s5672 + $0x81] sm:$0xff]
  %v7886 = vld [vmem:[%s5672 + $0x91] sm:$0xff]
  %v7887 = vld [vmem:[%s5672 + $0x99] sm:$0xff]
  %v7888 = vld [vmem:[%s5672 + $0xa9] sm:$0xff]
  %v7889 = vld [vmem:[%s5672 + $0xb1] sm:$0xff]
  %v7890 = vld [vmem:[%s5672 + $0xc1] sm:$0xff]
  %v7891 = vld [vmem:[%s5672 + $0xc9] sm:$0xff]
  %v7892 = vld [vmem:[%s5672 + $0xd9] sm:$0xff]
  %v7893 = vld [vmem:[%s5672 + $0xe1] sm:$0xff]
  %v7894 = vld [vmem:[%s5672 + $0xf1] sm:$0xff]
  %v7895 = vld [vmem:[%s5672 + $0xf9] sm:$0xff]
  %v7896 = vld [vmem:[%s5672 + $0x109] sm:$0xff]
  %v7897 = vld [vmem:[%s5672 + $0x111] sm:$0xff]
  %v7898 = vld [vmem:[%s5672 + $0x121] sm:$0xff]
  %v7899 = vld [vmem:[%s5672 + $0x129] sm:$0xff]
  %v7900 = vld [vmem:[%s5672 + $0x139] sm:$0xff]
  %v7901 = vld [vmem:[%s5672 + $0x141] sm:$0xff]
  %v7902 = vld [vmem:[%s5672 + $0x151] sm:$0xff]
  %v7903 = vld [vmem:[%s5672 + $0x159] sm:$0xff]
  %v7904 = vld [vmem:[%s5672 + $0x169] sm:$0xff]
  %v7905 = vld [vmem:[%s5672 + $0x171] sm:$0xff]
  %v7906 = vld [vmem:[%s5672 + $0x1b1] sm:$0xff]
  %v7907 = vld [vmem:[%s5672 + $0x1b9] sm:$0xff]
  %v7908 = vld [vmem:[%s5672 + $0x1c9] sm:$0xff]
  %v7909 = vld [vmem:[%s5672 + $0x1d1] sm:$0xff]
  %v7910 = vld [vmem:[%s5672 + $0x1e1] sm:$0xff]
  %v7911 = vld [vmem:[%s5672 + $0x1e9] sm:$0xff]
  %v7912 = vld [vmem:[%s5672 + $0x1f9] sm:$0xff]
  %v7913 = vld [vmem:[%s5672 + $0x201] sm:$0xff]
  %v7914 = vld [vmem:[%s5672 + $0x211] sm:$0xff]
  %v7915 = vld [vmem:[%s5672 + $0x219] sm:$0xff]
  %v7916 = vld [vmem:[%s5672 + $0x229] sm:$0xff]
  %v7917 = vld [vmem:[%s5672 + $0x231] sm:$0xff]
  %v7918 = vld [vmem:[%s5672 + $0x241] sm:$0xff]
  %v7919 = vld [vmem:[%s5672 + $0x249] sm:$0xff]
  %v7920 = vld [vmem:[%s5672 + $0x259] sm:$0xff]
  %v7921 = vld [vmem:[%s5672 + $0x261] sm:$0xff]
  %v7922 = vld [vmem:[%s5672 + $0x271] sm:$0xff]
  %v7923 = vld [vmem:[%s5672 + $0x279] sm:$0xff]
  %v7924 = vld [vmem:[%s5672 + $0x289] sm:$0xff]
  %v7925 = vld [vmem:[%s5672 + $0x291] sm:$0xff]
  %v7926 = vld [vmem:[%s5672 + $0x2a1] sm:$0xff]
  %v7927 = vld [vmem:[%s5672 + $0x2a9] sm:$0xff]
  %v7928 = vld [vmem:[%s5672 + $0x2b9] sm:$0xff]
  %v7929 = vld [vmem:[%s5672 + $0x2c1] sm:$0xff]
  %v7930 = vld [vmem:[%s5672 + $0x2d1] sm:$0xff]
  %v7931 = vld [vmem:[%s5672 + $0x2d9] sm:$0xff]
  %v7932 = vld [vmem:[%s5672 + $0x2e9] sm:$0xff]
  %v7933 = vld [vmem:[%s5672 + $0x2f1] sm:$0xff]
  %v7934 = vld [vmem:[%s5672 + $0x301] sm:$0xff]
  %v7935 = vld [vmem:[%s5672 + $0x309] sm:$0xff]
  %v7936 = vld [vmem:[%s5672 + $0x319] sm:$0xff]
  %v7937 = vld [vmem:[%s5672 + $0x321] sm:$0xff]
  %v7938 = vpack.c.bf16 %v7875, %v7874
  %v7939 = vpack.c.bf16 %v7877, %v7876
  %v7940 = vpack.c.bf16 %v7879, %v7878
  %v7941 = vpack.c.bf16 %v7881, %v7880
  %v7942 = vpack.c.bf16 %v7883, %v7882
  %v7943 = vpack.c.bf16 %v7885, %v7884
  %v7944 = vpack.c.bf16 %v7887, %v7886
  %v7945 = vpack.c.bf16 %v7889, %v7888
  %v7946 = vpack.c.bf16 %v7891, %v7890
  %v7947 = vpack.c.bf16 %v7893, %v7892
  %v7948 = vpack.c.bf16 %v7895, %v7894
  %v7949 = vpack.c.bf16 %v7897, %v7896
  %v7950 = vpack.c.bf16 %v7899, %v7898
  %v7951 = vpack.c.bf16 %v7901, %v7900
  %v7952 = vpack.c.bf16 %v7903, %v7902
  %v7953 = vpack.c.bf16 %v7905, %v7904
  %v7954 = vpack.c.bf16 %v7907, %v7906
  %v7955 = vpack.c.bf16 %v7909, %v7908
  %v7956 = vpack.c.bf16 %v7911, %v7910
  %v7957 = vpack.c.bf16 %v7913, %v7912
  %v7958 = vpack.c.bf16 %v7915, %v7914
  %v7959 = vpack.c.bf16 %v7917, %v7916
  %v7960 = vpack.c.bf16 %v7919, %v7918
  %v7961 = vpack.c.bf16 %v7921, %v7920
  %v7962 = vpack.c.bf16 %v7923, %v7922
  %v7963 = vpack.c.bf16 %v7925, %v7924
  %v7964 = vpack.c.bf16 %v7927, %v7926
  %v7965 = vpack.c.bf16 %v7929, %v7928
  %v7966 = vpack.c.bf16 %v7931, %v7930
  %v7967 = vpack.c.bf16 %v7933, %v7932
  %v7968 = vpack.c.bf16 %v7935, %v7934
  %v7969 = vpack.c.bf16 %v7937, %v7936
  %s7970 = scalar_lea.vmem %s2, 16
  %v7971 = vld [vmem:[%s7970] sm:$0xf]
  %v7973 = vsel %vm5056, %v7938, 0
  %v7976 = vsel %vm5056, %v7939, 0
  %v7979 = vsel %vm5056, %v7940, 0
  %v7982 = vsel %vm5056, %v7941, 0
  %v7985 = vsel %vm5056, %v7942, 0
  %v7988 = vsel %vm5056, %v7943, 0
  %v7991 = vsel %vm5056, %v7944, 0
  %v7994 = vsel %vm5056, %v7945, 0
  %v7997 = vsel %vm5056, %v7946, 0
  %v8000 = vsel %vm5056, %v7947, 0
  %v8003 = vsel %vm5056, %v7948, 0
  %v8006 = vsel %vm5056, %v7949, 0
  %v8009 = vsel %vm5056, %v7950, 0
  %v8012 = vsel %vm5056, %v7951, 0
  %v8015 = vsel %vm5056, %v7952, 0
  %v8018 = vsel %vm5056, %v7953, 0
  %v8021 = vsel %vm5056, %v7954, 0
  %v8024 = vsel %vm5056, %v7955, 0
  %v8027 = vsel %vm5056, %v7956, 0
  %v8030 = vsel %vm5056, %v7957, 0
  %v8033 = vsel %vm5056, %v7958, 0
  %v8036 = vsel %vm5056, %v7959, 0
  %v8039 = vsel %vm5056, %v7960, 0
  %v8042 = vsel %vm5056, %v7961, 0
  %v8045 = vsel %vm5056, %v7962, 0
  %v8048 = vsel %vm5056, %v7963, 0
  %v8051 = vsel %vm5056, %v7964, 0
  %v8054 = vsel %vm5056, %v7965, 0
  %v8057 = vsel %vm5056, %v7966, 0
  %v8060 = vsel %vm5056, %v7967, 0
  %v8063 = vsel %vm5056, %v7968, 0
  %v8066 = vsel %vm5056, %v7969, 0
  %v8069 = vsel %vm6093, %v7971, 0
  %8071 = vmatprep.subr.bf16.mxu0 0
  %8072 = vmatpush1.bf16.msra.mxu0 %v8069
  %8073 = vmatprep.subr.bf16.mxu0 0
  %8074 = vmatpush1.bf16.msra.mxu0 0
  %8075 = vmatprep.subr.bf16.mxu0 0
  %8076 = vmatpush1.bf16.msra.mxu0 0
  %8077 = vmatprep.subr.bf16.mxu0 0
  %8078 = vmatpush1.bf16.msra.mxu0 0
  %8079 = vmatprep.subr.bf16.mxu0 0
  %8080 = vmatpush1.bf16.msra.mxu0 0
  %8081 = vmatprep.subr.bf16.mxu0 0
  %8082 = vmatpush1.bf16.msra.mxu0 0
  %8083 = vmatprep.subr.bf16.mxu0 0
  %8084 = vmatpush1.bf16.msra.mxu0 0
  %8085 = vmatprep.subr.bf16.mxu0 0
  %8086 = vmatpush1.bf16.msra.mxu0 0
  %8087 = vmatprep.subr.bf16.mxu0 0
  %8088 = vmatpush1.bf16.msra.mxu0 0
  %8089 = vmatprep.subr.bf16.mxu0 0
  %8090 = vmatpush1.bf16.msra.mxu0 0
  %8091 = vmatprep.subr.bf16.mxu0 0
  %8092 = vmatpush1.bf16.msra.mxu0 0
  %8093 = vmatprep.subr.bf16.mxu0 0
  %8094 = vmatpush1.bf16.msra.mxu0 0
  %8095 = vmatprep.subr.bf16.mxu0 0
  %8096 = vmatpush1.bf16.msra.mxu0 0
  %8097 = vmatprep.subr.bf16.mxu0 0
  %8098 = vmatpush1.bf16.msra.mxu0 0
  %8099 = vmatprep.subr.bf16.mxu0 0
  %8100 = vmatpush1.bf16.msra.mxu0 0
  %8101 = vmatprep.subr.bf16.mxu0 0
  %8102 = vmatpush1.bf16.msra.mxu0 0
  %8103 = vmatprep.mubr.bf16.mxu0 0
  %8104 = vmatmul.mubr.bf16.gmra.mrb[0].mxu0 %v7973
  %v8105 = vpop.f32.mrb[0].mxu0
  %v8106 = vadd.f32 0.0, %v8105
  %v8107 = vpop.f32.mrb[0].mxu0
  %v8108 = vpop.f32.mrb[0].mxu0
  %v8109 = vadd.f32 0.0, %v8108
  %v8110 = vpop.f32.mrb[0].mxu0
  %8111 = vmatprep.mubr.bf16.mxu0 0
  %8112 = vmatmul.mubr.bf16.gmra.mrb[0].mxu0 %v7976
  %v8113 = vpop.f32.mrb[0].mxu0
  %v8114 = vadd.f32 0.0, %v8113
  %v8115 = vpop.f32.mrb[0].mxu0
  %v8116 = vpop.f32.mrb[0].mxu0
  %v8117 = vadd.f32 0.0, %v8116
  %v8118 = vpop.f32.mrb[0].mxu0
  %8119 = vmatprep.mubr.bf16.mxu0 0
  %8120 = vmatmul.mubr.bf16.gmra.mrb[0].mxu0 %v7979
  %v8121 = vpop.f32.mrb[0].mxu0
  %v8122 = vadd.f32 0.0, %v8121
  %v8123 = vpop.f32.mrb[0].mxu0
  %v8124 = vpop.f32.mrb[0].mxu0
  %v8125 = vadd.f32 0.0, %v8124
  %v8126 = vpop.f32.mrb[0].mxu0
  %8127 = vmatprep.mubr.bf16.mxu0 0
  %8128 = vmatmul.mubr.bf16.gmra.mrb[0].mxu0 %v7982
  %v8129 = vpop.f32.mrb[0].mxu0
  %v8130 = vadd.f32 0.0, %v8129
  %v8131 = vpop.f32.mrb[0].mxu0
  %v8132 = vpop.f32.mrb[0].mxu0
  %v8133 = vadd.f32 0.0, %v8132
  %v8134 = vpop.f32.mrb[0].mxu0
  %8135 = vmatprep.mubr.bf16.mxu0 0
  %8136 = vmatmul.mubr.bf16.gmra.mrb[0].mxu0 %v7985
  %v8137 = vpop.f32.mrb[0].mxu0
  %v8138 = vadd.f32 0.0, %v8137
  %v8139 = vpop.f32.mrb[0].mxu0
  %v8140 = vpop.f32.mrb[0].mxu0
  %v8141 = vadd.f32 0.0, %v8140
  %v8142 = vpop.f32.mrb[0].mxu0
  %8143 = vmatprep.mubr.bf16.mxu0 0
  %8144 = vmatmul.mubr.bf16.gmra.mrb[0].mxu0 %v7988
  %v8145 = vpop.f32.mrb[0].mxu0
  %v8146 = vadd.f32 0.0, %v8145
  %v8147 = vpop.f32.mrb[0].mxu0
  %v8148 = vpop.f32.mrb[0].mxu0
  %v8149 = vadd.f32 0.0, %v8148
  %v8150 = vpop.f32.mrb[0].mxu0
  %8151 = vmatprep.mubr.bf16.mxu0 0
  %8152 = vmatmul.mubr.bf16.gmra.mrb[0].mxu0 %v7991
  %v8153 = vpop.f32.mrb[0].mxu0
  %v8154 = vadd.f32 0.0, %v8153
  %v8155 = vpop.f32.mrb[0].mxu0
  %v8156 = vpop.f32.mrb[0].mxu0
  %v8157 = vadd.f32 0.0, %v8156
  %v8158 = vpop.f32.mrb[0].mxu0
  %8159 = vmatprep.mubr.bf16.mxu0 0
  %8160 = vmatmul.mubr.bf16.gmra.mrb[0].mxu0 %v7994
  %v8161 = vpop.f32.mrb[0].mxu0
  %v8162 = vadd.f32 0.0, %v8161
  %v8163 = vpop.f32.mrb[0].mxu0
  %v8164 = vpop.f32.mrb[0].mxu0
  %v8165 = vadd.f32 0.0, %v8164
  %v8166 = vpop.f32.mrb[0].mxu0
  %8167 = vmatprep.mubr.bf16.mxu0 0
  %8168 = vmatmul.mubr.bf16.gmra.mrb[0].mxu0 %v7997
  %v8169 = vpop.f32.mrb[0].mxu0
  %v8170 = vadd.f32 0.0, %v8169
  %v8171 = vpop.f32.mrb[0].mxu0
  %v8172 = vpop.f32.mrb[0].mxu0
  %v8173 = vadd.f32 0.0, %v8172
  %v8174 = vpop.f32.mrb[0].mxu0
  %8175 = vmatprep.mubr.bf16.mxu0 0
  %8176 = vmatmul.mubr.bf16.gmra.mrb[0].mxu0 %v8000
  %v8177 = vpop.f32.mrb[0].mxu0
  %v8178 = vadd.f32 0.0, %v8177
  %v8179 = vpop.f32.mrb[0].mxu0
  %v8180 = vpop.f32.mrb[0].mxu0
  %v8181 = vadd.f32 0.0, %v8180
  %v8182 = vpop.f32.mrb[0].mxu0
  %8183 = vmatprep.mubr.bf16.mxu0 0
  %8184 = vmatmul.mubr.bf16.gmra.mrb[0].mxu0 %v8003
  %v8185 = vpop.f32.mrb[0].mxu0
  %v8186 = vadd.f32 0.0, %v8185
  %v8187 = vpop.f32.mrb[0].mxu0
  %v8188 = vpop.f32.mrb[0].mxu0
  %v8189 = vadd.f32 0.0, %v8188
  %v8190 = vpop.f32.mrb[0].mxu0
  %8191 = vmatprep.mubr.bf16.mxu0 0
  %8192 = vmatmul.mubr.bf16.gmra.mrb[0].mxu0 %v8006
  %v8193 = vpop.f32.mrb[0].mxu0
  %v8194 = vadd.f32 0.0, %v8193
  %v8195 = vpop.f32.mrb[0].mxu0
  %v8196 = vpop.f32.mrb[0].mxu0
  %v8197 = vadd.f32 0.0, %v8196
  %v8198 = vpop.f32.mrb[0].mxu0
  %8199 = vmatprep.mubr.bf16.mxu0 0
  %8200 = vmatmul.mubr.bf16.gmra.mrb[0].mxu0 %v8009
  %v8201 = vpop.f32.mrb[0].mxu0
  %v8202 = vadd.f32 0.0, %v8201
  %v8203 = vpop.f32.mrb[0].mxu0
  %v8204 = vpop.f32.mrb[0].mxu0
  %v8205 = vadd.f32 0.0, %v8204
  %v8206 = vpop.f32.mrb[0].mxu0
  %8207 = vmatprep.mubr.bf16.mxu0 0
  %8208 = vmatmul.mubr.bf16.gmra.mrb[0].mxu0 %v8012
  %v8209 = vpop.f32.mrb[0].mxu0
  %v8210 = vadd.f32 0.0, %v8209
  %v8211 = vpop.f32.mrb[0].mxu0
  %v8212 = vpop.f32.mrb[0].mxu0
  %v8213 = vadd.f32 0.0, %v8212
  %v8214 = vpop.f32.mrb[0].mxu0
  %8215 = vmatprep.mubr.bf16.mxu0 0
  %8216 = vmatmul.mubr.bf16.gmra.mrb[0].mxu0 %v8015
  %v8217 = vpop.f32.mrb[0].mxu0
  %v8218 = vadd.f32 0.0, %v8217
  %v8219 = vpop.f32.mrb[0].mxu0
  %v8220 = vpop.f32.mrb[0].mxu0
  %v8221 = vadd.f32 0.0, %v8220
  %v8222 = vpop.f32.mrb[0].mxu0
  %8223 = vmatprep.mubr.bf16.mxu0 0
  %8224 = vmatmul.mubr.bf16.gmra.mrb[0].mxu0 %v8018
  %v8225 = vpop.f32.mrb[0].mxu0
  %v8226 = vadd.f32 0.0, %v8225
  %v8227 = vpop.f32.mrb[0].mxu0
  %v8228 = vpop.f32.mrb[0].mxu0
  %v8229 = vadd.f32 0.0, %v8228
  %v8230 = vpop.f32.mrb[0].mxu0
  %8231 = vmatprep.mubr.bf16.mxu0 0
  %8232 = vmatmul.mubr.bf16.gmra.mrb[0].mxu0 %v8021
  %v8233 = vpop.f32.mrb[0].mxu0
  %v8234 = vadd.f32 0.0, %v8233
  %v8235 = vpop.f32.mrb[0].mxu0
  %v8236 = vpop.f32.mrb[0].mxu0
  %v8237 = vadd.f32 0.0, %v8236
  %v8238 = vpop.f32.mrb[0].mxu0
  %8239 = vmatprep.mubr.bf16.mxu0 0
  %8240 = vmatmul.mubr.bf16.gmra.mrb[0].mxu0 %v8024
  %v8241 = vpop.f32.mrb[0].mxu0
  %v8242 = vadd.f32 0.0, %v8241
  %v8243 = vpop.f32.mrb[0].mxu0
  %v8244 = vpop.f32.mrb[0].mxu0
  %v8245 = vadd.f32 0.0, %v8244
  %v8246 = vpop.f32.mrb[0].mxu0
  %8247 = vmatprep.mubr.bf16.mxu0 0
  %8248 = vmatmul.mubr.bf16.gmra.mrb[0].mxu0 %v8027
  %v8249 = vpop.f32.mrb[0].mxu0
  %v8250 = vadd.f32 0.0, %v8249
  %v8251 = vpop.f32.mrb[0].mxu0
  %v8252 = vpop.f32.mrb[0].mxu0
  %v8253 = vadd.f32 0.0, %v8252
  %v8254 = vpop.f32.mrb[0].mxu0
  %8255 = vmatprep.mubr.bf16.mxu0 0
  %8256 = vmatmul.mubr.bf16.gmra.mrb[0].mxu0 %v8030
  %v8257 = vpop.f32.mrb[0].mxu0
  %v8258 = vadd.f32 0.0, %v8257
  %v8259 = vpop.f32.mrb[0].mxu0
  %v8260 = vpop.f32.mrb[0].mxu0
  %v8261 = vadd.f32 0.0, %v8260
  %v8262 = vpop.f32.mrb[0].mxu0
  %8263 = vmatprep.mubr.bf16.mxu0 0
  %8264 = vmatmul.mubr.bf16.gmra.mrb[0].mxu0 %v8033
  %v8265 = vpop.f32.mrb[0].mxu0
  %v8266 = vadd.f32 0.0, %v8265
  %v8267 = vpop.f32.mrb[0].mxu0
  %v8268 = vpop.f32.mrb[0].mxu0
  %v8269 = vadd.f32 0.0, %v8268
  %v8270 = vpop.f32.mrb[0].mxu0
  %8271 = vmatprep.mubr.bf16.mxu0 0
  %8272 = vmatmul.mubr.bf16.gmra.mrb[0].mxu0 %v8036
  %v8273 = vpop.f32.mrb[0].mxu0
  %v8274 = vadd.f32 0.0, %v8273
  %v8275 = vpop.f32.mrb[0].mxu0
  %v8276 = vpop.f32.mrb[0].mxu0
  %v8277 = vadd.f32 0.0, %v8276
  %v8278 = vpop.f32.mrb[0].mxu0
  %8279 = vmatprep.mubr.bf16.mxu0 0
  %8280 = vmatmul.mubr.bf16.gmra.mrb[0].mxu0 %v8039
  %v8281 = vpop.f32.mrb[0].mxu0
  %v8282 = vadd.f32 0.0, %v8281
  %v8283 = vpop.f32.mrb[0].mxu0
  %v8284 = vpop.f32.mrb[0].mxu0
  %v8285 = vadd.f32 0.0, %v8284
  %v8286 = vpop.f32.mrb[0].mxu0
  %8287 = vmatprep.mubr.bf16.mxu0 0
  %8288 = vmatmul.mubr.bf16.gmra.mrb[0].mxu0 %v8042
  %v8289 = vpop.f32.mrb[0].mxu0
  %v8290 = vadd.f32 0.0, %v8289
  %v8291 = vpop.f32.mrb[0].mxu0
  %v8292 = vpop.f32.mrb[0].mxu0
  %v8293 = vadd.f32 0.0, %v8292
  %v8294 = vpop.f32.mrb[0].mxu0
  %8295 = vmatprep.mubr.bf16.mxu0 0
  %8296 = vmatmul.mubr.bf16.gmra.mrb[0].mxu0 %v8045
  %v8297 = vpop.f32.mrb[0].mxu0
  %v8298 = vadd.f32 0.0, %v8297
  %v8299 = vpop.f32.mrb[0].mxu0
  %v8300 = vpop.f32.mrb[0].mxu0
  %v8301 = vadd.f32 0.0, %v8300
  %v8302 = vpop.f32.mrb[0].mxu0
  %8303 = vmatprep.mubr.bf16.mxu0 0
  %8304 = vmatmul.mubr.bf16.gmra.mrb[0].mxu0 %v8048
  %v8305 = vpop.f32.mrb[0].mxu0
  %v8306 = vadd.f32 0.0, %v8305
  %v8307 = vpop.f32.mrb[0].mxu0
  %v8308 = vpop.f32.mrb[0].mxu0
  %v8309 = vadd.f32 0.0, %v8308
  %v8310 = vpop.f32.mrb[0].mxu0
  %8311 = vmatprep.mubr.bf16.mxu0 0
  %8312 = vmatmul.mubr.bf16.gmra.mrb[0].mxu0 %v8051
  %v8313 = vpop.f32.mrb[0].mxu0
  %v8314 = vadd.f32 0.0, %v8313
  %v8315 = vpop.f32.mrb[0].mxu0
  %v8316 = vpop.f32.mrb[0].mxu0
  %v8317 = vadd.f32 0.0, %v8316
  %v8318 = vpop.f32.mrb[0].mxu0
  %8319 = vmatprep.mubr.bf16.mxu0 0
  %8320 = vmatmul.mubr.bf16.gmra.mrb[0].mxu0 %v8054
  %v8321 = vpop.f32.mrb[0].mxu0
  %v8322 = vadd.f32 0.0, %v8321
  %v8323 = vpop.f32.mrb[0].mxu0
  %v8324 = vpop.f32.mrb[0].mxu0
  %v8325 = vadd.f32 0.0, %v8324
  %v8326 = vpop.f32.mrb[0].mxu0
  %8327 = vmatprep.mubr.bf16.mxu0 0
  %8328 = vmatmul.mubr.bf16.gmra.mrb[0].mxu0 %v8057
  %v8329 = vpop.f32.mrb[0].mxu0
  %v8330 = vadd.f32 0.0, %v8329
  %v8331 = vpop.f32.mrb[0].mxu0
  %v8332 = vpop.f32.mrb[0].mxu0
  %v8333 = vadd.f32 0.0, %v8332
  %v8334 = vpop.f32.mrb[0].mxu0
  %8335 = vmatprep.mubr.bf16.mxu0 0
  %8336 = vmatmul.mubr.bf16.gmra.mrb[0].mxu0 %v8060
  %v8337 = vpop.f32.mrb[0].mxu0
  %v8338 = vadd.f32 0.0, %v8337
  %v8339 = vpop.f32.mrb[0].mxu0
  %v8340 = vpop.f32.mrb[0].mxu0
  %v8341 = vadd.f32 0.0, %v8340
  %v8342 = vpop.f32.mrb[0].mxu0
  %8343 = vmatprep.mubr.bf16.mxu0 0
  %8344 = vmatmul.mubr.bf16.gmra.mrb[0].mxu0 %v8063
  %v8345 = vpop.f32.mrb[0].mxu0
  %v8346 = vadd.f32 0.0, %v8345
  %v8347 = vpop.f32.mrb[0].mxu0
  %v8348 = vpop.f32.mrb[0].mxu0
  %v8349 = vadd.f32 0.0, %v8348
  %v8350 = vpop.f32.mrb[0].mxu0
  %8351 = vmatprep.mubr.bf16.mxu0 0
  %8352 = vmatmul.mubr.bf16.gmra.mrb[0].mxu0 %v8066
  %v8353 = vpop.f32.mrb[0].mxu0
  %v8354 = vadd.f32 0.0, %v8353
  %v8355 = vpop.f32.mrb[0].mxu0
  %v8356 = vpop.f32.mrb[0].mxu0
  %v8357 = vadd.f32 0.0, %v8356
  %v8358 = vpop.f32.mrb[0].mxu0
  %8359 = vdwg.mxu0
  %v8360 = vadd.f32 %v7810, %v8106
  %v8361 = vadd.f32 %v7811, %v8109
  %v8362 = vadd.f32 %v7812, %v8114
  %v8363 = vadd.f32 %v7813, %v8117
  %v8364 = vadd.f32 %v7814, %v8122
  %v8365 = vadd.f32 %v7815, %v8125
  %v8366 = vadd.f32 %v7816, %v8130
  %v8367 = vadd.f32 %v7817, %v8133
  %v8368 = vadd.f32 %v7818, %v8138
  %v8369 = vadd.f32 %v7819, %v8141
  %v8370 = vadd.f32 %v7820, %v8146
  %v8371 = vadd.f32 %v7821, %v8149
  %v8372 = vadd.f32 %v7822, %v8154
  %v8373 = vadd.f32 %v7823, %v8157
  %v8374 = vadd.f32 %v7824, %v8162
  %v8375 = vadd.f32 %v7825, %v8165
  %v8376 = vadd.f32 %v7826, %v8170
  %v8377 = vadd.f32 %v7827, %v8173
  %v8378 = vadd.f32 %v7828, %v8178
  %v8379 = vadd.f32 %v7829, %v8181
  %v8380 = vadd.f32 %v7830, %v8186
  %v8381 = vadd.f32 %v7831, %v8189
  %v8382 = vadd.f32 %v7832, %v8194
  %v8383 = vadd.f32 %v7833, %v8197
  %v8384 = vadd.f32 %v7834, %v8202
  %v8385 = vadd.f32 %v7835, %v8205
  %v8386 = vadd.f32 %v7836, %v8210
  %v8387 = vadd.f32 %v7837, %v8213
  %v8388 = vadd.f32 %v7838, %v8218
  %v8389 = vadd.f32 %v7839, %v8221
  %v8390 = vadd.f32 %v7840, %v8226
  %v8391 = vadd.f32 %v7841, %v8229
  %v8392 = vadd.f32 %v7842, %v8234
  %v8393 = vadd.f32 %v7843, %v8237
  %v8394 = vadd.f32 %v7844, %v8242
  %v8395 = vadd.f32 %v7845, %v8245
  %v8396 = vadd.f32 %v7846, %v8250
  %v8397 = vadd.f32 %v7847, %v8253
  %v8398 = vadd.f32 %v7848, %v8258
  %v8399 = vadd.f32 %v7849, %v8261
  %v8400 = vadd.f32 %v7850, %v8266
  %v8401 = vadd.f32 %v7851, %v8269
  %v8402 = vadd.f32 %v7852, %v8274
  %v8403 = vadd.f32 %v7853, %v8277
  %v8404 = vadd.f32 %v7854, %v8282
  %v8405 = vadd.f32 %v7855, %v8285
  %v8406 = vadd.f32 %v7856, %v8290
  %v8407 = vadd.f32 %v7857, %v8293
  %v8408 = vadd.f32 %v7858, %v8298
  %v8409 = vadd.f32 %v7859, %v8301
  %v8410 = vadd.f32 %v7860, %v8306
  %v8411 = vadd.f32 %v7861, %v8309
  %v8412 = vadd.f32 %v7862, %v8314
  %v8413 = vadd.f32 %v7863, %v8317
  %v8414 = vadd.f32 %v7864, %v8322
  %v8415 = vadd.f32 %v7865, %v8325
  %v8416 = vadd.f32 %v7866, %v8330
  %v8417 = vadd.f32 %v7867, %v8333
  %v8418 = vadd.f32 %v7868, %v8338
  %v8419 = vadd.f32 %v7869, %v8341
  %v8420 = vadd.f32 %v7870, %v8346
  %v8421 = vadd.f32 %v7871, %v8349
  %v8422 = vadd.f32 %v7872, %v8354
  %v8423 = vadd.f32 %v7873, %v8357
  %v8424 = vld [vmem:[%s5672 + $0x2] sm:$0xff]
  %v8425 = vld [vmem:[%s5672 + $0xa] sm:$0xff]
  %v8426 = vld [vmem:[%s5672 + $0x1a] sm:$0xff]
  %v8427 = vld [vmem:[%s5672 + $0x22] sm:$0xff]
  %v8428 = vld [vmem:[%s5672 + $0x32] sm:$0xff]
  %v8429 = vld [vmem:[%s5672 + $0x3a] sm:$0xff]
  %v8430 = vld [vmem:[%s5672 + $0x4a] sm:$0xff]
  %v8431 = vld [vmem:[%s5672 + $0x52] sm:$0xff]
  %v8432 = vld [vmem:[%s5672 + $0x62] sm:$0xff]
  %v8433 = vld [vmem:[%s5672 + $0x6a] sm:$0xff]
  %v8434 = vld [vmem:[%s5672 + $0x7a] sm:$0xff]
  %v8435 = vld [vmem:[%s5672 + $0x82] sm:$0xff]
  %v8436 = vld [vmem:[%s5672 + $0x92] sm:$0xff]
  %v8437 = vld [vmem:[%s5672 + $0x9a] sm:$0xff]
  %v8438 = vld [vmem:[%s5672 + $0xaa] sm:$0xff]
  %v8439 = vld [vmem:[%s5672 + $0xb2] sm:$0xff]
  %v8440 = vld [vmem:[%s5672 + $0xc2] sm:$0xff]
  %v8441 = vld [vmem:[%s5672 + $0xca] sm:$0xff]
  %v8442 = vld [vmem:[%s5672 + $0xda] sm:$0xff]
  %v8443 = vld [vmem:[%s5672 + $0xe2] sm:$0xff]
  %v8444 = vld [vmem:[%s5672 + $0xf2] sm:$0xff]
  %v8445 = vld [vmem:[%s5672 + $0xfa] sm:$0xff]
  %v8446 = vld [vmem:[%s5672 + $0x10a] sm:$0xff]
  %v8447 = vld [vmem:[%s5672 + $0x112] sm:$0xff]
  %v8448 = vld [vmem:[%s5672 + $0x122] sm:$0xff]
  %v8449 = vld [vmem:[%s5672 + $0x12a] sm:$0xff]
  %v8450 = vld [vmem:[%s5672 + $0x13a] sm:$0xff]
  %v8451 = vld [vmem:[%s5672 + $0x142] sm:$0xff]
  %v8452 = vld [vmem:[%s5672 + $0x152] sm:$0xff]
  %v8453 = vld [vmem:[%s5672 + $0x15a] sm:$0xff]
  %v8454 = vld [vmem:[%s5672 + $0x16a] sm:$0xff]
  %v8455 = vld [vmem:[%s5672 + $0x172] sm:$0xff]
  %v8456 = vld [vmem:[%s5672 + $0x1b2] sm:$0xff]
  %v8457 = vld [vmem:[%s5672 + $0x1ba] sm:$0xff]
  %v8458 = vld [vmem:[%s5672 + $0x1ca] sm:$0xff]
  %v8459 = vld [vmem:[%s5672 + $0x1d2] sm:$0xff]
  %v8460 = vld [vmem:[%s5672 + $0x1e2] sm:$0xff]
  %v8461 = vld [vmem:[%s5672 + $0x1ea] sm:$0xff]
  %v8462 = vld [vmem:[%s5672 + $0x1fa] sm:$0xff]
  %v8463 = vld [vmem:[%s5672 + $0x202] sm:$0xff]
  %v8464 = vld [vmem:[%s5672 + $0x212] sm:$0xff]
  %v8465 = vld [vmem:[%s5672 + $0x21a] sm:$0xff]
  %v8466 = vld [vmem:[%s5672 + $0x22a] sm:$0xff]
  %v8467 = vld [vmem:[%s5672 + $0x232] sm:$0xff]
  %v8468 = vld [vmem:[%s5672 + $0x242] sm:$0xff]
  %v8469 = vld [vmem:[%s5672 + $0x24a] sm:$0xff]
  %v8470 = vld [vmem:[%s5672 + $0x25a] sm:$0xff]
  %v8471 = vld [vmem:[%s5672 + $0x262] sm:$0xff]
  %v8472 = vld [vmem:[%s5672 + $0x272] sm:$0xff]
  %v8473 = vld [vmem:[%s5672 + $0x27a] sm:$0xff]
  %v8474 = vld [vmem:[%s5672 + $0x28a] sm:$0xff]
  %v8475 = vld [vmem:[%s5672 + $0x292] sm:$0xff]
  %v8476 = vld [vmem:[%s5672 + $0x2a2] sm:$0xff]
  %v8477 = vld [vmem:[%s5672 + $0x2aa] sm:$0xff]
  %v8478 = vld [vmem:[%s5672 + $0x2ba] sm:$0xff]
  %v8479 = vld [vmem:[%s5672 + $0x2c2] sm:$0xff]
  %v8480 = vld [vmem:[%s5672 + $0x2d2] sm:$0xff]
  %v8481 = vld [vmem:[%s5672 + $0x2da] sm:$0xff]
  %v8482 = vld [vmem:[%s5672 + $0x2ea] sm:$0xff]
  %v8483 = vld [vmem:[%s5672 + $0x2f2] sm:$0xff]
  %v8484 = vld [vmem:[%s5672 + $0x302] sm:$0xff]
  %v8485 = vld [vmem:[%s5672 + $0x30a] sm:$0xff]
  %v8486 = vld [vmem:[%s5672 + $0x31a] sm:$0xff]
  %v8487 = vld [vmem:[%s5672 + $0x322] sm:$0xff]
  %v8488 = vpack.c.bf16 %v8425, %v8424
  %v8489 = vpack.c.bf16 %v8427, %v8426
  %v8490 = vpack.c.bf16 %v8429, %v8428
  %v8491 = vpack.c.bf16 %v8431, %v8430
  %v8492 = vpack.c.bf16 %v8433, %v8432
  %v8493 = vpack.c.bf16 %v8435, %v8434
  %v8494 = vpack.c.bf16 %v8437, %v8436
  %v8495 = vpack.c.bf16 %v8439, %v8438
  %v8496 = vpack.c.bf16 %v8441, %v8440
  %v8497 = vpack.c.bf16 %v8443, %v8442
  %v8498 = vpack.c.bf16 %v8445, %v8444
  %v8499 = vpack.c.bf16 %v8447, %v8446
  %v8500 = vpack.c.bf16 %v8449, %v8448
  %v8501 = vpack.c.bf16 %v8451, %v8450
  %v8502 = vpack.c.bf16 %v8453, %v8452
  %v8503 = vpack.c.bf16 %v8455, %v8454
  %v8504 = vpack.c.bf16 %v8457, %v8456
  %v8505 = vpack.c.bf16 %v8459, %v8458
  %v8506 = vpack.c.bf16 %v8461, %v8460
  %v8507 = vpack.c.bf16 %v8463, %v8462
  %v8508 = vpack.c.bf16 %v8465, %v8464
  %v8509 = vpack.c.bf16 %v8467, %v8466
  %v8510 = vpack.c.bf16 %v8469, %v8468
  %v8511 = vpack.c.bf16 %v8471, %v8470
  %v8512 = vpack.c.bf16 %v8473, %v8472
  %v8513 = vpack.c.bf16 %v8475, %v8474
  %v8514 = vpack.c.bf16 %v8477, %v8476
  %v8515 = vpack.c.bf16 %v8479, %v8478
  %v8516 = vpack.c.bf16 %v8481, %v8480
  %v8517 = vpack.c.bf16 %v8483, %v8482
  %v8518 = vpack.c.bf16 %v8485, %v8484
  %v8519 = vpack.c.bf16 %v8487, %v8486
  %s8520 = scalar_lea.vmem %s2, 20
  %v8521 = vld [vmem:[%s8520] sm:$0xf]
  %v8523 = vsel %vm5056, %v8488, 0
  %v8526 = vsel %vm5056, %v8489, 0
  %v8529 = vsel %vm5056, %v8490, 0
  %v8532 = vsel %vm5056, %v8491, 0
  %v8535 = vsel %vm5056, %v8492, 0
  %v8538 = vsel %vm5056, %v8493, 0
  %v8541 = vsel %vm5056, %v8494, 0
  %v8544 = vsel %vm5056, %v8495, 0
  %v8547 = vsel %vm5056, %v8496, 0
  %v8550 = vsel %vm5056, %v8497, 0
  %v8553 = vsel %vm5056, %v8498, 0
  %v8556 = vsel %vm5056, %v8499, 0
  %v8559 = vsel %vm5056, %v8500, 0
  %v8562 = vsel %vm5056, %v8501, 0
  %v8565 = vsel %vm5056, %v8502, 0
  %v8568 = vsel %vm5056, %v8503, 0
  %v8571 = vsel %vm5056, %v8504, 0
  %v8574 = vsel %vm5056, %v8505, 0
  %v8577 = vsel %vm5056, %v8506, 0
  %v8580 = vsel %vm5056, %v8507, 0
  %v8583 = vsel %vm5056, %v8508, 0
  %v8586 = vsel %vm5056, %v8509, 0
  %v8589 = vsel %vm5056, %v8510, 0
  %v8592 = vsel %vm5056, %v8511, 0
  %v8595 = vsel %vm5056, %v8512, 0
  %v8598 = vsel %vm5056, %v8513, 0
  %v8601 = vsel %vm5056, %v8514, 0
  %v8604 = vsel %vm5056, %v8515, 0
  %v8607 = vsel %vm5056, %v8516, 0
  %v8610 = vsel %vm5056, %v8517, 0
  %v8613 = vsel %vm5056, %v8518, 0
  %v8616 = vsel %vm5056, %v8519, 0
  %v8619 = vsel %vm6093, %v8521, 0
  %8621 = vmatprep.subr.bf16.mxu0 0
  %8622 = vmatpush1.bf16.msra.mxu0 %v8619
  %8623 = vmatprep.subr.bf16.mxu0 0
  %8624 = vmatpush1.bf16.msra.mxu0 0
  %8625 = vmatprep.subr.bf16.mxu0 0
  %8626 = vmatpush1.bf16.msra.mxu0 0
  %8627 = vmatprep.subr.bf16.mxu0 0
  %8628 = vmatpush1.bf16.msra.mxu0 0
  %8629 = vmatprep.subr.bf16.mxu0 0
  %8630 = vmatpush1.bf16.msra.mxu0 0
  %8631 = vmatprep.subr.bf16.mxu0 0
  %8632 = vmatpush1.bf16.msra.mxu0 0
  %8633 = vmatprep.subr.bf16.mxu0 0
  %8634 = vmatpush1.bf16.msra.mxu0 0
  %8635 = vmatprep.subr.bf16.mxu0 0
  %8636 = vmatpush1.bf16.msra.mxu0 0
  %8637 = vmatprep.subr.bf16.mxu0 0
  %8638 = vmatpush1.bf16.msra.mxu0 0
  %8639 = vmatprep.subr.bf16.mxu0 0
  %8640 = vmatpush1.bf16.msra.mxu0 0
  %8641 = vmatprep.subr.bf16.mxu0 0
  %8642 = vmatpush1.bf16.msra.mxu0 0
  %8643 = vmatprep.subr.bf16.mxu0 0
  %8644 = vmatpush1.bf16.msra.mxu0 0
  %8645 = vmatprep.subr.bf16.mxu0 0
  %8646 = vmatpush1.bf16.msra.mxu0 0
  %8647 = vmatprep.subr.bf16.mxu0 0
  %8648 = vmatpush1.bf16.msra.mxu0 0
  %8649 = vmatprep.subr.bf16.mxu0 0
  %8650 = vmatpush1.bf16.msra.mxu0 0
  %8651 = vmatprep.subr.bf16.mxu0 0
  %8652 = vmatpush1.bf16.msra.mxu0 0
  %8653 = vmatprep.mubr.bf16.mxu0 0
  %8654 = vmatmul.mubr.bf16.gmra.mrb[0].mxu0 %v8523
  %v8655 = vpop.f32.mrb[0].mxu0
  %v8656 = vadd.f32 0.0, %v8655
  %v8657 = vpop.f32.mrb[0].mxu0
  %v8658 = vpop.f32.mrb[0].mxu0
  %v8659 = vadd.f32 0.0, %v8658
  %v8660 = vpop.f32.mrb[0].mxu0
  %8661 = vmatprep.mubr.bf16.mxu0 0
  %8662 = vmatmul.mubr.bf16.gmra.mrb[0].mxu0 %v8526
  %v8663 = vpop.f32.mrb[0].mxu0
  %v8664 = vadd.f32 0.0, %v8663
  %v8665 = vpop.f32.mrb[0].mxu0
  %v8666 = vpop.f32.mrb[0].mxu0
  %v8667 = vadd.f32 0.0, %v8666
  %v8668 = vpop.f32.mrb[0].mxu0
  %8669 = vmatprep.mubr.bf16.mxu0 0
  %8670 = vmatmul.mubr.bf16.gmra.mrb[0].mxu0 %v8529
  %v8671 = vpop.f32.mrb[0].mxu0
  %v8672 = vadd.f32 0.0, %v8671
  %v8673 = vpop.f32.mrb[0].mxu0
  %v8674 = vpop.f32.mrb[0].mxu0
  %v8675 = vadd.f32 0.0, %v8674
  %v8676 = vpop.f32.mrb[0].mxu0
  %8677 = vmatprep.mubr.bf16.mxu0 0
  %8678 = vmatmul.mubr.bf16.gmra.mrb[0].mxu0 %v8532
  %v8679 = vpop.f32.mrb[0].mxu0
  %v8680 = vadd.f32 0.0, %v8679
  %v8681 = vpop.f32.mrb[0].mxu0
  %v8682 = vpop.f32.mrb[0].mxu0
  %v8683 = vadd.f32 0.0, %v8682
  %v8684 = vpop.f32.mrb[0].mxu0
  %8685 = vmatprep.mubr.bf16.mxu0 0
  %8686 = vmatmul.mubr.bf16.gmra.mrb[0].mxu0 %v8535
  %v8687 = vpop.f32.mrb[0].mxu0
  %v8688 = vadd.f32 0.0, %v8687
  %v8689 = vpop.f32.mrb[0].mxu0
  %v8690 = vpop.f32.mrb[0].mxu0
  %v8691 = vadd.f32 0.0, %v8690
  %v8692 = vpop.f32.mrb[0].mxu0
  %8693 = vmatprep.mubr.bf16.mxu0 0
  %8694 = vmatmul.mubr.bf16.gmra.mrb[0].mxu0 %v8538
  %v8695 = vpop.f32.mrb[0].mxu0
  %v8696 = vadd.f32 0.0, %v8695
  %v8697 = vpop.f32.mrb[0].mxu0
  %v8698 = vpop.f32.mrb[0].mxu0
  %v8699 = vadd.f32 0.0, %v8698
  %v8700 = vpop.f32.mrb[0].mxu0
  %8701 = vmatprep.mubr.bf16.mxu0 0
  %8702 = vmatmul.mubr.bf16.gmra.mrb[0].mxu0 %v8541
  %v8703 = vpop.f32.mrb[0].mxu0
  %v8704 = vadd.f32 0.0, %v8703
  %v8705 = vpop.f32.mrb[0].mxu0
  %v8706 = vpop.f32.mrb[0].mxu0
  %v8707 = vadd.f32 0.0, %v8706
  %v8708 = vpop.f32.mrb[0].mxu0
  %8709 = vmatprep.mubr.bf16.mxu0 0
  %8710 = vmatmul.mubr.bf16.gmra.mrb[0].mxu0 %v8544
  %v8711 = vpop.f32.mrb[0].mxu0
  %v8712 = vadd.f32 0.0, %v8711
  %v8713 = vpop.f32.mrb[0].mxu0
  %v8714 = vpop.f32.mrb[0].mxu0
  %v8715 = vadd.f32 0.0, %v8714
  %v8716 = vpop.f32.mrb[0].mxu0
  %8717 = vmatprep.mubr.bf16.mxu0 0
  %8718 = vmatmul.mubr.bf16.gmra.mrb[0].mxu0 %v8547
  %v8719 = vpop.f32.mrb[0].mxu0
  %v8720 = vadd.f32 0.0, %v8719
  %v8721 = vpop.f32.mrb[0].mxu0
  %v8722 = vpop.f32.mrb[0].mxu0
  %v8723 = vadd.f32 0.0, %v8722
  %v8724 = vpop.f32.mrb[0].mxu0
  %8725 = vmatprep.mubr.bf16.mxu0 0
  %8726 = vmatmul.mubr.bf16.gmra.mrb[0].mxu0 %v8550
  %v8727 = vpop.f32.mrb[0].mxu0
  %v8728 = vadd.f32 0.0, %v8727
  %v8729 = vpop.f32.mrb[0].mxu0
  %v8730 = vpop.f32.mrb[0].mxu0
  %v8731 = vadd.f32 0.0, %v8730
  %v8732 = vpop.f32.mrb[0].mxu0
  %8733 = vmatprep.mubr.bf16.mxu0 0
  %8734 = vmatmul.mubr.bf16.gmra.mrb[0].mxu0 %v8553
  %v8735 = vpop.f32.mrb[0].mxu0
  %v8736 = vadd.f32 0.0, %v8735
  %v8737 = vpop.f32.mrb[0].mxu0
  %v8738 = vpop.f32.mrb[0].mxu0
  %v8739 = vadd.f32 0.0, %v8738
  %v8740 = vpop.f32.mrb[0].mxu0
  %8741 = vmatprep.mubr.bf16.mxu0 0
  %8742 = vmatmul.mubr.bf16.gmra.mrb[0].mxu0 %v8556
  %v8743 = vpop.f32.mrb[0].mxu0
  %v8744 = vadd.f32 0.0, %v8743
  %v8745 = vpop.f32.mrb[0].mxu0
  %v8746 = vpop.f32.mrb[0].mxu0
  %v8747 = vadd.f32 0.0, %v8746
  %v8748 = vpop.f32.mrb[0].mxu0
  %8749 = vmatprep.mubr.bf16.mxu0 0
  %8750 = vmatmul.mubr.bf16.gmra.mrb[0].mxu0 %v8559
  %v8751 = vpop.f32.mrb[0].mxu0
  %v8752 = vadd.f32 0.0, %v8751
  %v8753 = vpop.f32.mrb[0].mxu0
  %v8754 = vpop.f32.mrb[0].mxu0
  %v8755 = vadd.f32 0.0, %v8754
  %v8756 = vpop.f32.mrb[0].mxu0
  %8757 = vmatprep.mubr.bf16.mxu0 0
  %8758 = vmatmul.mubr.bf16.gmra.mrb[0].mxu0 %v8562
  %v8759 = vpop.f32.mrb[0].mxu0
  %v8760 = vadd.f32 0.0, %v8759
  %v8761 = vpop.f32.mrb[0].mxu0
  %v8762 = vpop.f32.mrb[0].mxu0
  %v8763 = vadd.f32 0.0, %v8762
  %v8764 = vpop.f32.mrb[0].mxu0
  %8765 = vmatprep.mubr.bf16.mxu0 0
  %8766 = vmatmul.mubr.bf16.gmra.mrb[0].mxu0 %v8565
  %v8767 = vpop.f32.mrb[0].mxu0
  %v8768 = vadd.f32 0.0, %v8767
  %v8769 = vpop.f32.mrb[0].mxu0
  %v8770 = vpop.f32.mrb[0].mxu0
  %v8771 = vadd.f32 0.0, %v8770
  %v8772 = vpop.f32.mrb[0].mxu0
  %8773 = vmatprep.mubr.bf16.mxu0 0
  %8774 = vmatmul.mubr.bf16.gmra.mrb[0].mxu0 %v8568
  %v8775 = vpop.f32.mrb[0].mxu0
  %v8776 = vadd.f32 0.0, %v8775
  %v8777 = vpop.f32.mrb[0].mxu0
  %v8778 = vpop.f32.mrb[0].mxu0
  %v8779 = vadd.f32 0.0, %v8778
  %v8780 = vpop.f32.mrb[0].mxu0
  %8781 = vmatprep.mubr.bf16.mxu0 0
  %8782 = vmatmul.mubr.bf16.gmra.mrb[0].mxu0 %v8571
  %v8783 = vpop.f32.mrb[0].mxu0
  %v8784 = vadd.f32 0.0, %v8783
  %v8785 = vpop.f32.mrb[0].mxu0
  %v8786 = vpop.f32.mrb[0].mxu0
  %v8787 = vadd.f32 0.0, %v8786
  %v8788 = vpop.f32.mrb[0].mxu0
  %8789 = vmatprep.mubr.bf16.mxu0 0
  %8790 = vmatmul.mubr.bf16.gmra.mrb[0].mxu0 %v8574
  %v8791 = vpop.f32.mrb[0].mxu0
  %v8792 = vadd.f32 0.0, %v8791
  %v8793 = vpop.f32.mrb[0].mxu0
  %v8794 = vpop.f32.mrb[0].mxu0
  %v8795 = vadd.f32 0.0, %v8794
  %v8796 = vpop.f32.mrb[0].mxu0
  %8797 = vmatprep.mubr.bf16.mxu0 0
  %8798 = vmatmul.mubr.bf16.gmra.mrb[0].mxu0 %v8577
  %v8799 = vpop.f32.mrb[0].mxu0
  %v8800 = vadd.f32 0.0, %v8799
  %v8801 = vpop.f32.mrb[0].mxu0
  %v8802 = vpop.f32.mrb[0].mxu0
  %v8803 = vadd.f32 0.0, %v8802
  %v8804 = vpop.f32.mrb[0].mxu0
  %8805 = vmatprep.mubr.bf16.mxu0 0
  %8806 = vmatmul.mubr.bf16.gmra.mrb[0].mxu0 %v8580
  %v8807 = vpop.f32.mrb[0].mxu0
  %v8808 = vadd.f32 0.0, %v8807
  %v8809 = vpop.f32.mrb[0].mxu0
  %v8810 = vpop.f32.mrb[0].mxu0
  %v8811 = vadd.f32 0.0, %v8810
  %v8812 = vpop.f32.mrb[0].mxu0
  %8813 = vmatprep.mubr.bf16.mxu0 0
  %8814 = vmatmul.mubr.bf16.gmra.mrb[0].mxu0 %v8583
  %v8815 = vpop.f32.mrb[0].mxu0
  %v8816 = vadd.f32 0.0, %v8815
  %v8817 = vpop.f32.mrb[0].mxu0
  %v8818 = vpop.f32.mrb[0].mxu0
  %v8819 = vadd.f32 0.0, %v8818
  %v8820 = vpop.f32.mrb[0].mxu0
  %8821 = vmatprep.mubr.bf16.mxu0 0
  %8822 = vmatmul.mubr.bf16.gmra.mrb[0].mxu0 %v8586
  %v8823 = vpop.f32.mrb[0].mxu0
  %v8824 = vadd.f32 0.0, %v8823
  %v8825 = vpop.f32.mrb[0].mxu0
  %v8826 = vpop.f32.mrb[0].mxu0
  %v8827 = vadd.f32 0.0, %v8826
  %v8828 = vpop.f32.mrb[0].mxu0
  %8829 = vmatprep.mubr.bf16.mxu0 0
  %8830 = vmatmul.mubr.bf16.gmra.mrb[0].mxu0 %v8589
  %v8831 = vpop.f32.mrb[0].mxu0
  %v8832 = vadd.f32 0.0, %v8831
  %v8833 = vpop.f32.mrb[0].mxu0
  %v8834 = vpop.f32.mrb[0].mxu0
  %v8835 = vadd.f32 0.0, %v8834
  %v8836 = vpop.f32.mrb[0].mxu0
  %8837 = vmatprep.mubr.bf16.mxu0 0
  %8838 = vmatmul.mubr.bf16.gmra.mrb[0].mxu0 %v8592
  %v8839 = vpop.f32.mrb[0].mxu0
  %v8840 = vadd.f32 0.0, %v8839
  %v8841 = vpop.f32.mrb[0].mxu0
  %v8842 = vpop.f32.mrb[0].mxu0
  %v8843 = vadd.f32 0.0, %v8842
  %v8844 = vpop.f32.mrb[0].mxu0
  %8845 = vmatprep.mubr.bf16.mxu0 0
  %8846 = vmatmul.mubr.bf16.gmra.mrb[0].mxu0 %v8595
  %v8847 = vpop.f32.mrb[0].mxu0
  %v8848 = vadd.f32 0.0, %v8847
  %v8849 = vpop.f32.mrb[0].mxu0
  %v8850 = vpop.f32.mrb[0].mxu0
  %v8851 = vadd.f32 0.0, %v8850
  %v8852 = vpop.f32.mrb[0].mxu0
  %8853 = vmatprep.mubr.bf16.mxu0 0
  %8854 = vmatmul.mubr.bf16.gmra.mrb[0].mxu0 %v8598
  %v8855 = vpop.f32.mrb[0].mxu0
  %v8856 = vadd.f32 0.0, %v8855
  %v8857 = vpop.f32.mrb[0].mxu0
  %v8858 = vpop.f32.mrb[0].mxu0
  %v8859 = vadd.f32 0.0, %v8858
  %v8860 = vpop.f32.mrb[0].mxu0
  %8861 = vmatprep.mubr.bf16.mxu0 0
  %8862 = vmatmul.mubr.bf16.gmra.mrb[0].mxu0 %v8601
  %v8863 = vpop.f32.mrb[0].mxu0
  %v8864 = vadd.f32 0.0, %v8863
  %v8865 = vpop.f32.mrb[0].mxu0
  %v8866 = vpop.f32.mrb[0].mxu0
  %v8867 = vadd.f32 0.0, %v8866
  %v8868 = vpop.f32.mrb[0].mxu0
  %8869 = vmatprep.mubr.bf16.mxu0 0
  %8870 = vmatmul.mubr.bf16.gmra.mrb[0].mxu0 %v8604
  %v8871 = vpop.f32.mrb[0].mxu0
  %v8872 = vadd.f32 0.0, %v8871
  %v8873 = vpop.f32.mrb[0].mxu0
  %v8874 = vpop.f32.mrb[0].mxu0
  %v8875 = vadd.f32 0.0, %v8874
  %v8876 = vpop.f32.mrb[0].mxu0
  %8877 = vmatprep.mubr.bf16.mxu0 0
  %8878 = vmatmul.mubr.bf16.gmra.mrb[0].mxu0 %v8607
  %v8879 = vpop.f32.mrb[0].mxu0
  %v8880 = vadd.f32 0.0, %v8879
  %v8881 = vpop.f32.mrb[0].mxu0
  %v8882 = vpop.f32.mrb[0].mxu0
  %v8883 = vadd.f32 0.0, %v8882
  %v8884 = vpop.f32.mrb[0].mxu0
  %8885 = vmatprep.mubr.bf16.mxu0 0
  %8886 = vmatmul.mubr.bf16.gmra.mrb[0].mxu0 %v8610
  %v8887 = vpop.f32.mrb[0].mxu0
  %v8888 = vadd.f32 0.0, %v8887
  %v8889 = vpop.f32.mrb[0].mxu0
  %v8890 = vpop.f32.mrb[0].mxu0
  %v8891 = vadd.f32 0.0, %v8890
  %v8892 = vpop.f32.mrb[0].mxu0
  %8893 = vmatprep.mubr.bf16.mxu0 0
  %8894 = vmatmul.mubr.bf16.gmra.mrb[0].mxu0 %v8613
  %v8895 = vpop.f32.mrb[0].mxu0
  %v8896 = vadd.f32 0.0, %v8895
  %v8897 = vpop.f32.mrb[0].mxu0
  %v8898 = vpop.f32.mrb[0].mxu0
  %v8899 = vadd.f32 0.0, %v8898
  %v8900 = vpop.f32.mrb[0].mxu0
  %8901 = vmatprep.mubr.bf16.mxu0 0
  %8902 = vmatmul.mubr.bf16.gmra.mrb[0].mxu0 %v8616
  %v8903 = vpop.f32.mrb[0].mxu0
  %v8904 = vadd.f32 0.0, %v8903
  %v8905 = vpop.f32.mrb[0].mxu0
  %v8906 = vpop.f32.mrb[0].mxu0
  %v8907 = vadd.f32 0.0, %v8906
  %v8908 = vpop.f32.mrb[0].mxu0
  %8909 = vdwg.mxu0
  %v8910 = vadd.f32 %v8360, %v8656
  %v8911 = vadd.f32 %v8361, %v8659
  %v8912 = vadd.f32 %v8362, %v8664
  %v8913 = vadd.f32 %v8363, %v8667
  %v8914 = vadd.f32 %v8364, %v8672
  %v8915 = vadd.f32 %v8365, %v8675
  %v8916 = vadd.f32 %v8366, %v8680
  %v8917 = vadd.f32 %v8367, %v8683
  %v8918 = vadd.f32 %v8368, %v8688
  %v8919 = vadd.f32 %v8369, %v8691
  %v8920 = vadd.f32 %v8370, %v8696
  %v8921 = vadd.f32 %v8371, %v8699
  %v8922 = vadd.f32 %v8372, %v8704
  %v8923 = vadd.f32 %v8373, %v8707
  %v8924 = vadd.f32 %v8374, %v8712
  %v8925 = vadd.f32 %v8375, %v8715
  %v8926 = vadd.f32 %v8376, %v8720
  %v8927 = vadd.f32 %v8377, %v8723
  %v8928 = vadd.f32 %v8378, %v8728
  %v8929 = vadd.f32 %v8379, %v8731
  %v8930 = vadd.f32 %v8380, %v8736
  %v8931 = vadd.f32 %v8381, %v8739
  %v8932 = vadd.f32 %v8382, %v8744
  %v8933 = vadd.f32 %v8383, %v8747
  %v8934 = vadd.f32 %v8384, %v8752
  %v8935 = vadd.f32 %v8385, %v8755
  %v8936 = vadd.f32 %v8386, %v8760
  %v8937 = vadd.f32 %v8387, %v8763
  %v8938 = vadd.f32 %v8388, %v8768
  %v8939 = vadd.f32 %v8389, %v8771
  %v8940 = vadd.f32 %v8390, %v8776
  %v8941 = vadd.f32 %v8391, %v8779
  %v8942 = vadd.f32 %v8392, %v8784
  %v8943 = vadd.f32 %v8393, %v8787
  %v8944 = vadd.f32 %v8394, %v8792
  %v8945 = vadd.f32 %v8395, %v8795
  %v8946 = vadd.f32 %v8396, %v8800
  %v8947 = vadd.f32 %v8397, %v8803
  %v8948 = vadd.f32 %v8398, %v8808
  %v8949 = vadd.f32 %v8399, %v8811
  %v8950 = vadd.f32 %v8400, %v8816
  %v8951 = vadd.f32 %v8401, %v8819
  %v8952 = vadd.f32 %v8402, %v8824
  %v8953 = vadd.f32 %v8403, %v8827
  %v8954 = vadd.f32 %v8404, %v8832
  %v8955 = vadd.f32 %v8405, %v8835
  %v8956 = vadd.f32 %v8406, %v8840
  %v8957 = vadd.f32 %v8407, %v8843
  %v8958 = vadd.f32 %v8408, %v8848
  %v8959 = vadd.f32 %v8409, %v8851
  %v8960 = vadd.f32 %v8410, %v8856
  %v8961 = vadd.f32 %v8411, %v8859
  %v8962 = vadd.f32 %v8412, %v8864
  %v8963 = vadd.f32 %v8413, %v8867
  %v8964 = vadd.f32 %v8414, %v8872
  %v8965 = vadd.f32 %v8415, %v8875
  %v8966 = vadd.f32 %v8416, %v8880
  %v8967 = vadd.f32 %v8417, %v8883
  %v8968 = vadd.f32 %v8418, %v8888
  %v8969 = vadd.f32 %v8419, %v8891
  %v8970 = vadd.f32 %v8420, %v8896
  %v8971 = vadd.f32 %v8421, %v8899
  %v8972 = vadd.f32 %v8422, %v8904
  %v8973 = vadd.f32 %v8423, %v8907
  %s8974 = scalar_lea.vmem [#allocation3], 48
  %v8975 = vld [vmem:[%s8974] sm:$0xff]
  %v8976 = vld [vmem:[%s8974 + $0x8] sm:$0xff]
  %v8977 = vld [vmem:[%s8974 + $0x18] sm:$0xff]
  %v8978 = vld [vmem:[%s8974 + $0x20] sm:$0xff]
  %v8979 = vld [vmem:[%s8974 + $0x30] sm:$0xff]
  %v8980 = vld [vmem:[%s8974 + $0x38] sm:$0xff]
  %v8981 = vld [vmem:[%s8974 + $0x48] sm:$0xff]
  %v8982 = vld [vmem:[%s8974 + $0x50] sm:$0xff]
  %v8983 = vld [vmem:[%s8974 + $0x60] sm:$0xff]
  %v8984 = vld [vmem:[%s8974 + $0x68] sm:$0xff]
  %v8985 = vld [vmem:[%s8974 + $0x78] sm:$0xff]
  %v8986 = vld [vmem:[%s8974 + $0x80] sm:$0xff]
  %v8987 = vld [vmem:[%s8974 + $0x90] sm:$0xff]
  %v8988 = vld [vmem:[%s8974 + $0x98] sm:$0xff]
  %v8989 = vld [vmem:[%s8974 + $0xa8] sm:$0xff]
  %v8990 = vld [vmem:[%s8974 + $0xb0] sm:$0xff]
  %v8991 = vld [vmem:[%s8974 + $0xc0] sm:$0xff]
  %v8992 = vld [vmem:[%s8974 + $0xc8] sm:$0xff]
  %v8993 = vld [vmem:[%s8974 + $0xd8] sm:$0xff]
  %v8994 = vld [vmem:[%s8974 + $0xe0] sm:$0xff]
  %v8995 = vld [vmem:[%s8974 + $0xf0] sm:$0xff]
  %v8996 = vld [vmem:[%s8974 + $0xf8] sm:$0xff]
  %v8997 = vld [vmem:[%s8974 + $0x108] sm:$0xff]
  %v8998 = vld [vmem:[%s8974 + $0x110] sm:$0xff]
  %v8999 = vld [vmem:[%s8974 + $0x120] sm:$0xff]
  %v9000 = vld [vmem:[%s8974 + $0x128] sm:$0xff]
  %v9001 = vld [vmem:[%s8974 + $0x138] sm:$0xff]
  %v9002 = vld [vmem:[%s8974 + $0x140] sm:$0xff]
  %v9003 = vld [vmem:[%s8974 + $0x150] sm:$0xff]
  %v9004 = vld [vmem:[%s8974 + $0x158] sm:$0xff]
  %v9005 = vld [vmem:[%s8974 + $0x168] sm:$0xff]
  %v9006 = vld [vmem:[%s8974 + $0x170] sm:$0xff]
  %v9007 = vld [vmem:[%s8974 + $0x1b0] sm:$0xff]
  %v9008 = vld [vmem:[%s8974 + $0x1b8] sm:$0xff]
  %v9009 = vld [vmem:[%s8974 + $0x1c8] sm:$0xff]
  %v9010 = vld [vmem:[%s8974 + $0x1d0] sm:$0xff]
  %v9011 = vld [vmem:[%s8974 + $0x1e0] sm:$0xff]
  %v9012 = vld [vmem:[%s8974 + $0x1e8] sm:$0xff]
  %v9013 = vld [vmem:[%s8974 + $0x1f8] sm:$0xff]
  %v9014 = vld [vmem:[%s8974 + $0x200] sm:$0xff]
  %v9015 = vld [vmem:[%s8974 + $0x210] sm:$0xff]
  %v9016 = vld [vmem:[%s8974 + $0x218] sm:$0xff]
  %v9017 = vld [vmem:[%s8974 + $0x228] sm:$0xff]
  %v9018 = vld [vmem:[%s8974 + $0x230] sm:$0xff]
  %v9019 = vld [vmem:[%s8974 + $0x240] sm:$0xff]
  %v9020 = vld [vmem:[%s8974 + $0x248] sm:$0xff]
  %v9021 = vld [vmem:[%s8974 + $0x258] sm:$0xff]
  %v9022 = vld [vmem:[%s8974 + $0x260] sm:$0xff]
  %v9023 = vld [vmem:[%s8974 + $0x270] sm:$0xff]
  %v9024 = vld [vmem:[%s8974 + $0x278] sm:$0xff]
  %v9025 = vld [vmem:[%s8974 + $0x288] sm:$0xff]
  %v9026 = vld [vmem:[%s8974 + $0x290] sm:$0xff]
  %v9027 = vld [vmem:[%s8974 + $0x2a0] sm:$0xff]
  %v9028 = vld [vmem:[%s8974 + $0x2a8] sm:$0xff]
  %v9029 = vld [vmem:[%s8974 + $0x2b8] sm:$0xff]
  %v9030 = vld [vmem:[%s8974 + $0x2c0] sm:$0xff]
  %v9031 = vld [vmem:[%s8974 + $0x2d0] sm:$0xff]
  %v9032 = vld [vmem:[%s8974 + $0x2d8] sm:$0xff]
  %v9033 = vld [vmem:[%s8974 + $0x2e8] sm:$0xff]
  %v9034 = vld [vmem:[%s8974 + $0x2f0] sm:$0xff]
  %v9035 = vld [vmem:[%s8974 + $0x300] sm:$0xff]
  %v9036 = vld [vmem:[%s8974 + $0x308] sm:$0xff]
  %v9037 = vld [vmem:[%s8974 + $0x318] sm:$0xff]
  %v9038 = vld [vmem:[%s8974 + $0x320] sm:$0xff]
  %v9039 = vpack.c.bf16 %v8976, %v8975
  %v9040 = vpack.c.bf16 %v8978, %v8977
  %v9041 = vpack.c.bf16 %v8980, %v8979
  %v9042 = vpack.c.bf16 %v8982, %v8981
  %v9043 = vpack.c.bf16 %v8984, %v8983
  %v9044 = vpack.c.bf16 %v8986, %v8985
  %v9045 = vpack.c.bf16 %v8988, %v8987
  %v9046 = vpack.c.bf16 %v8990, %v8989
  %v9047 = vpack.c.bf16 %v8992, %v8991
  %v9048 = vpack.c.bf16 %v8994, %v8993
  %v9049 = vpack.c.bf16 %v8996, %v8995
  %v9050 = vpack.c.bf16 %v8998, %v8997
  %v9051 = vpack.c.bf16 %v9000, %v8999
  %v9052 = vpack.c.bf16 %v9002, %v9001
  %v9053 = vpack.c.bf16 %v9004, %v9003
  %v9054 = vpack.c.bf16 %v9006, %v9005
  %v9055 = vpack.c.bf16 %v9008, %v9007
  %v9056 = vpack.c.bf16 %v9010, %v9009
  %v9057 = vpack.c.bf16 %v9012, %v9011
  %v9058 = vpack.c.bf16 %v9014, %v9013
  %v9059 = vpack.c.bf16 %v9016, %v9015
  %v9060 = vpack.c.bf16 %v9018, %v9017
  %v9061 = vpack.c.bf16 %v9020, %v9019
  %v9062 = vpack.c.bf16 %v9022, %v9021
  %v9063 = vpack.c.bf16 %v9024, %v9023
  %v9064 = vpack.c.bf16 %v9026, %v9025
  %v9065 = vpack.c.bf16 %v9028, %v9027
  %v9066 = vpack.c.bf16 %v9030, %v9029
  %v9067 = vpack.c.bf16 %v9032, %v9031
  %v9068 = vpack.c.bf16 %v9034, %v9033
  %v9069 = vpack.c.bf16 %v9036, %v9035
  %v9070 = vpack.c.bf16 %v9038, %v9037
  %s9071 = scalar_lea.vmem %s2, 24
  %v9072 = vld [vmem:[%s9071] sm:$0xf]
  %v9074 = vsel %vm5056, %v9039, 0
  %v9077 = vsel %vm5056, %v9040, 0
  %v9080 = vsel %vm5056, %v9041, 0
  %v9083 = vsel %vm5056, %v9042, 0
  %v9086 = vsel %vm5056, %v9043, 0
  %v9089 = vsel %vm5056, %v9044, 0
  %v9092 = vsel %vm5056, %v9045, 0
  %v9095 = vsel %vm5056, %v9046, 0
  %v9098 = vsel %vm5056, %v9047, 0
  %v9101 = vsel %vm5056, %v9048, 0
  %v9104 = vsel %vm5056, %v9049, 0
  %v9107 = vsel %vm5056, %v9050, 0
  %v9110 = vsel %vm5056, %v9051, 0
  %v9113 = vsel %vm5056, %v9052, 0
  %v9116 = vsel %vm5056, %v9053, 0
  %v9119 = vsel %vm5056, %v9054, 0
  %v9122 = vsel %vm5056, %v9055, 0
  %v9125 = vsel %vm5056, %v9056, 0
  %v9128 = vsel %vm5056, %v9057, 0
  %v9131 = vsel %vm5056, %v9058, 0
  %v9134 = vsel %vm5056, %v9059, 0
  %v9137 = vsel %vm5056, %v9060, 0
  %v9140 = vsel %vm5056, %v9061, 0
  %v9143 = vsel %vm5056, %v9062, 0
  %v9146 = vsel %vm5056, %v9063, 0
  %v9149 = vsel %vm5056, %v9064, 0
  %v9152 = vsel %vm5056, %v9065, 0
  %v9155 = vsel %vm5056, %v9066, 0
  %v9158 = vsel %vm5056, %v9067, 0
  %v9161 = vsel %vm5056, %v9068, 0
  %v9164 = vsel %vm5056, %v9069, 0
  %v9167 = vsel %vm5056, %v9070, 0
  %v9170 = vsel %vm6093, %v9072, 0
  %9172 = vmatprep.subr.bf16.mxu0 0
  %9173 = vmatpush1.bf16.msra.mxu0 %v9170
  %9174 = vmatprep.subr.bf16.mxu0 0
  %9175 = vmatpush1.bf16.msra.mxu0 0
  %9176 = vmatprep.subr.bf16.mxu0 0
  %9177 = vmatpush1.bf16.msra.mxu0 0
  %9178 = vmatprep.subr.bf16.mxu0 0
  %9179 = vmatpush1.bf16.msra.mxu0 0
  %9180 = vmatprep.subr.bf16.mxu0 0
  %9181 = vmatpush1.bf16.msra.mxu0 0
  %9182 = vmatprep.subr.bf16.mxu0 0
  %9183 = vmatpush1.bf16.msra.mxu0 0
  %9184 = vmatprep.subr.bf16.mxu0 0
  %9185 = vmatpush1.bf16.msra.mxu0 0
  %9186 = vmatprep.subr.bf16.mxu0 0
  %9187 = vmatpush1.bf16.msra.mxu0 0
  %9188 = vmatprep.subr.bf16.mxu0 0
  %9189 = vmatpush1.bf16.msra.mxu0 0
  %9190 = vmatprep.subr.bf16.mxu0 0
  %9191 = vmatpush1.bf16.msra.mxu0 0
  %9192 = vmatprep.subr.bf16.mxu0 0
  %9193 = vmatpush1.bf16.msra.mxu0 0
  %9194 = vmatprep.subr.bf16.mxu0 0
  %9195 = vmatpush1.bf16.msra.mxu0 0
  %9196 = vmatprep.subr.bf16.mxu0 0
  %9197 = vmatpush1.bf16.msra.mxu0 0
  %9198 = vmatprep.subr.bf16.mxu0 0
  %9199 = vmatpush1.bf16.msra.mxu0 0
  %9200 = vmatprep.subr.bf16.mxu0 0
  %9201 = vmatpush1.bf16.msra.mxu0 0
  %9202 = vmatprep.subr.bf16.mxu0 0
  %9203 = vmatpush1.bf16.msra.mxu0 0
  %9204 = vmatprep.mubr.bf16.mxu0 0
  %9205 = vmatmul.mubr.bf16.gmra.mrb[0].mxu0 %v9074
  %v9206 = vpop.f32.mrb[0].mxu0
  %v9207 = vadd.f32 0.0, %v9206
  %v9208 = vpop.f32.mrb[0].mxu0
  %v9209 = vpop.f32.mrb[0].mxu0
  %v9210 = vadd.f32 0.0, %v9209
  %v9211 = vpop.f32.mrb[0].mxu0
  %9212 = vmatprep.mubr.bf16.mxu0 0
  %9213 = vmatmul.mubr.bf16.gmra.mrb[0].mxu0 %v9077
  %v9214 = vpop.f32.mrb[0].mxu0
  %v9215 = vadd.f32 0.0, %v9214
  %v9216 = vpop.f32.mrb[0].mxu0
  %v9217 = vpop.f32.mrb[0].mxu0
  %v9218 = vadd.f32 0.0, %v9217
  %v9219 = vpop.f32.mrb[0].mxu0
  %9220 = vmatprep.mubr.bf16.mxu0 0
  %9221 = vmatmul.mubr.bf16.gmra.mrb[0].mxu0 %v9080
  %v9222 = vpop.f32.mrb[0].mxu0
  %v9223 = vadd.f32 0.0, %v9222
  %v9224 = vpop.f32.mrb[0].mxu0
  %v9225 = vpop.f32.mrb[0].mxu0
  %v9226 = vadd.f32 0.0, %v9225
  %v9227 = vpop.f32.mrb[0].mxu0
  %9228 = vmatprep.mubr.bf16.mxu0 0
  %9229 = vmatmul.mubr.bf16.gmra.mrb[0].mxu0 %v9083
  %v9230 = vpop.f32.mrb[0].mxu0
  %v9231 = vadd.f32 0.0, %v9230
  %v9232 = vpop.f32.mrb[0].mxu0
  %v9233 = vpop.f32.mrb[0].mxu0
  %v9234 = vadd.f32 0.0, %v9233
  %v9235 = vpop.f32.mrb[0].mxu0
  %9236 = vmatprep.mubr.bf16.mxu0 0
  %9237 = vmatmul.mubr.bf16.gmra.mrb[0].mxu0 %v9086
  %v9238 = vpop.f32.mrb[0].mxu0
  %v9239 = vadd.f32 0.0, %v9238
  %v9240 = vpop.f32.mrb[0].mxu0
  %v9241 = vpop.f32.mrb[0].mxu0
  %v9242 = vadd.f32 0.0, %v9241
  %v9243 = vpop.f32.mrb[0].mxu0
  %9244 = vmatprep.mubr.bf16.mxu0 0
  %9245 = vmatmul.mubr.bf16.gmra.mrb[0].mxu0 %v9089
  %v9246 = vpop.f32.mrb[0].mxu0
  %v9247 = vadd.f32 0.0, %v9246
  %v9248 = vpop.f32.mrb[0].mxu0
  %v9249 = vpop.f32.mrb[0].mxu0
  %v9250 = vadd.f32 0.0, %v9249
  %v9251 = vpop.f32.mrb[0].mxu0
  %9252 = vmatprep.mubr.bf16.mxu0 0
  %9253 = vmatmul.mubr.bf16.gmra.mrb[0].mxu0 %v9092
  %v9254 = vpop.f32.mrb[0].mxu0
  %v9255 = vadd.f32 0.0, %v9254
  %v9256 = vpop.f32.mrb[0].mxu0
  %v9257 = vpop.f32.mrb[0].mxu0
  %v9258 = vadd.f32 0.0, %v9257
  %v9259 = vpop.f32.mrb[0].mxu0
  %9260 = vmatprep.mubr.bf16.mxu0 0
  %9261 = vmatmul.mubr.bf16.gmra.mrb[0].mxu0 %v9095
  %v9262 = vpop.f32.mrb[0].mxu0
  %v9263 = vadd.f32 0.0, %v9262
  %v9264 = vpop.f32.mrb[0].mxu0
  %v9265 = vpop.f32.mrb[0].mxu0
  %v9266 = vadd.f32 0.0, %v9265
  %v9267 = vpop.f32.mrb[0].mxu0
  %9268 = vmatprep.mubr.bf16.mxu0 0
  %9269 = vmatmul.mubr.bf16.gmra.mrb[0].mxu0 %v9098
  %v9270 = vpop.f32.mrb[0].mxu0
  %v9271 = vadd.f32 0.0, %v9270
  %v9272 = vpop.f32.mrb[0].mxu0
  %v9273 = vpop.f32.mrb[0].mxu0
  %v9274 = vadd.f32 0.0, %v9273
  %v9275 = vpop.f32.mrb[0].mxu0
  %9276 = vmatprep.mubr.bf16.mxu0 0
  %9277 = vmatmul.mubr.bf16.gmra.mrb[0].mxu0 %v9101
  %v9278 = vpop.f32.mrb[0].mxu0
  %v9279 = vadd.f32 0.0, %v9278
  %v9280 = vpop.f32.mrb[0].mxu0
  %v9281 = vpop.f32.mrb[0].mxu0
  %v9282 = vadd.f32 0.0, %v9281
  %v9283 = vpop.f32.mrb[0].mxu0
  %9284 = vmatprep.mubr.bf16.mxu0 0
  %9285 = vmatmul.mubr.bf16.gmra.mrb[0].mxu0 %v9104
  %v9286 = vpop.f32.mrb[0].mxu0
  %v9287 = vadd.f32 0.0, %v9286
  %v9288 = vpop.f32.mrb[0].mxu0
  %v9289 = vpop.f32.mrb[0].mxu0
  %v9290 = vadd.f32 0.0, %v9289
  %v9291 = vpop.f32.mrb[0].mxu0
  %9292 = vmatprep.mubr.bf16.mxu0 0
  %9293 = vmatmul.mubr.bf16.gmra.mrb[0].mxu0 %v9107
  %v9294 = vpop.f32.mrb[0].mxu0
  %v9295 = vadd.f32 0.0, %v9294
  %v9296 = vpop.f32.mrb[0].mxu0
  %v9297 = vpop.f32.mrb[0].mxu0
  %v9298 = vadd.f32 0.0, %v9297
  %v9299 = vpop.f32.mrb[0].mxu0
  %9300 = vmatprep.mubr.bf16.mxu0 0
  %9301 = vmatmul.mubr.bf16.gmra.mrb[0].mxu0 %v9110
  %v9302 = vpop.f32.mrb[0].mxu0
  %v9303 = vadd.f32 0.0, %v9302
  %v9304 = vpop.f32.mrb[0].mxu0
  %v9305 = vpop.f32.mrb[0].mxu0
  %v9306 = vadd.f32 0.0, %v9305
  %v9307 = vpop.f32.mrb[0].mxu0
  %9308 = vmatprep.mubr.bf16.mxu0 0
  %9309 = vmatmul.mubr.bf16.gmra.mrb[0].mxu0 %v9113
  %v9310 = vpop.f32.mrb[0].mxu0
  %v9311 = vadd.f32 0.0, %v9310
  %v9312 = vpop.f32.mrb[0].mxu0
  %v9313 = vpop.f32.mrb[0].mxu0
  %v9314 = vadd.f32 0.0, %v9313
  %v9315 = vpop.f32.mrb[0].mxu0
  %9316 = vmatprep.mubr.bf16.mxu0 0
  %9317 = vmatmul.mubr.bf16.gmra.mrb[0].mxu0 %v9116
  %v9318 = vpop.f32.mrb[0].mxu0
  %v9319 = vadd.f32 0.0, %v9318
  %v9320 = vpop.f32.mrb[0].mxu0
  %v9321 = vpop.f32.mrb[0].mxu0
  %v9322 = vadd.f32 0.0, %v9321
  %v9323 = vpop.f32.mrb[0].mxu0
  %9324 = vmatprep.mubr.bf16.mxu0 0
  %9325 = vmatmul.mubr.bf16.gmra.mrb[0].mxu0 %v9119
  %v9326 = vpop.f32.mrb[0].mxu0
  %v9327 = vadd.f32 0.0, %v9326
  %v9328 = vpop.f32.mrb[0].mxu0
  %v9329 = vpop.f32.mrb[0].mxu0
  %v9330 = vadd.f32 0.0, %v9329
  %v9331 = vpop.f32.mrb[0].mxu0
  %9332 = vmatprep.mubr.bf16.mxu0 0
  %9333 = vmatmul.mubr.bf16.gmra.mrb[0].mxu0 %v9122
  %v9334 = vpop.f32.mrb[0].mxu0
  %v9335 = vadd.f32 0.0, %v9334
  %v9336 = vpop.f32.mrb[0].mxu0
  %v9337 = vpop.f32.mrb[0].mxu0
  %v9338 = vadd.f32 0.0, %v9337
  %v9339 = vpop.f32.mrb[0].mxu0
  %9340 = vmatprep.mubr.bf16.mxu0 0
  %9341 = vmatmul.mubr.bf16.gmra.mrb[0].mxu0 %v9125
  %v9342 = vpop.f32.mrb[0].mxu0
  %v9343 = vadd.f32 0.0, %v9342
  %v9344 = vpop.f32.mrb[0].mxu0
  %v9345 = vpop.f32.mrb[0].mxu0
  %v9346 = vadd.f32 0.0, %v9345
  %v9347 = vpop.f32.mrb[0].mxu0
  %9348 = vmatprep.mubr.bf16.mxu0 0
  %9349 = vmatmul.mubr.bf16.gmra.mrb[0].mxu0 %v9128
  %v9350 = vpop.f32.mrb[0].mxu0
  %v9351 = vadd.f32 0.0, %v9350
  %v9352 = vpop.f32.mrb[0].mxu0
  %v9353 = vpop.f32.mrb[0].mxu0
  %v9354 = vadd.f32 0.0, %v9353
  %v9355 = vpop.f32.mrb[0].mxu0
  %9356 = vmatprep.mubr.bf16.mxu0 0
  %9357 = vmatmul.mubr.bf16.gmra.mrb[0].mxu0 %v9131
  %v9358 = vpop.f32.mrb[0].mxu0
  %v9359 = vadd.f32 0.0, %v9358
  %v9360 = vpop.f32.mrb[0].mxu0
  %v9361 = vpop.f32.mrb[0].mxu0
  %v9362 = vadd.f32 0.0, %v9361
  %v9363 = vpop.f32.mrb[0].mxu0
  %9364 = vmatprep.mubr.bf16.mxu0 0
  %9365 = vmatmul.mubr.bf16.gmra.mrb[0].mxu0 %v9134
  %v9366 = vpop.f32.mrb[0].mxu0
  %v9367 = vadd.f32 0.0, %v9366
  %v9368 = vpop.f32.mrb[0].mxu0
  %v9369 = vpop.f32.mrb[0].mxu0
  %v9370 = vadd.f32 0.0, %v9369
  %v9371 = vpop.f32.mrb[0].mxu0
  %9372 = vmatprep.mubr.bf16.mxu0 0
  %9373 = vmatmul.mubr.bf16.gmra.mrb[0].mxu0 %v9137
  %v9374 = vpop.f32.mrb[0].mxu0
  %v9375 = vadd.f32 0.0, %v9374
  %v9376 = vpop.f32.mrb[0].mxu0
  %v9377 = vpop.f32.mrb[0].mxu0
  %v9378 = vadd.f32 0.0, %v9377
  %v9379 = vpop.f32.mrb[0].mxu0
  %9380 = vmatprep.mubr.bf16.mxu0 0
  %9381 = vmatmul.mubr.bf16.gmra.mrb[0].mxu0 %v9140
  %v9382 = vpop.f32.mrb[0].mxu0
  %v9383 = vadd.f32 0.0, %v9382
  %v9384 = vpop.f32.mrb[0].mxu0
  %v9385 = vpop.f32.mrb[0].mxu0
  %v9386 = vadd.f32 0.0, %v9385
  %v9387 = vpop.f32.mrb[0].mxu0
  %9388 = vmatprep.mubr.bf16.mxu0 0
  %9389 = vmatmul.mubr.bf16.gmra.mrb[0].mxu0 %v9143
  %v9390 = vpop.f32.mrb[0].mxu0
  %v9391 = vadd.f32 0.0, %v9390
  %v9392 = vpop.f32.mrb[0].mxu0
  %v9393 = vpop.f32.mrb[0].mxu0
  %v9394 = vadd.f32 0.0, %v9393
  %v9395 = vpop.f32.mrb[0].mxu0
  %9396 = vmatprep.mubr.bf16.mxu0 0
  %9397 = vmatmul.mubr.bf16.gmra.mrb[0].mxu0 %v9146
  %v9398 = vpop.f32.mrb[0].mxu0
  %v9399 = vadd.f32 0.0, %v9398
  %v9400 = vpop.f32.mrb[0].mxu0
  %v9401 = vpop.f32.mrb[0].mxu0
  %v9402 = vadd.f32 0.0, %v9401
  %v9403 = vpop.f32.mrb[0].mxu0
  %9404 = vmatprep.mubr.bf16.mxu0 0
  %9405 = vmatmul.mubr.bf16.gmra.mrb[0].mxu0 %v9149
  %v9406 = vpop.f32.mrb[0].mxu0
  %v9407 = vadd.f32 0.0, %v9406
  %v9408 = vpop.f32.mrb[0].mxu0
  %v9409 = vpop.f32.mrb[0].mxu0
  %v9410 = vadd.f32 0.0, %v9409
  %v9411 = vpop.f32.mrb[0].mxu0
  %9412 = vmatprep.mubr.bf16.mxu0 0
  %9413 = vmatmul.mubr.bf16.gmra.mrb[0].mxu0 %v9152
  %v9414 = vpop.f32.mrb[0].mxu0
  %v9415 = vadd.f32 0.0, %v9414
  %v9416 = vpop.f32.mrb[0].mxu0
  %v9417 = vpop.f32.mrb[0].mxu0
  %v9418 = vadd.f32 0.0, %v9417
  %v9419 = vpop.f32.mrb[0].mxu0
  %9420 = vmatprep.mubr.bf16.mxu0 0
  %9421 = vmatmul.mubr.bf16.gmra.mrb[0].mxu0 %v9155
  %v9422 = vpop.f32.mrb[0].mxu0
  %v9423 = vadd.f32 0.0, %v9422
  %v9424 = vpop.f32.mrb[0].mxu0
  %v9425 = vpop.f32.mrb[0].mxu0
  %v9426 = vadd.f32 0.0, %v9425
  %v9427 = vpop.f32.mrb[0].mxu0
  %9428 = vmatprep.mubr.bf16.mxu0 0
  %9429 = vmatmul.mubr.bf16.gmra.mrb[0].mxu0 %v9158
  %v9430 = vpop.f32.mrb[0].mxu0
  %v9431 = vadd.f32 0.0, %v9430
  %v9432 = vpop.f32.mrb[0].mxu0
  %v9433 = vpop.f32.mrb[0].mxu0
  %v9434 = vadd.f32 0.0, %v9433
  %v9435 = vpop.f32.mrb[0].mxu0
  %9436 = vmatprep.mubr.bf16.mxu0 0
  %9437 = vmatmul.mubr.bf16.gmra.mrb[0].mxu0 %v9161
  %v9438 = vpop.f32.mrb[0].mxu0
  %v9439 = vadd.f32 0.0, %v9438
  %v9440 = vpop.f32.mrb[0].mxu0
  %v9441 = vpop.f32.mrb[0].mxu0
  %v9442 = vadd.f32 0.0, %v9441
  %v9443 = vpop.f32.mrb[0].mxu0
  %9444 = vmatprep.mubr.bf16.mxu0 0
  %9445 = vmatmul.mubr.bf16.gmra.mrb[0].mxu0 %v9164
  %v9446 = vpop.f32.mrb[0].mxu0
  %v9447 = vadd.f32 0.0, %v9446
  %v9448 = vpop.f32.mrb[0].mxu0
  %v9449 = vpop.f32.mrb[0].mxu0
  %v9450 = vadd.f32 0.0, %v9449
  %v9451 = vpop.f32.mrb[0].mxu0
  %9452 = vmatprep.mubr.bf16.mxu0 0
  %9453 = vmatmul.mubr.bf16.gmra.mrb[0].mxu0 %v9167
  %v9454 = vpop.f32.mrb[0].mxu0
  %v9455 = vadd.f32 0.0, %v9454
  %v9456 = vpop.f32.mrb[0].mxu0
  %v9457 = vpop.f32.mrb[0].mxu0
  %v9458 = vadd.f32 0.0, %v9457
  %v9459 = vpop.f32.mrb[0].mxu0
  %9460 = vdwg.mxu0
  %v9461 = vadd.f32 %v8910, %v9207
  %v9462 = vadd.f32 %v8911, %v9210
  %v9463 = vadd.f32 %v8912, %v9215
  %v9464 = vadd.f32 %v8913, %v9218
  %v9465 = vadd.f32 %v8914, %v9223
  %v9466 = vadd.f32 %v8915, %v9226
  %v9467 = vadd.f32 %v8916, %v9231
  %v9468 = vadd.f32 %v8917, %v9234
  %v9469 = vadd.f32 %v8918, %v9239
  %v9470 = vadd.f32 %v8919, %v9242
  %v9471 = vadd.f32 %v8920, %v9247
  %v9472 = vadd.f32 %v8921, %v9250
  %v9473 = vadd.f32 %v8922, %v9255
  %v9474 = vadd.f32 %v8923, %v9258
  %v9475 = vadd.f32 %v8924, %v9263
  %v9476 = vadd.f32 %v8925, %v9266
  %v9477 = vadd.f32 %v8926, %v9271
  %v9478 = vadd.f32 %v8927, %v9274
  %v9479 = vadd.f32 %v8928, %v9279
  %v9480 = vadd.f32 %v8929, %v9282
  %v9481 = vadd.f32 %v8930, %v9287
  %v9482 = vadd.f32 %v8931, %v9290
  %v9483 = vadd.f32 %v8932, %v9295
  %v9484 = vadd.f32 %v8933, %v9298
  %v9485 = vadd.f32 %v8934, %v9303
  %v9486 = vadd.f32 %v8935, %v9306
  %v9487 = vadd.f32 %v8936, %v9311
  %v9488 = vadd.f32 %v8937, %v9314
  %v9489 = vadd.f32 %v8938, %v9319
  %v9490 = vadd.f32 %v8939, %v9322
  %v9491 = vadd.f32 %v8940, %v9327
  %v9492 = vadd.f32 %v8941, %v9330
  %v9493 = vadd.f32 %v8942, %v9335
  %v9494 = vadd.f32 %v8943, %v9338
  %v9495 = vadd.f32 %v8944, %v9343
  %v9496 = vadd.f32 %v8945, %v9346
  %v9497 = vadd.f32 %v8946, %v9351
  %v9498 = vadd.f32 %v8947, %v9354
  %v9499 = vadd.f32 %v8948, %v9359
  %v9500 = vadd.f32 %v8949, %v9362
  %v9501 = vadd.f32 %v8950, %v9367
  %v9502 = vadd.f32 %v8951, %v9370
  %v9503 = vadd.f32 %v8952, %v9375
  %v9504 = vadd.f32 %v8953, %v9378
  %v9505 = vadd.f32 %v8954, %v9383
  %v9506 = vadd.f32 %v8955, %v9386
  %v9507 = vadd.f32 %v8956, %v9391
  %v9508 = vadd.f32 %v8957, %v9394
  %v9509 = vadd.f32 %v8958, %v9399
  %v9510 = vadd.f32 %v8959, %v9402
  %v9511 = vadd.f32 %v8960, %v9407
  %v9512 = vadd.f32 %v8961, %v9410
  %v9513 = vadd.f32 %v8962, %v9415
  %v9514 = vadd.f32 %v8963, %v9418
  %v9515 = vadd.f32 %v8964, %v9423
  %v9516 = vadd.f32 %v8965, %v9426
  %v9517 = vadd.f32 %v8966, %v9431
  %v9518 = vadd.f32 %v8967, %v9434
  %v9519 = vadd.f32 %v8968, %v9439
  %v9520 = vadd.f32 %v8969, %v9442
  %v9521 = vadd.f32 %v8970, %v9447
  %v9522 = vadd.f32 %v8971, %v9450
  %v9523 = vadd.f32 %v8972, %v9455
  %v9524 = vadd.f32 %v8973, %v9458
  %v9525 = vld [vmem:[%s8974 + $0x1] sm:$0xff]
  %v9526 = vld [vmem:[%s8974 + $0x9] sm:$0xff]
  %v9527 = vld [vmem:[%s8974 + $0x19] sm:$0xff]
  %v9528 = vld [vmem:[%s8974 + $0x21] sm:$0xff]
  %v9529 = vld [vmem:[%s8974 + $0x31] sm:$0xff]
  %v9530 = vld [vmem:[%s8974 + $0x39] sm:$0xff]
  %v9531 = vld [vmem:[%s8974 + $0x49] sm:$0xff]
  %v9532 = vld [vmem:[%s8974 + $0x51] sm:$0xff]
  %v9533 = vld [vmem:[%s8974 + $0x61] sm:$0xff]
  %v9534 = vld [vmem:[%s8974 + $0x69] sm:$0xff]
  %v9535 = vld [vmem:[%s8974 + $0x79] sm:$0xff]
  %v9536 = vld [vmem:[%s8974 + $0x81] sm:$0xff]
  %v9537 = vld [vmem:[%s8974 + $0x91] sm:$0xff]
  %v9538 = vld [vmem:[%s8974 + $0x99] sm:$0xff]
  %v9539 = vld [vmem:[%s8974 + $0xa9] sm:$0xff]
  %v9540 = vld [vmem:[%s8974 + $0xb1] sm:$0xff]
  %v9541 = vld [vmem:[%s8974 + $0xc1] sm:$0xff]
  %v9542 = vld [vmem:[%s8974 + $0xc9] sm:$0xff]
  %v9543 = vld [vmem:[%s8974 + $0xd9] sm:$0xff]
  %v9544 = vld [vmem:[%s8974 + $0xe1] sm:$0xff]
  %v9545 = vld [vmem:[%s8974 + $0xf1] sm:$0xff]
  %v9546 = vld [vmem:[%s8974 + $0xf9] sm:$0xff]
  %v9547 = vld [vmem:[%s8974 + $0x109] sm:$0xff]
  %v9548 = vld [vmem:[%s8974 + $0x111] sm:$0xff]
  %v9549 = vld [vmem:[%s8974 + $0x121] sm:$0xff]
  %v9550 = vld [vmem:[%s8974 + $0x129] sm:$0xff]
  %v9551 = vld [vmem:[%s8974 + $0x139] sm:$0xff]
  %v9552 = vld [vmem:[%s8974 + $0x141] sm:$0xff]
  %v9553 = vld [vmem:[%s8974 + $0x151] sm:$0xff]
  %v9554 = vld [vmem:[%s8974 + $0x159] sm:$0xff]
  %v9555 = vld [vmem:[%s8974 + $0x169] sm:$0xff]
  %v9556 = vld [vmem:[%s8974 + $0x171] sm:$0xff]
  %v9557 = vld [vmem:[%s8974 + $0x1b1] sm:$0xff]
  %v9558 = vld [vmem:[%s8974 + $0x1b9] sm:$0xff]
  %v9559 = vld [vmem:[%s8974 + $0x1c9] sm:$0xff]
  %v9560 = vld [vmem:[%s8974 + $0x1d1] sm:$0xff]
  %v9561 = vld [vmem:[%s8974 + $0x1e1] sm:$0xff]
  %v9562 = vld [vmem:[%s8974 + $0x1e9] sm:$0xff]
  %v9563 = vld [vmem:[%s8974 + $0x1f9] sm:$0xff]
  %v9564 = vld [vmem:[%s8974 + $0x201] sm:$0xff]
  %v9565 = vld [vmem:[%s8974 + $0x211] sm:$0xff]
  %v9566 = vld [vmem:[%s8974 + $0x219] sm:$0xff]
  %v9567 = vld [vmem:[%s8974 + $0x229] sm:$0xff]
  %v9568 = vld [vmem:[%s8974 + $0x231] sm:$0xff]
  %v9569 = vld [vmem:[%s8974 + $0x241] sm:$0xff]
  %v9570 = vld [vmem:[%s8974 + $0x249] sm:$0xff]
  %v9571 = vld [vmem:[%s8974 + $0x259] sm:$0xff]
  %v9572 = vld [vmem:[%s8974 + $0x261] sm:$0xff]
  %v9573 = vld [vmem:[%s8974 + $0x271] sm:$0xff]
  %v9574 = vld [vmem:[%s8974 + $0x279] sm:$0xff]
  %v9575 = vld [vmem:[%s8974 + $0x289] sm:$0xff]
  %v9576 = vld [vmem:[%s8974 + $0x291] sm:$0xff]
  %v9577 = vld [vmem:[%s8974 + $0x2a1] sm:$0xff]
  %v9578 = vld [vmem:[%s8974 + $0x2a9] sm:$0xff]
  %v9579 = vld [vmem:[%s8974 + $0x2b9] sm:$0xff]
  %v9580 = vld [vmem:[%s8974 + $0x2c1] sm:$0xff]
  %v9581 = vld [vmem:[%s8974 + $0x2d1] sm:$0xff]
  %v9582 = vld [vmem:[%s8974 + $0x2d9] sm:$0xff]
  %v9583 = vld [vmem:[%s8974 + $0x2e9] sm:$0xff]
  %v9584 = vld [vmem:[%s8974 + $0x2f1] sm:$0xff]
  %v9585 = vld [vmem:[%s8974 + $0x301] sm:$0xff]
  %v9586 = vld [vmem:[%s8974 + $0x309] sm:$0xff]
  %v9587 = vld [vmem:[%s8974 + $0x319] sm:$0xff]
  %v9588 = vld [vmem:[%s8974 + $0x321] sm:$0xff]
  %v9589 = vpack.c.bf16 %v9526, %v9525
  %v9590 = vpack.c.bf16 %v9528, %v9527
  %v9591 = vpack.c.bf16 %v9530, %v9529
  %v9592 = vpack.c.bf16 %v9532, %v9531
  %v9593 = vpack.c.bf16 %v9534, %v9533
  %v9594 = vpack.c.bf16 %v9536, %v9535
  %v9595 = vpack.c.bf16 %v9538, %v9537
  %v9596 = vpack.c.bf16 %v9540, %v9539
  %v9597 = vpack.c.bf16 %v9542, %v9541
  %v9598 = vpack.c.bf16 %v9544, %v9543
  %v9599 = vpack.c.bf16 %v9546, %v9545
  %v9600 = vpack.c.bf16 %v9548, %v9547
  %v9601 = vpack.c.bf16 %v9550, %v9549
  %v9602 = vpack.c.bf16 %v9552, %v9551
  %v9603 = vpack.c.bf16 %v9554, %v9553
  %v9604 = vpack.c.bf16 %v9556, %v9555
  %v9605 = vpack.c.bf16 %v9558, %v9557
  %v9606 = vpack.c.bf16 %v9560, %v9559
  %v9607 = vpack.c.bf16 %v9562, %v9561
  %v9608 = vpack.c.bf16 %v9564, %v9563
  %v9609 = vpack.c.bf16 %v9566, %v9565
  %v9610 = vpack.c.bf16 %v9568, %v9567
  %v9611 = vpack.c.bf16 %v9570, %v9569
  %v9612 = vpack.c.bf16 %v9572, %v9571
  %v9613 = vpack.c.bf16 %v9574, %v9573
  %v9614 = vpack.c.bf16 %v9576, %v9575
  %v9615 = vpack.c.bf16 %v9578, %v9577
  %v9616 = vpack.c.bf16 %v9580, %v9579
  %v9617 = vpack.c.bf16 %v9582, %v9581
  %v9618 = vpack.c.bf16 %v9584, %v9583
  %v9619 = vpack.c.bf16 %v9586, %v9585
  %v9620 = vpack.c.bf16 %v9588, %v9587
  %s9621 = scalar_lea.vmem %s2, 28
  %v9622 = vld [vmem:[%s9621] sm:$0xf]
  %v9624 = vsel %vm5056, %v9589, 0
  %v9627 = vsel %vm5056, %v9590, 0
  %v9630 = vsel %vm5056, %v9591, 0
  %v9633 = vsel %vm5056, %v9592, 0
  %v9636 = vsel %vm5056, %v9593, 0
  %v9639 = vsel %vm5056, %v9594, 0
  %v9642 = vsel %vm5056, %v9595, 0
  %v9645 = vsel %vm5056, %v9596, 0
  %v9648 = vsel %vm5056, %v9597, 0
  %v9651 = vsel %vm5056, %v9598, 0
  %v9654 = vsel %vm5056, %v9599, 0
  %v9657 = vsel %vm5056, %v9600, 0
  %v9660 = vsel %vm5056, %v9601, 0
  %v9663 = vsel %vm5056, %v9602, 0
  %v9666 = vsel %vm5056, %v9603, 0
  %v9669 = vsel %vm5056, %v9604, 0
  %v9672 = vsel %vm5056, %v9605, 0
  %v9675 = vsel %vm5056, %v9606, 0
  %v9678 = vsel %vm5056, %v9607, 0
  %v9681 = vsel %vm5056, %v9608, 0
  %v9684 = vsel %vm5056, %v9609, 0
  %v9687 = vsel %vm5056, %v9610, 0
  %v9690 = vsel %vm5056, %v9611, 0
  %v9693 = vsel %vm5056, %v9612, 0
  %v9696 = vsel %vm5056, %v9613, 0
  %v9699 = vsel %vm5056, %v9614, 0
  %v9702 = vsel %vm5056, %v9615, 0
  %v9705 = vsel %vm5056, %v9616, 0
  %v9708 = vsel %vm5056, %v9617, 0
  %v9711 = vsel %vm5056, %v9618, 0
  %v9714 = vsel %vm5056, %v9619, 0
  %v9717 = vsel %vm5056, %v9620, 0
  %v9720 = vsel %vm6093, %v9622, 0
  %9722 = vmatprep.subr.bf16.mxu0 0
  %9723 = vmatpush1.bf16.msra.mxu0 %v9720
  %9724 = vmatprep.subr.bf16.mxu0 0
  %9725 = vmatpush1.bf16.msra.mxu0 0
  %9726 = vmatprep.subr.bf16.mxu0 0
  %9727 = vmatpush1.bf16.msra.mxu0 0
  %9728 = vmatprep.subr.bf16.mxu0 0
  %9729 = vmatpush1.bf16.msra.mxu0 0
  %9730 = vmatprep.subr.bf16.mxu0 0
  %9731 = vmatpush1.bf16.msra.mxu0 0
  %9732 = vmatprep.subr.bf16.mxu0 0
  %9733 = vmatpush1.bf16.msra.mxu0 0
  %9734 = vmatprep.subr.bf16.mxu0 0
  %9735 = vmatpush1.bf16.msra.mxu0 0
  %9736 = vmatprep.subr.bf16.mxu0 0
  %9737 = vmatpush1.bf16.msra.mxu0 0
  %9738 = vmatprep.subr.bf16.mxu0 0
  %9739 = vmatpush1.bf16.msra.mxu0 0
  %9740 = vmatprep.subr.bf16.mxu0 0
  %9741 = vmatpush1.bf16.msra.mxu0 0
  %9742 = vmatprep.subr.bf16.mxu0 0
  %9743 = vmatpush1.bf16.msra.mxu0 0
  %9744 = vmatprep.subr.bf16.mxu0 0
  %9745 = vmatpush1.bf16.msra.mxu0 0
  %9746 = vmatprep.subr.bf16.mxu0 0
  %9747 = vmatpush1.bf16.msra.mxu0 0
  %9748 = vmatprep.subr.bf16.mxu0 0
  %9749 = vmatpush1.bf16.msra.mxu0 0
  %9750 = vmatprep.subr.bf16.mxu0 0
  %9751 = vmatpush1.bf16.msra.mxu0 0
  %9752 = vmatprep.subr.bf16.mxu0 0
  %9753 = vmatpush1.bf16.msra.mxu0 0
  %9754 = vmatprep.mubr.bf16.mxu0 0
  %9755 = vmatmul.mubr.bf16.gmra.mrb[0].mxu0 %v9624
  %v9756 = vpop.f32.mrb[0].mxu0
  %v9757 = vadd.f32 0.0, %v9756
  %v9758 = vpop.f32.mrb[0].mxu0
  %v9759 = vpop.f32.mrb[0].mxu0
  %v9760 = vadd.f32 0.0, %v9759
  %v9761 = vpop.f32.mrb[0].mxu0
  %9762 = vmatprep.mubr.bf16.mxu0 0
  %9763 = vmatmul.mubr.bf16.gmra.mrb[0].mxu0 %v9627
  %v9764 = vpop.f32.mrb[0].mxu0
  %v9765 = vadd.f32 0.0, %v9764
  %v9766 = vpop.f32.mrb[0].mxu0
  %v9767 = vpop.f32.mrb[0].mxu0
  %v9768 = vadd.f32 0.0, %v9767
  %v9769 = vpop.f32.mrb[0].mxu0
  %9770 = vmatprep.mubr.bf16.mxu0 0
  %9771 = vmatmul.mubr.bf16.gmra.mrb[0].mxu0 %v9630
  %v9772 = vpop.f32.mrb[0].mxu0
  %v9773 = vadd.f32 0.0, %v9772
  %v9774 = vpop.f32.mrb[0].mxu0
  %v9775 = vpop.f32.mrb[0].mxu0
  %v9776 = vadd.f32 0.0, %v9775
  %v9777 = vpop.f32.mrb[0].mxu0
  %9778 = vmatprep.mubr.bf16.mxu0 0
  %9779 = vmatmul.mubr.bf16.gmra.mrb[0].mxu0 %v9633
  %v9780 = vpop.f32.mrb[0].mxu0
  %v9781 = vadd.f32 0.0, %v9780
  %v9782 = vpop.f32.mrb[0].mxu0
  %v9783 = vpop.f32.mrb[0].mxu0
  %v9784 = vadd.f32 0.0, %v9783
  %v9785 = vpop.f32.mrb[0].mxu0
  %9786 = vmatprep.mubr.bf16.mxu0 0
  %9787 = vmatmul.mubr.bf16.gmra.mrb[0].mxu0 %v9636
  %v9788 = vpop.f32.mrb[0].mxu0
  %v9789 = vadd.f32 0.0, %v9788
  %v9790 = vpop.f32.mrb[0].mxu0
  %v9791 = vpop.f32.mrb[0].mxu0
  %v9792 = vadd.f32 0.0, %v9791
  %v9793 = vpop.f32.mrb[0].mxu0
  %9794 = vmatprep.mubr.bf16.mxu0 0
  %9795 = vmatmul.mubr.bf16.gmra.mrb[0].mxu0 %v9639
  %v9796 = vpop.f32.mrb[0].mxu0
  %v9797 = vadd.f32 0.0, %v9796
  %v9798 = vpop.f32.mrb[0].mxu0
  %v9799 = vpop.f32.mrb[0].mxu0
  %v9800 = vadd.f32 0.0, %v9799
  %v9801 = vpop.f32.mrb[0].mxu0
  %9802 = vmatprep.mubr.bf16.mxu0 0
  %9803 = vmatmul.mubr.bf16.gmra.mrb[0].mxu0 %v9642
  %v9804 = vpop.f32.mrb[0].mxu0
  %v9805 = vadd.f32 0.0, %v9804
  %v9806 = vpop.f32.mrb[0].mxu0
  %v9807 = vpop.f32.mrb[0].mxu0
  %v9808 = vadd.f32 0.0, %v9807
  %v9809 = vpop.f32.mrb[0].mxu0
  %9810 = vmatprep.mubr.bf16.mxu0 0
  %9811 = vmatmul.mubr.bf16.gmra.mrb[0].mxu0 %v9645
  %v9812 = vpop.f32.mrb[0].mxu0
  %v9813 = vadd.f32 0.0, %v9812
  %v9814 = vpop.f32.mrb[0].mxu0
  %v9815 = vpop.f32.mrb[0].mxu0
  %v9816 = vadd.f32 0.0, %v9815
  %v9817 = vpop.f32.mrb[0].mxu0
  %9818 = vmatprep.mubr.bf16.mxu0 0
  %9819 = vmatmul.mubr.bf16.gmra.mrb[0].mxu0 %v9648
  %v9820 = vpop.f32.mrb[0].mxu0
  %v9821 = vadd.f32 0.0, %v9820
  %v9822 = vpop.f32.mrb[0].mxu0
  %v9823 = vpop.f32.mrb[0].mxu0
  %v9824 = vadd.f32 0.0, %v9823
  %v9825 = vpop.f32.mrb[0].mxu0
  %9826 = vmatprep.mubr.bf16.mxu0 0
  %9827 = vmatmul.mubr.bf16.gmra.mrb[0].mxu0 %v9651
  %v9828 = vpop.f32.mrb[0].mxu0
  %v9829 = vadd.f32 0.0, %v9828
  %v9830 = vpop.f32.mrb[0].mxu0
  %v9831 = vpop.f32.mrb[0].mxu0
  %v9832 = vadd.f32 0.0, %v9831
  %v9833 = vpop.f32.mrb[0].mxu0
  %9834 = vmatprep.mubr.bf16.mxu0 0
  %9835 = vmatmul.mubr.bf16.gmra.mrb[0].mxu0 %v9654
  %v9836 = vpop.f32.mrb[0].mxu0
  %v9837 = vadd.f32 0.0, %v9836
  %v9838 = vpop.f32.mrb[0].mxu0
  %v9839 = vpop.f32.mrb[0].mxu0
  %v9840 = vadd.f32 0.0, %v9839
  %v9841 = vpop.f32.mrb[0].mxu0
  %9842 = vmatprep.mubr.bf16.mxu0 0
  %9843 = vmatmul.mubr.bf16.gmra.mrb[0].mxu0 %v9657
  %v9844 = vpop.f32.mrb[0].mxu0
  %v9845 = vadd.f32 0.0, %v9844
  %v9846 = vpop.f32.mrb[0].mxu0
  %v9847 = vpop.f32.mrb[0].mxu0
  %v9848 = vadd.f32 0.0, %v9847
  %v9849 = vpop.f32.mrb[0].mxu0
  %9850 = vmatprep.mubr.bf16.mxu0 0
  %9851 = vmatmul.mubr.bf16.gmra.mrb[0].mxu0 %v9660
  %v9852 = vpop.f32.mrb[0].mxu0
  %v9853 = vadd.f32 0.0, %v9852
  %v9854 = vpop.f32.mrb[0].mxu0
  %v9855 = vpop.f32.mrb[0].mxu0
  %v9856 = vadd.f32 0.0, %v9855
  %v9857 = vpop.f32.mrb[0].mxu0
  %9858 = vmatprep.mubr.bf16.mxu0 0
  %9859 = vmatmul.mubr.bf16.gmra.mrb[0].mxu0 %v9663
  %v9860 = vpop.f32.mrb[0].mxu0
  %v9861 = vadd.f32 0.0, %v9860
  %v9862 = vpop.f32.mrb[0].mxu0
  %v9863 = vpop.f32.mrb[0].mxu0
  %v9864 = vadd.f32 0.0, %v9863
  %v9865 = vpop.f32.mrb[0].mxu0
  %9866 = vmatprep.mubr.bf16.mxu0 0
  %9867 = vmatmul.mubr.bf16.gmra.mrb[0].mxu0 %v9666
  %v9868 = vpop.f32.mrb[0].mxu0
  %v9869 = vadd.f32 0.0, %v9868
  %v9870 = vpop.f32.mrb[0].mxu0
  %v9871 = vpop.f32.mrb[0].mxu0
  %v9872 = vadd.f32 0.0, %v9871
  %v9873 = vpop.f32.mrb[0].mxu0
  %9874 = vmatprep.mubr.bf16.mxu0 0
  %9875 = vmatmul.mubr.bf16.gmra.mrb[0].mxu0 %v9669
  %v9876 = vpop.f32.mrb[0].mxu0
  %v9877 = vadd.f32 0.0, %v9876
  %v9878 = vpop.f32.mrb[0].mxu0
  %v9879 = vpop.f32.mrb[0].mxu0
  %v9880 = vadd.f32 0.0, %v9879
  %v9881 = vpop.f32.mrb[0].mxu0
  %9882 = vmatprep.mubr.bf16.mxu0 0
  %9883 = vmatmul.mubr.bf16.gmra.mrb[0].mxu0 %v9672
  %v9884 = vpop.f32.mrb[0].mxu0
  %v9885 = vadd.f32 0.0, %v9884
  %v9886 = vpop.f32.mrb[0].mxu0
  %v9887 = vpop.f32.mrb[0].mxu0
  %v9888 = vadd.f32 0.0, %v9887
  %v9889 = vpop.f32.mrb[0].mxu0
  %9890 = vmatprep.mubr.bf16.mxu0 0
  %9891 = vmatmul.mubr.bf16.gmra.mrb[0].mxu0 %v9675
  %v9892 = vpop.f32.mrb[0].mxu0
  %v9893 = vadd.f32 0.0, %v9892
  %v9894 = vpop.f32.mrb[0].mxu0
  %v9895 = vpop.f32.mrb[0].mxu0
  %v9896 = vadd.f32 0.0, %v9895
  %v9897 = vpop.f32.mrb[0].mxu0
  %9898 = vmatprep.mubr.bf16.mxu0 0
  %9899 = vmatmul.mubr.bf16.gmra.mrb[0].mxu0 %v9678
  %v9900 = vpop.f32.mrb[0].mxu0
  %v9901 = vadd.f32 0.0, %v9900
  %v9902 = vpop.f32.mrb[0].mxu0
  %v9903 = vpop.f32.mrb[0].mxu0
  %v9904 = vadd.f32 0.0, %v9903
  %v9905 = vpop.f32.mrb[0].mxu0
  %9906 = vmatprep.mubr.bf16.mxu0 0
  %9907 = vmatmul.mubr.bf16.gmra.mrb[0].mxu0 %v9681
  %v9908 = vpop.f32.mrb[0].mxu0
  %v9909 = vadd.f32 0.0, %v9908
  %v9910 = vpop.f32.mrb[0].mxu0
  %v9911 = vpop.f32.mrb[0].mxu0
  %v9912 = vadd.f32 0.0, %v9911
  %v9913 = vpop.f32.mrb[0].mxu0
  %9914 = vmatprep.mubr.bf16.mxu0 0
  %9915 = vmatmul.mubr.bf16.gmra.mrb[0].mxu0 %v9684
  %v9916 = vpop.f32.mrb[0].mxu0
  %v9917 = vadd.f32 0.0, %v9916
  %v9918 = vpop.f32.mrb[0].mxu0
  %v9919 = vpop.f32.mrb[0].mxu0
  %v9920 = vadd.f32 0.0, %v9919
  %v9921 = vpop.f32.mrb[0].mxu0
  %9922 = vmatprep.mubr.bf16.mxu0 0
  %9923 = vmatmul.mubr.bf16.gmra.mrb[0].mxu0 %v9687
  %v9924 = vpop.f32.mrb[0].mxu0
  %v9925 = vadd.f32 0.0, %v9924
  %v9926 = vpop.f32.mrb[0].mxu0
  %v9927 = vpop.f32.mrb[0].mxu0
  %v9928 = vadd.f32 0.0, %v9927
  %v9929 = vpop.f32.mrb[0].mxu0
  %9930 = vmatprep.mubr.bf16.mxu0 0
  %9931 = vmatmul.mubr.bf16.gmra.mrb[0].mxu0 %v9690
  %v9932 = vpop.f32.mrb[0].mxu0
  %v9933 = vadd.f32 0.0, %v9932
  %v9934 = vpop.f32.mrb[0].mxu0
  %v9935 = vpop.f32.mrb[0].mxu0
  %v9936 = vadd.f32 0.0, %v9935
  %v9937 = vpop.f32.mrb[0].mxu0
  %9938 = vmatprep.mubr.bf16.mxu0 0
  %9939 = vmatmul.mubr.bf16.gmra.mrb[0].mxu0 %v9693
  %v9940 = vpop.f32.mrb[0].mxu0
  %v9941 = vadd.f32 0.0, %v9940
  %v9942 = vpop.f32.mrb[0].mxu0
  %v9943 = vpop.f32.mrb[0].mxu0
  %v9944 = vadd.f32 0.0, %v9943
  %v9945 = vpop.f32.mrb[0].mxu0
  %9946 = vmatprep.mubr.bf16.mxu0 0
  %9947 = vmatmul.mubr.bf16.gmra.mrb[0].mxu0 %v9696
  %v9948 = vpop.f32.mrb[0].mxu0
  %v9949 = vadd.f32 0.0, %v9948
  %v9950 = vpop.f32.mrb[0].mxu0
  %v9951 = vpop.f32.mrb[0].mxu0
  %v9952 = vadd.f32 0.0, %v9951
  %v9953 = vpop.f32.mrb[0].mxu0
  %9954 = vmatprep.mubr.bf16.mxu0 0
  %9955 = vmatmul.mubr.bf16.gmra.mrb[0].mxu0 %v9699
  %v9956 = vpop.f32.mrb[0].mxu0
  %v9957 = vadd.f32 0.0, %v9956
  %v9958 = vpop.f32.mrb[0].mxu0
  %v9959 = vpop.f32.mrb[0].mxu0
  %v9960 = vadd.f32 0.0, %v9959
  %v9961 = vpop.f32.mrb[0].mxu0
  %9962 = vmatprep.mubr.bf16.mxu0 0
  %9963 = vmatmul.mubr.bf16.gmra.mrb[0].mxu0 %v9702
  %v9964 = vpop.f32.mrb[0].mxu0
  %v9965 = vadd.f32 0.0, %v9964
  %v9966 = vpop.f32.mrb[0].mxu0
  %v9967 = vpop.f32.mrb[0].mxu0
  %v9968 = vadd.f32 0.0, %v9967
  %v9969 = vpop.f32.mrb[0].mxu0
  %9970 = vmatprep.mubr.bf16.mxu0 0
  %9971 = vmatmul.mubr.bf16.gmra.mrb[0].mxu0 %v9705
  %v9972 = vpop.f32.mrb[0].mxu0
  %v9973 = vadd.f32 0.0, %v9972
  %v9974 = vpop.f32.mrb[0].mxu0
  %v9975 = vpop.f32.mrb[0].mxu0
  %v9976 = vadd.f32 0.0, %v9975
  %v9977 = vpop.f32.mrb[0].mxu0
  %9978 = vmatprep.mubr.bf16.mxu0 0
  %9979 = vmatmul.mubr.bf16.gmra.mrb[0].mxu0 %v9708
  %v9980 = vpop.f32.mrb[0].mxu0
  %v9981 = vadd.f32 0.0, %v9980
  %v9982 = vpop.f32.mrb[0].mxu0
  %v9983 = vpop.f32.mrb[0].mxu0
  %v9984 = vadd.f32 0.0, %v9983
  %v9985 = vpop.f32.mrb[0].mxu0
  %9986 = vmatprep.mubr.bf16.mxu0 0
  %9987 = vmatmul.mubr.bf16.gmra.mrb[0].mxu0 %v9711
  %v9988 = vpop.f32.mrb[0].mxu0
  %v9989 = vadd.f32 0.0, %v9988
  %v9990 = vpop.f32.mrb[0].mxu0
  %v9991 = vpop.f32.mrb[0].mxu0
  %v9992 = vadd.f32 0.0, %v9991
  %v9993 = vpop.f32.mrb[0].mxu0
  %9994 = vmatprep.mubr.bf16.mxu0 0
  %9995 = vmatmul.mubr.bf16.gmra.mrb[0].mxu0 %v9714
  %v9996 = vpop.f32.mrb[0].mxu0
  %v9997 = vadd.f32 0.0, %v9996
  %v9998 = vpop.f32.mrb[0].mxu0
  %v9999 = vpop.f32.mrb[0].mxu0
  %v10000 = vadd.f32 0.0, %v9999
  %v10001 = vpop.f32.mrb[0].mxu0
  %10002 = vmatprep.mubr.bf16.mxu0 0
  %10003 = vmatmul.mubr.bf16.gmra.mrb[0].mxu0 %v9717
  %v10004 = vpop.f32.mrb[0].mxu0
  %v10005 = vadd.f32 0.0, %v10004
  %v10006 = vpop.f32.mrb[0].mxu0
  %v10007 = vpop.f32.mrb[0].mxu0
  %v10008 = vadd.f32 0.0, %v10007
  %v10009 = vpop.f32.mrb[0].mxu0
  %10010 = vdwg.mxu0
  %v10011 = vadd.f32 %v9461, %v9757
  %v10012 = vadd.f32 %v9462, %v9760
  %v10013 = vadd.f32 %v9463, %v9765
  %v10014 = vadd.f32 %v9464, %v9768
  %v10015 = vadd.f32 %v9465, %v9773
  %v10016 = vadd.f32 %v9466, %v9776
  %v10017 = vadd.f32 %v9467, %v9781
  %v10018 = vadd.f32 %v9468, %v9784
  %v10019 = vadd.f32 %v9469, %v9789
  %v10020 = vadd.f32 %v9470, %v9792
  %v10021 = vadd.f32 %v9471, %v9797
  %v10022 = vadd.f32 %v9472, %v9800
  %v10023 = vadd.f32 %v9473, %v9805
  %v10024 = vadd.f32 %v9474, %v9808
  %v10025 = vadd.f32 %v9475, %v9813
  %v10026 = vadd.f32 %v9476, %v9816
  %v10027 = vadd.f32 %v9477, %v9821
  %v10028 = vadd.f32 %v9478, %v9824
  %v10029 = vadd.f32 %v9479, %v9829
  %v10030 = vadd.f32 %v9480, %v9832
  %v10031 = vadd.f32 %v9481, %v9837
  %v10032 = vadd.f32 %v9482, %v9840
  %v10033 = vadd.f32 %v9483, %v9845
  %v10034 = vadd.f32 %v9484, %v9848
  %v10035 = vadd.f32 %v9485, %v9853
  %v10036 = vadd.f32 %v9486, %v9856
  %v10037 = vadd.f32 %v9487, %v9861
  %v10038 = vadd.f32 %v9488, %v9864
  %v10039 = vadd.f32 %v9489, %v9869
  %v10040 = vadd.f32 %v9490, %v9872
  %v10041 = vadd.f32 %v9491, %v9877
  %v10042 = vadd.f32 %v9492, %v9880
  %v10043 = vadd.f32 %v9493, %v9885
  %v10044 = vadd.f32 %v9494, %v9888
  %v10045 = vadd.f32 %v9495, %v9893
  %v10046 = vadd.f32 %v9496, %v9896
  %v10047 = vadd.f32 %v9497, %v9901
  %v10048 = vadd.f32 %v9498, %v9904
  %v10049 = vadd.f32 %v9499, %v9909
  %v10050 = vadd.f32 %v9500, %v9912
  %v10051 = vadd.f32 %v9501, %v9917
  %v10052 = vadd.f32 %v9502, %v9920
  %v10053 = vadd.f32 %v9503, %v9925
  %v10054 = vadd.f32 %v9504, %v9928
  %v10055 = vadd.f32 %v9505, %v9933
  %v10056 = vadd.f32 %v9506, %v9936
  %v10057 = vadd.f32 %v9507, %v9941
  %v10058 = vadd.f32 %v9508, %v9944
  %v10059 = vadd.f32 %v9509, %v9949
  %v10060 = vadd.f32 %v9510, %v9952
  %v10061 = vadd.f32 %v9511, %v9957
  %v10062 = vadd.f32 %v9512, %v9960
  %v10063 = vadd.f32 %v9513, %v9965
  %v10064 = vadd.f32 %v9514, %v9968
  %v10065 = vadd.f32 %v9515, %v9973
  %v10066 = vadd.f32 %v9516, %v9976
  %v10067 = vadd.f32 %v9517, %v9981
  %v10068 = vadd.f32 %v9518, %v9984
  %v10069 = vadd.f32 %v9519, %v9989
  %v10070 = vadd.f32 %v9520, %v9992
  %v10071 = vadd.f32 %v9521, %v9997
  %v10072 = vadd.f32 %v9522, %v10000
  %v10073 = vadd.f32 %v9523, %v10005
  %v10074 = vadd.f32 %v9524, %v10008
  %v10075 = vld [vmem:[%s8974 + $0x2] sm:$0xff]
  %v10076 = vld [vmem:[%s8974 + $0xa] sm:$0xff]
  %v10077 = vld [vmem:[%s8974 + $0x1a] sm:$0xff]
  %v10078 = vld [vmem:[%s8974 + $0x22] sm:$0xff]
  %v10079 = vld [vmem:[%s8974 + $0x32] sm:$0xff]
  %v10080 = vld [vmem:[%s8974 + $0x3a] sm:$0xff]
  %v10081 = vld [vmem:[%s8974 + $0x4a] sm:$0xff]
  %v10082 = vld [vmem:[%s8974 + $0x52] sm:$0xff]
  %v10083 = vld [vmem:[%s8974 + $0x62] sm:$0xff]
  %v10084 = vld [vmem:[%s8974 + $0x6a] sm:$0xff]
  %v10085 = vld [vmem:[%s8974 + $0x7a] sm:$0xff]
  %v10086 = vld [vmem:[%s8974 + $0x82] sm:$0xff]
  %v10087 = vld [vmem:[%s8974 + $0x92] sm:$0xff]
  %v10088 = vld [vmem:[%s8974 + $0x9a] sm:$0xff]
  %v10089 = vld [vmem:[%s8974 + $0xaa] sm:$0xff]
  %v10090 = vld [vmem:[%s8974 + $0xb2] sm:$0xff]
  %v10091 = vld [vmem:[%s8974 + $0xc2] sm:$0xff]
  %v10092 = vld [vmem:[%s8974 + $0xca] sm:$0xff]
  %v10093 = vld [vmem:[%s8974 + $0xda] sm:$0xff]
  %v10094 = vld [vmem:[%s8974 + $0xe2] sm:$0xff]
  %v10095 = vld [vmem:[%s8974 + $0xf2] sm:$0xff]
  %v10096 = vld [vmem:[%s8974 + $0xfa] sm:$0xff]
  %v10097 = vld [vmem:[%s8974 + $0x10a] sm:$0xff]
  %v10098 = vld [vmem:[%s8974 + $0x112] sm:$0xff]
  %v10099 = vld [vmem:[%s8974 + $0x122] sm:$0xff]
  %v10100 = vld [vmem:[%s8974 + $0x12a] sm:$0xff]
  %v10101 = vld [vmem:[%s8974 + $0x13a] sm:$0xff]
  %v10102 = vld [vmem:[%s8974 + $0x142] sm:$0xff]
  %v10103 = vld [vmem:[%s8974 + $0x152] sm:$0xff]
  %v10104 = vld [vmem:[%s8974 + $0x15a] sm:$0xff]
  %v10105 = vld [vmem:[%s8974 + $0x16a] sm:$0xff]
  %v10106 = vld [vmem:[%s8974 + $0x172] sm:$0xff]
  %v10107 = vld [vmem:[%s8974 + $0x1b2] sm:$0xff]
  %v10108 = vld [vmem:[%s8974 + $0x1ba] sm:$0xff]
  %v10109 = vld [vmem:[%s8974 + $0x1ca] sm:$0xff]
  %v10110 = vld [vmem:[%s8974 + $0x1d2] sm:$0xff]
  %v10111 = vld [vmem:[%s8974 + $0x1e2] sm:$0xff]
  %v10112 = vld [vmem:[%s8974 + $0x1ea] sm:$0xff]
  %v10113 = vld [vmem:[%s8974 + $0x1fa] sm:$0xff]
  %v10114 = vld [vmem:[%s8974 + $0x202] sm:$0xff]
  %v10115 = vld [vmem:[%s8974 + $0x212] sm:$0xff]
  %v10116 = vld [vmem:[%s8974 + $0x21a] sm:$0xff]
  %v10117 = vld [vmem:[%s8974 + $0x22a] sm:$0xff]
  %v10118 = vld [vmem:[%s8974 + $0x232] sm:$0xff]
  %v10119 = vld [vmem:[%s8974 + $0x242] sm:$0xff]
  %v10120 = vld [vmem:[%s8974 + $0x24a] sm:$0xff]
  %v10121 = vld [vmem:[%s8974 + $0x25a] sm:$0xff]
  %v10122 = vld [vmem:[%s8974 + $0x262] sm:$0xff]
  %v10123 = vld [vmem:[%s8974 + $0x272] sm:$0xff]
  %v10124 = vld [vmem:[%s8974 + $0x27a] sm:$0xff]
  %v10125 = vld [vmem:[%s8974 + $0x28a] sm:$0xff]
  %v10126 = vld [vmem:[%s8974 + $0x292] sm:$0xff]
  %v10127 = vld [vmem:[%s8974 + $0x2a2] sm:$0xff]
  %v10128 = vld [vmem:[%s8974 + $0x2aa] sm:$0xff]
  %v10129 = vld [vmem:[%s8974 + $0x2ba] sm:$0xff]
  %v10130 = vld [vmem:[%s8974 + $0x2c2] sm:$0xff]
  %v10131 = vld [vmem:[%s8974 + $0x2d2] sm:$0xff]
  %v10132 = vld [vmem:[%s8974 + $0x2da] sm:$0xff]
  %v10133 = vld [vmem:[%s8974 + $0x2ea] sm:$0xff]
  %v10134 = vld [vmem:[%s8974 + $0x2f2] sm:$0xff]
  %v10135 = vld [vmem:[%s8974 + $0x302] sm:$0xff]
  %v10136 = vld [vmem:[%s8974 + $0x30a] sm:$0xff]
  %v10137 = vld [vmem:[%s8974 + $0x31a] sm:$0xff]
  %v10138 = vld [vmem:[%s8974 + $0x322] sm:$0xff]
  %v10139 = vpack.c.bf16 %v10076, %v10075
  %v10140 = vpack.c.bf16 %v10078, %v10077
  %v10141 = vpack.c.bf16 %v10080, %v10079
  %v10142 = vpack.c.bf16 %v10082, %v10081
  %v10143 = vpack.c.bf16 %v10084, %v10083
  %v10144 = vpack.c.bf16 %v10086, %v10085
  %v10145 = vpack.c.bf16 %v10088, %v10087
  %v10146 = vpack.c.bf16 %v10090, %v10089
  %v10147 = vpack.c.bf16 %v10092, %v10091
  %v10148 = vpack.c.bf16 %v10094, %v10093
  %v10149 = vpack.c.bf16 %v10096, %v10095
  %v10150 = vpack.c.bf16 %v10098, %v10097
  %v10151 = vpack.c.bf16 %v10100, %v10099
  %v10152 = vpack.c.bf16 %v10102, %v10101
  %v10153 = vpack.c.bf16 %v10104, %v10103
  %v10154 = vpack.c.bf16 %v10106, %v10105
  %v10155 = vpack.c.bf16 %v10108, %v10107
  %v10156 = vpack.c.bf16 %v10110, %v10109
  %v10157 = vpack.c.bf16 %v10112, %v10111
  %v10158 = vpack.c.bf16 %v10114, %v10113
  %v10159 = vpack.c.bf16 %v10116, %v10115
  %v10160 = vpack.c.bf16 %v10118, %v10117
  %v10161 = vpack.c.bf16 %v10120, %v10119
  %v10162 = vpack.c.bf16 %v10122, %v10121
  %v10163 = vpack.c.bf16 %v10124, %v10123
  %v10164 = vpack.c.bf16 %v10126, %v10125
  %v10165 = vpack.c.bf16 %v10128, %v10127
  %v10166 = vpack.c.bf16 %v10130, %v10129
  %v10167 = vpack.c.bf16 %v10132, %v10131
  %v10168 = vpack.c.bf16 %v10134, %v10133
  %v10169 = vpack.c.bf16 %v10136, %v10135
  %v10170 = vpack.c.bf16 %v10138, %v10137
  %s10171 = scalar_lea.vmem %s2, 32
  %v10172 = vld [vmem:[%s10171] sm:$0xf]
  %v10174 = vsel %vm5056, %v10139, 0
  %v10177 = vsel %vm5056, %v10140, 0
  %v10180 = vsel %vm5056, %v10141, 0
  %v10183 = vsel %vm5056, %v10142, 0
  %v10186 = vsel %vm5056, %v10143, 0
  %v10189 = vsel %vm5056, %v10144, 0
  %v10192 = vsel %vm5056, %v10145, 0
  %v10195 = vsel %vm5056, %v10146, 0
  %v10198 = vsel %vm5056, %v10147, 0
  %v10201 = vsel %vm5056, %v10148, 0
  %v10204 = vsel %vm5056, %v10149, 0
  %v10207 = vsel %vm5056, %v10150, 0
  %v10210 = vsel %vm5056, %v10151, 0
  %v10213 = vsel %vm5056, %v10152, 0
  %v10216 = vsel %vm5056, %v10153, 0
  %v10219 = vsel %vm5056, %v10154, 0
  %v10222 = vsel %vm5056, %v10155, 0
  %v10225 = vsel %vm5056, %v10156, 0
  %v10228 = vsel %vm5056, %v10157, 0
  %v10231 = vsel %vm5056, %v10158, 0
  %v10234 = vsel %vm5056, %v10159, 0
  %v10237 = vsel %vm5056, %v10160, 0
  %v10240 = vsel %vm5056, %v10161, 0
  %v10243 = vsel %vm5056, %v10162, 0
  %v10246 = vsel %vm5056, %v10163, 0
  %v10249 = vsel %vm5056, %v10164, 0
  %v10252 = vsel %vm5056, %v10165, 0
  %v10255 = vsel %vm5056, %v10166, 0
  %v10258 = vsel %vm5056, %v10167, 0
  %v10261 = vsel %vm5056, %v10168, 0
  %v10264 = vsel %vm5056, %v10169, 0
  %v10267 = vsel %vm5056, %v10170, 0
  %v10270 = vsel %vm6093, %v10172, 0
  %10272 = vmatprep.subr.bf16.mxu0 0
  %10273 = vmatpush1.bf16.msra.mxu0 %v10270
  %10274 = vmatprep.subr.bf16.mxu0 0
  %10275 = vmatpush1.bf16.msra.mxu0 0
  %10276 = vmatprep.subr.bf16.mxu0 0
  %10277 = vmatpush1.bf16.msra.mxu0 0
  %10278 = vmatprep.subr.bf16.mxu0 0
  %10279 = vmatpush1.bf16.msra.mxu0 0
  %10280 = vmatprep.subr.bf16.mxu0 0
  %10281 = vmatpush1.bf16.msra.mxu0 0
  %10282 = vmatprep.subr.bf16.mxu0 0
  %10283 = vmatpush1.bf16.msra.mxu0 0
  %10284 = vmatprep.subr.bf16.mxu0 0
  %10285 = vmatpush1.bf16.msra.mxu0 0
  %10286 = vmatprep.subr.bf16.mxu0 0
  %10287 = vmatpush1.bf16.msra.mxu0 0
  %10288 = vmatprep.subr.bf16.mxu0 0
  %10289 = vmatpush1.bf16.msra.mxu0 0
  %10290 = vmatprep.subr.bf16.mxu0 0
  %10291 = vmatpush1.bf16.msra.mxu0 0
  %10292 = vmatprep.subr.bf16.mxu0 0
  %10293 = vmatpush1.bf16.msra.mxu0 0
  %10294 = vmatprep.subr.bf16.mxu0 0
  %10295 = vmatpush1.bf16.msra.mxu0 0
  %10296 = vmatprep.subr.bf16.mxu0 0
  %10297 = vmatpush1.bf16.msra.mxu0 0
  %10298 = vmatprep.subr.bf16.mxu0 0
  %10299 = vmatpush1.bf16.msra.mxu0 0
  %10300 = vmatprep.subr.bf16.mxu0 0
  %10301 = vmatpush1.bf16.msra.mxu0 0
  %10302 = vmatprep.subr.bf16.mxu0 0
  %10303 = vmatpush1.bf16.msra.mxu0 0
  %10304 = vmatprep.mubr.bf16.mxu0 0
  %10305 = vmatmul.mubr.bf16.gmra.mrb[0].mxu0 %v10174
  %v10306 = vpop.f32.mrb[0].mxu0
  %v10307 = vadd.f32 0.0, %v10306
  %v10308 = vpop.f32.mrb[0].mxu0
  %v10309 = vpop.f32.mrb[0].mxu0
  %v10310 = vadd.f32 0.0, %v10309
  %v10311 = vpop.f32.mrb[0].mxu0
  %10312 = vmatprep.mubr.bf16.mxu0 0
  %10313 = vmatmul.mubr.bf16.gmra.mrb[0].mxu0 %v10177
  %v10314 = vpop.f32.mrb[0].mxu0
  %v10315 = vadd.f32 0.0, %v10314
  %v10316 = vpop.f32.mrb[0].mxu0
  %v10317 = vpop.f32.mrb[0].mxu0
  %v10318 = vadd.f32 0.0, %v10317
  %v10319 = vpop.f32.mrb[0].mxu0
  %10320 = vmatprep.mubr.bf16.mxu0 0
  %10321 = vmatmul.mubr.bf16.gmra.mrb[0].mxu0 %v10180
  %v10322 = vpop.f32.mrb[0].mxu0
  %v10323 = vadd.f32 0.0, %v10322
  %v10324 = vpop.f32.mrb[0].mxu0
  %v10325 = vpop.f32.mrb[0].mxu0
  %v10326 = vadd.f32 0.0, %v10325
  %v10327 = vpop.f32.mrb[0].mxu0
  %10328 = vmatprep.mubr.bf16.mxu0 0
  %10329 = vmatmul.mubr.bf16.gmra.mrb[0].mxu0 %v10183
  %v10330 = vpop.f32.mrb[0].mxu0
  %v10331 = vadd.f32 0.0, %v10330
  %v10332 = vpop.f32.mrb[0].mxu0
  %v10333 = vpop.f32.mrb[0].mxu0
  %v10334 = vadd.f32 0.0, %v10333
  %v10335 = vpop.f32.mrb[0].mxu0
  %10336 = vmatprep.mubr.bf16.mxu0 0
  %10337 = vmatmul.mubr.bf16.gmra.mrb[0].mxu0 %v10186
  %v10338 = vpop.f32.mrb[0].mxu0
  %v10339 = vadd.f32 0.0, %v10338
  %v10340 = vpop.f32.mrb[0].mxu0
  %v10341 = vpop.f32.mrb[0].mxu0
  %v10342 = vadd.f32 0.0, %v10341
  %v10343 = vpop.f32.mrb[0].mxu0
  %10344 = vmatprep.mubr.bf16.mxu0 0
  %10345 = vmatmul.mubr.bf16.gmra.mrb[0].mxu0 %v10189
  %v10346 = vpop.f32.mrb[0].mxu0
  %v10347 = vadd.f32 0.0, %v10346
  %v10348 = vpop.f32.mrb[0].mxu0
  %v10349 = vpop.f32.mrb[0].mxu0
  %v10350 = vadd.f32 0.0, %v10349
  %v10351 = vpop.f32.mrb[0].mxu0
  %10352 = vmatprep.mubr.bf16.mxu0 0
  %10353 = vmatmul.mubr.bf16.gmra.mrb[0].mxu0 %v10192
  %v10354 = vpop.f32.mrb[0].mxu0
  %v10355 = vadd.f32 0.0, %v10354
  %v10356 = vpop.f32.mrb[0].mxu0
  %v10357 = vpop.f32.mrb[0].mxu0
  %v10358 = vadd.f32 0.0, %v10357
  %v10359 = vpop.f32.mrb[0].mxu0
  %10360 = vmatprep.mubr.bf16.mxu0 0
  %10361 = vmatmul.mubr.bf16.gmra.mrb[0].mxu0 %v10195
  %v10362 = vpop.f32.mrb[0].mxu0
  %v10363 = vadd.f32 0.0, %v10362
  %v10364 = vpop.f32.mrb[0].mxu0
  %v10365 = vpop.f32.mrb[0].mxu0
  %v10366 = vadd.f32 0.0, %v10365
  %v10367 = vpop.f32.mrb[0].mxu0
  %10368 = vmatprep.mubr.bf16.mxu0 0
  %10369 = vmatmul.mubr.bf16.gmra.mrb[0].mxu0 %v10198
  %v10370 = vpop.f32.mrb[0].mxu0
  %v10371 = vadd.f32 0.0, %v10370
  %v10372 = vpop.f32.mrb[0].mxu0
  %v10373 = vpop.f32.mrb[0].mxu0
  %v10374 = vadd.f32 0.0, %v10373
  %v10375 = vpop.f32.mrb[0].mxu0
  %10376 = vmatprep.mubr.bf16.mxu0 0
  %10377 = vmatmul.mubr.bf16.gmra.mrb[0].mxu0 %v10201
  %v10378 = vpop.f32.mrb[0].mxu0
  %v10379 = vadd.f32 0.0, %v10378
  %v10380 = vpop.f32.mrb[0].mxu0
  %v10381 = vpop.f32.mrb[0].mxu0
  %v10382 = vadd.f32 0.0, %v10381
  %v10383 = vpop.f32.mrb[0].mxu0
  %10384 = vmatprep.mubr.bf16.mxu0 0
  %10385 = vmatmul.mubr.bf16.gmra.mrb[0].mxu0 %v10204
  %v10386 = vpop.f32.mrb[0].mxu0
  %v10387 = vadd.f32 0.0, %v10386
  %v10388 = vpop.f32.mrb[0].mxu0
  %v10389 = vpop.f32.mrb[0].mxu0
  %v10390 = vadd.f32 0.0, %v10389
  %v10391 = vpop.f32.mrb[0].mxu0
  %10392 = vmatprep.mubr.bf16.mxu0 0
  %10393 = vmatmul.mubr.bf16.gmra.mrb[0].mxu0 %v10207
  %v10394 = vpop.f32.mrb[0].mxu0
  %v10395 = vadd.f32 0.0, %v10394
  %v10396 = vpop.f32.mrb[0].mxu0
  %v10397 = vpop.f32.mrb[0].mxu0
  %v10398 = vadd.f32 0.0, %v10397
  %v10399 = vpop.f32.mrb[0].mxu0
  %10400 = vmatprep.mubr.bf16.mxu0 0
  %10401 = vmatmul.mubr.bf16.gmra.mrb[0].mxu0 %v10210
  %v10402 = vpop.f32.mrb[0].mxu0
  %v10403 = vadd.f32 0.0, %v10402
  %v10404 = vpop.f32.mrb[0].mxu0
  %v10405 = vpop.f32.mrb[0].mxu0
  %v10406 = vadd.f32 0.0, %v10405
  %v10407 = vpop.f32.mrb[0].mxu0
  %10408 = vmatprep.mubr.bf16.mxu0 0
  %10409 = vmatmul.mubr.bf16.gmra.mrb[0].mxu0 %v10213
  %v10410 = vpop.f32.mrb[0].mxu0
  %v10411 = vadd.f32 0.0, %v10410
  %v10412 = vpop.f32.mrb[0].mxu0
  %v10413 = vpop.f32.mrb[0].mxu0
  %v10414 = vadd.f32 0.0, %v10413
  %v10415 = vpop.f32.mrb[0].mxu0
  %10416 = vmatprep.mubr.bf16.mxu0 0
  %10417 = vmatmul.mubr.bf16.gmra.mrb[0].mxu0 %v10216
  %v10418 = vpop.f32.mrb[0].mxu0
  %v10419 = vadd.f32 0.0, %v10418
  %v10420 = vpop.f32.mrb[0].mxu0
  %v10421 = vpop.f32.mrb[0].mxu0
  %v10422 = vadd.f32 0.0, %v10421
  %v10423 = vpop.f32.mrb[0].mxu0
  %10424 = vmatprep.mubr.bf16.mxu0 0
  %10425 = vmatmul.mubr.bf16.gmra.mrb[0].mxu0 %v10219
  %v10426 = vpop.f32.mrb[0].mxu0
  %v10427 = vadd.f32 0.0, %v10426
  %v10428 = vpop.f32.mrb[0].mxu0
  %v10429 = vpop.f32.mrb[0].mxu0
  %v10430 = vadd.f32 0.0, %v10429
  %v10431 = vpop.f32.mrb[0].mxu0
  %10432 = vmatprep.mubr.bf16.mxu0 0
  %10433 = vmatmul.mubr.bf16.gmra.mrb[0].mxu0 %v10222
  %v10434 = vpop.f32.mrb[0].mxu0
  %v10435 = vadd.f32 0.0, %v10434
  %v10436 = vpop.f32.mrb[0].mxu0
  %v10437 = vpop.f32.mrb[0].mxu0
  %v10438 = vadd.f32 0.0, %v10437
  %v10439 = vpop.f32.mrb[0].mxu0
  %10440 = vmatprep.mubr.bf16.mxu0 0
  %10441 = vmatmul.mubr.bf16.gmra.mrb[0].mxu0 %v10225
  %v10442 = vpop.f32.mrb[0].mxu0
  %v10443 = vadd.f32 0.0, %v10442
  %v10444 = vpop.f32.mrb[0].mxu0
  %v10445 = vpop.f32.mrb[0].mxu0
  %v10446 = vadd.f32 0.0, %v10445
  %v10447 = vpop.f32.mrb[0].mxu0
  %10448 = vmatprep.mubr.bf16.mxu0 0
  %10449 = vmatmul.mubr.bf16.gmra.mrb[0].mxu0 %v10228
  %v10450 = vpop.f32.mrb[0].mxu0
  %v10451 = vadd.f32 0.0, %v10450
  %v10452 = vpop.f32.mrb[0].mxu0
  %v10453 = vpop.f32.mrb[0].mxu0
  %v10454 = vadd.f32 0.0, %v10453
  %v10455 = vpop.f32.mrb[0].mxu0
  %10456 = vmatprep.mubr.bf16.mxu0 0
  %10457 = vmatmul.mubr.bf16.gmra.mrb[0].mxu0 %v10231
  %v10458 = vpop.f32.mrb[0].mxu0
  %v10459 = vadd.f32 0.0, %v10458
  %v10460 = vpop.f32.mrb[0].mxu0
  %v10461 = vpop.f32.mrb[0].mxu0
  %v10462 = vadd.f32 0.0, %v10461
  %v10463 = vpop.f32.mrb[0].mxu0
  %10464 = vmatprep.mubr.bf16.mxu0 0
  %10465 = vmatmul.mubr.bf16.gmra.mrb[0].mxu0 %v10234
  %v10466 = vpop.f32.mrb[0].mxu0
  %v10467 = vadd.f32 0.0, %v10466
  %v10468 = vpop.f32.mrb[0].mxu0
  %v10469 = vpop.f32.mrb[0].mxu0
  %v10470 = vadd.f32 0.0, %v10469
  %v10471 = vpop.f32.mrb[0].mxu0
  %10472 = vmatprep.mubr.bf16.mxu0 0
  %10473 = vmatmul.mubr.bf16.gmra.mrb[0].mxu0 %v10237
  %v10474 = vpop.f32.mrb[0].mxu0
  %v10475 = vadd.f32 0.0, %v10474
  %v10476 = vpop.f32.mrb[0].mxu0
  %v10477 = vpop.f32.mrb[0].mxu0
  %v10478 = vadd.f32 0.0, %v10477
  %v10479 = vpop.f32.mrb[0].mxu0
  %10480 = vmatprep.mubr.bf16.mxu0 0
  %10481 = vmatmul.mubr.bf16.gmra.mrb[0].mxu0 %v10240
  %v10482 = vpop.f32.mrb[0].mxu0
  %v10483 = vadd.f32 0.0, %v10482
  %v10484 = vpop.f32.mrb[0].mxu0
  %v10485 = vpop.f32.mrb[0].mxu0
  %v10486 = vadd.f32 0.0, %v10485
  %v10487 = vpop.f32.mrb[0].mxu0
  %10488 = vmatprep.mubr.bf16.mxu0 0
  %10489 = vmatmul.mubr.bf16.gmra.mrb[0].mxu0 %v10243
  %v10490 = vpop.f32.mrb[0].mxu0
  %v10491 = vadd.f32 0.0, %v10490
  %v10492 = vpop.f32.mrb[0].mxu0
  %v10493 = vpop.f32.mrb[0].mxu0
  %v10494 = vadd.f32 0.0, %v10493
  %v10495 = vpop.f32.mrb[0].mxu0
  %10496 = vmatprep.mubr.bf16.mxu0 0
  %10497 = vmatmul.mubr.bf16.gmra.mrb[0].mxu0 %v10246
  %v10498 = vpop.f32.mrb[0].mxu0
  %v10499 = vadd.f32 0.0, %v10498
  %v10500 = vpop.f32.mrb[0].mxu0
  %v10501 = vpop.f32.mrb[0].mxu0
  %v10502 = vadd.f32 0.0, %v10501
  %v10503 = vpop.f32.mrb[0].mxu0
  %10504 = vmatprep.mubr.bf16.mxu0 0
  %10505 = vmatmul.mubr.bf16.gmra.mrb[0].mxu0 %v10249
  %v10506 = vpop.f32.mrb[0].mxu0
  %v10507 = vadd.f32 0.0, %v10506
  %v10508 = vpop.f32.mrb[0].mxu0
  %v10509 = vpop.f32.mrb[0].mxu0
  %v10510 = vadd.f32 0.0, %v10509
  %v10511 = vpop.f32.mrb[0].mxu0
  %10512 = vmatprep.mubr.bf16.mxu0 0
  %10513 = vmatmul.mubr.bf16.gmra.mrb[0].mxu0 %v10252
  %v10514 = vpop.f32.mrb[0].mxu0
  %v10515 = vadd.f32 0.0, %v10514
  %v10516 = vpop.f32.mrb[0].mxu0
  %v10517 = vpop.f32.mrb[0].mxu0
  %v10518 = vadd.f32 0.0, %v10517
  %v10519 = vpop.f32.mrb[0].mxu0
  %10520 = vmatprep.mubr.bf16.mxu0 0
  %10521 = vmatmul.mubr.bf16.gmra.mrb[0].mxu0 %v10255
  %v10522 = vpop.f32.mrb[0].mxu0
  %v10523 = vadd.f32 0.0, %v10522
  %v10524 = vpop.f32.mrb[0].mxu0
  %v10525 = vpop.f32.mrb[0].mxu0
  %v10526 = vadd.f32 0.0, %v10525
  %v10527 = vpop.f32.mrb[0].mxu0
  %10528 = vmatprep.mubr.bf16.mxu0 0
  %10529 = vmatmul.mubr.bf16.gmra.mrb[0].mxu0 %v10258
  %v10530 = vpop.f32.mrb[0].mxu0
  %v10531 = vadd.f32 0.0, %v10530
  %v10532 = vpop.f32.mrb[0].mxu0
  %v10533 = vpop.f32.mrb[0].mxu0
  %v10534 = vadd.f32 0.0, %v10533
  %v10535 = vpop.f32.mrb[0].mxu0
  %10536 = vmatprep.mubr.bf16.mxu0 0
  %10537 = vmatmul.mubr.bf16.gmra.mrb[0].mxu0 %v10261
  %v10538 = vpop.f32.mrb[0].mxu0
  %v10539 = vadd.f32 0.0, %v10538
  %v10540 = vpop.f32.mrb[0].mxu0
  %v10541 = vpop.f32.mrb[0].mxu0
  %v10542 = vadd.f32 0.0, %v10541
  %v10543 = vpop.f32.mrb[0].mxu0
  %10544 = vmatprep.mubr.bf16.mxu0 0
  %10545 = vmatmul.mubr.bf16.gmra.mrb[0].mxu0 %v10264
  %v10546 = vpop.f32.mrb[0].mxu0
  %v10547 = vadd.f32 0.0, %v10546
  %v10548 = vpop.f32.mrb[0].mxu0
  %v10549 = vpop.f32.mrb[0].mxu0
  %v10550 = vadd.f32 0.0, %v10549
  %v10551 = vpop.f32.mrb[0].mxu0
  %10552 = vmatprep.mubr.bf16.mxu0 0
  %10553 = vmatmul.mubr.bf16.gmra.mrb[0].mxu0 %v10267
  %v10554 = vpop.f32.mrb[0].mxu0
  %v10555 = vadd.f32 0.0, %v10554
  %v10556 = vpop.f32.mrb[0].mxu0
  %v10557 = vpop.f32.mrb[0].mxu0
  %v10558 = vadd.f32 0.0, %v10557
  %v10559 = vpop.f32.mrb[0].mxu0
  %10560 = vdwg.mxu0
  %v10561 = vadd.f32 %v10011, %v10307
  %v10562 = vadd.f32 %v10012, %v10310
  %v10563 = vadd.f32 %v10013, %v10315
  %v10564 = vadd.f32 %v10014, %v10318
  %v10565 = vadd.f32 %v10015, %v10323
  %v10566 = vadd.f32 %v10016, %v10326
  %v10567 = vadd.f32 %v10017, %v10331
  %v10568 = vadd.f32 %v10018, %v10334
  %v10569 = vadd.f32 %v10019, %v10339
  %v10570 = vadd.f32 %v10020, %v10342
  %v10571 = vadd.f32 %v10021, %v10347
  %v10572 = vadd.f32 %v10022, %v10350
  %v10573 = vadd.f32 %v10023, %v10355
  %v10574 = vadd.f32 %v10024, %v10358
  %v10575 = vadd.f32 %v10025, %v10363
  %v10576 = vadd.f32 %v10026, %v10366
  %v10577 = vadd.f32 %v10027, %v10371
  %v10578 = vadd.f32 %v10028, %v10374
  %v10579 = vadd.f32 %v10029, %v10379
  %v10580 = vadd.f32 %v10030, %v10382
  %v10581 = vadd.f32 %v10031, %v10387
  %v10582 = vadd.f32 %v10032, %v10390
  %v10583 = vadd.f32 %v10033, %v10395
  %v10584 = vadd.f32 %v10034, %v10398
  %v10585 = vadd.f32 %v10035, %v10403
  %v10586 = vadd.f32 %v10036, %v10406
  %v10587 = vadd.f32 %v10037, %v10411
  %v10588 = vadd.f32 %v10038, %v10414
  %v10589 = vadd.f32 %v10039, %v10419
  %v10590 = vadd.f32 %v10040, %v10422
  %v10591 = vadd.f32 %v10041, %v10427
  %v10592 = vadd.f32 %v10042, %v10430
  %v10593 = vadd.f32 %v10043, %v10435
  %v10594 = vadd.f32 %v10044, %v10438
  %v10595 = vadd.f32 %v10045, %v10443
  %v10596 = vadd.f32 %v10046, %v10446
  %v10597 = vadd.f32 %v10047, %v10451
  %v10598 = vadd.f32 %v10048, %v10454
  %v10599 = vadd.f32 %v10049, %v10459
  %v10600 = vadd.f32 %v10050, %v10462
  %v10601 = vadd.f32 %v10051, %v10467
  %v10602 = vadd.f32 %v10052, %v10470
  %v10603 = vadd.f32 %v10053, %v10475
  %v10604 = vadd.f32 %v10054, %v10478
  %v10605 = vadd.f32 %v10055, %v10483
  %v10606 = vadd.f32 %v10056, %v10486
  %v10607 = vadd.f32 %v10057, %v10491
  %v10608 = vadd.f32 %v10058, %v10494
  %v10609 = vadd.f32 %v10059, %v10499
  %v10610 = vadd.f32 %v10060, %v10502
  %v10611 = vadd.f32 %v10061, %v10507
  %v10612 = vadd.f32 %v10062, %v10510
  %v10613 = vadd.f32 %v10063, %v10515
  %v10614 = vadd.f32 %v10064, %v10518
  %v10615 = vadd.f32 %v10065, %v10523
  %v10616 = vadd.f32 %v10066, %v10526
  %v10617 = vadd.f32 %v10067, %v10531
  %v10618 = vadd.f32 %v10068, %v10534
  %v10619 = vadd.f32 %v10069, %v10539
  %v10620 = vadd.f32 %v10070, %v10542
  %v10621 = vadd.f32 %v10071, %v10547
  %v10622 = vadd.f32 %v10072, %v10550
  %v10623 = vadd.f32 %v10073, %v10555
  %v10624 = vadd.f32 %v10074, %v10558
  %v10625 = vsel %vm5056, %v10561, 0.0
  %v10626 = vsel %vm5056, %v10562, 0.0
  %v10627 = vadd.f32 %v10625, %v10626
  %v10628 = vsel %vm5056, %v10563, 0.0
  %v10629 = vadd.f32 %v10627, %v10628
  %v10630 = vsel %vm5056, %v10564, 0.0
  %v10631 = vadd.f32 %v10629, %v10630
  %v10632 = vsel %vm5056, %v10565, 0.0
  %v10633 = vadd.f32 %v10631, %v10632
  %v10634 = vsel %vm5056, %v10566, 0.0
  %v10635 = vadd.f32 %v10633, %v10634
  %v10636 = vsel %vm5056, %v10567, 0.0
  %v10637 = vadd.f32 %v10635, %v10636
  %v10638 = vsel %vm5056, %v10568, 0.0
  %v10639 = vadd.f32 %v10637, %v10638
  %v10640 = vsel %vm5056, %v10569, 0.0
  %v10641 = vadd.f32 %v10639, %v10640
  %v10642 = vsel %vm5056, %v10570, 0.0
  %v10643 = vadd.f32 %v10641, %v10642
  %v10644 = vsel %vm5056, %v10571, 0.0
  %v10645 = vadd.f32 %v10643, %v10644
  %v10646 = vsel %vm5056, %v10572, 0.0
  %v10647 = vadd.f32 %v10645, %v10646
  %v10648 = vsel %vm5056, %v10573, 0.0
  %v10649 = vadd.f32 %v10647, %v10648
  %v10650 = vsel %vm5056, %v10574, 0.0
  %v10651 = vadd.f32 %v10649, %v10650
  %v10652 = vsel %vm5056, %v10575, 0.0
  %v10653 = vadd.f32 %v10651, %v10652
  %v10654 = vsel %vm5056, %v10576, 0.0
  %v10655 = vadd.f32 %v10653, %v10654
  %v10656 = vsel %vm5056, %v10577, 0.0
  %v10657 = vadd.f32 %v10655, %v10656
  %v10658 = vsel %vm5056, %v10578, 0.0
  %v10659 = vadd.f32 %v10657, %v10658
  %v10660 = vsel %vm5056, %v10579, 0.0
  %v10661 = vadd.f32 %v10659, %v10660
  %v10662 = vsel %vm5056, %v10580, 0.0
  %v10663 = vadd.f32 %v10661, %v10662
  %v10664 = vsel %vm5056, %v10581, 0.0
  %v10665 = vadd.f32 %v10663, %v10664
  %v10666 = vsel %vm5056, %v10582, 0.0
  %v10667 = vadd.f32 %v10665, %v10666
  %v10668 = vsel %vm5056, %v10583, 0.0
  %v10669 = vadd.f32 %v10667, %v10668
  %v10670 = vsel %vm5056, %v10584, 0.0
  %v10671 = vadd.f32 %v10669, %v10670
  %v10672 = vsel %vm5056, %v10585, 0.0
  %v10673 = vadd.f32 %v10671, %v10672
  %v10674 = vsel %vm5056, %v10586, 0.0
  %v10675 = vadd.f32 %v10673, %v10674
  %v10676 = vsel %vm5056, %v10587, 0.0
  %v10677 = vadd.f32 %v10675, %v10676
  %v10678 = vsel %vm5056, %v10588, 0.0
  %v10679 = vadd.f32 %v10677, %v10678
  %v10680 = vsel %vm5056, %v10589, 0.0
  %v10681 = vadd.f32 %v10679, %v10680
  %v10682 = vsel %vm5056, %v10590, 0.0
  %v10683 = vadd.f32 %v10681, %v10682
  %v10684 = vsel %vm5056, %v10591, 0.0
  %v10685 = vadd.f32 %v10683, %v10684
  %v10686 = vsel %vm5056, %v10592, 0.0
  %v10687 = vadd.f32 %v10685, %v10686
  %v10688 = vsel %vm5056, %v10593, 0.0
  %v10689 = vadd.f32 %v10687, %v10688
  %v10690 = vsel %vm5056, %v10594, 0.0
  %v10691 = vadd.f32 %v10689, %v10690
  %v10692 = vsel %vm5056, %v10595, 0.0
  %v10693 = vadd.f32 %v10691, %v10692
  %v10694 = vsel %vm5056, %v10596, 0.0
  %v10695 = vadd.f32 %v10693, %v10694
  %v10696 = vsel %vm5056, %v10597, 0.0
  %v10697 = vadd.f32 %v10695, %v10696
  %v10698 = vsel %vm5056, %v10598, 0.0
  %v10699 = vadd.f32 %v10697, %v10698
  %v10700 = vsel %vm5056, %v10599, 0.0
  %v10701 = vadd.f32 %v10699, %v10700
  %v10702 = vsel %vm5056, %v10600, 0.0
  %v10703 = vadd.f32 %v10701, %v10702
  %v10704 = vsel %vm5056, %v10601, 0.0
  %v10705 = vadd.f32 %v10703, %v10704
  %v10706 = vsel %vm5056, %v10602, 0.0
  %v10707 = vadd.f32 %v10705, %v10706
  %v10708 = vsel %vm5056, %v10603, 0.0
  %v10709 = vadd.f32 %v10707, %v10708
  %v10710 = vsel %vm5056, %v10604, 0.0
  %v10711 = vadd.f32 %v10709, %v10710
  %v10712 = vsel %vm5056, %v10605, 0.0
  %v10713 = vadd.f32 %v10711, %v10712
  %v10714 = vsel %vm5056, %v10606, 0.0
  %v10715 = vadd.f32 %v10713, %v10714
  %v10716 = vsel %vm5056, %v10607, 0.0
  %v10717 = vadd.f32 %v10715, %v10716
  %v10718 = vsel %vm5056, %v10608, 0.0
  %v10719 = vadd.f32 %v10717, %v10718
  %v10720 = vsel %vm5056, %v10609, 0.0
  %v10721 = vadd.f32 %v10719, %v10720
  %v10722 = vsel %vm5056, %v10610, 0.0
  %v10723 = vadd.f32 %v10721, %v10722
  %v10724 = vsel %vm5056, %v10611, 0.0
  %v10725 = vadd.f32 %v10723, %v10724
  %v10726 = vsel %vm5056, %v10612, 0.0
  %v10727 = vadd.f32 %v10725, %v10726
  %v10728 = vsel %vm5056, %v10613, 0.0
  %v10729 = vadd.f32 %v10727, %v10728
  %v10730 = vsel %vm5056, %v10614, 0.0
  %v10731 = vadd.f32 %v10729, %v10730
  %v10732 = vsel %vm5056, %v10615, 0.0
  %v10733 = vadd.f32 %v10731, %v10732
  %v10734 = vsel %vm5056, %v10616, 0.0
  %v10735 = vadd.f32 %v10733, %v10734
  %v10736 = vsel %vm5056, %v10617, 0.0
  %v10737 = vadd.f32 %v10735, %v10736
  %v10738 = vsel %vm5056, %v10618, 0.0
  %v10739 = vadd.f32 %v10737, %v10738
  %v10740 = vsel %vm5056, %v10619, 0.0
  %v10741 = vadd.f32 %v10739, %v10740
  %v10742 = vsel %vm5056, %v10620, 0.0
  %v10743 = vadd.f32 %v10741, %v10742
  %v10744 = vsel %vm5056, %v10621, 0.0
  %v10745 = vadd.f32 %v10743, %v10744
  %v10746 = vsel %vm5056, %v10622, 0.0
  %v10747 = vadd.f32 %v10745, %v10746
  %v10748 = vsel %vm5056, %v10623, 0.0
  %v10749 = vadd.f32 %v10747, %v10748
  %v10750 = vsel %vm5056, %v10624, 0.0
  %v10751 = vadd.f32 %v10749, %v10750
  %v10752 = vrot.slane %v10751, 4
  %v10753 = vadd.f32 %v10751, %v10752
  %v10754 = vrot.slane %v10753, 2
  %v10755 = vadd.f32 %v10753, %v10754
  %v10756 = vrot.slane %v10755, 1
  %v10757 = vadd.f32 %v10755, %v10756
  %v10758 = vmul.f32 %v10757, 0.001953125
  %v10759 = vsub.f32 %v10561, %v10758
  %v10760 = vsub.f32 %v10562, %v10758
  %v10761 = vsub.f32 %v10563, %v10758
  %v10762 = vsub.f32 %v10564, %v10758
  %v10763 = vsub.f32 %v10565, %v10758
  %v10764 = vsub.f32 %v10566, %v10758
  %v10765 = vsub.f32 %v10567, %v10758
  %v10766 = vsub.f32 %v10568, %v10758
  %v10767 = vsub.f32 %v10569, %v10758
  %v10768 = vsub.f32 %v10570, %v10758
  %v10769 = vsub.f32 %v10571, %v10758
  %v10770 = vsub.f32 %v10572, %v10758
  %v10771 = vsub.f32 %v10573, %v10758
  %v10772 = vsub.f32 %v10574, %v10758
  %v10773 = vsub.f32 %v10575, %v10758
  %v10774 = vsub.f32 %v10576, %v10758
  %v10775 = vsub.f32 %v10577, %v10758
  %v10776 = vsub.f32 %v10578, %v10758
  %v10777 = vsub.f32 %v10579, %v10758
  %v10778 = vsub.f32 %v10580, %v10758
  %v10779 = vsub.f32 %v10581, %v10758
  %v10780 = vsub.f32 %v10582, %v10758
  %v10781 = vsub.f32 %v10583, %v10758
  %v10782 = vsub.f32 %v10584, %v10758
  %v10783 = vsub.f32 %v10585, %v10758
  %v10784 = vsub.f32 %v10586, %v10758
  %v10785 = vsub.f32 %v10587, %v10758
  %v10786 = vsub.f32 %v10588, %v10758
  %v10787 = vsub.f32 %v10589, %v10758
  %v10788 = vsub.f32 %v10590, %v10758
  %v10789 = vsub.f32 %v10591, %v10758
  %v10790 = vsub.f32 %v10592, %v10758
  %v10791 = vsub.f32 %v10593, %v10758
  %v10792 = vsub.f32 %v10594, %v10758
  %v10793 = vsub.f32 %v10595, %v10758
  %v10794 = vsub.f32 %v10596, %v10758
  %v10795 = vsub.f32 %v10597, %v10758
  %v10796 = vsub.f32 %v10598, %v10758
  %v10797 = vsub.f32 %v10599, %v10758
  %v10798 = vsub.f32 %v10600, %v10758
  %v10799 = vsub.f32 %v10601, %v10758
  %v10800 = vsub.f32 %v10602, %v10758
  %v10801 = vsub.f32 %v10603, %v10758
  %v10802 = vsub.f32 %v10604, %v10758
  %v10803 = vsub.f32 %v10605, %v10758
  %v10804 = vsub.f32 %v10606, %v10758
  %v10805 = vsub.f32 %v10607, %v10758
  %v10806 = vsub.f32 %v10608, %v10758
  %v10807 = vsub.f32 %v10609, %v10758
  %v10808 = vsub.f32 %v10610, %v10758
  %v10809 = vsub.f32 %v10611, %v10758
  %v10810 = vsub.f32 %v10612, %v10758
  %v10811 = vsub.f32 %v10613, %v10758
  %v10812 = vsub.f32 %v10614, %v10758
  %v10813 = vsub.f32 %v10615, %v10758
  %v10814 = vsub.f32 %v10616, %v10758
  %v10815 = vsub.f32 %v10617, %v10758
  %v10816 = vsub.f32 %v10618, %v10758
  %v10817 = vsub.f32 %v10619, %v10758
  %v10818 = vsub.f32 %v10620, %v10758
  %v10819 = vsub.f32 %v10621, %v10758
  %v10820 = vsub.f32 %v10622, %v10758
  %v10821 = vsub.f32 %v10623, %v10758
  %v10822 = vsub.f32 %v10624, %v10758
  %v10823 = vmul.f32 %v10759, %v10759
  %v10824 = vmul.f32 %v10760, %v10760
  %v10825 = vmul.f32 %v10761, %v10761
  %v10826 = vmul.f32 %v10762, %v10762
  %v10827 = vmul.f32 %v10763, %v10763
  %v10828 = vmul.f32 %v10764, %v10764
  %v10829 = vmul.f32 %v10765, %v10765
  %v10830 = vmul.f32 %v10766, %v10766
  %v10831 = vmul.f32 %v10767, %v10767
  %v10832 = vmul.f32 %v10768, %v10768
  %v10833 = vmul.f32 %v10769, %v10769
  %v10834 = vmul.f32 %v10770, %v10770
  %v10835 = vmul.f32 %v10771, %v10771
  %v10836 = vmul.f32 %v10772, %v10772
  %v10837 = vmul.f32 %v10773, %v10773
  %v10838 = vmul.f32 %v10774, %v10774
  %v10839 = vmul.f32 %v10775, %v10775
  %v10840 = vmul.f32 %v10776, %v10776
  %v10841 = vmul.f32 %v10777, %v10777
  %v10842 = vmul.f32 %v10778, %v10778
  %v10843 = vmul.f32 %v10779, %v10779
  %v10844 = vmul.f32 %v10780, %v10780
  %v10845 = vmul.f32 %v10781, %v10781
  %v10846 = vmul.f32 %v10782, %v10782
  %v10847 = vmul.f32 %v10783, %v10783
  %v10848 = vmul.f32 %v10784, %v10784
  %v10849 = vmul.f32 %v10785, %v10785
  %v10850 = vmul.f32 %v10786, %v10786
  %v10851 = vmul.f32 %v10787, %v10787
  %v10852 = vmul.f32 %v10788, %v10788
  %v10853 = vmul.f32 %v10789, %v10789
  %v10854 = vmul.f32 %v10790, %v10790
  %v10855 = vmul.f32 %v10791, %v10791
  %v10856 = vmul.f32 %v10792, %v10792
  %v10857 = vmul.f32 %v10793, %v10793
  %v10858 = vmul.f32 %v10794, %v10794
  %v10859 = vmul.f32 %v10795, %v10795
  %v10860 = vmul.f32 %v10796, %v10796
  %v10861 = vmul.f32 %v10797, %v10797
  %v10862 = vmul.f32 %v10798, %v10798
  %v10863 = vmul.f32 %v10799, %v10799
  %v10864 = vmul.f32 %v10800, %v10800
  %v10865 = vmul.f32 %v10801, %v10801
  %v10866 = vmul.f32 %v10802, %v10802
  %v10867 = vmul.f32 %v10803, %v10803
  %v10868 = vmul.f32 %v10804, %v10804
  %v10869 = vmul.f32 %v10805, %v10805
  %v10870 = vmul.f32 %v10806, %v10806
  %v10871 = vmul.f32 %v10807, %v10807
  %v10872 = vmul.f32 %v10808, %v10808
  %v10873 = vmul.f32 %v10809, %v10809
  %v10874 = vmul.f32 %v10810, %v10810
  %v10875 = vmul.f32 %v10811, %v10811
  %v10876 = vmul.f32 %v10812, %v10812
  %v10877 = vmul.f32 %v10813, %v10813
  %v10878 = vmul.f32 %v10814, %v10814
  %v10879 = vmul.f32 %v10815, %v10815
  %v10880 = vmul.f32 %v10816, %v10816
  %v10881 = vmul.f32 %v10817, %v10817
  %v10882 = vmul.f32 %v10818, %v10818
  %v10883 = vmul.f32 %v10819, %v10819
  %v10884 = vmul.f32 %v10820, %v10820
  %v10885 = vmul.f32 %v10821, %v10821
  %v10886 = vmul.f32 %v10822, %v10822
  %v10887 = vsel %vm5056, %v10823, 0.0
  %v10888 = vsel %vm5056, %v10824, 0.0
  %v10889 = vadd.f32 %v10887, %v10888
  %v10890 = vsel %vm5056, %v10825, 0.0
  %v10891 = vadd.f32 %v10889, %v10890
  %v10892 = vsel %vm5056, %v10826, 0.0
  %v10893 = vadd.f32 %v10891, %v10892
  %v10894 = vsel %vm5056, %v10827, 0.0
  %v10895 = vadd.f32 %v10893, %v10894
  %v10896 = vsel %vm5056, %v10828, 0.0
  %v10897 = vadd.f32 %v10895, %v10896
  %v10898 = vsel %vm5056, %v10829, 0.0
  %v10899 = vadd.f32 %v10897, %v10898
  %v10900 = vsel %vm5056, %v10830, 0.0
  %v10901 = vadd.f32 %v10899, %v10900
  %v10902 = vsel %vm5056, %v10831, 0.0
  %v10903 = vadd.f32 %v10901, %v10902
  %v10904 = vsel %vm5056, %v10832, 0.0
  %v10905 = vadd.f32 %v10903, %v10904
  %v10906 = vsel %vm5056, %v10833, 0.0
  %v10907 = vadd.f32 %v10905, %v10906
  %v10908 = vsel %vm5056, %v10834, 0.0
  %v10909 = vadd.f32 %v10907, %v10908
  %v10910 = vsel %vm5056, %v10835, 0.0
  %v10911 = vadd.f32 %v10909, %v10910
  %v10912 = vsel %vm5056, %v10836, 0.0
  %v10913 = vadd.f32 %v10911, %v10912
  %v10914 = vsel %vm5056, %v10837, 0.0
  %v10915 = vadd.f32 %v10913, %v10914
  %v10916 = vsel %vm5056, %v10838, 0.0
  %v10917 = vadd.f32 %v10915, %v10916
  %v10918 = vsel %vm5056, %v10839, 0.0
  %v10919 = vadd.f32 %v10917, %v10918
  %v10920 = vsel %vm5056, %v10840, 0.0
  %v10921 = vadd.f32 %v10919, %v10920
  %v10922 = vsel %vm5056, %v10841, 0.0
  %v10923 = vadd.f32 %v10921, %v10922
  %v10924 = vsel %vm5056, %v10842, 0.0
  %v10925 = vadd.f32 %v10923, %v10924
  %v10926 = vsel %vm5056, %v10843, 0.0
  %v10927 = vadd.f32 %v10925, %v10926
  %v10928 = vsel %vm5056, %v10844, 0.0
  %v10929 = vadd.f32 %v10927, %v10928
  %v10930 = vsel %vm5056, %v10845, 0.0
  %v10931 = vadd.f32 %v10929, %v10930
  %v10932 = vsel %vm5056, %v10846, 0.0
  %v10933 = vadd.f32 %v10931, %v10932
  %v10934 = vsel %vm5056, %v10847, 0.0
  %v10935 = vadd.f32 %v10933, %v10934
  %v10936 = vsel %vm5056, %v10848, 0.0
  %v10937 = vadd.f32 %v10935, %v10936
  %v10938 = vsel %vm5056, %v10849, 0.0
  %v10939 = vadd.f32 %v10937, %v10938
  %v10940 = vsel %vm5056, %v10850, 0.0
  %v10941 = vadd.f32 %v10939, %v10940
  %v10942 = vsel %vm5056, %v10851, 0.0
  %v10943 = vadd.f32 %v10941, %v10942
  %v10944 = vsel %vm5056, %v10852, 0.0
  %v10945 = vadd.f32 %v10943, %v10944
  %v10946 = vsel %vm5056, %v10853, 0.0
  %v10947 = vadd.f32 %v10945, %v10946
  %v10948 = vsel %vm5056, %v10854, 0.0
  %v10949 = vadd.f32 %v10947, %v10948
  %v10950 = vsel %vm5056, %v10855, 0.0
  %v10951 = vadd.f32 %v10949, %v10950
  %v10952 = vsel %vm5056, %v10856, 0.0
  %v10953 = vadd.f32 %v10951, %v10952
  %v10954 = vsel %vm5056, %v10857, 0.0
  %v10955 = vadd.f32 %v10953, %v10954
  %v10956 = vsel %vm5056, %v10858, 0.0
  %v10957 = vadd.f32 %v10955, %v10956
  %v10958 = vsel %vm5056, %v10859, 0.0
  %v10959 = vadd.f32 %v10957, %v10958
  %v10960 = vsel %vm5056, %v10860, 0.0
  %v10961 = vadd.f32 %v10959, %v10960
  %v10962 = vsel %vm5056, %v10861, 0.0
  %v10963 = vadd.f32 %v10961, %v10962
  %v10964 = vsel %vm5056, %v10862, 0.0
  %v10965 = vadd.f32 %v10963, %v10964
  %v10966 = vsel %vm5056, %v10863, 0.0
  %v10967 = vadd.f32 %v10965, %v10966
  %v10968 = vsel %vm5056, %v10864, 0.0
  %v10969 = vadd.f32 %v10967, %v10968
  %v10970 = vsel %vm5056, %v10865, 0.0
  %v10971 = vadd.f32 %v10969, %v10970
  %v10972 = vsel %vm5056, %v10866, 0.0
  %v10973 = vadd.f32 %v10971, %v10972
  %v10974 = vsel %vm5056, %v10867, 0.0
  %v10975 = vadd.f32 %v10973, %v10974
  %v10976 = vsel %vm5056, %v10868, 0.0
  %v10977 = vadd.f32 %v10975, %v10976
  %v10978 = vsel %vm5056, %v10869, 0.0
  %v10979 = vadd.f32 %v10977, %v10978
  %v10980 = vsel %vm5056, %v10870, 0.0
  %v10981 = vadd.f32 %v10979, %v10980
  %v10982 = vsel %vm5056, %v10871, 0.0
  %v10983 = vadd.f32 %v10981, %v10982
  %v10984 = vsel %vm5056, %v10872, 0.0
  %v10985 = vadd.f32 %v10983, %v10984
  %v10986 = vsel %vm5056, %v10873, 0.0
  %v10987 = vadd.f32 %v10985, %v10986
  %v10988 = vsel %vm5056, %v10874, 0.0
  %v10989 = vadd.f32 %v10987, %v10988
  %v10990 = vsel %vm5056, %v10875, 0.0
  %v10991 = vadd.f32 %v10989, %v10990
  %v10992 = vsel %vm5056, %v10876, 0.0
  %v10993 = vadd.f32 %v10991, %v10992
  %v10994 = vsel %vm5056, %v10877, 0.0
  %v10995 = vadd.f32 %v10993, %v10994
  %v10996 = vsel %vm5056, %v10878, 0.0
  %v10997 = vadd.f32 %v10995, %v10996
  %v10998 = vsel %vm5056, %v10879, 0.0
  %v10999 = vadd.f32 %v10997, %v10998
  %v11000 = vsel %vm5056, %v10880, 0.0
  %v11001 = vadd.f32 %v10999, %v11000
  %v11002 = vsel %vm5056, %v10881, 0.0
  %v11003 = vadd.f32 %v11001, %v11002
  %v11004 = vsel %vm5056, %v10882, 0.0
  %v11005 = vadd.f32 %v11003, %v11004
  %v11006 = vsel %vm5056, %v10883, 0.0
  %v11007 = vadd.f32 %v11005, %v11006
  %v11008 = vsel %vm5056, %v10884, 0.0
  %v11009 = vadd.f32 %v11007, %v11008
  %v11010 = vsel %vm5056, %v10885, 0.0
  %v11011 = vadd.f32 %v11009, %v11010
  %v11012 = vsel %vm5056, %v10886, 0.0
  %v11013 = vadd.f32 %v11011, %v11012
  %v11014 = vrot.slane %v11013, 4
  %v11015 = vadd.f32 %v11013, %v11014
  %v11016 = vrot.slane %v11015, 2
  %v11017 = vadd.f32 %v11015, %v11016
  %v11018 = vrot.slane %v11017, 1
  %v11019 = vadd.f32 %v11017, %v11018
  %v11020 = vmul.f32 %v11019, 0.001953125
  %v11021 = vadd.f32 %v11020, 1e-05
  %v11022 = vrsqrt.pop %v11021
  %v11023 = vmul.f32 %v23, %v11022
  %v11024 = vmul.f32 %v10758, %v11023
  %v11025 = vsub.f32 %v24, %v11024
  %v11026 = vlaneseq
  %v11027 = vshrl.u32 %v11026, 7
  %v11028 = vsub.s32 0, %v11027
  %v11029 = vrot.slane %v11023, %v11028
  %v11030 = vmul.f32 %v10561, %v11029
  %v11031 = vmul.f32 %v10562, %v11029
  %v11032 = vmul.f32 %v10563, %v11029
  %v11033 = vmul.f32 %v10564, %v11029
  %v11034 = vmul.f32 %v10565, %v11029
  %v11035 = vmul.f32 %v10566, %v11029
  %v11036 = vmul.f32 %v10567, %v11029
  %v11037 = vmul.f32 %v10568, %v11029
  %v11038 = vmul.f32 %v10569, %v11029
  %v11039 = vmul.f32 %v10570, %v11029
  %v11040 = vmul.f32 %v10571, %v11029
  %v11041 = vmul.f32 %v10572, %v11029
  %v11042 = vmul.f32 %v10573, %v11029
  %v11043 = vmul.f32 %v10574, %v11029
  %v11044 = vmul.f32 %v10575, %v11029
  %v11045 = vmul.f32 %v10576, %v11029
  %v11046 = vmul.f32 %v10577, %v11029
  %v11047 = vmul.f32 %v10578, %v11029
  %v11048 = vmul.f32 %v10579, %v11029
  %v11049 = vmul.f32 %v10580, %v11029
  %v11050 = vmul.f32 %v10581, %v11029
  %v11051 = vmul.f32 %v10582, %v11029
  %v11052 = vmul.f32 %v10583, %v11029
  %v11053 = vmul.f32 %v10584, %v11029
  %v11054 = vmul.f32 %v10585, %v11029
  %v11055 = vmul.f32 %v10586, %v11029
  %v11056 = vmul.f32 %v10587, %v11029
  %v11057 = vmul.f32 %v10588, %v11029
  %v11058 = vmul.f32 %v10589, %v11029
  %v11059 = vmul.f32 %v10590, %v11029
  %v11060 = vmul.f32 %v10591, %v11029
  %v11061 = vmul.f32 %v10592, %v11029
  %v11062 = vmul.f32 %v10593, %v11029
  %v11063 = vmul.f32 %v10594, %v11029
  %v11064 = vmul.f32 %v10595, %v11029
  %v11065 = vmul.f32 %v10596, %v11029
  %v11066 = vmul.f32 %v10597, %v11029
  %v11067 = vmul.f32 %v10598, %v11029
  %v11068 = vmul.f32 %v10599, %v11029
  %v11069 = vmul.f32 %v10600, %v11029
  %v11070 = vmul.f32 %v10601, %v11029
  %v11071 = vmul.f32 %v10602, %v11029
  %v11072 = vmul.f32 %v10603, %v11029
  %v11073 = vmul.f32 %v10604, %v11029
  %v11074 = vmul.f32 %v10605, %v11029
  %v11075 = vmul.f32 %v10606, %v11029
  %v11076 = vmul.f32 %v10607, %v11029
  %v11077 = vmul.f32 %v10608, %v11029
  %v11078 = vmul.f32 %v10609, %v11029
  %v11079 = vmul.f32 %v10610, %v11029
  %v11080 = vmul.f32 %v10611, %v11029
  %v11081 = vmul.f32 %v10612, %v11029
  %v11082 = vmul.f32 %v10613, %v11029
  %v11083 = vmul.f32 %v10614, %v11029
  %v11084 = vmul.f32 %v10615, %v11029
  %v11085 = vmul.f32 %v10616, %v11029
  %v11086 = vmul.f32 %v10617, %v11029
  %v11087 = vmul.f32 %v10618, %v11029
  %v11088 = vmul.f32 %v10619, %v11029
  %v11089 = vmul.f32 %v10620, %v11029
  %v11090 = vmul.f32 %v10621, %v11029
  %v11091 = vmul.f32 %v10622, %v11029
  %v11092 = vmul.f32 %v10623, %v11029
  %v11093 = vmul.f32 %v10624, %v11029
  %v11094 = vlaneseq
  %v11095 = vshrl.u32 %v11094, 7
  %v11096 = vsub.s32 0, %v11095
  %v11097 = vrot.slane %v11025, %v11096
  %v11098 = vadd.f32 %v11030, %v11097
  %v11099 = vadd.f32 %v11031, %v11097
  %v11100 = vadd.f32 %v11032, %v11097
  %v11101 = vadd.f32 %v11033, %v11097
  %v11102 = vadd.f32 %v11034, %v11097
  %v11103 = vadd.f32 %v11035, %v11097
  %v11104 = vadd.f32 %v11036, %v11097
  %v11105 = vadd.f32 %v11037, %v11097
  %v11106 = vadd.f32 %v11038, %v11097
  %v11107 = vadd.f32 %v11039, %v11097
  %v11108 = vadd.f32 %v11040, %v11097
  %v11109 = vadd.f32 %v11041, %v11097
  %v11110 = vadd.f32 %v11042, %v11097
  %v11111 = vadd.f32 %v11043, %v11097
  %v11112 = vadd.f32 %v11044, %v11097
  %v11113 = vadd.f32 %v11045, %v11097
  %v11114 = vadd.f32 %v11046, %v11097
  %v11115 = vadd.f32 %v11047, %v11097
  %v11116 = vadd.f32 %v11048, %v11097
  %v11117 = vadd.f32 %v11049, %v11097
  %v11118 = vadd.f32 %v11050, %v11097
  %v11119 = vadd.f32 %v11051, %v11097
  %v11120 = vadd.f32 %v11052, %v11097
  %v11121 = vadd.f32 %v11053, %v11097
  %v11122 = vadd.f32 %v11054, %v11097
  %v11123 = vadd.f32 %v11055, %v11097
  %v11124 = vadd.f32 %v11056, %v11097
  %v11125 = vadd.f32 %v11057, %v11097
  %v11126 = vadd.f32 %v11058, %v11097
  %v11127 = vadd.f32 %v11059, %v11097
  %v11128 = vadd.f32 %v11060, %v11097
  %v11129 = vadd.f32 %v11061, %v11097
  %v11130 = vadd.f32 %v11062, %v11097
  %v11131 = vadd.f32 %v11063, %v11097
  %v11132 = vadd.f32 %v11064, %v11097
  %v11133 = vadd.f32 %v11065, %v11097
  %v11134 = vadd.f32 %v11066, %v11097
  %v11135 = vadd.f32 %v11067, %v11097
  %v11136 = vadd.f32 %v11068, %v11097
  %v11137 = vadd.f32 %v11069, %v11097
  %v11138 = vadd.f32 %v11070, %v11097
  %v11139 = vadd.f32 %v11071, %v11097
  %v11140 = vadd.f32 %v11072, %v11097
  %v11141 = vadd.f32 %v11073, %v11097
  %v11142 = vadd.f32 %v11074, %v11097
  %v11143 = vadd.f32 %v11075, %v11097
  %v11144 = vadd.f32 %v11076, %v11097
  %v11145 = vadd.f32 %v11077, %v11097
  %v11146 = vadd.f32 %v11078, %v11097
  %v11147 = vadd.f32 %v11079, %v11097
  %v11148 = vadd.f32 %v11080, %v11097
  %v11149 = vadd.f32 %v11081, %v11097
  %v11150 = vadd.f32 %v11082, %v11097
  %v11151 = vadd.f32 %v11083, %v11097
  %v11152 = vadd.f32 %v11084, %v11097
  %v11153 = vadd.f32 %v11085, %v11097
  %v11154 = vadd.f32 %v11086, %v11097
  %v11155 = vadd.f32 %v11087, %v11097
  %v11156 = vadd.f32 %v11088, %v11097
  %v11157 = vadd.f32 %v11089, %v11097
  %v11158 = vadd.f32 %v11090, %v11097
  %v11159 = vadd.f32 %v11091, %v11097
  %v11160 = vadd.f32 %v11092, %v11097
  %v11161 = vadd.f32 %v11093, %v11097
  %v11162 = vld [vmem:[%s4 + $0x4] sm:$0x1]
  %v11163 = vld [vmem:[%s4 + $0x5] sm:$0x1]
  %vm11164 = vcmask 130112
  %v11165 = vsel %vm11164, %v2537, 0.0
  %v11166 = vsel %vm11164, %v2540, 0.0
  %v11167 = vadd.f32 %v11165, %v11166
  %v11168 = vsel %vm11164, %v2545, 0.0
  %v11169 = vadd.f32 %v11167, %v11168
  %v11170 = vsel %vm11164, %v2548, 0.0
  %v11171 = vadd.f32 %v11169, %v11170
  %v11172 = vsel %vm11164, %v2553, 0.0
  %v11173 = vadd.f32 %v11171, %v11172
  %v11174 = vsel %vm11164, %v2556, 0.0
  %v11175 = vadd.f32 %v11173, %v11174
  %v11176 = vsel %vm11164, %v2561, 0.0
  %v11177 = vadd.f32 %v11175, %v11176
  %v11178 = vsel %vm11164, %v2564, 0.0
  %v11179 = vadd.f32 %v11177, %v11178
  %v11180 = vsel %vm11164, %v2569, 0.0
  %v11181 = vadd.f32 %v11179, %v11180
  %v11182 = vsel %vm11164, %v2572, 0.0
  %v11183 = vadd.f32 %v11181, %v11182
  %v11184 = vsel %vm11164, %v2577, 0.0
  %v11185 = vadd.f32 %v11183, %v11184
  %v11186 = vsel %vm11164, %v2580, 0.0
  %v11187 = vadd.f32 %v11185, %v11186
  %v11188 = vsel %vm11164, %v2585, 0.0
  %v11189 = vadd.f32 %v11187, %v11188
  %v11190 = vsel %vm11164, %v2588, 0.0
  %v11191 = vadd.f32 %v11189, %v11190
  %v11192 = vsel %vm11164, %v2593, 0.0
  %v11193 = vadd.f32 %v11191, %v11192
  %v11194 = vsel %vm11164, %v2596, 0.0
  %v11195 = vadd.f32 %v11193, %v11194
  %v11196 = vsel %vm11164, %v2601, 0.0
  %v11197 = vadd.f32 %v11195, %v11196
  %v11198 = vsel %vm11164, %v2604, 0.0
  %v11199 = vadd.f32 %v11197, %v11198
  %v11200 = vsel %vm11164, %v2609, 0.0
  %v11201 = vadd.f32 %v11199, %v11200
  %v11202 = vsel %vm11164, %v2612, 0.0
  %v11203 = vadd.f32 %v11201, %v11202
  %v11204 = vsel %vm11164, %v2617, 0.0
  %v11205 = vadd.f32 %v11203, %v11204
  %v11206 = vsel %vm11164, %v2620, 0.0
  %v11207 = vadd.f32 %v11205, %v11206
  %v11208 = vsel %vm11164, %v2625, 0.0
  %v11209 = vadd.f32 %v11207, %v11208
  %v11210 = vsel %vm11164, %v2628, 0.0
  %v11211 = vadd.f32 %v11209, %v11210
  %v11212 = vsel %vm11164, %v2633, 0.0
  %v11213 = vadd.f32 %v11211, %v11212
  %v11214 = vsel %vm11164, %v2636, 0.0
  %v11215 = vadd.f32 %v11213, %v11214
  %v11216 = vsel %vm11164, %v2641, 0.0
  %v11217 = vadd.f32 %v11215, %v11216
  %v11218 = vsel %vm11164, %v2644, 0.0
  %v11219 = vadd.f32 %v11217, %v11218
  %v11220 = vsel %vm11164, %v2649, 0.0
  %v11221 = vadd.f32 %v11219, %v11220
  %v11222 = vsel %vm11164, %v2652, 0.0
  %v11223 = vadd.f32 %v11221, %v11222
  %v11224 = vsel %vm11164, %v2657, 0.0
  %v11225 = vadd.f32 %v11223, %v11224
  %v11226 = vsel %vm11164, %v2660, 0.0
  %v11227 = vadd.f32 %v11225, %v11226
  %v11228 = vsel %vm11164, %v2665, 0.0
  %v11229 = vadd.f32 %v11227, %v11228
  %v11230 = vsel %vm11164, %v2668, 0.0
  %v11231 = vadd.f32 %v11229, %v11230
  %v11232 = vsel %vm11164, %v2673, 0.0
  %v11233 = vadd.f32 %v11231, %v11232
  %v11234 = vsel %vm11164, %v2676, 0.0
  %v11235 = vadd.f32 %v11233, %v11234
  %v11236 = vsel %vm11164, %v2681, 0.0
  %v11237 = vadd.f32 %v11235, %v11236
  %v11238 = vsel %vm11164, %v2684, 0.0
  %v11239 = vadd.f32 %v11237, %v11238
  %v11240 = vsel %vm11164, %v2689, 0.0
  %v11241 = vadd.f32 %v11239, %v11240
  %v11242 = vsel %vm11164, %v2692, 0.0
  %v11243 = vadd.f32 %v11241, %v11242
  %v11244 = vsel %vm11164, %v2697, 0.0
  %v11245 = vadd.f32 %v11243, %v11244
  %v11246 = vsel %vm11164, %v2700, 0.0
  %v11247 = vadd.f32 %v11245, %v11246
  %v11248 = vsel %vm11164, %v2705, 0.0
  %v11249 = vadd.f32 %v11247, %v11248
  %v11250 = vsel %vm11164, %v2708, 0.0
  %v11251 = vadd.f32 %v11249, %v11250
  %v11252 = vsel %vm11164, %v2713, 0.0
  %v11253 = vadd.f32 %v11251, %v11252
  %v11254 = vsel %vm11164, %v2716, 0.0
  %v11255 = vadd.f32 %v11253, %v11254
  %v11256 = vsel %vm11164, %v2721, 0.0
  %v11257 = vadd.f32 %v11255, %v11256
  %v11258 = vsel %vm11164, %v2724, 0.0
  %v11259 = vadd.f32 %v11257, %v11258
  %v11260 = vsel %vm11164, %v2729, 0.0
  %v11261 = vadd.f32 %v11259, %v11260
  %v11262 = vsel %vm11164, %v2732, 0.0
  %v11263 = vadd.f32 %v11261, %v11262
  %v11264 = vsel %vm11164, %v2737, 0.0
  %v11265 = vadd.f32 %v11263, %v11264
  %v11266 = vsel %vm11164, %v2740, 0.0
  %v11267 = vadd.f32 %v11265, %v11266
  %v11268 = vsel %vm11164, %v2745, 0.0
  %v11269 = vadd.f32 %v11267, %v11268
  %v11270 = vsel %vm11164, %v2748, 0.0
  %v11271 = vadd.f32 %v11269, %v11270
  %v11272 = vsel %vm11164, %v2753, 0.0
  %v11273 = vadd.f32 %v11271, %v11272
  %v11274 = vsel %vm11164, %v2756, 0.0
  %v11275 = vadd.f32 %v11273, %v11274
  %v11276 = vsel %vm11164, %v2761, 0.0
  %v11277 = vadd.f32 %v11275, %v11276
  %v11278 = vsel %vm11164, %v2764, 0.0
  %v11279 = vadd.f32 %v11277, %v11278
  %v11280 = vsel %vm11164, %v2769, 0.0
  %v11281 = vadd.f32 %v11279, %v11280
  %v11282 = vsel %vm11164, %v2772, 0.0
  %v11283 = vadd.f32 %v11281, %v11282
  %v11284 = vsel %vm11164, %v2777, 0.0
  %v11285 = vadd.f32 %v11283, %v11284
  %v11286 = vsel %vm11164, %v2780, 0.0
  %v11287 = vadd.f32 %v11285, %v11286
  %v11288 = vsel %vm11164, %v2785, 0.0
  %v11289 = vadd.f32 %v11287, %v11288
  %v11290 = vsel %vm11164, %v2788, 0.0
  %v11291 = vadd.f32 %v11289, %v11290
  %v11292 = vrot.slane %v11291, 4
  %v11293 = vadd.f32 %v11291, %v11292
  %v11294 = vrot.slane %v11293, 2
  %v11295 = vadd.f32 %v11293, %v11294
  %v11296 = vrot.slane %v11295, 1
  %v11297 = vadd.f32 %v11295, %v11296
  %v11298 = vmul.f32 %v11297, 0.001953125
  %v11299 = vsub.f32 %v2537, %v11298
  %v11300 = vsub.f32 %v2540, %v11298
  %v11301 = vsub.f32 %v2545, %v11298
  %v11302 = vsub.f32 %v2548, %v11298
  %v11303 = vsub.f32 %v2553, %v11298
  %v11304 = vsub.f32 %v2556, %v11298
  %v11305 = vsub.f32 %v2561, %v11298
  %v11306 = vsub.f32 %v2564, %v11298
  %v11307 = vsub.f32 %v2569, %v11298
  %v11308 = vsub.f32 %v2572, %v11298
  %v11309 = vsub.f32 %v2577, %v11298
  %v11310 = vsub.f32 %v2580, %v11298
  %v11311 = vsub.f32 %v2585, %v11298
  %v11312 = vsub.f32 %v2588, %v11298
  %v11313 = vsub.f32 %v2593, %v11298
  %v11314 = vsub.f32 %v2596, %v11298
  %v11315 = vsub.f32 %v2601, %v11298
  %v11316 = vsub.f32 %v2604, %v11298
  %v11317 = vsub.f32 %v2609, %v11298
  %v11318 = vsub.f32 %v2612, %v11298
  %v11319 = vsub.f32 %v2617, %v11298
  %v11320 = vsub.f32 %v2620, %v11298
  %v11321 = vsub.f32 %v2625, %v11298
  %v11322 = vsub.f32 %v2628, %v11298
  %v11323 = vsub.f32 %v2633, %v11298
  %v11324 = vsub.f32 %v2636, %v11298
  %v11325 = vsub.f32 %v2641, %v11298
  %v11326 = vsub.f32 %v2644, %v11298
  %v11327 = vsub.f32 %v2649, %v11298
  %v11328 = vsub.f32 %v2652, %v11298
  %v11329 = vsub.f32 %v2657, %v11298
  %v11330 = vsub.f32 %v2660, %v11298
  %v11331 = vsub.f32 %v2665, %v11298
  %v11332 = vsub.f32 %v2668, %v11298
  %v11333 = vsub.f32 %v2673, %v11298
  %v11334 = vsub.f32 %v2676, %v11298
  %v11335 = vsub.f32 %v2681, %v11298
  %v11336 = vsub.f32 %v2684, %v11298
  %v11337 = vsub.f32 %v2689, %v11298
  %v11338 = vsub.f32 %v2692, %v11298
  %v11339 = vsub.f32 %v2697, %v11298
  %v11340 = vsub.f32 %v2700, %v11298
  %v11341 = vsub.f32 %v2705, %v11298
  %v11342 = vsub.f32 %v2708, %v11298
  %v11343 = vsub.f32 %v2713, %v11298
  %v11344 = vsub.f32 %v2716, %v11298
  %v11345 = vsub.f32 %v2721, %v11298
  %v11346 = vsub.f32 %v2724, %v11298
  %v11347 = vsub.f32 %v2729, %v11298
  %v11348 = vsub.f32 %v2732, %v11298
  %v11349 = vsub.f32 %v2737, %v11298
  %v11350 = vsub.f32 %v2740, %v11298
  %v11351 = vsub.f32 %v2745, %v11298
  %v11352 = vsub.f32 %v2748, %v11298
  %v11353 = vsub.f32 %v2753, %v11298
  %v11354 = vsub.f32 %v2756, %v11298
  %v11355 = vsub.f32 %v2761, %v11298
  %v11356 = vsub.f32 %v2764, %v11298
  %v11357 = vsub.f32 %v2769, %v11298
  %v11358 = vsub.f32 %v2772, %v11298
  %v11359 = vsub.f32 %v2777, %v11298
  %v11360 = vsub.f32 %v2780, %v11298
  %v11361 = vsub.f32 %v2785, %v11298
  %v11362 = vsub.f32 %v2788, %v11298
  %v11363 = vmul.f32 %v11299, %v11299
  %v11364 = vmul.f32 %v11300, %v11300
  %v11365 = vmul.f32 %v11301, %v11301
  %v11366 = vmul.f32 %v11302, %v11302
  %v11367 = vmul.f32 %v11303, %v11303
  %v11368 = vmul.f32 %v11304, %v11304
  %v11369 = vmul.f32 %v11305, %v11305
  %v11370 = vmul.f32 %v11306, %v11306
  %v11371 = vmul.f32 %v11307, %v11307
  %v11372 = vmul.f32 %v11308, %v11308
  %v11373 = vmul.f32 %v11309, %v11309
  %v11374 = vmul.f32 %v11310, %v11310
  %v11375 = vmul.f32 %v11311, %v11311
  %v11376 = vmul.f32 %v11312, %v11312
  %v11377 = vmul.f32 %v11313, %v11313
  %v11378 = vmul.f32 %v11314, %v11314
  %v11379 = vmul.f32 %v11315, %v11315
  %v11380 = vmul.f32 %v11316, %v11316
  %v11381 = vmul.f32 %v11317, %v11317
  %v11382 = vmul.f32 %v11318, %v11318
  %v11383 = vmul.f32 %v11319, %v11319
  %v11384 = vmul.f32 %v11320, %v11320
  %v11385 = vmul.f32 %v11321, %v11321
  %v11386 = vmul.f32 %v11322, %v11322
  %v11387 = vmul.f32 %v11323, %v11323
  %v11388 = vmul.f32 %v11324, %v11324
  %v11389 = vmul.f32 %v11325, %v11325
  %v11390 = vmul.f32 %v11326, %v11326
  %v11391 = vmul.f32 %v11327, %v11327
  %v11392 = vmul.f32 %v11328, %v11328
  %v11393 = vmul.f32 %v11329, %v11329
  %v11394 = vmul.f32 %v11330, %v11330
  %v11395 = vmul.f32 %v11331, %v11331
  %v11396 = vmul.f32 %v11332, %v11332
  %v11397 = vmul.f32 %v11333, %v11333
  %v11398 = vmul.f32 %v11334, %v11334
  %v11399 = vmul.f32 %v11335, %v11335
  %v11400 = vmul.f32 %v11336, %v11336
  %v11401 = vmul.f32 %v11337, %v11337
  %v11402 = vmul.f32 %v11338, %v11338
  %v11403 = vmul.f32 %v11339, %v11339
  %v11404 = vmul.f32 %v11340, %v11340
  %v11405 = vmul.f32 %v11341, %v11341
  %v11406 = vmul.f32 %v11342, %v11342
  %v11407 = vmul.f32 %v11343, %v11343
  %v11408 = vmul.f32 %v11344, %v11344
  %v11409 = vmul.f32 %v11345, %v11345
  %v11410 = vmul.f32 %v11346, %v11346
  %v11411 = vmul.f32 %v11347, %v11347
  %v11412 = vmul.f32 %v11348, %v11348
  %v11413 = vmul.f32 %v11349, %v11349
  %v11414 = vmul.f32 %v11350, %v11350
  %v11415 = vmul.f32 %v11351, %v11351
  %v11416 = vmul.f32 %v11352, %v11352
  %v11417 = vmul.f32 %v11353, %v11353
  %v11418 = vmul.f32 %v11354, %v11354
  %v11419 = vmul.f32 %v11355, %v11355
  %v11420 = vmul.f32 %v11356, %v11356
  %v11421 = vmul.f32 %v11357, %v11357
  %v11422 = vmul.f32 %v11358, %v11358
  %v11423 = vmul.f32 %v11359, %v11359
  %v11424 = vmul.f32 %v11360, %v11360
  %v11425 = vmul.f32 %v11361, %v11361
  %v11426 = vmul.f32 %v11362, %v11362
  %v11427 = vsel %vm11164, %v11363, 0.0
  %v11428 = vsel %vm11164, %v11364, 0.0
  %v11429 = vadd.f32 %v11427, %v11428
  %v11430 = vsel %vm11164, %v11365, 0.0
  %v11431 = vadd.f32 %v11429, %v11430
  %v11432 = vsel %vm11164, %v11366, 0.0
  %v11433 = vadd.f32 %v11431, %v11432
  %v11434 = vsel %vm11164, %v11367, 0.0
  %v11435 = vadd.f32 %v11433, %v11434
  %v11436 = vsel %vm11164, %v11368, 0.0
  %v11437 = vadd.f32 %v11435, %v11436
  %v11438 = vsel %vm11164, %v11369, 0.0
  %v11439 = vadd.f32 %v11437, %v11438
  %v11440 = vsel %vm11164, %v11370, 0.0
  %v11441 = vadd.f32 %v11439, %v11440
  %v11442 = vsel %vm11164, %v11371, 0.0
  %v11443 = vadd.f32 %v11441, %v11442
  %v11444 = vsel %vm11164, %v11372, 0.0
  %v11445 = vadd.f32 %v11443, %v11444
  %v11446 = vsel %vm11164, %v11373, 0.0
  %v11447 = vadd.f32 %v11445, %v11446
  %v11448 = vsel %vm11164, %v11374, 0.0
  %v11449 = vadd.f32 %v11447, %v11448
  %v11450 = vsel %vm11164, %v11375, 0.0
  %v11451 = vadd.f32 %v11449, %v11450
  %v11452 = vsel %vm11164, %v11376, 0.0
  %v11453 = vadd.f32 %v11451, %v11452
  %v11454 = vsel %vm11164, %v11377, 0.0
  %v11455 = vadd.f32 %v11453, %v11454
  %v11456 = vsel %vm11164, %v11378, 0.0
  %v11457 = vadd.f32 %v11455, %v11456
  %v11458 = vsel %vm11164, %v11379, 0.0
  %v11459 = vadd.f32 %v11457, %v11458
  %v11460 = vsel %vm11164, %v11380, 0.0
  %v11461 = vadd.f32 %v11459, %v11460
  %v11462 = vsel %vm11164, %v11381, 0.0
  %v11463 = vadd.f32 %v11461, %v11462
  %v11464 = vsel %vm11164, %v11382, 0.0
  %v11465 = vadd.f32 %v11463, %v11464
  %v11466 = vsel %vm11164, %v11383, 0.0
  %v11467 = vadd.f32 %v11465, %v11466
  %v11468 = vsel %vm11164, %v11384, 0.0
  %v11469 = vadd.f32 %v11467, %v11468
  %v11470 = vsel %vm11164, %v11385, 0.0
  %v11471 = vadd.f32 %v11469, %v11470
  %v11472 = vsel %vm11164, %v11386, 0.0
  %v11473 = vadd.f32 %v11471, %v11472
  %v11474 = vsel %vm11164, %v11387, 0.0
  %v11475 = vadd.f32 %v11473, %v11474
  %v11476 = vsel %vm11164, %v11388, 0.0
  %v11477 = vadd.f32 %v11475, %v11476
  %v11478 = vsel %vm11164, %v11389, 0.0
  %v11479 = vadd.f32 %v11477, %v11478
  %v11480 = vsel %vm11164, %v11390, 0.0
  %v11481 = vadd.f32 %v11479, %v11480
  %v11482 = vsel %vm11164, %v11391, 0.0
  %v11483 = vadd.f32 %v11481, %v11482
  %v11484 = vsel %vm11164, %v11392, 0.0
  %v11485 = vadd.f32 %v11483, %v11484
  %v11486 = vsel %vm11164, %v11393, 0.0
  %v11487 = vadd.f32 %v11485, %v11486
  %v11488 = vsel %vm11164, %v11394, 0.0
  %v11489 = vadd.f32 %v11487, %v11488
  %v11490 = vsel %vm11164, %v11395, 0.0
  %v11491 = vadd.f32 %v11489, %v11490
  %v11492 = vsel %vm11164, %v11396, 0.0
  %v11493 = vadd.f32 %v11491, %v11492
  %v11494 = vsel %vm11164, %v11397, 0.0
  %v11495 = vadd.f32 %v11493, %v11494
  %v11496 = vsel %vm11164, %v11398, 0.0
  %v11497 = vadd.f32 %v11495, %v11496
  %v11498 = vsel %vm11164, %v11399, 0.0
  %v11499 = vadd.f32 %v11497, %v11498
  %v11500 = vsel %vm11164, %v11400, 0.0
  %v11501 = vadd.f32 %v11499, %v11500
  %v11502 = vsel %vm11164, %v11401, 0.0
  %v11503 = vadd.f32 %v11501, %v11502
  %v11504 = vsel %vm11164, %v11402, 0.0
  %v11505 = vadd.f32 %v11503, %v11504
  %v11506 = vsel %vm11164, %v11403, 0.0
  %v11507 = vadd.f32 %v11505, %v11506
  %v11508 = vsel %vm11164, %v11404, 0.0
  %v11509 = vadd.f32 %v11507, %v11508
  %v11510 = vsel %vm11164, %v11405, 0.0
  %v11511 = vadd.f32 %v11509, %v11510
  %v11512 = vsel %vm11164, %v11406, 0.0
  %v11513 = vadd.f32 %v11511, %v11512
  %v11514 = vsel %vm11164, %v11407, 0.0
  %v11515 = vadd.f32 %v11513, %v11514
  %v11516 = vsel %vm11164, %v11408, 0.0
  %v11517 = vadd.f32 %v11515, %v11516
  %v11518 = vsel %vm11164, %v11409, 0.0
  %v11519 = vadd.f32 %v11517, %v11518
  %v11520 = vsel %vm11164, %v11410, 0.0
  %v11521 = vadd.f32 %v11519, %v11520
  %v11522 = vsel %vm11164, %v11411, 0.0
  %v11523 = vadd.f32 %v11521, %v11522
  %v11524 = vsel %vm11164, %v11412, 0.0
  %v11525 = vadd.f32 %v11523, %v11524
  %v11526 = vsel %vm11164, %v11413, 0.0
  %v11527 = vadd.f32 %v11525, %v11526
  %v11528 = vsel %vm11164, %v11414, 0.0
  %v11529 = vadd.f32 %v11527, %v11528
  %v11530 = vsel %vm11164, %v11415, 0.0
  %v11531 = vadd.f32 %v11529, %v11530
  %v11532 = vsel %vm11164, %v11416, 0.0
  %v11533 = vadd.f32 %v11531, %v11532
  %v11534 = vsel %vm11164, %v11417, 0.0
  %v11535 = vadd.f32 %v11533, %v11534
  %v11536 = vsel %vm11164, %v11418, 0.0
  %v11537 = vadd.f32 %v11535, %v11536
  %v11538 = vsel %vm11164, %v11419, 0.0
  %v11539 = vadd.f32 %v11537, %v11538
  %v11540 = vsel %vm11164, %v11420, 0.0
  %v11541 = vadd.f32 %v11539, %v11540
  %v11542 = vsel %vm11164, %v11421, 0.0
  %v11543 = vadd.f32 %v11541, %v11542
  %v11544 = vsel %vm11164, %v11422, 0.0
  %v11545 = vadd.f32 %v11543, %v11544
  %v11546 = vsel %vm11164, %v11423, 0.0
  %v11547 = vadd.f32 %v11545, %v11546
  %v11548 = vsel %vm11164, %v11424, 0.0
  %v11549 = vadd.f32 %v11547, %v11548
  %v11550 = vsel %vm11164, %v11425, 0.0
  %v11551 = vadd.f32 %v11549, %v11550
  %v11552 = vsel %vm11164, %v11426, 0.0
  %v11553 = vadd.f32 %v11551, %v11552
  %v11554 = vrot.slane %v11553, 4
  %v11555 = vadd.f32 %v11553, %v11554
  %v11556 = vrot.slane %v11555, 2
  %v11557 = vadd.f32 %v11555, %v11556
  %v11558 = vrot.slane %v11557, 1
  %v11559 = vadd.f32 %v11557, %v11558
  %v11560 = vmul.f32 %v11559, 0.001953125
  %v11561 = vadd.f32 %v11560, 1e-05
  %v11562 = vrsqrt.pop %v11561
  %11564 = vrot.lane.b32.xlu0 %v11562, 120
  %v11565 = vpop.permute.xlu0 %11564
  %v11567 = vmul.f32 %v11162, %v11565
  %11569 = vrot.lane.b32.xlu0 %v11567, 8
  %v11570 = vpop.permute.xlu0 %11569
  %v11572 = vmul.f32 %v11298, %v11570
  %11574 = vrot.lane.b32.xlu0 %v11572, 120
  %v11575 = vpop.permute.xlu0 %11574
  %v11577 = vsub.f32 %v11163, %v11575
  %v11578 = vlaneseq
  %v11579 = vshrl.u32 %v11578, 7
  %v11580 = vsub.s32 0, %v11579
  %v11581 = vrot.slane %v11567, %v11580
  %11583 = vrot.lane.b32.xlu0 %v11581, 8
  %v11584 = vpop.permute.xlu0 %11583
  %v11586 = vmul.f32 %v2537, %v11584
  %v11587 = vmul.f32 %v2540, %v11584
  %v11588 = vmul.f32 %v2545, %v11584
  %v11589 = vmul.f32 %v2548, %v11584
  %v11590 = vmul.f32 %v2553, %v11584
  %v11591 = vmul.f32 %v2556, %v11584
  %v11592 = vmul.f32 %v2561, %v11584
  %v11593 = vmul.f32 %v2564, %v11584
  %v11594 = vmul.f32 %v2569, %v11584
  %v11595 = vmul.f32 %v2572, %v11584
  %v11596 = vmul.f32 %v2577, %v11584
  %v11597 = vmul.f32 %v2580, %v11584
  %v11598 = vmul.f32 %v2585, %v11584
  %v11599 = vmul.f32 %v2588, %v11584
  %v11600 = vmul.f32 %v2593, %v11584
  %v11601 = vmul.f32 %v2596, %v11584
  %v11602 = vmul.f32 %v2601, %v11584
  %v11603 = vmul.f32 %v2604, %v11584
  %v11604 = vmul.f32 %v2609, %v11584
  %v11605 = vmul.f32 %v2612, %v11584
  %v11606 = vmul.f32 %v2617, %v11584
  %v11607 = vmul.f32 %v2620, %v11584
  %v11608 = vmul.f32 %v2625, %v11584
  %v11609 = vmul.f32 %v2628, %v11584
  %v11610 = vmul.f32 %v2633, %v11584
  %v11611 = vmul.f32 %v2636, %v11584
  %v11612 = vmul.f32 %v2641, %v11584
  %v11613 = vmul.f32 %v2644, %v11584
  %v11614 = vmul.f32 %v2649, %v11584
  %v11615 = vmul.f32 %v2652, %v11584
  %v11616 = vmul.f32 %v2657, %v11584
  %v11617 = vmul.f32 %v2660, %v11584
  %v11618 = vmul.f32 %v2665, %v11584
  %v11619 = vmul.f32 %v2668, %v11584
  %v11620 = vmul.f32 %v2673, %v11584
  %v11621 = vmul.f32 %v2676, %v11584
  %v11622 = vmul.f32 %v2681, %v11584
  %v11623 = vmul.f32 %v2684, %v11584
  %v11624 = vmul.f32 %v2689, %v11584
  %v11625 = vmul.f32 %v2692, %v11584
  %v11626 = vmul.f32 %v2697, %v11584
  %v11627 = vmul.f32 %v2700, %v11584
  %v11628 = vmul.f32 %v2705, %v11584
  %v11629 = vmul.f32 %v2708, %v11584
  %v11630 = vmul.f32 %v2713, %v11584
  %v11631 = vmul.f32 %v2716, %v11584
  %v11632 = vmul.f32 %v2721, %v11584
  %v11633 = vmul.f32 %v2724, %v11584
  %v11634 = vmul.f32 %v2729, %v11584
  %v11635 = vmul.f32 %v2732, %v11584
  %v11636 = vmul.f32 %v2737, %v11584
  %v11637 = vmul.f32 %v2740, %v11584
  %v11638 = vmul.f32 %v2745, %v11584
  %v11639 = vmul.f32 %v2748, %v11584
  %v11640 = vmul.f32 %v2753, %v11584
  %v11641 = vmul.f32 %v2756, %v11584
  %v11642 = vmul.f32 %v2761, %v11584
  %v11643 = vmul.f32 %v2764, %v11584
  %v11644 = vmul.f32 %v2769, %v11584
  %v11645 = vmul.f32 %v2772, %v11584
  %v11646 = vmul.f32 %v2777, %v11584
  %v11647 = vmul.f32 %v2780, %v11584
  %v11648 = vmul.f32 %v2785, %v11584
  %v11649 = vmul.f32 %v2788, %v11584
  %v11650 = vlaneseq
  %v11651 = vshrl.u32 %v11650, 7
  %v11652 = vsub.s32 0, %v11651
  %v11653 = vrot.slane %v11577, %v11652
  %11655 = vrot.lane.b32.xlu0 %v11653, 8
  %v11656 = vpop.permute.xlu0 %11655
  %v11658 = vadd.f32 %v11586, %v11656
  %v11659 = vadd.f32 %v11587, %v11656
  %v11660 = vadd.f32 %v11588, %v11656
  %v11661 = vadd.f32 %v11589, %v11656
  %v11662 = vadd.f32 %v11590, %v11656
  %v11663 = vadd.f32 %v11591, %v11656
  %v11664 = vadd.f32 %v11592, %v11656
  %v11665 = vadd.f32 %v11593, %v11656
  %v11666 = vadd.f32 %v11594, %v11656
  %v11667 = vadd.f32 %v11595, %v11656
  %v11668 = vadd.f32 %v11596, %v11656
  %v11669 = vadd.f32 %v11597, %v11656
  %v11670 = vadd.f32 %v11598, %v11656
  %v11671 = vadd.f32 %v11599, %v11656
  %v11672 = vadd.f32 %v11600, %v11656
  %v11673 = vadd.f32 %v11601, %v11656
  %v11674 = vadd.f32 %v11602, %v11656
  %v11675 = vadd.f32 %v11603, %v11656
  %v11676 = vadd.f32 %v11604, %v11656
  %v11677 = vadd.f32 %v11605, %v11656
  %v11678 = vadd.f32 %v11606, %v11656
  %v11679 = vadd.f32 %v11607, %v11656
  %v11680 = vadd.f32 %v11608, %v11656
  %v11681 = vadd.f32 %v11609, %v11656
  %v11682 = vadd.f32 %v11610, %v11656
  %v11683 = vadd.f32 %v11611, %v11656
  %v11684 = vadd.f32 %v11612, %v11656
  %v11685 = vadd.f32 %v11613, %v11656
  %v11686 = vadd.f32 %v11614, %v11656
  %v11687 = vadd.f32 %v11615, %v11656
  %v11688 = vadd.f32 %v11616, %v11656
  %v11689 = vadd.f32 %v11617, %v11656
  %v11690 = vadd.f32 %v11618, %v11656
  %v11691 = vadd.f32 %v11619, %v11656
  %v11692 = vadd.f32 %v11620, %v11656
  %v11693 = vadd.f32 %v11621, %v11656
  %v11694 = vadd.f32 %v11622, %v11656
  %v11695 = vadd.f32 %v11623, %v11656
  %v11696 = vadd.f32 %v11624, %v11656
  %v11697 = vadd.f32 %v11625, %v11656
  %v11698 = vadd.f32 %v11626, %v11656
  %v11699 = vadd.f32 %v11627, %v11656
  %v11700 = vadd.f32 %v11628, %v11656
  %v11701 = vadd.f32 %v11629, %v11656
  %v11702 = vadd.f32 %v11630, %v11656
  %v11703 = vadd.f32 %v11631, %v11656
  %v11704 = vadd.f32 %v11632, %v11656
  %v11705 = vadd.f32 %v11633, %v11656
  %v11706 = vadd.f32 %v11634, %v11656
  %v11707 = vadd.f32 %v11635, %v11656
  %v11708 = vadd.f32 %v11636, %v11656
  %v11709 = vadd.f32 %v11637, %v11656
  %v11710 = vadd.f32 %v11638, %v11656
  %v11711 = vadd.f32 %v11639, %v11656
  %v11712 = vadd.f32 %v11640, %v11656
  %v11713 = vadd.f32 %v11641, %v11656
  %v11714 = vadd.f32 %v11642, %v11656
  %v11715 = vadd.f32 %v11643, %v11656
  %v11716 = vadd.f32 %v11644, %v11656
  %v11717 = vadd.f32 %v11645, %v11656
  %v11718 = vadd.f32 %v11646, %v11656
  %v11719 = vadd.f32 %v11647, %v11656
  %v11720 = vadd.f32 %v11648, %v11656
  %v11721 = vadd.f32 %v11649, %v11656
  %11786 = vrot.lane.b32.xlu0 %v11658, 120
  %v11787 = vpop.permute.xlu0 %11786
  %11788 = vrot.lane.b32.xlu0 %v11659, 120
  %v11789 = vpop.permute.xlu0 %11788
  %11790 = vrot.lane.b32.xlu0 %v11660, 120
  %v11791 = vpop.permute.xlu0 %11790
  %11792 = vrot.lane.b32.xlu0 %v11661, 120
  %v11793 = vpop.permute.xlu0 %11792
  %11794 = vrot.lane.b32.xlu0 %v11662, 120
  %v11795 = vpop.permute.xlu0 %11794
  %11796 = vrot.lane.b32.xlu0 %v11663, 120
  %v11797 = vpop.permute.xlu0 %11796
  %11798 = vrot.lane.b32.xlu0 %v11664, 120
  %v11799 = vpop.permute.xlu0 %11798
  %11800 = vrot.lane.b32.xlu0 %v11665, 120
  %v11801 = vpop.permute.xlu0 %11800
  %11802 = vrot.lane.b32.xlu0 %v11666, 120
  %v11803 = vpop.permute.xlu0 %11802
  %11804 = vrot.lane.b32.xlu0 %v11667, 120
  %v11805 = vpop.permute.xlu0 %11804
  %11806 = vrot.lane.b32.xlu0 %v11668, 120
  %v11807 = vpop.permute.xlu0 %11806
  %11808 = vrot.lane.b32.xlu0 %v11669, 120
  %v11809 = vpop.permute.xlu0 %11808
  %11810 = vrot.lane.b32.xlu0 %v11670, 120
  %v11811 = vpop.permute.xlu0 %11810
  %11812 = vrot.lane.b32.xlu0 %v11671, 120
  %v11813 = vpop.permute.xlu0 %11812
  %11814 = vrot.lane.b32.xlu0 %v11672, 120
  %v11815 = vpop.permute.xlu0 %11814
  %11816 = vrot.lane.b32.xlu0 %v11673, 120
  %v11817 = vpop.permute.xlu0 %11816
  %11818 = vrot.lane.b32.xlu0 %v11674, 120
  %v11819 = vpop.permute.xlu0 %11818
  %11820 = vrot.lane.b32.xlu0 %v11675, 120
  %v11821 = vpop.permute.xlu0 %11820
  %11822 = vrot.lane.b32.xlu0 %v11676, 120
  %v11823 = vpop.permute.xlu0 %11822
  %11824 = vrot.lane.b32.xlu0 %v11677, 120
  %v11825 = vpop.permute.xlu0 %11824
  %11826 = vrot.lane.b32.xlu0 %v11678, 120
  %v11827 = vpop.permute.xlu0 %11826
  %11828 = vrot.lane.b32.xlu0 %v11679, 120
  %v11829 = vpop.permute.xlu0 %11828
  %11830 = vrot.lane.b32.xlu0 %v11680, 120
  %v11831 = vpop.permute.xlu0 %11830
  %11832 = vrot.lane.b32.xlu0 %v11681, 120
  %v11833 = vpop.permute.xlu0 %11832
  %11834 = vrot.lane.b32.xlu0 %v11682, 120
  %v11835 = vpop.permute.xlu0 %11834
  %11836 = vrot.lane.b32.xlu0 %v11683, 120
  %v11837 = vpop.permute.xlu0 %11836
  %11838 = vrot.lane.b32.xlu0 %v11684, 120
  %v11839 = vpop.permute.xlu0 %11838
  %11840 = vrot.lane.b32.xlu0 %v11685, 120
  %v11841 = vpop.permute.xlu0 %11840
  %11842 = vrot.lane.b32.xlu0 %v11686, 120
  %v11843 = vpop.permute.xlu0 %11842
  %11844 = vrot.lane.b32.xlu0 %v11687, 120
  %v11845 = vpop.permute.xlu0 %11844
  %11846 = vrot.lane.b32.xlu0 %v11688, 120
  %v11847 = vpop.permute.xlu0 %11846
  %11848 = vrot.lane.b32.xlu0 %v11689, 120
  %v11849 = vpop.permute.xlu0 %11848
  %11850 = vrot.lane.b32.xlu0 %v11690, 120
  %v11851 = vpop.permute.xlu0 %11850
  %11852 = vrot.lane.b32.xlu0 %v11691, 120
  %v11853 = vpop.permute.xlu0 %11852
  %11854 = vrot.lane.b32.xlu0 %v11692, 120
  %v11855 = vpop.permute.xlu0 %11854
  %11856 = vrot.lane.b32.xlu0 %v11693, 120
  %v11857 = vpop.permute.xlu0 %11856
  %11858 = vrot.lane.b32.xlu0 %v11694, 120
  %v11859 = vpop.permute.xlu0 %11858
  %11860 = vrot.lane.b32.xlu0 %v11695, 120
  %v11861 = vpop.permute.xlu0 %11860
  %11862 = vrot.lane.b32.xlu0 %v11696, 120
  %v11863 = vpop.permute.xlu0 %11862
  %11864 = vrot.lane.b32.xlu0 %v11697, 120
  %v11865 = vpop.permute.xlu0 %11864
  %11866 = vrot.lane.b32.xlu0 %v11698, 120
  %v11867 = vpop.permute.xlu0 %11866
  %11868 = vrot.lane.b32.xlu0 %v11699, 120
  %v11869 = vpop.permute.xlu0 %11868
  %11870 = vrot.lane.b32.xlu0 %v11700, 120
  %v11871 = vpop.permute.xlu0 %11870
  %11872 = vrot.lane.b32.xlu0 %v11701, 120
  %v11873 = vpop.permute.xlu0 %11872
  %11874 = vrot.lane.b32.xlu0 %v11702, 120
  %v11875 = vpop.permute.xlu0 %11874
  %11876 = vrot.lane.b32.xlu0 %v11703, 120
  %v11877 = vpop.permute.xlu0 %11876
  %11878 = vrot.lane.b32.xlu0 %v11704, 120
  %v11879 = vpop.permute.xlu0 %11878
  %11880 = vrot.lane.b32.xlu0 %v11705, 120
  %v11881 = vpop.permute.xlu0 %11880
  %11882 = vrot.lane.b32.xlu0 %v11706, 120
  %v11883 = vpop.permute.xlu0 %11882
  %11884 = vrot.lane.b32.xlu0 %v11707, 120
  %v11885 = vpop.permute.xlu0 %11884
  %11886 = vrot.lane.b32.xlu0 %v11708, 120
  %v11887 = vpop.permute.xlu0 %11886
  %11888 = vrot.lane.b32.xlu0 %v11709, 120
  %v11889 = vpop.permute.xlu0 %11888
  %11890 = vrot.lane.b32.xlu0 %v11710, 120
  %v11891 = vpop.permute.xlu0 %11890
  %11892 = vrot.lane.b32.xlu0 %v11711, 120
  %v11893 = vpop.permute.xlu0 %11892
  %11894 = vrot.lane.b32.xlu0 %v11712, 120
  %v11895 = vpop.permute.xlu0 %11894
  %11896 = vrot.lane.b32.xlu0 %v11713, 120
  %v11897 = vpop.permute.xlu0 %11896
  %11898 = vrot.lane.b32.xlu0 %v11714, 120
  %v11899 = vpop.permute.xlu0 %11898
  %11900 = vrot.lane.b32.xlu0 %v11715, 120
  %v11901 = vpop.permute.xlu0 %11900
  %11902 = vrot.lane.b32.xlu0 %v11716, 120
  %v11903 = vpop.permute.xlu0 %11902
  %11904 = vrot.lane.b32.xlu0 %v11717, 120
  %v11905 = vpop.permute.xlu0 %11904
  %11906 = vrot.lane.b32.xlu0 %v11718, 120
  %v11907 = vpop.permute.xlu0 %11906
  %11908 = vrot.lane.b32.xlu0 %v11719, 120
  %v11909 = vpop.permute.xlu0 %11908
  %11910 = vrot.lane.b32.xlu0 %v11720, 120
  %v11911 = vpop.permute.xlu0 %11910
  %11912 = vrot.lane.b32.xlu0 %v11721, 120
  %v11913 = vpop.permute.xlu0 %11912
  %v11978 = vadd.f32 %v11098, %v11787
  %v11979 = vadd.f32 %v11099, %v11789
  %v11980 = vadd.f32 %v11100, %v11791
  %v11981 = vadd.f32 %v11101, %v11793
  %v11982 = vadd.f32 %v11102, %v11795
  %v11983 = vadd.f32 %v11103, %v11797
  %v11984 = vadd.f32 %v11104, %v11799
  %v11985 = vadd.f32 %v11105, %v11801
  %v11986 = vadd.f32 %v11106, %v11803
  %v11987 = vadd.f32 %v11107, %v11805
  %v11988 = vadd.f32 %v11108, %v11807
  %v11989 = vadd.f32 %v11109, %v11809
  %v11990 = vadd.f32 %v11110, %v11811
  %v11991 = vadd.f32 %v11111, %v11813
  %v11992 = vadd.f32 %v11112, %v11815
  %v11993 = vadd.f32 %v11113, %v11817
  %v11994 = vadd.f32 %v11114, %v11819
  %v11995 = vadd.f32 %v11115, %v11821
  %v11996 = vadd.f32 %v11116, %v11823
  %v11997 = vadd.f32 %v11117, %v11825
  %v11998 = vadd.f32 %v11118, %v11827
  %v11999 = vadd.f32 %v11119, %v11829
  %v12000 = vadd.f32 %v11120, %v11831
  %v12001 = vadd.f32 %v11121, %v11833
  %v12002 = vadd.f32 %v11122, %v11835
  %v12003 = vadd.f32 %v11123, %v11837
  %v12004 = vadd.f32 %v11124, %v11839
  %v12005 = vadd.f32 %v11125, %v11841
  %v12006 = vadd.f32 %v11126, %v11843
  %v12007 = vadd.f32 %v11127, %v11845
  %v12008 = vadd.f32 %v11128, %v11847
  %v12009 = vadd.f32 %v11129, %v11849
  %v12010 = vadd.f32 %v11130, %v11851
  %v12011 = vadd.f32 %v11131, %v11853
  %v12012 = vadd.f32 %v11132, %v11855
  %v12013 = vadd.f32 %v11133, %v11857
  %v12014 = vadd.f32 %v11134, %v11859
  %v12015 = vadd.f32 %v11135, %v11861
  %v12016 = vadd.f32 %v11136, %v11863
  %v12017 = vadd.f32 %v11137, %v11865
  %v12018 = vadd.f32 %v11138, %v11867
  %v12019 = vadd.f32 %v11139, %v11869
  %v12020 = vadd.f32 %v11140, %v11871
  %v12021 = vadd.f32 %v11141, %v11873
  %v12022 = vadd.f32 %v11142, %v11875
  %v12023 = vadd.f32 %v11143, %v11877
  %v12024 = vadd.f32 %v11144, %v11879
  %v12025 = vadd.f32 %v11145, %v11881
  %v12026 = vadd.f32 %v11146, %v11883
  %v12027 = vadd.f32 %v11147, %v11885
  %v12028 = vadd.f32 %v11148, %v11887
  %v12029 = vadd.f32 %v11149, %v11889
  %v12030 = vadd.f32 %v11150, %v11891
  %v12031 = vadd.f32 %v11151, %v11893
  %v12032 = vadd.f32 %v11152, %v11895
  %v12033 = vadd.f32 %v11153, %v11897
  %v12034 = vadd.f32 %v11154, %v11899
  %v12035 = vadd.f32 %v11155, %v11901
  %v12036 = vadd.f32 %v11156, %v11903
  %v12037 = vadd.f32 %v11157, %v11905
  %v12038 = vadd.f32 %v11158, %v11907
  %v12039 = vadd.f32 %v11159, %v11909
  %v12040 = vadd.f32 %v11160, %v11911
  %v12041 = vadd.f32 %v11161, %v11913
  %v12042 = vmax.f32 %v11978, 0.0
  %v12043 = vmax.f32 %v11979, 0.0
  %v12044 = vmax.f32 %v11980, 0.0
  %v12045 = vmax.f32 %v11981, 0.0
  %v12046 = vmax.f32 %v11982, 0.0
  %v12047 = vmax.f32 %v11983, 0.0
  %v12048 = vmax.f32 %v11984, 0.0
  %v12049 = vmax.f32 %v11985, 0.0
  %v12050 = vmax.f32 %v11986, 0.0
  %v12051 = vmax.f32 %v11987, 0.0
  %v12052 = vmax.f32 %v11988, 0.0
  %v12053 = vmax.f32 %v11989, 0.0
  %v12054 = vmax.f32 %v11990, 0.0
  %v12055 = vmax.f32 %v11991, 0.0
  %v12056 = vmax.f32 %v11992, 0.0
  %v12057 = vmax.f32 %v11993, 0.0
  %v12058 = vmax.f32 %v11994, 0.0
  %v12059 = vmax.f32 %v11995, 0.0
  %v12060 = vmax.f32 %v11996, 0.0
  %v12061 = vmax.f32 %v11997, 0.0
  %v12062 = vmax.f32 %v11998, 0.0
  %v12063 = vmax.f32 %v11999, 0.0
  %v12064 = vmax.f32 %v12000, 0.0
  %v12065 = vmax.f32 %v12001, 0.0
  %v12066 = vmax.f32 %v12002, 0.0
  %v12067 = vmax.f32 %v12003, 0.0
  %v12068 = vmax.f32 %v12004, 0.0
  %v12069 = vmax.f32 %v12005, 0.0
  %v12070 = vmax.f32 %v12006, 0.0
  %v12071 = vmax.f32 %v12007, 0.0
  %v12072 = vmax.f32 %v12008, 0.0
  %v12073 = vmax.f32 %v12009, 0.0
  %v12074 = vmax.f32 %v12010, 0.0
  %v12075 = vmax.f32 %v12011, 0.0
  %v12076 = vmax.f32 %v12012, 0.0
  %v12077 = vmax.f32 %v12013, 0.0
  %v12078 = vmax.f32 %v12014, 0.0
  %v12079 = vmax.f32 %v12015, 0.0
  %v12080 = vmax.f32 %v12016, 0.0
  %v12081 = vmax.f32 %v12017, 0.0
  %v12082 = vmax.f32 %v12018, 0.0
  %v12083 = vmax.f32 %v12019, 0.0
  %v12084 = vmax.f32 %v12020, 0.0
  %v12085 = vmax.f32 %v12021, 0.0
  %v12086 = vmax.f32 %v12022, 0.0
  %v12087 = vmax.f32 %v12023, 0.0
  %v12088 = vmax.f32 %v12024, 0.0
  %v12089 = vmax.f32 %v12025, 0.0
  %v12090 = vmax.f32 %v12026, 0.0
  %v12091 = vmax.f32 %v12027, 0.0
  %v12092 = vmax.f32 %v12028, 0.0
  %v12093 = vmax.f32 %v12029, 0.0
  %v12094 = vmax.f32 %v12030, 0.0
  %v12095 = vmax.f32 %v12031, 0.0
  %v12096 = vmax.f32 %v12032, 0.0
  %v12097 = vmax.f32 %v12033, 0.0
  %v12098 = vmax.f32 %v12034, 0.0
  %v12099 = vmax.f32 %v12035, 0.0
  %v12100 = vmax.f32 %v12036, 0.0
  %v12101 = vmax.f32 %v12037, 0.0
  %v12102 = vmax.f32 %v12038, 0.0
  %v12103 = vmax.f32 %v12039, 0.0
  %v12104 = vmax.f32 %v12040, 0.0
  %v12105 = vmax.f32 %v12041, 0.0
  %12106 = vst.msk [vmem:[%s5] sm:$0xff] %vm5056, %v12042
  %12107 = vst.msk [vmem:[%s5 + $0x8] sm:$0xff] %vm5056, %v12043
  %12108 = vst.msk [vmem:[%s5 + $0x10] sm:$0xff] %vm5056, %v12044
  %12109 = vst.msk [vmem:[%s5 + $0x18] sm:$0xff] %vm5056, %v12045
  %12110 = vst.msk [vmem:[%s5 + $0x20] sm:$0xff] %vm5056, %v12046
  %12111 = vst.msk [vmem:[%s5 + $0x28] sm:$0xff] %vm5056, %v12047
  %12112 = vst.msk [vmem:[%s5 + $0x30] sm:$0xff] %vm5056, %v12048
  %12113 = vst.msk [vmem:[%s5 + $0x38] sm:$0xff] %vm5056, %v12049
  %12114 = vst.msk [vmem:[%s5 + $0x40] sm:$0xff] %vm5056, %v12050
  %12115 = vst.msk [vmem:[%s5 + $0x48] sm:$0xff] %vm5056, %v12051
  %12116 = vst.msk [vmem:[%s5 + $0x50] sm:$0xff] %vm5056, %v12052
  %12117 = vst.msk [vmem:[%s5 + $0x58] sm:$0xff] %vm5056, %v12053
  %12118 = vst.msk [vmem:[%s5 + $0x60] sm:$0xff] %vm5056, %v12054
  %12119 = vst.msk [vmem:[%s5 + $0x68] sm:$0xff] %vm5056, %v12055
  %12120 = vst.msk [vmem:[%s5 + $0x70] sm:$0xff] %vm5056, %v12056
  %12121 = vst.msk [vmem:[%s5 + $0x78] sm:$0xff] %vm5056, %v12057
  %12122 = vst.msk [vmem:[%s5 + $0x80] sm:$0xff] %vm5056, %v12058
  %12123 = vst.msk [vmem:[%s5 + $0x88] sm:$0xff] %vm5056, %v12059
  %12124 = vst.msk [vmem:[%s5 + $0x90] sm:$0xff] %vm5056, %v12060
  %12125 = vst.msk [vmem:[%s5 + $0x98] sm:$0xff] %vm5056, %v12061
  %12126 = vst.msk [vmem:[%s5 + $0xa0] sm:$0xff] %vm5056, %v12062
  %12127 = vst.msk [vmem:[%s5 + $0xa8] sm:$0xff] %vm5056, %v12063
  %12128 = vst.msk [vmem:[%s5 + $0xb0] sm:$0xff] %vm5056, %v12064
  %12129 = vst.msk [vmem:[%s5 + $0xb8] sm:$0xff] %vm5056, %v12065
  %12130 = vst.msk [vmem:[%s5 + $0xc0] sm:$0xff] %vm5056, %v12066
  %12131 = vst.msk [vmem:[%s5 + $0xc8] sm:$0xff] %vm5056, %v12067
  %12132 = vst.msk [vmem:[%s5 + $0xd0] sm:$0xff] %vm5056, %v12068
  %12133 = vst.msk [vmem:[%s5 + $0xd8] sm:$0xff] %vm5056, %v12069
  %12134 = vst.msk [vmem:[%s5 + $0xe0] sm:$0xff] %vm5056, %v12070
  %12135 = vst.msk [vmem:[%s5 + $0xe8] sm:$0xff] %vm5056, %v12071
  %12136 = vst.msk [vmem:[%s5 + $0xf0] sm:$0xff] %vm5056, %v12072
  %12137 = vst.msk [vmem:[%s5 + $0xf8] sm:$0xff] %vm5056, %v12073
  %12138 = vst.msk [vmem:[%s5 + $0x100] sm:$0xff] %vm5056, %v12074
  %12139 = vst.msk [vmem:[%s5 + $0x108] sm:$0xff] %vm5056, %v12075
  %12140 = vst.msk [vmem:[%s5 + $0x110] sm:$0xff] %vm5056, %v12076
  %12141 = vst.msk [vmem:[%s5 + $0x118] sm:$0xff] %vm5056, %v12077
  %12142 = vst.msk [vmem:[%s5 + $0x120] sm:$0xff] %vm5056, %v12078
  %12143 = vst.msk [vmem:[%s5 + $0x128] sm:$0xff] %vm5056, %v12079
  %12144 = vst.msk [vmem:[%s5 + $0x130] sm:$0xff] %vm5056, %v12080
  %12145 = vst.msk [vmem:[%s5 + $0x138] sm:$0xff] %vm5056, %v12081
  %12146 = vst.msk [vmem:[%s5 + $0x140] sm:$0xff] %vm5056, %v12082
  %12147 = vst.msk [vmem:[%s5 + $0x148] sm:$0xff] %vm5056, %v12083
  %12148 = vst.msk [vmem:[%s5 + $0x150] sm:$0xff] %vm5056, %v12084
  %12149 = vst.msk [vmem:[%s5 + $0x158] sm:$0xff] %vm5056, %v12085
  %12150 = vst.msk [vmem:[%s5 + $0x160] sm:$0xff] %vm5056, %v12086
  %12151 = vst.msk [vmem:[%s5 + $0x168] sm:$0xff] %vm5056, %v12087
  %12152 = vst.msk [vmem:[%s5 + $0x170] sm:$0xff] %vm5056, %v12088
  %12153 = vst.msk [vmem:[%s5 + $0x178] sm:$0xff] %vm5056, %v12089
  %12154 = vst.msk [vmem:[%s5 + $0x180] sm:$0xff] %vm5056, %v12090
  %12155 = vst.msk [vmem:[%s5 + $0x188] sm:$0xff] %vm5056, %v12091
  %12156 = vst.msk [vmem:[%s5 + $0x190] sm:$0xff] %vm5056, %v12092
  %12157 = vst.msk [vmem:[%s5 + $0x198] sm:$0xff] %vm5056, %v12093
  %12158 = vst.msk [vmem:[%s5 + $0x1a0] sm:$0xff] %vm5056, %v12094
  %12159 = vst.msk [vmem:[%s5 + $0x1a8] sm:$0xff] %vm5056, %v12095
  %12160 = vst.msk [vmem:[%s5 + $0x1b0] sm:$0xff] %vm5056, %v12096
  %12161 = vst.msk [vmem:[%s5 + $0x1b8] sm:$0xff] %vm5056, %v12097
  %12162 = vst.msk [vmem:[%s5 + $0x1c0] sm:$0xff] %vm5056, %v12098
  %12163 = vst.msk [vmem:[%s5 + $0x1c8] sm:$0xff] %vm5056, %v12099
  %12164 = vst.msk [vmem:[%s5 + $0x1d0] sm:$0xff] %vm5056, %v12100
  %12165 = vst.msk [vmem:[%s5 + $0x1d8] sm:$0xff] %vm5056, %v12101
  %12166 = vst.msk [vmem:[%s5 + $0x1e0] sm:$0xff] %vm5056, %v12102
  %12167 = vst.msk [vmem:[%s5 + $0x1e8] sm:$0xff] %vm5056, %v12103
  %12168 = vst.msk [vmem:[%s5 + $0x1f0] sm:$0xff] %vm5056, %v12104
  %12169 = vst.msk [vmem:[%s5 + $0x1f8] sm:$0xff] %vm5056, %v12105
  // Predicated region
  $region22: #{tpu_custom_call.1} parent=0 // pred_check
    _
  $region23: #{tpu_custom_call.1} parent=0 // pred_check_branch
    %12171 = sbr.rel (0) target = $region25
  $region24: #{tpu_custom_call.1} parent=0 // pred_region
    _
  $region25: #{tpu_custom_call.1} parent=0 // pred_fallthru
    _
  // Predicated region
  $region26: #{tpu_custom_call.1} parent=0 // pred_check
    _
  $region27: #{tpu_custom_call.1} parent=0 // pred_check_branch
    %12173 = sbr.rel (0) target = $region29
  $region28: #{tpu_custom_call.1} parent=0 // pred_region
    _
  $region29: #{tpu_custom_call.1} parent=0 // pred_fallthru
    _

</llo_original>
